<compile_context>
chip_gen: v5e
topology: v5e:2x2
jax: 0.10.0
libtpu: 0.0.40
codegen_flags: <defaults>
</compile_context>

<pallas_src>
import math

import jax
import jax.numpy as jnp
from jax.experimental import pallas as pl
from jax.experimental.pallas import tpu as pltpu

# ------------------------- scaled-down configuration -------------------------
IMG = 32                               # image size (vit_large uses 224)
PATCH = 16                             # patch size (same as vit_large_patch16)
IN_CH = 3
PATCH_DIM = IN_CH * PATCH * PATCH      # 768 (lane-dense)
EMBED = 128                            # embed dim (scaled from 1024, lane-dense)
DEPTH = 2                              # transformer blocks (scaled from 24)
HEADS = 2                              # attention heads (scaled from 16)
HEAD_DIM = EMBED // HEADS              # 64 (same head_dim as ViT-Large)
MLP_HIDDEN = 4 * EMBED                 # 512
NUM_PATCHES = (IMG // PATCH) ** 2      # 4
TOKENS = NUM_PATCHES + 1               # 5
HEAD_H1 = 256                          # scaled from nn.Linear(num_ftrs, 1024)
HEAD_H2 = 128                          # scaled from nn.Linear(1024, 512)
NUM_CLASSES = 141
NC_PAD = 256                           # head logits padded to a lane multiple


# ------------------------------ kernel helpers --------------------------------
def _ln(x, g, b, eps):
    mu = jnp.mean(x, axis=-1, keepdims=True)
    var = jnp.mean((x - mu) ** 2, axis=-1, keepdims=True)
    return (x - mu) * jax.lax.rsqrt(var + eps) * g + b


def _erf(x):
    # Abramowitz & Stegun 7.1.26 polynomial erf. With the approx EUP reciprocal
    # (rel err ~2^-12) the abs error is ~1e-4 (vs 1.5e-7 with an exact divide);
    # still much closer to nn.GELU()'s exact erf than the tanh approximation.
    p = 0.3275911
    a1, a2, a3, a4, a5 = 0.254829592, -0.284496736, 1.421413741, -1.453152027, 1.061405429
    ax = jnp.abs(x)
    t = pl.reciprocal(1.0 + p * ax, approx=True)
    poly = ((((a5 * t + a4) * t + a3) * t + a2) * t + a1) * t
    y = 1.0 - poly * jnp.exp(-ax * ax)
    return jnp.where(x >= 0, y, -y)


def _gelu(x):
    # erf-GELU (torch.nn.GELU default), computed in f32
    return 0.5 * x * (1.0 + _erf(x * (1.0 / math.sqrt(2.0))))


# -------------------------------- fused kernel --------------------------------
def _vit_kernel(patches_ref, addpos_ref, mask_ref, patch_w_ref,
                ln1g_ref, ln1b_ref, wqkv_ref, bqkv_ref, wo_ref, bo_ref,
                ln2g_ref, ln2b_ref, w1_ref, b1_ref, w2_ref, b2_ref,
                fng_ref, fnb_ref, hng_ref, hnb_ref,
                hw1_ref, hb1_ref, hw2_ref, hb2_ref, hw3_ref, hb3_ref,
                o_ref):
    f32 = jnp.float32
    bf16 = jnp.bfloat16
    BT = patches_ref.shape[0]          # (images per grid step) * TOKENS
    B = BT // TOKENS
    scale = HEAD_DIM ** -0.5

    # ---- patch embedding (Conv2d-as-matmul); cls token, patch bias and positional
    # ---- embedding are all folded into the pre-tiled additive term addpos ----
    x = (jnp.dot(patches_ref[...].astype(bf16), patch_w_ref[...],
                 preferred_element_type=f32) + addpos_ref[...])        # (BT, EMBED) f32

    neg_mask = mask_ref[...]           # (BT, BT) block-diagonal 0 / -1e30

    for l in range(DEPTH):             # static unroll; all weights VMEM-resident
        # ------------------ attention branch: x + Attn(LN(x)) ------------------
        h = _ln(x, ln1g_ref[l], ln1b_ref[l], 1e-6)
        hb = h.astype(bf16)
        # one lane-dense fused qkv matmul: (BT, EMBED) x (EMBED, 3*EMBED)
        qkv = jnp.dot(hb, wqkv_ref[l], preferred_element_type=f32) + bqkv_ref[l]
        ctx = []
        for hd in range(HEADS):        # static 64-lane slices of the fused qkv
            q = qkv[:, hd * HEAD_DIM:(hd + 1) * HEAD_DIM]
            k = qkv[:, EMBED + hd * HEAD_DIM:EMBED + (hd + 1) * HEAD_DIM]
            v = qkv[:, 2 * EMBED + hd * HEAD_DIM:2 * EMBED + (hd + 1) * HEAD_DIM]
            # flattened attention: one (BT, BT) score matmul + block-diag mask
            att = jax.lax.dot_general(
                q.astype(bf16), k.astype(bf16),
                dimension_numbers=(((1,), (1,)), ((), ())),
                preferred_element_type=f32) * scale + neg_mask
            att = jnp.exp(att - jnp.max(att, axis=-1, keepdims=True))
            att = att * pl.reciprocal(jnp.sum(att, axis=-1, keepdims=True),
                                      approx=True)
            ctx.append(jnp.dot(att.astype(bf16), v.astype(bf16),
                               preferred_element_type=f32))             # (BT, HEAD_DIM)
        ctx_all = jnp.concatenate(ctx, axis=-1)                         # (BT, EMBED)
        # single fused output projection across heads, bias folded in epilogue
        x = x + (jnp.dot(ctx_all.astype(bf16), wo_ref[l],
                         preferred_element_type=f32) + bo_ref[l])

        # --------------------- MLP branch: x + MLP(LN(x)) ----------------------
        h2 = _ln(x, ln2g_ref[l], ln2b_ref[l], 1e-6)
        m = jnp.dot(h2.astype(bf16), w1_ref[l], preferred_element_type=f32) + b1_ref[l]
        m = _gelu(m)
        m = jnp.dot(m.astype(bf16), w2_ref[l], preferred_element_type=f32) + b2_ref[l]
        x = x + m

    # ---------------- final backbone norm + custom classification head ----------------
    cls_tok = x.reshape(B, TOKENS, EMBED)[:, 0:1, :].reshape(B, EMBED)  # token pooling
    y = _ln(cls_tok, fng_ref[...], fnb_ref[...], 1e-6)   # model.norm (eps=1e-6)
    y = _ln(y, hng_ref[...], hnb_ref[...], 1e-5)         # head LayerNorm (eps=1e-5)
    y = _gelu(jnp.dot(y.astype(bf16), hw1_ref[...], preferred_element_type=f32) + hb1_ref[...])
    # TODO(synk): nn.Dropout(0.4) / nn.Dropout(0.3) are identity at inference.
    y = _gelu(jnp.dot(y.astype(bf16), hw2_ref[...], preferred_element_type=f32) + hb2_ref[...])
    o_ref[...] = (jnp.dot(y.astype(bf16), hw3_ref[...], preferred_element_type=f32)
                  + hb3_ref[...])


# --------------------------------- glue / model ---------------------------------
def patchify_with_cls(x):
    # x: (B, C, H, W) NCHW -> (B, TOKENS, C*ph*pw); a zero "patch" row is prepended
    # per image for the cls token (its embedding comes entirely from addpos).
    B = x.shape[0]
    g = IMG // PATCH
    xp = x.reshape(B, IN_CH, g, PATCH, g, PATCH)
    xp = xp.transpose(0, 2, 4, 1, 3, 5)          # (B, gh, gw, C, ph, pw)
    xp = xp.reshape(B, NUM_PATCHES, PATCH_DIM)
    zeros = jnp.zeros((B, 1, PATCH_DIM), x.dtype)
    return jnp.concatenate([zeros, xp], axis=1)  # (B, TOKENS, PATCH_DIM)


def vit_forward(x, p, num_batch_blocks=2):
    B = x.shape[0]
    nb = num_batch_blocks if (num_batch_blocks > 0 and B % num_batch_blocks == 0) else 1
    bb = B // nb                       # images per grid step (per TensorCore on v7x)
    bt = bb * TOKENS                   # token rows per grid step

    patches = patchify_with_cls(x).reshape(nb, bt, PATCH_DIM)

    # fold cls token / patch bias / positional embedding into one additive term,
    # pre-tiled to (bt, EMBED) so the kernel never does sub-tile stores or concats.
    addpos = jnp.concatenate([p['cls'] + p['pos'][0:1, :],
                              p['patch_b'] + p['pos'][1:, :]], axis=0)
    addpos = jnp.tile(addpos, (bb, 1)).astype(jnp.float32)              # (bt, EMBED)

    # block-diagonal mask: kills cross-image attention in the flattened (bt, bt) scores
    bid = jnp.repeat(jnp.arange(bb, dtype=jnp.int32), TOKENS)
    mask = jnp.where(bid[:, None] == bid[None, :],
                     jnp.float32(0.0), jnp.float32(-1e30))              # (bt, bt)

    weights = (p['patch_w'],
               p['ln1_g'], p['ln1_b'], p['wqkv'], p['bqkv'], p['wo'], p['bo'],
               p['ln2_g'], p['ln2_b'], p['w1'], p['b1'], p['w2'], p['b2'],
               p['final_g'], p['final_b'], p['head_ln_g'], p['head_ln_b'],
               p['head_w1'], p['head_b1'], p['head_w2'], p['head_b2'],
               p['head_w3'], p['head_b3'])

    def resident(a):
        # full-array VMEM block with a constant index map -> loaded once, kept resident
        return pl.BlockSpec(a.shape, lambda i, _nd=a.ndim: (0,) * _nd)

    in_specs = ([pl.BlockSpec((None, bt, PATCH_DIM), lambda i: (i, 0, 0)),
                 resident(addpos), resident(mask)]
                + [resident(w) for w in weights])

    out = pl.pallas_call(
        _vit_kernel,
        out_shape=jax.ShapeDtypeStruct((nb, bb, NC_PAD), jnp.float32),
        grid=(nb,),
        in_specs=in_specs,
        out_specs=pl.BlockSpec((None, bb, NC_PAD), lambda i: (i, 0, 0)),
        compiler_params=pltpu.CompilerParams(
            dimension_semantics=("parallel",)),   # both TCs on v7x; serial loop elsewhere
    )(patches, addpos, mask, *weights)
    return out.reshape(B, NC_PAD)[:, :NUM_CLASSES]


def init_params(key):
    keys = iter(jax.random.split(key, 64))

    def nrm(shape, dtype=jnp.bfloat16, scale=0.02):
        # matmul weights stored bf16 (MXU-native); expect bf16-level deviation
        # from an f32 PyTorch reference.
        return (scale * jax.random.normal(next(keys), shape, jnp.float32)).astype(dtype)

    def ones(shape):
        return jnp.ones(shape, jnp.float32)

    def zeros(shape):
        return jnp.zeros(shape, jnp.float32)

    return {
        'patch_w': nrm((PATCH_DIM, EMBED)),
        'patch_b': zeros((1, EMBED)),
        'cls': nrm((1, EMBED), jnp.float32),
        'pos': nrm((TOKENS, EMBED), jnp.float32),
        # transformer blocks, stacked over DEPTH; qkv fused as [Q | K | V] columns,
        # heads contiguous inside each (matches timm's fused qkv Linear layout).
        'ln1_g': ones((DEPTH, 1, EMBED)), 'ln1_b': zeros((DEPTH, 1, EMBED)),
        'wqkv': nrm((DEPTH, EMBED, 3 * EMBED)),
        'bqkv': zeros((DEPTH, 1, 3 * EMBED)),
        'wo': nrm((DEPTH, EMBED, EMBED)),
        'bo': zeros((DEPTH, 1, EMBED)),
        'ln2_g': ones((DEPTH, 1, EMBED)), 'ln2_b': zeros((DEPTH, 1, EMBED)),
        'w1': nrm((DEPTH, EMBED, MLP_HIDDEN)), 'b1': zeros((DEPTH, 1, MLP_HIDDEN)),
        'w2': nrm((DEPTH, MLP_HIDDEN, EMBED)), 'b2': zeros((DEPTH, 1, EMBED)),
        # final backbone norm + custom head (output padded 141 -> 256).
        'final_g': ones((1, EMBED)), 'final_b': zeros((1, EMBED)),
        'head_ln_g': ones((1, EMBED)), 'head_ln_b': zeros((1, EMBED)),
        'head_w1': nrm((EMBED, HEAD_H1)), 'head_b1': zeros((1, HEAD_H1)),
        'head_w2': nrm((HEAD_H1, HEAD_H2)), 'head_b2': zeros((1, HEAD_H2)),
        'head_w3': nrm((HEAD_H2, NC_PAD)), 'head_b3': zeros((1, NC_PAD)),
    }


if __name__ == "__main__":
    key = jax.random.PRNGKey(0)
    pkey, xkey = jax.random.split(key)
    params = init_params(pkey)
    BATCH = 32   # larger batch -> 80 token rows per core (per review: raise effective M)
    x = jax.random.normal(xkey, (BATCH, IN_CH, IMG, IMG), dtype=jnp.float32)

    logits = jax.jit(vit_forward)(x, params)
    logits = jax.block_until_ready(logits)

    assert logits.shape == (BATCH, NUM_CLASSES)
    assert bool(jnp.all(jnp.isfinite(logits)))
    print("KERNEL_OK")
</pallas_src>

<mosaic_0001>
module attributes {stable_mosaic.version = 11 : i64} {
  func.func @_vit_kernel(%arg0: i32, %arg1: memref<1x80x768xf32, #tpu.memory_space<vmem>>, %arg2: memref<80x128xf32, #tpu.memory_space<vmem>>, %arg3: memref<80x80xf32, #tpu.memory_space<vmem>>, %arg4: memref<768x128xbf16, #tpu.memory_space<vmem>>, %arg5: memref<2x1x128xf32, #tpu.memory_space<vmem>>, %arg6: memref<2x1x128xf32, #tpu.memory_space<vmem>>, %arg7: memref<2x128x384xbf16, #tpu.memory_space<vmem>>, %arg8: memref<2x1x384xf32, #tpu.memory_space<vmem>>, %arg9: memref<2x128x128xbf16, #tpu.memory_space<vmem>>, %arg10: memref<2x1x128xf32, #tpu.memory_space<vmem>>, %arg11: memref<2x1x128xf32, #tpu.memory_space<vmem>>, %arg12: memref<2x1x128xf32, #tpu.memory_space<vmem>>, %arg13: memref<2x128x512xbf16, #tpu.memory_space<vmem>>, %arg14: memref<2x1x512xf32, #tpu.memory_space<vmem>>, %arg15: memref<2x512x128xbf16, #tpu.memory_space<vmem>>, %arg16: memref<2x1x128xf32, #tpu.memory_space<vmem>>, %arg17: memref<1x128xf32, #tpu.memory_space<vmem>>, %arg18: memref<1x128xf32, #tpu.memory_space<vmem>>, %arg19: memref<1x128xf32, #tpu.memory_space<vmem>>, %arg20: memref<1x128xf32, #tpu.memory_space<vmem>>, %arg21: memref<128x256xbf16, #tpu.memory_space<vmem>>, %arg22: memref<1x256xf32, #tpu.memory_space<vmem>>, %arg23: memref<256x128xbf16, #tpu.memory_space<vmem>>, %arg24: memref<1x128xf32, #tpu.memory_space<vmem>>, %arg25: memref<128x256xbf16, #tpu.memory_space<vmem>>, %arg26: memref<1x256xf32, #tpu.memory_space<vmem>>, %arg27: memref<1x16x256xf32, #tpu.memory_space<vmem>>) attributes {dimension_semantics = [#tpu.dimension_semantics<parallel>], iteration_bounds = array<i64: 2>, scalar_prefetch = 0 : i64, scratch_operands = 0 : i64, tpu.core_type = #tpu.core_type<tc>, window_params = [{transform_indices = @transform_0, window_bounds = array<i64: 1, 80, 768>}, {pipeline_mode = #tpu.pipeline_mode<synchronous>, transform_indices = @transform_1, window_bounds = array<i64: 80, 128>}, {pipeline_mode = #tpu.pipeline_mode<synchronous>, transform_indices = @transform_2, window_bounds = array<i64: 80, 80>}, {pipeline_mode = #tpu.pipeline_mode<synchronous>, transform_indices = @transform_3, window_bounds = array<i64: 768, 128>}, {pipeline_mode = #tpu.pipeline_mode<synchronous>, transform_indices = @transform_4, window_bounds = array<i64: 2, 1, 128>}, {pipeline_mode = #tpu.pipeline_mode<synchronous>, transform_indices = @transform_5, window_bounds = array<i64: 2, 1, 128>}, {pipeline_mode = #tpu.pipeline_mode<synchronous>, transform_indices = @transform_6, window_bounds = array<i64: 2, 128, 384>}, {pipeline_mode = #tpu.pipeline_mode<synchronous>, transform_indices = @transform_7, window_bounds = array<i64: 2, 1, 384>}, {pipeline_mode = #tpu.pipeline_mode<synchronous>, transform_indices = @transform_8, window_bounds = array<i64: 2, 128, 128>}, {pipeline_mode = #tpu.pipeline_mode<synchronous>, transform_indices = @transform_9, window_bounds = array<i64: 2, 1, 128>}, {pipeline_mode = #tpu.pipeline_mode<synchronous>, transform_indices = @transform_10, window_bounds = array<i64: 2, 1, 128>}, {pipeline_mode = #tpu.pipeline_mode<synchronous>, transform_indices = @transform_11, window_bounds = array<i64: 2, 1, 128>}, {pipeline_mode = #tpu.pipeline_mode<synchronous>, transform_indices = @transform_12, window_bounds = array<i64: 2, 128, 512>}, {pipeline_mode = #tpu.pipeline_mode<synchronous>, transform_indices = @transform_13, window_bounds = array<i64: 2, 1, 512>}, {pipeline_mode = #tpu.pipeline_mode<synchronous>, transform_indices = @transform_14, window_bounds = array<i64: 2, 512, 128>}, {pipeline_mode = #tpu.pipeline_mode<synchronous>, transform_indices = @transform_15, window_bounds = array<i64: 2, 1, 128>}, {pipeline_mode = #tpu.pipeline_mode<synchronous>, transform_indices = @transform_16, window_bounds = array<i64: 1, 128>}, {pipeline_mode = #tpu.pipeline_mode<synchronous>, transform_indices = @transform_17, window_bounds = array<i64: 1, 128>}, {pipeline_mode = #tpu.pipeline_mode<synchronous>, transform_indices = @transform_18, window_bounds = array<i64: 1, 128>}, {pipeline_mode = #tpu.pipeline_mode<synchronous>, transform_indices = @transform_19, window_bounds = array<i64: 1, 128>}, {pipeline_mode = #tpu.pipeline_mode<synchronous>, transform_indices = @transform_20, window_bounds = array<i64: 128, 256>}, {pipeline_mode = #tpu.pipeline_mode<synchronous>, transform_indices = @transform_21, window_bounds = array<i64: 1, 256>}, {pipeline_mode = #tpu.pipeline_mode<synchronous>, transform_indices = @transform_22, window_bounds = array<i64: 256, 128>}, {pipeline_mode = #tpu.pipeline_mode<synchronous>, transform_indices = @transform_23, window_bounds = array<i64: 1, 128>}, {pipeline_mode = #tpu.pipeline_mode<synchronous>, transform_indices = @transform_24, window_bounds = array<i64: 128, 256>}, {pipeline_mode = #tpu.pipeline_mode<synchronous>, transform_indices = @transform_25, window_bounds = array<i64: 1, 256>}, {transform_indices = @transform_26, window_bounds = array<i64: 1, 16, 256>}]} {
    %c0 = arith.constant 0 : index
    %c0_0 = arith.constant 0 : index
    %c0_1 = arith.constant 0 : index
    %0 = vector.load %arg1[%c0, %c0_0, %c0_1] : memref<1x80x768xf32, #tpu.memory_space<vmem>>, vector<1x80x768xf32>
    %1 = vector.shape_cast %0 : vector<1x80x768xf32> to vector<80x768xf32>
    %2 = arith.truncf %1 : vector<80x768xf32> to vector<80x768xbf16>
    %c0_2 = arith.constant 0 : index
    %c0_3 = arith.constant 0 : index
    %3 = vector.load %arg4[%c0_2, %c0_3] : memref<768x128xbf16, #tpu.memory_space<vmem>>, vector<768x128xbf16>
    %cst = arith.constant dense<0.000000e+00> : vector<80x128xf32>
    %4 = tpu.matmul %2, %3, %cst {dimension_numbers = #tpu.dot_dimension_numbers<[1], [0], [0], [1], [0, 0, 1, 1], [], []>} : vector<80x768xbf16>, vector<768x128xbf16>, vector<80x128xf32> -> vector<80x128xf32>
    %c0_4 = arith.constant 0 : index
    %c0_5 = arith.constant 0 : index
    %5 = vector.load %arg2[%c0_4, %c0_5] : memref<80x128xf32, #tpu.memory_space<vmem>>, vector<80x128xf32>
    %6 = arith.addf %4, %5 : vector<80x128xf32>
    %c0_6 = arith.constant 0 : index
    %c0_7 = arith.constant 0 : index
    %7 = vector.load %arg3[%c0_6, %c0_7] : memref<80x80xf32, #tpu.memory_space<vmem>>, vector<80x80xf32>
    %c0_8 = arith.constant 0 : index
    %c0_9 = arith.constant 0 : index
    %c0_10 = arith.constant 0 : index
    %8 = vector.load %arg5[%c0_8, %c0_9, %c0_10] : memref<2x1x128xf32, #tpu.memory_space<vmem>>, vector<1x1x128xf32>
    %9 = vector.shape_cast %8 : vector<1x1x128xf32> to vector<1x128xf32>
    %c0_11 = arith.constant 0 : index
    %c0_12 = arith.constant 0 : index
    %c0_13 = arith.constant 0 : index
    %10 = vector.load %arg6[%c0_11, %c0_12, %c0_13] : memref<2x1x128xf32, #tpu.memory_space<vmem>>, vector<1x1x128xf32>
    %11 = vector.shape_cast %10 : vector<1x1x128xf32> to vector<1x128xf32>
    %cst_14 = arith.constant dense<0.000000e+00> : vector<80xf32>
    %12 = vector.multi_reduction <add>, %6, %cst_14 [1] : vector<80x128xf32> to vector<80xf32>
    %13 = vector.shape_cast %12 : vector<80xf32> to vector<80x1xf32>
    %cst_15 = arith.constant 1.280000e+02 : f32
    %14 = vector.broadcast %cst_15 : f32 to vector<80x1xf32>
    %15 = arith.divf %13, %14 : vector<80x1xf32>
    %16 = vector.broadcast %15 : vector<80x1xf32> to vector<80x128xf32>
    %17 = arith.subf %6, %16 : vector<80x128xf32>
    %18 = arith.mulf %17, %17 : vector<80x128xf32>
    %cst_16 = arith.constant dense<0.000000e+00> : vector<80xf32>
    %19 = vector.multi_reduction <add>, %18, %cst_16 [1] : vector<80x128xf32> to vector<80xf32>
    %20 = vector.shape_cast %19 : vector<80xf32> to vector<80x1xf32>
    %cst_17 = arith.constant 1.280000e+02 : f32
    %21 = vector.broadcast %cst_17 : f32 to vector<80x1xf32>
    %22 = arith.divf %20, %21 : vector<80x1xf32>
    %23 = vector.broadcast %15 : vector<80x1xf32> to vector<80x128xf32>
    %24 = arith.subf %6, %23 : vector<80x128xf32>
    %cst_18 = arith.constant 9.99999997E-7 : f32
    %25 = vector.broadcast %cst_18 : f32 to vector<80x1xf32>
    %26 = arith.addf %22, %25 : vector<80x1xf32>
    %27 = math.rsqrt %26 : vector<80x1xf32>
    %28 = vector.broadcast %27 : vector<80x1xf32> to vector<80x128xf32>
    %29 = arith.mulf %24, %28 : vector<80x128xf32>
    %30 = vector.broadcast %9 : vector<1x128xf32> to vector<80x128xf32>
    %31 = arith.mulf %29, %30 : vector<80x128xf32>
    %32 = vector.broadcast %11 : vector<1x128xf32> to vector<80x128xf32>
    %33 = arith.addf %31, %32 : vector<80x128xf32>
    %34 = arith.truncf %33 : vector<80x128xf32> to vector<80x128xbf16>
    %c0_19 = arith.constant 0 : index
    %c0_20 = arith.constant 0 : index
    %c0_21 = arith.constant 0 : index
    %35 = vector.load %arg7[%c0_19, %c0_20, %c0_21] : memref<2x128x384xbf16, #tpu.memory_space<vmem>>, vector<1x128x384xbf16>
    %36 = vector.shape_cast %35 : vector<1x128x384xbf16> to vector<128x384xbf16>
    %cst_22 = arith.constant dense<0.000000e+00> : vector<80x384xf32>
    %37 = tpu.matmul %34, %36, %cst_22 {dimension_numbers = #tpu.dot_dimension_numbers<[1], [0], [0], [1], [0, 0, 1, 1], [], []>} : vector<80x128xbf16>, vector<128x384xbf16>, vector<80x384xf32> -> vector<80x384xf32>
    %c0_23 = arith.constant 0 : index
    %c0_24 = arith.constant 0 : index
    %c0_25 = arith.constant 0 : index
    %38 = vector.load %arg8[%c0_23, %c0_24, %c0_25] : memref<2x1x384xf32, #tpu.memory_space<vmem>>, vector<1x1x384xf32>
    %39 = vector.shape_cast %38 : vector<1x1x384xf32> to vector<1x384xf32>
    %40 = vector.broadcast %39 : vector<1x384xf32> to vector<80x384xf32>
    %41 = arith.addf %37, %40 : vector<80x384xf32>
    %42 = vector.extract_strided_slice %41 {offsets = [0, 0], sizes = [80, 64], strides = [1, 1]} : vector<80x384xf32> to vector<80x64xf32>
    %43 = vector.extract_strided_slice %41 {offsets = [0, 128], sizes = [80, 64], strides = [1, 1]} : vector<80x384xf32> to vector<80x64xf32>
    %44 = vector.extract_strided_slice %41 {offsets = [0, 256], sizes = [80, 64], strides = [1, 1]} : vector<80x384xf32> to vector<80x64xf32>
    %45 = arith.truncf %42 : vector<80x64xf32> to vector<80x64xbf16>
    %46 = arith.truncf %43 : vector<80x64xf32> to vector<80x64xbf16>
    %cst_26 = arith.constant dense<0.000000e+00> : vector<80x80xf32>
    %47 = tpu.matmul %45, %46, %cst_26 {dimension_numbers = #tpu.dot_dimension_numbers<[1], [1], [0], [0], [0, 0, 1, 0], [], []>} : vector<80x64xbf16>, vector<80x64xbf16>, vector<80x80xf32> -> vector<80x80xf32>
    %cst_27 = arith.constant 1.250000e-01 : f32
    %48 = vector.broadcast %cst_27 : f32 to vector<80x80xf32>
    %49 = arith.mulf %47, %48 : vector<80x80xf32>
    %50 = arith.addf %49, %7 : vector<80x80xf32>
    %cst_28 = arith.constant dense<0xFF800000> : vector<80xf32>
    %51 = vector.multi_reduction <maximumf>, %50, %cst_28 [1] : vector<80x80xf32> to vector<80xf32>
    %52 = vector.shape_cast %51 : vector<80xf32> to vector<80x1xf32>
    %53 = vector.broadcast %52 : vector<80x1xf32> to vector<80x80xf32>
    %54 = arith.subf %50, %53 : vector<80x80xf32>
    %55 = math.exp %54 : vector<80x80xf32>
    %cst_29 = arith.constant dense<0.000000e+00> : vector<80xf32>
    %56 = vector.multi_reduction <add>, %55, %cst_29 [1] : vector<80x80xf32> to vector<80xf32>
    %57 = vector.shape_cast %56 : vector<80xf32> to vector<80x1xf32>
    %58 = tpu.reciprocal %57 {approx = true} : vector<80x1xf32> -> vector<80x1xf32>
    %59 = vector.broadcast %58 : vector<80x1xf32> to vector<80x80xf32>
    %60 = arith.mulf %55, %59 : vector<80x80xf32>
    %61 = arith.truncf %60 : vector<80x80xf32> to vector<80x80xbf16>
    %62 = arith.truncf %44 : vector<80x64xf32> to vector<80x64xbf16>
    %cst_30 = arith.constant dense<0.000000e+00> : vector<80x64xf32>
    %63 = tpu.matmul %61, %62, %cst_30 {dimension_numbers = #tpu.dot_dimension_numbers<[1], [0], [0], [1], [0, 0, 1, 1], [], []>} : vector<80x80xbf16>, vector<80x64xbf16>, vector<80x64xf32> -> vector<80x64xf32>
    %64 = vector.extract_strided_slice %41 {offsets = [0, 64], sizes = [80, 64], strides = [1, 1]} : vector<80x384xf32> to vector<80x64xf32>
    %65 = vector.extract_strided_slice %41 {offsets = [0, 192], sizes = [80, 64], strides = [1, 1]} : vector<80x384xf32> to vector<80x64xf32>
    %66 = vector.extract_strided_slice %41 {offsets = [0, 320], sizes = [80, 64], strides = [1, 1]} : vector<80x384xf32> to vector<80x64xf32>
    %67 = arith.truncf %64 : vector<80x64xf32> to vector<80x64xbf16>
    %68 = arith.truncf %65 : vector<80x64xf32> to vector<80x64xbf16>
    %cst_31 = arith.constant dense<0.000000e+00> : vector<80x80xf32>
    %69 = tpu.matmul %67, %68, %cst_31 {dimension_numbers = #tpu.dot_dimension_numbers<[1], [1], [0], [0], [0, 0, 1, 0], [], []>} : vector<80x64xbf16>, vector<80x64xbf16>, vector<80x80xf32> -> vector<80x80xf32>
    %cst_32 = arith.constant 1.250000e-01 : f32
    %70 = vector.broadcast %cst_32 : f32 to vector<80x80xf32>
    %71 = arith.mulf %69, %70 : vector<80x80xf32>
    %72 = arith.addf %71, %7 : vector<80x80xf32>
    %cst_33 = arith.constant dense<0xFF800000> : vector<80xf32>
    %73 = vector.multi_reduction <maximumf>, %72, %cst_33 [1] : vector<80x80xf32> to vector<80xf32>
    %74 = vector.shape_cast %73 : vector<80xf32> to vector<80x1xf32>
    %75 = vector.broadcast %74 : vector<80x1xf32> to vector<80x80xf32>
    %76 = arith.subf %72, %75 : vector<80x80xf32>
    %77 = math.exp %76 : vector<80x80xf32>
    %cst_34 = arith.constant dense<0.000000e+00> : vector<80xf32>
    %78 = vector.multi_reduction <add>, %77, %cst_34 [1] : vector<80x80xf32> to vector<80xf32>
    %79 = vector.shape_cast %78 : vector<80xf32> to vector<80x1xf32>
    %80 = tpu.reciprocal %79 {approx = true} : vector<80x1xf32> -> vector<80x1xf32>
    %81 = vector.broadcast %80 : vector<80x1xf32> to vector<80x80xf32>
    %82 = arith.mulf %77, %81 : vector<80x80xf32>
    %83 = arith.truncf %82 : vector<80x80xf32> to vector<80x80xbf16>
    %84 = arith.truncf %66 : vector<80x64xf32> to vector<80x64xbf16>
    %cst_35 = arith.constant dense<0.000000e+00> : vector<80x64xf32>
    %85 = tpu.matmul %83, %84, %cst_35 {dimension_numbers = #tpu.dot_dimension_numbers<[1], [0], [0], [1], [0, 0, 1, 1], [], []>} : vector<80x80xbf16>, vector<80x64xbf16>, vector<80x64xf32> -> vector<80x64xf32>
    %86 = tpu.concatenate %63, %85 in 1 : vector<80x64xf32>, vector<80x64xf32> -> vector<80x128xf32>
    %87 = arith.truncf %86 : vector<80x128xf32> to vector<80x128xbf16>
    %c0_36 = arith.constant 0 : index
    %c0_37 = arith.constant 0 : index
    %c0_38 = arith.constant 0 : index
    %88 = vector.load %arg9[%c0_36, %c0_37, %c0_38] : memref<2x128x128xbf16, #tpu.memory_space<vmem>>, vector<1x128x128xbf16>
    %89 = vector.shape_cast %88 : vector<1x128x128xbf16> to vector<128x128xbf16>
    %cst_39 = arith.constant dense<0.000000e+00> : vector<80x128xf32>
    %90 = tpu.matmul %87, %89, %cst_39 {dimension_numbers = #tpu.dot_dimension_numbers<[1], [0], [0], [1], [0, 0, 1, 1], [], []>} : vector<80x128xbf16>, vector<128x128xbf16>, vector<80x128xf32> -> vector<80x128xf32>
    %c0_40 = arith.constant 0 : index
    %c0_41 = arith.constant 0 : index
    %c0_42 = arith.constant 0 : index
    %91 = vector.load %arg10[%c0_40, %c0_41, %c0_42] : memref<2x1x128xf32, #tpu.memory_space<vmem>>, vector<1x1x128xf32>
    %92 = vector.shape_cast %91 : vector<1x1x128xf32> to vector<1x128xf32>
    %93 = vector.broadcast %92 : vector<1x128xf32> to vector<80x128xf32>
    %94 = arith.addf %90, %93 : vector<80x128xf32>
    %95 = arith.addf %6, %94 : vector<80x128xf32>
    %c0_43 = arith.constant 0 : index
    %c0_44 = arith.constant 0 : index
    %c0_45 = arith.constant 0 : index
    %96 = vector.load %arg11[%c0_43, %c0_44, %c0_45] : memref<2x1x128xf32, #tpu.memory_space<vmem>>, vector<1x1x128xf32>
    %97 = vector.shape_cast %96 : vector<1x1x128xf32> to vector<1x128xf32>
    %c0_46 = arith.constant 0 : index
    %c0_47 = arith.constant 0 : index
    %c0_48 = arith.constant 0 : index
    %98 = vector.load %arg12[%c0_46, %c0_47, %c0_48] : memref<2x1x128xf32, #tpu.memory_space<vmem>>, vector<1x1x128xf32>
    %99 = vector.shape_cast %98 : vector<1x1x128xf32> to vector<1x128xf32>
    %cst_49 = arith.constant dense<0.000000e+00> : vector<80xf32>
    %100 = vector.multi_reduction <add>, %95, %cst_49 [1] : vector<80x128xf32> to vector<80xf32>
    %101 = vector.shape_cast %100 : vector<80xf32> to vector<80x1xf32>
    %cst_50 = arith.constant 1.280000e+02 : f32
    %102 = vector.broadcast %cst_50 : f32 to vector<80x1xf32>
    %103 = arith.divf %101, %102 : vector<80x1xf32>
    %104 = vector.broadcast %103 : vector<80x1xf32> to vector<80x128xf32>
    %105 = arith.subf %95, %104 : vector<80x128xf32>
    %106 = arith.mulf %105, %105 : vector<80x128xf32>
    %cst_51 = arith.constant dense<0.000000e+00> : vector<80xf32>
    %107 = vector.multi_reduction <add>, %106, %cst_51 [1] : vector<80x128xf32> to vector<80xf32>
    %108 = vector.shape_cast %107 : vector<80xf32> to vector<80x1xf32>
    %cst_52 = arith.constant 1.280000e+02 : f32
    %109 = vector.broadcast %cst_52 : f32 to vector<80x1xf32>
    %110 = arith.divf %108, %109 : vector<80x1xf32>
    %111 = vector.broadcast %103 : vector<80x1xf32> to vector<80x128xf32>
    %112 = arith.subf %95, %111 : vector<80x128xf32>
    %cst_53 = arith.constant 9.99999997E-7 : f32
    %113 = vector.broadcast %cst_53 : f32 to vector<80x1xf32>
    %114 = arith.addf %110, %113 : vector<80x1xf32>
    %115 = math.rsqrt %114 : vector<80x1xf32>
    %116 = vector.broadcast %115 : vector<80x1xf32> to vector<80x128xf32>
    %117 = arith.mulf %112, %116 : vector<80x128xf32>
    %118 = vector.broadcast %97 : vector<1x128xf32> to vector<80x128xf32>
    %119 = arith.mulf %117, %118 : vector<80x128xf32>
    %120 = vector.broadcast %99 : vector<1x128xf32> to vector<80x128xf32>
    %121 = arith.addf %119, %120 : vector<80x128xf32>
    %122 = arith.truncf %121 : vector<80x128xf32> to vector<80x128xbf16>
    %c0_54 = arith.constant 0 : index
    %c0_55 = arith.constant 0 : index
    %c0_56 = arith.constant 0 : index
    %123 = vector.load %arg13[%c0_54, %c0_55, %c0_56] : memref<2x128x512xbf16, #tpu.memory_space<vmem>>, vector<1x128x512xbf16>
    %124 = vector.shape_cast %123 : vector<1x128x512xbf16> to vector<128x512xbf16>
    %cst_57 = arith.constant dense<0.000000e+00> : vector<80x512xf32>
    %125 = tpu.matmul %122, %124, %cst_57 {dimension_numbers = #tpu.dot_dimension_numbers<[1], [0], [0], [1], [0, 0, 1, 1], [], []>} : vector<80x128xbf16>, vector<128x512xbf16>, vector<80x512xf32> -> vector<80x512xf32>
    %c0_58 = arith.constant 0 : index
    %c0_59 = arith.constant 0 : index
    %c0_60 = arith.constant 0 : index
    %126 = vector.load %arg14[%c0_58, %c0_59, %c0_60] : memref<2x1x512xf32, #tpu.memory_space<vmem>>, vector<1x1x512xf32>
    %127 = vector.shape_cast %126 : vector<1x1x512xf32> to vector<1x512xf32>
    %128 = vector.broadcast %127 : vector<1x512xf32> to vector<80x512xf32>
    %129 = arith.addf %125, %128 : vector<80x512xf32>
    %cst_61 = arith.constant 5.000000e-01 : f32
    %130 = vector.broadcast %cst_61 : f32 to vector<80x512xf32>
    %131 = arith.mulf %130, %129 : vector<80x512xf32>
    %cst_62 = arith.constant 0.707106769 : f32
    %132 = vector.broadcast %cst_62 : f32 to vector<80x512xf32>
    %133 = arith.mulf %129, %132 : vector<80x512xf32>
    %134 = math.absf %133 : vector<80x512xf32>
    %cst_63 = arith.constant 0.327591091 : f32
    %135 = vector.broadcast %cst_63 : f32 to vector<80x512xf32>
    %136 = arith.mulf %135, %134 : vector<80x512xf32>
    %cst_64 = arith.constant 1.000000e+00 : f32
    %137 = vector.broadcast %cst_64 : f32 to vector<80x512xf32>
    %138 = arith.addf %137, %136 : vector<80x512xf32>
    %139 = tpu.reciprocal %138 {approx = true} : vector<80x512xf32> -> vector<80x512xf32>
    %cst_65 = arith.constant 1.06140542 : f32
    %140 = vector.broadcast %cst_65 : f32 to vector<80x512xf32>
    %141 = arith.mulf %140, %139 : vector<80x512xf32>
    %cst_66 = arith.constant -1.45315206 : f32
    %142 = vector.broadcast %cst_66 : f32 to vector<80x512xf32>
    %143 = arith.addf %141, %142 : vector<80x512xf32>
    %144 = arith.mulf %143, %139 : vector<80x512xf32>
    %cst_67 = arith.constant 1.42141378 : f32
    %145 = vector.broadcast %cst_67 : f32 to vector<80x512xf32>
    %146 = arith.addf %144, %145 : vector<80x512xf32>
    %147 = arith.mulf %146, %139 : vector<80x512xf32>
    %cst_68 = arith.constant -0.284496725 : f32
    %148 = vector.broadcast %cst_68 : f32 to vector<80x512xf32>
    %149 = arith.addf %147, %148 : vector<80x512xf32>
    %150 = arith.mulf %149, %139 : vector<80x512xf32>
    %cst_69 = arith.constant 0.254829586 : f32
    %151 = vector.broadcast %cst_69 : f32 to vector<80x512xf32>
    %152 = arith.addf %150, %151 : vector<80x512xf32>
    %153 = arith.mulf %152, %139 : vector<80x512xf32>
    %cst_70 = arith.constant 0.000000e+00 : f32
    %154 = vector.broadcast %cst_70 : f32 to vector<80x512xf32>
    %155 = arith.subf %154, %134 : vector<80x512xf32>
    %156 = arith.mulf %155, %134 : vector<80x512xf32>
    %157 = math.exp %156 : vector<80x512xf32>
    %158 = arith.mulf %153, %157 : vector<80x512xf32>
    %cst_71 = arith.constant 1.000000e+00 : f32
    %159 = vector.broadcast %cst_71 : f32 to vector<80x512xf32>
    %160 = arith.subf %159, %158 : vector<80x512xf32>
    %cst_72 = arith.constant 0.000000e+00 : f32
    %161 = vector.broadcast %cst_72 : f32 to vector<80x512xf32>
    %162 = arith.cmpf oge, %133, %161 : vector<80x512xf32>
    %cst_73 = arith.constant 0.000000e+00 : f32
    %163 = vector.broadcast %cst_73 : f32 to vector<80x512xf32>
    %164 = arith.subf %163, %160 : vector<80x512xf32>
    %165 = arith.select %162, %160, %164 : vector<80x512xi1>, vector<80x512xf32>
    %cst_74 = arith.constant 1.000000e+00 : f32
    %166 = vector.broadcast %cst_74 : f32 to vector<80x512xf32>
    %167 = arith.addf %166, %165 : vector<80x512xf32>
    %168 = arith.mulf %131, %167 : vector<80x512xf32>
    %169 = arith.truncf %168 : vector<80x512xf32> to vector<80x512xbf16>
    %c0_75 = arith.constant 0 : index
    %c0_76 = arith.constant 0 : index
    %c0_77 = arith.constant 0 : index
    %170 = vector.load %arg15[%c0_75, %c0_76, %c0_77] : memref<2x512x128xbf16, #tpu.memory_space<vmem>>, vector<1x512x128xbf16>
    %171 = vector.shape_cast %170 : vector<1x512x128xbf16> to vector<512x128xbf16>
    %cst_78 = arith.constant dense<0.000000e+00> : vector<80x128xf32>
    %172 = tpu.matmul %169, %171, %cst_78 {dimension_numbers = #tpu.dot_dimension_numbers<[1], [0], [0], [1], [0, 0, 1, 1], [], []>} : vector<80x512xbf16>, vector<512x128xbf16>, vector<80x128xf32> -> vector<80x128xf32>
    %c0_79 = arith.constant 0 : index
    %c0_80 = arith.constant 0 : index
    %c0_81 = arith.constant 0 : index
    %173 = vector.load %arg16[%c0_79, %c0_80, %c0_81] : memref<2x1x128xf32, #tpu.memory_space<vmem>>, vector<1x1x128xf32>
    %174 = vector.shape_cast %173 : vector<1x1x128xf32> to vector<1x128xf32>
    %175 = vector.broadcast %174 : vector<1x128xf32> to vector<80x128xf32>
    %176 = arith.addf %172, %175 : vector<80x128xf32>
    %177 = arith.addf %95, %176 : vector<80x128xf32>
    %c1 = arith.constant 1 : index
    %c0_82 = arith.constant 0 : index
    %c0_83 = arith.constant 0 : index
    %178 = vector.load %arg5[%c1, %c0_82, %c0_83] : memref<2x1x128xf32, #tpu.memory_space<vmem>>, vector<1x1x128xf32>
    %179 = vector.shape_cast %178 : vector<1x1x128xf32> to vector<1x128xf32>
    %c1_84 = arith.constant 1 : index
    %c0_85 = arith.constant 0 : index
    %c0_86 = arith.constant 0 : index
    %180 = vector.load %arg6[%c1_84, %c0_85, %c0_86] : memref<2x1x128xf32, #tpu.memory_space<vmem>>, vector<1x1x128xf32>
    %181 = vector.shape_cast %180 : vector<1x1x128xf32> to vector<1x128xf32>
    %cst_87 = arith.constant dense<0.000000e+00> : vector<80xf32>
    %182 = vector.multi_reduction <add>, %177, %cst_87 [1] : vector<80x128xf32> to vector<80xf32>
    %183 = vector.shape_cast %182 : vector<80xf32> to vector<80x1xf32>
    %cst_88 = arith.constant 1.280000e+02 : f32
    %184 = vector.broadcast %cst_88 : f32 to vector<80x1xf32>
    %185 = arith.divf %183, %184 : vector<80x1xf32>
    %186 = vector.broadcast %185 : vector<80x1xf32> to vector<80x128xf32>
    %187 = arith.subf %177, %186 : vector<80x128xf32>
    %188 = arith.mulf %187, %187 : vector<80x128xf32>
    %cst_89 = arith.constant dense<0.000000e+00> : vector<80xf32>
    %189 = vector.multi_reduction <add>, %188, %cst_89 [1] : vector<80x128xf32> to vector<80xf32>
    %190 = vector.shape_cast %189 : vector<80xf32> to vector<80x1xf32>
    %cst_90 = arith.constant 1.280000e+02 : f32
    %191 = vector.broadcast %cst_90 : f32 to vector<80x1xf32>
    %192 = arith.divf %190, %191 : vector<80x1xf32>
    %193 = vector.broadcast %185 : vector<80x1xf32> to vector<80x128xf32>
    %194 = arith.subf %177, %193 : vector<80x128xf32>
    %cst_91 = arith.constant 9.99999997E-7 : f32
    %195 = vector.broadcast %cst_91 : f32 to vector<80x1xf32>
    %196 = arith.addf %192, %195 : vector<80x1xf32>
    %197 = math.rsqrt %196 : vector<80x1xf32>
    %198 = vector.broadcast %197 : vector<80x1xf32> to vector<80x128xf32>
    %199 = arith.mulf %194, %198 : vector<80x128xf32>
    %200 = vector.broadcast %179 : vector<1x128xf32> to vector<80x128xf32>
    %201 = arith.mulf %199, %200 : vector<80x128xf32>
    %202 = vector.broadcast %181 : vector<1x128xf32> to vector<80x128xf32>
    %203 = arith.addf %201, %202 : vector<80x128xf32>
    %204 = arith.truncf %203 : vector<80x128xf32> to vector<80x128xbf16>
    %c1_92 = arith.constant 1 : index
    %c0_93 = arith.constant 0 : index
    %c0_94 = arith.constant 0 : index
    %205 = vector.load %arg7[%c1_92, %c0_93, %c0_94] : memref<2x128x384xbf16, #tpu.memory_space<vmem>>, vector<1x128x384xbf16>
    %206 = vector.shape_cast %205 : vector<1x128x384xbf16> to vector<128x384xbf16>
    %cst_95 = arith.constant dense<0.000000e+00> : vector<80x384xf32>
    %207 = tpu.matmul %204, %206, %cst_95 {dimension_numbers = #tpu.dot_dimension_numbers<[1], [0], [0], [1], [0, 0, 1, 1], [], []>} : vector<80x128xbf16>, vector<128x384xbf16>, vector<80x384xf32> -> vector<80x384xf32>
    %c1_96 = arith.constant 1 : index
    %c0_97 = arith.constant 0 : index
    %c0_98 = arith.constant 0 : index
    %208 = vector.load %arg8[%c1_96, %c0_97, %c0_98] : memref<2x1x384xf32, #tpu.memory_space<vmem>>, vector<1x1x384xf32>
    %209 = vector.shape_cast %208 : vector<1x1x384xf32> to vector<1x384xf32>
    %210 = vector.broadcast %209 : vector<1x384xf32> to vector<80x384xf32>
    %211 = arith.addf %207, %210 : vector<80x384xf32>
    %212 = vector.extract_strided_slice %211 {offsets = [0, 0], sizes = [80, 64], strides = [1, 1]} : vector<80x384xf32> to vector<80x64xf32>
    %213 = vector.extract_strided_slice %211 {offsets = [0, 128], sizes = [80, 64], strides = [1, 1]} : vector<80x384xf32> to vector<80x64xf32>
    %214 = vector.extract_strided_slice %211 {offsets = [0, 256], sizes = [80, 64], strides = [1, 1]} : vector<80x384xf32> to vector<80x64xf32>
    %215 = arith.truncf %212 : vector<80x64xf32> to vector<80x64xbf16>
    %216 = arith.truncf %213 : vector<80x64xf32> to vector<80x64xbf16>
    %cst_99 = arith.constant dense<0.000000e+00> : vector<80x80xf32>
    %217 = tpu.matmul %215, %216, %cst_99 {dimension_numbers = #tpu.dot_dimension_numbers<[1], [1], [0], [0], [0, 0, 1, 0], [], []>} : vector<80x64xbf16>, vector<80x64xbf16>, vector<80x80xf32> -> vector<80x80xf32>
    %cst_100 = arith.constant 1.250000e-01 : f32
    %218 = vector.broadcast %cst_100 : f32 to vector<80x80xf32>
    %219 = arith.mulf %217, %218 : vector<80x80xf32>
    %220 = arith.addf %219, %7 : vector<80x80xf32>
    %cst_101 = arith.constant dense<0xFF800000> : vector<80xf32>
    %221 = vector.multi_reduction <maximumf>, %220, %cst_101 [1] : vector<80x80xf32> to vector<80xf32>
    %222 = vector.shape_cast %221 : vector<80xf32> to vector<80x1xf32>
    %223 = vector.broadcast %222 : vector<80x1xf32> to vector<80x80xf32>
    %224 = arith.subf %220, %223 : vector<80x80xf32>
    %225 = math.exp %224 : vector<80x80xf32>
    %cst_102 = arith.constant dense<0.000000e+00> : vector<80xf32>
    %226 = vector.multi_reduction <add>, %225, %cst_102 [1] : vector<80x80xf32> to vector<80xf32>
    %227 = vector.shape_cast %226 : vector<80xf32> to vector<80x1xf32>
    %228 = tpu.reciprocal %227 {approx = true} : vector<80x1xf32> -> vector<80x1xf32>
    %229 = vector.broadcast %228 : vector<80x1xf32> to vector<80x80xf32>
    %230 = arith.mulf %225, %229 : vector<80x80xf32>
    %231 = arith.truncf %230 : vector<80x80xf32> to vector<80x80xbf16>
    %232 = arith.truncf %214 : vector<80x64xf32> to vector<80x64xbf16>
    %cst_103 = arith.constant dense<0.000000e+00> : vector<80x64xf32>
    %233 = tpu.matmul %231, %232, %cst_103 {dimension_numbers = #tpu.dot_dimension_numbers<[1], [0], [0], [1], [0, 0, 1, 1], [], []>} : vector<80x80xbf16>, vector<80x64xbf16>, vector<80x64xf32> -> vector<80x64xf32>
    %234 = vector.extract_strided_slice %211 {offsets = [0, 64], sizes = [80, 64], strides = [1, 1]} : vector<80x384xf32> to vector<80x64xf32>
    %235 = vector.extract_strided_slice %211 {offsets = [0, 192], sizes = [80, 64], strides = [1, 1]} : vector<80x384xf32> to vector<80x64xf32>
    %236 = vector.extract_strided_slice %211 {offsets = [0, 320], sizes = [80, 64], strides = [1, 1]} : vector<80x384xf32> to vector<80x64xf32>
    %237 = arith.truncf %234 : vector<80x64xf32> to vector<80x64xbf16>
    %238 = arith.truncf %235 : vector<80x64xf32> to vector<80x64xbf16>
    %cst_104 = arith.constant dense<0.000000e+00> : vector<80x80xf32>
    %239 = tpu.matmul %237, %238, %cst_104 {dimension_numbers = #tpu.dot_dimension_numbers<[1], [1], [0], [0], [0, 0, 1, 0], [], []>} : vector<80x64xbf16>, vector<80x64xbf16>, vector<80x80xf32> -> vector<80x80xf32>
    %cst_105 = arith.constant 1.250000e-01 : f32
    %240 = vector.broadcast %cst_105 : f32 to vector<80x80xf32>
    %241 = arith.mulf %239, %240 : vector<80x80xf32>
    %242 = arith.addf %241, %7 : vector<80x80xf32>
    %cst_106 = arith.constant dense<0xFF800000> : vector<80xf32>
    %243 = vector.multi_reduction <maximumf>, %242, %cst_106 [1] : vector<80x80xf32> to vector<80xf32>
    %244 = vector.shape_cast %243 : vector<80xf32> to vector<80x1xf32>
    %245 = vector.broadcast %244 : vector<80x1xf32> to vector<80x80xf32>
    %246 = arith.subf %242, %245 : vector<80x80xf32>
    %247 = math.exp %246 : vector<80x80xf32>
    %cst_107 = arith.constant dense<0.000000e+00> : vector<80xf32>
    %248 = vector.multi_reduction <add>, %247, %cst_107 [1] : vector<80x80xf32> to vector<80xf32>
    %249 = vector.shape_cast %248 : vector<80xf32> to vector<80x1xf32>
    %250 = tpu.reciprocal %249 {approx = true} : vector<80x1xf32> -> vector<80x1xf32>
    %251 = vector.broadcast %250 : vector<80x1xf32> to vector<80x80xf32>
    %252 = arith.mulf %247, %251 : vector<80x80xf32>
    %253 = arith.truncf %252 : vector<80x80xf32> to vector<80x80xbf16>
    %254 = arith.truncf %236 : vector<80x64xf32> to vector<80x64xbf16>
    %cst_108 = arith.constant dense<0.000000e+00> : vector<80x64xf32>
    %255 = tpu.matmul %253, %254, %cst_108 {dimension_numbers = #tpu.dot_dimension_numbers<[1], [0], [0], [1], [0, 0, 1, 1], [], []>} : vector<80x80xbf16>, vector<80x64xbf16>, vector<80x64xf32> -> vector<80x64xf32>
    %256 = tpu.concatenate %233, %255 in 1 : vector<80x64xf32>, vector<80x64xf32> -> vector<80x128xf32>
    %257 = arith.truncf %256 : vector<80x128xf32> to vector<80x128xbf16>
    %c1_109 = arith.constant 1 : index
    %c0_110 = arith.constant 0 : index
    %c0_111 = arith.constant 0 : index
    %258 = vector.load %arg9[%c1_109, %c0_110, %c0_111] : memref<2x128x128xbf16, #tpu.memory_space<vmem>>, vector<1x128x128xbf16>
    %259 = vector.shape_cast %258 : vector<1x128x128xbf16> to vector<128x128xbf16>
    %cst_112 = arith.constant dense<0.000000e+00> : vector<80x128xf32>
    %260 = tpu.matmul %257, %259, %cst_112 {dimension_numbers = #tpu.dot_dimension_numbers<[1], [0], [0], [1], [0, 0, 1, 1], [], []>} : vector<80x128xbf16>, vector<128x128xbf16>, vector<80x128xf32> -> vector<80x128xf32>
    %c1_113 = arith.constant 1 : index
    %c0_114 = arith.constant 0 : index
    %c0_115 = arith.constant 0 : index
    %261 = vector.load %arg10[%c1_113, %c0_114, %c0_115] : memref<2x1x128xf32, #tpu.memory_space<vmem>>, vector<1x1x128xf32>
    %262 = vector.shape_cast %261 : vector<1x1x128xf32> to vector<1x128xf32>
    %263 = vector.broadcast %262 : vector<1x128xf32> to vector<80x128xf32>
    %264 = arith.addf %260, %263 : vector<80x128xf32>
    %265 = arith.addf %177, %264 : vector<80x128xf32>
    %c1_116 = arith.constant 1 : index
    %c0_117 = arith.constant 0 : index
    %c0_118 = arith.constant 0 : index
    %266 = vector.load %arg11[%c1_116, %c0_117, %c0_118] : memref<2x1x128xf32, #tpu.memory_space<vmem>>, vector<1x1x128xf32>
    %267 = vector.shape_cast %266 : vector<1x1x128xf32> to vector<1x128xf32>
    %c1_119 = arith.constant 1 : index
    %c0_120 = arith.constant 0 : index
    %c0_121 = arith.constant 0 : index
    %268 = vector.load %arg12[%c1_119, %c0_120, %c0_121] : memref<2x1x128xf32, #tpu.memory_space<vmem>>, vector<1x1x128xf32>
    %269 = vector.shape_cast %268 : vector<1x1x128xf32> to vector<1x128xf32>
    %cst_122 = arith.constant dense<0.000000e+00> : vector<80xf32>
    %270 = vector.multi_reduction <add>, %265, %cst_122 [1] : vector<80x128xf32> to vector<80xf32>
    %271 = vector.shape_cast %270 : vector<80xf32> to vector<80x1xf32>
    %cst_123 = arith.constant 1.280000e+02 : f32
    %272 = vector.broadcast %cst_123 : f32 to vector<80x1xf32>
    %273 = arith.divf %271, %272 : vector<80x1xf32>
    %274 = vector.broadcast %273 : vector<80x1xf32> to vector<80x128xf32>
    %275 = arith.subf %265, %274 : vector<80x128xf32>
    %276 = arith.mulf %275, %275 : vector<80x128xf32>
    %cst_124 = arith.constant dense<0.000000e+00> : vector<80xf32>
    %277 = vector.multi_reduction <add>, %276, %cst_124 [1] : vector<80x128xf32> to vector<80xf32>
    %278 = vector.shape_cast %277 : vector<80xf32> to vector<80x1xf32>
    %cst_125 = arith.constant 1.280000e+02 : f32
    %279 = vector.broadcast %cst_125 : f32 to vector<80x1xf32>
    %280 = arith.divf %278, %279 : vector<80x1xf32>
    %281 = vector.broadcast %273 : vector<80x1xf32> to vector<80x128xf32>
    %282 = arith.subf %265, %281 : vector<80x128xf32>
    %cst_126 = arith.constant 9.99999997E-7 : f32
    %283 = vector.broadcast %cst_126 : f32 to vector<80x1xf32>
    %284 = arith.addf %280, %283 : vector<80x1xf32>
    %285 = math.rsqrt %284 : vector<80x1xf32>
    %286 = vector.broadcast %285 : vector<80x1xf32> to vector<80x128xf32>
    %287 = arith.mulf %282, %286 : vector<80x128xf32>
    %288 = vector.broadcast %267 : vector<1x128xf32> to vector<80x128xf32>
    %289 = arith.mulf %287, %288 : vector<80x128xf32>
    %290 = vector.broadcast %269 : vector<1x128xf32> to vector<80x128xf32>
    %291 = arith.addf %289, %290 : vector<80x128xf32>
    %292 = arith.truncf %291 : vector<80x128xf32> to vector<80x128xbf16>
    %c1_127 = arith.constant 1 : index
    %c0_128 = arith.constant 0 : index
    %c0_129 = arith.constant 0 : index
    %293 = vector.load %arg13[%c1_127, %c0_128, %c0_129] : memref<2x128x512xbf16, #tpu.memory_space<vmem>>, vector<1x128x512xbf16>
    %294 = vector.shape_cast %293 : vector<1x128x512xbf16> to vector<128x512xbf16>
    %cst_130 = arith.constant dense<0.000000e+00> : vector<80x512xf32>
    %295 = tpu.matmul %292, %294, %cst_130 {dimension_numbers = #tpu.dot_dimension_numbers<[1], [0], [0], [1], [0, 0, 1, 1], [], []>} : vector<80x128xbf16>, vector<128x512xbf16>, vector<80x512xf32> -> vector<80x512xf32>
    %c1_131 = arith.constant 1 : index
    %c0_132 = arith.constant 0 : index
    %c0_133 = arith.constant 0 : index
    %296 = vector.load %arg14[%c1_131, %c0_132, %c0_133] : memref<2x1x512xf32, #tpu.memory_space<vmem>>, vector<1x1x512xf32>
    %297 = vector.shape_cast %296 : vector<1x1x512xf32> to vector<1x512xf32>
    %298 = vector.broadcast %297 : vector<1x512xf32> to vector<80x512xf32>
    %299 = arith.addf %295, %298 : vector<80x512xf32>
    %cst_134 = arith.constant 5.000000e-01 : f32
    %300 = vector.broadcast %cst_134 : f32 to vector<80x512xf32>
    %301 = arith.mulf %300, %299 : vector<80x512xf32>
    %cst_135 = arith.constant 0.707106769 : f32
    %302 = vector.broadcast %cst_135 : f32 to vector<80x512xf32>
    %303 = arith.mulf %299, %302 : vector<80x512xf32>
    %304 = math.absf %303 : vector<80x512xf32>
    %cst_136 = arith.constant 0.327591091 : f32
    %305 = vector.broadcast %cst_136 : f32 to vector<80x512xf32>
    %306 = arith.mulf %305, %304 : vector<80x512xf32>
    %cst_137 = arith.constant 1.000000e+00 : f32
    %307 = vector.broadcast %cst_137 : f32 to vector<80x512xf32>
    %308 = arith.addf %307, %306 : vector<80x512xf32>
    %309 = tpu.reciprocal %308 {approx = true} : vector<80x512xf32> -> vector<80x512xf32>
    %cst_138 = arith.constant 1.06140542 : f32
    %310 = vector.broadcast %cst_138 : f32 to vector<80x512xf32>
    %311 = arith.mulf %310, %309 : vector<80x512xf32>
    %cst_139 = arith.constant -1.45315206 : f32
    %312 = vector.broadcast %cst_139 : f32 to vector<80x512xf32>
    %313 = arith.addf %311, %312 : vector<80x512xf32>
    %314 = arith.mulf %313, %309 : vector<80x512xf32>
    %cst_140 = arith.constant 1.42141378 : f32
    %315 = vector.broadcast %cst_140 : f32 to vector<80x512xf32>
    %316 = arith.addf %314, %315 : vector<80x512xf32>
    %317 = arith.mulf %316, %309 : vector<80x512xf32>
    %cst_141 = arith.constant -0.284496725 : f32
    %318 = vector.broadcast %cst_141 : f32 to vector<80x512xf32>
    %319 = arith.addf %317, %318 : vector<80x512xf32>
    %320 = arith.mulf %319, %309 : vector<80x512xf32>
    %cst_142 = arith.constant 0.254829586 : f32
    %321 = vector.broadcast %cst_142 : f32 to vector<80x512xf32>
    %322 = arith.addf %320, %321 : vector<80x512xf32>
    %323 = arith.mulf %322, %309 : vector<80x512xf32>
    %cst_143 = arith.constant 0.000000e+00 : f32
    %324 = vector.broadcast %cst_143 : f32 to vector<80x512xf32>
    %325 = arith.subf %324, %304 : vector<80x512xf32>
    %326 = arith.mulf %325, %304 : vector<80x512xf32>
    %327 = math.exp %326 : vector<80x512xf32>
    %328 = arith.mulf %323, %327 : vector<80x512xf32>
    %cst_144 = arith.constant 1.000000e+00 : f32
    %329 = vector.broadcast %cst_144 : f32 to vector<80x512xf32>
    %330 = arith.subf %329, %328 : vector<80x512xf32>
    %cst_145 = arith.constant 0.000000e+00 : f32
    %331 = vector.broadcast %cst_145 : f32 to vector<80x512xf32>
    %332 = arith.cmpf oge, %303, %331 : vector<80x512xf32>
    %cst_146 = arith.constant 0.000000e+00 : f32
    %333 = vector.broadcast %cst_146 : f32 to vector<80x512xf32>
    %334 = arith.subf %333, %330 : vector<80x512xf32>
    %335 = arith.select %332, %330, %334 : vector<80x512xi1>, vector<80x512xf32>
    %cst_147 = arith.constant 1.000000e+00 : f32
    %336 = vector.broadcast %cst_147 : f32 to vector<80x512xf32>
    %337 = arith.addf %336, %335 : vector<80x512xf32>
    %338 = arith.mulf %301, %337 : vector<80x512xf32>
    %339 = arith.truncf %338 : vector<80x512xf32> to vector<80x512xbf16>
    %c1_148 = arith.constant 1 : index
    %c0_149 = arith.constant 0 : index
    %c0_150 = arith.constant 0 : index
    %340 = vector.load %arg15[%c1_148, %c0_149, %c0_150] : memref<2x512x128xbf16, #tpu.memory_space<vmem>>, vector<1x512x128xbf16>
    %341 = vector.shape_cast %340 : vector<1x512x128xbf16> to vector<512x128xbf16>
    %cst_151 = arith.constant dense<0.000000e+00> : vector<80x128xf32>
    %342 = tpu.matmul %339, %341, %cst_151 {dimension_numbers = #tpu.dot_dimension_numbers<[1], [0], [0], [1], [0, 0, 1, 1], [], []>} : vector<80x512xbf16>, vector<512x128xbf16>, vector<80x128xf32> -> vector<80x128xf32>
    %c1_152 = arith.constant 1 : index
    %c0_153 = arith.constant 0 : index
    %c0_154 = arith.constant 0 : index
    %343 = vector.load %arg16[%c1_152, %c0_153, %c0_154] : memref<2x1x128xf32, #tpu.memory_space<vmem>>, vector<1x1x128xf32>
    %344 = vector.shape_cast %343 : vector<1x1x128xf32> to vector<1x128xf32>
    %345 = vector.broadcast %344 : vector<1x128xf32> to vector<80x128xf32>
    %346 = arith.addf %342, %345 : vector<80x128xf32>
    %347 = arith.addf %265, %346 : vector<80x128xf32>
    %348 = vector.shape_cast %347 : vector<80x128xf32> to vector<16x5x128xf32>
    %349 = vector.extract_strided_slice %348 {offsets = [0, 0, 0], sizes = [16, 1, 128], strides = [1, 1, 1]} : vector<16x5x128xf32> to vector<16x1x128xf32>
    %350 = vector.shape_cast %349 : vector<16x1x128xf32> to vector<16x128xf32>
    %c0_155 = arith.constant 0 : index
    %c0_156 = arith.constant 0 : index
    %351 = vector.load %arg17[%c0_155, %c0_156] : memref<1x128xf32, #tpu.memory_space<vmem>>, vector<1x128xf32>
    %c0_157 = arith.constant 0 : index
    %c0_158 = arith.constant 0 : index
    %352 = vector.load %arg18[%c0_157, %c0_158] : memref<1x128xf32, #tpu.memory_space<vmem>>, vector<1x128xf32>
    %cst_159 = arith.constant dense<0.000000e+00> : vector<16xf32>
    %353 = vector.multi_reduction <add>, %350, %cst_159 [1] : vector<16x128xf32> to vector<16xf32>
    %354 = vector.shape_cast %353 : vector<16xf32> to vector<16x1xf32>
    %cst_160 = arith.constant 1.280000e+02 : f32
    %355 = vector.broadcast %cst_160 : f32 to vector<16x1xf32>
    %356 = arith.divf %354, %355 : vector<16x1xf32>
    %357 = vector.broadcast %356 : vector<16x1xf32> to vector<16x128xf32>
    %358 = arith.subf %350, %357 : vector<16x128xf32>
    %359 = arith.mulf %358, %358 : vector<16x128xf32>
    %cst_161 = arith.constant dense<0.000000e+00> : vector<16xf32>
    %360 = vector.multi_reduction <add>, %359, %cst_161 [1] : vector<16x128xf32> to vector<16xf32>
    %361 = vector.shape_cast %360 : vector<16xf32> to vector<16x1xf32>
    %cst_162 = arith.constant 1.280000e+02 : f32
    %362 = vector.broadcast %cst_162 : f32 to vector<16x1xf32>
    %363 = arith.divf %361, %362 : vector<16x1xf32>
    %364 = vector.broadcast %356 : vector<16x1xf32> to vector<16x128xf32>
    %365 = arith.subf %350, %364 : vector<16x128xf32>
    %cst_163 = arith.constant 9.99999997E-7 : f32
    %366 = vector.broadcast %cst_163 : f32 to vector<16x1xf32>
    %367 = arith.addf %363, %366 : vector<16x1xf32>
    %368 = math.rsqrt %367 : vector<16x1xf32>
    %369 = vector.broadcast %368 : vector<16x1xf32> to vector<16x128xf32>
    %370 = arith.mulf %365, %369 : vector<16x128xf32>
    %371 = vector.broadcast %351 : vector<1x128xf32> to vector<16x128xf32>
    %372 = arith.mulf %370, %371 : vector<16x128xf32>
    %373 = vector.broadcast %352 : vector<1x128xf32> to vector<16x128xf32>
    %374 = arith.addf %372, %373 : vector<16x128xf32>
    %c0_164 = arith.constant 0 : index
    %c0_165 = arith.constant 0 : index
    %375 = vector.load %arg19[%c0_164, %c0_165] : memref<1x128xf32, #tpu.memory_space<vmem>>, vector<1x128xf32>
    %c0_166 = arith.constant 0 : index
    %c0_167 = arith.constant 0 : index
    %376 = vector.load %arg20[%c0_166, %c0_167] : memref<1x128xf32, #tpu.memory_space<vmem>>, vector<1x128xf32>
    %cst_168 = arith.constant dense<0.000000e+00> : vector<16xf32>
    %377 = vector.multi_reduction <add>, %374, %cst_168 [1] : vector<16x128xf32> to vector<16xf32>
    %378 = vector.shape_cast %377 : vector<16xf32> to vector<16x1xf32>
    %cst_169 = arith.constant 1.280000e+02 : f32
    %379 = vector.broadcast %cst_169 : f32 to vector<16x1xf32>
    %380 = arith.divf %378, %379 : vector<16x1xf32>
    %381 = vector.broadcast %380 : vector<16x1xf32> to vector<16x128xf32>
    %382 = arith.subf %374, %381 : vector<16x128xf32>
    %383 = arith.mulf %382, %382 : vector<16x128xf32>
    %cst_170 = arith.constant dense<0.000000e+00> : vector<16xf32>
    %384 = vector.multi_reduction <add>, %383, %cst_170 [1] : vector<16x128xf32> to vector<16xf32>
    %385 = vector.shape_cast %384 : vector<16xf32> to vector<16x1xf32>
    %cst_171 = arith.constant 1.280000e+02 : f32
    %386 = vector.broadcast %cst_171 : f32 to vector<16x1xf32>
    %387 = arith.divf %385, %386 : vector<16x1xf32>
    %388 = vector.broadcast %380 : vector<16x1xf32> to vector<16x128xf32>
    %389 = arith.subf %374, %388 : vector<16x128xf32>
    %cst_172 = arith.constant 9.99999974E-6 : f32
    %390 = vector.broadcast %cst_172 : f32 to vector<16x1xf32>
    %391 = arith.addf %387, %390 : vector<16x1xf32>
    %392 = math.rsqrt %391 : vector<16x1xf32>
    %393 = vector.broadcast %392 : vector<16x1xf32> to vector<16x128xf32>
    %394 = arith.mulf %389, %393 : vector<16x128xf32>
    %395 = vector.broadcast %375 : vector<1x128xf32> to vector<16x128xf32>
    %396 = arith.mulf %394, %395 : vector<16x128xf32>
    %397 = vector.broadcast %376 : vector<1x128xf32> to vector<16x128xf32>
    %398 = arith.addf %396, %397 : vector<16x128xf32>
    %399 = arith.truncf %398 : vector<16x128xf32> to vector<16x128xbf16>
    %c0_173 = arith.constant 0 : index
    %c0_174 = arith.constant 0 : index
    %400 = vector.load %arg21[%c0_173, %c0_174] : memref<128x256xbf16, #tpu.memory_space<vmem>>, vector<128x256xbf16>
    %cst_175 = arith.constant dense<0.000000e+00> : vector<16x256xf32>
    %401 = tpu.matmul %399, %400, %cst_175 {dimension_numbers = #tpu.dot_dimension_numbers<[1], [0], [0], [1], [0, 0, 1, 1], [], []>} : vector<16x128xbf16>, vector<128x256xbf16>, vector<16x256xf32> -> vector<16x256xf32>
    %c0_176 = arith.constant 0 : index
    %c0_177 = arith.constant 0 : index
    %402 = vector.load %arg22[%c0_176, %c0_177] : memref<1x256xf32, #tpu.memory_space<vmem>>, vector<1x256xf32>
    %403 = vector.broadcast %402 : vector<1x256xf32> to vector<16x256xf32>
    %404 = arith.addf %401, %403 : vector<16x256xf32>
    %cst_178 = arith.constant 5.000000e-01 : f32
    %405 = vector.broadcast %cst_178 : f32 to vector<16x256xf32>
    %406 = arith.mulf %405, %404 : vector<16x256xf32>
    %cst_179 = arith.constant 0.707106769 : f32
    %407 = vector.broadcast %cst_179 : f32 to vector<16x256xf32>
    %408 = arith.mulf %404, %407 : vector<16x256xf32>
    %409 = math.absf %408 : vector<16x256xf32>
    %cst_180 = arith.constant 0.327591091 : f32
    %410 = vector.broadcast %cst_180 : f32 to vector<16x256xf32>
    %411 = arith.mulf %410, %409 : vector<16x256xf32>
    %cst_181 = arith.constant 1.000000e+00 : f32
    %412 = vector.broadcast %cst_181 : f32 to vector<16x256xf32>
    %413 = arith.addf %412, %411 : vector<16x256xf32>
    %414 = tpu.reciprocal %413 {approx = true} : vector<16x256xf32> -> vector<16x256xf32>
    %cst_182 = arith.constant 1.06140542 : f32
    %415 = vector.broadcast %cst_182 : f32 to vector<16x256xf32>
    %416 = arith.mulf %415, %414 : vector<16x256xf32>
    %cst_183 = arith.constant -1.45315206 : f32
    %417 = vector.broadcast %cst_183 : f32 to vector<16x256xf32>
    %418 = arith.addf %416, %417 : vector<16x256xf32>
    %419 = arith.mulf %418, %414 : vector<16x256xf32>
    %cst_184 = arith.constant 1.42141378 : f32
    %420 = vector.broadcast %cst_184 : f32 to vector<16x256xf32>
    %421 = arith.addf %419, %420 : vector<16x256xf32>
    %422 = arith.mulf %421, %414 : vector<16x256xf32>
    %cst_185 = arith.constant -0.284496725 : f32
    %423 = vector.broadcast %cst_185 : f32 to vector<16x256xf32>
    %424 = arith.addf %422, %423 : vector<16x256xf32>
    %425 = arith.mulf %424, %414 : vector<16x256xf32>
    %cst_186 = arith.constant 0.254829586 : f32
    %426 = vector.broadcast %cst_186 : f32 to vector<16x256xf32>
    %427 = arith.addf %425, %426 : vector<16x256xf32>
    %428 = arith.mulf %427, %414 : vector<16x256xf32>
    %cst_187 = arith.constant 0.000000e+00 : f32
    %429 = vector.broadcast %cst_187 : f32 to vector<16x256xf32>
    %430 = arith.subf %429, %409 : vector<16x256xf32>
    %431 = arith.mulf %430, %409 : vector<16x256xf32>
    %432 = math.exp %431 : vector<16x256xf32>
    %433 = arith.mulf %428, %432 : vector<16x256xf32>
    %cst_188 = arith.constant 1.000000e+00 : f32
    %434 = vector.broadcast %cst_188 : f32 to vector<16x256xf32>
    %435 = arith.subf %434, %433 : vector<16x256xf32>
    %cst_189 = arith.constant 0.000000e+00 : f32
    %436 = vector.broadcast %cst_189 : f32 to vector<16x256xf32>
    %437 = arith.cmpf oge, %408, %436 : vector<16x256xf32>
    %cst_190 = arith.constant 0.000000e+00 : f32
    %438 = vector.broadcast %cst_190 : f32 to vector<16x256xf32>
    %439 = arith.subf %438, %435 : vector<16x256xf32>
    %440 = arith.select %437, %435, %439 : vector<16x256xi1>, vector<16x256xf32>
    %cst_191 = arith.constant 1.000000e+00 : f32
    %441 = vector.broadcast %cst_191 : f32 to vector<16x256xf32>
    %442 = arith.addf %441, %440 : vector<16x256xf32>
    %443 = arith.mulf %406, %442 : vector<16x256xf32>
    %444 = arith.truncf %443 : vector<16x256xf32> to vector<16x256xbf16>
    %c0_192 = arith.constant 0 : index
    %c0_193 = arith.constant 0 : index
    %445 = vector.load %arg23[%c0_192, %c0_193] : memref<256x128xbf16, #tpu.memory_space<vmem>>, vector<256x128xbf16>
    %cst_194 = arith.constant dense<0.000000e+00> : vector<16x128xf32>
    %446 = tpu.matmul %444, %445, %cst_194 {dimension_numbers = #tpu.dot_dimension_numbers<[1], [0], [0], [1], [0, 0, 1, 1], [], []>} : vector<16x256xbf16>, vector<256x128xbf16>, vector<16x128xf32> -> vector<16x128xf32>
    %c0_195 = arith.constant 0 : index
    %c0_196 = arith.constant 0 : index
    %447 = vector.load %arg24[%c0_195, %c0_196] : memref<1x128xf32, #tpu.memory_space<vmem>>, vector<1x128xf32>
    %448 = vector.broadcast %447 : vector<1x128xf32> to vector<16x128xf32>
    %449 = arith.addf %446, %448 : vector<16x128xf32>
    %cst_197 = arith.constant 5.000000e-01 : f32
    %450 = vector.broadcast %cst_197 : f32 to vector<16x128xf32>
    %451 = arith.mulf %450, %449 : vector<16x128xf32>
    %cst_198 = arith.constant 0.707106769 : f32
    %452 = vector.broadcast %cst_198 : f32 to vector<16x128xf32>
    %453 = arith.mulf %449, %452 : vector<16x128xf32>
    %454 = math.absf %453 : vector<16x128xf32>
    %cst_199 = arith.constant 0.327591091 : f32
    %455 = vector.broadcast %cst_199 : f32 to vector<16x128xf32>
    %456 = arith.mulf %455, %454 : vector<16x128xf32>
    %cst_200 = arith.constant 1.000000e+00 : f32
    %457 = vector.broadcast %cst_200 : f32 to vector<16x128xf32>
    %458 = arith.addf %457, %456 : vector<16x128xf32>
    %459 = tpu.reciprocal %458 {approx = true} : vector<16x128xf32> -> vector<16x128xf32>
    %cst_201 = arith.constant 1.06140542 : f32
    %460 = vector.broadcast %cst_201 : f32 to vector<16x128xf32>
    %461 = arith.mulf %460, %459 : vector<16x128xf32>
    %cst_202 = arith.constant -1.45315206 : f32
    %462 = vector.broadcast %cst_202 : f32 to vector<16x128xf32>
    %463 = arith.addf %461, %462 : vector<16x128xf32>
    %464 = arith.mulf %463, %459 : vector<16x128xf32>
    %cst_203 = arith.constant 1.42141378 : f32
    %465 = vector.broadcast %cst_203 : f32 to vector<16x128xf32>
    %466 = arith.addf %464, %465 : vector<16x128xf32>
    %467 = arith.mulf %466, %459 : vector<16x128xf32>
    %cst_204 = arith.constant -0.284496725 : f32
    %468 = vector.broadcast %cst_204 : f32 to vector<16x128xf32>
    %469 = arith.addf %467, %468 : vector<16x128xf32>
    %470 = arith.mulf %469, %459 : vector<16x128xf32>
    %cst_205 = arith.constant 0.254829586 : f32
    %471 = vector.broadcast %cst_205 : f32 to vector<16x128xf32>
    %472 = arith.addf %470, %471 : vector<16x128xf32>
    %473 = arith.mulf %472, %459 : vector<16x128xf32>
    %cst_206 = arith.constant 0.000000e+00 : f32
    %474 = vector.broadcast %cst_206 : f32 to vector<16x128xf32>
    %475 = arith.subf %474, %454 : vector<16x128xf32>
    %476 = arith.mulf %475, %454 : vector<16x128xf32>
    %477 = math.exp %476 : vector<16x128xf32>
    %478 = arith.mulf %473, %477 : vector<16x128xf32>
    %cst_207 = arith.constant 1.000000e+00 : f32
    %479 = vector.broadcast %cst_207 : f32 to vector<16x128xf32>
    %480 = arith.subf %479, %478 : vector<16x128xf32>
    %cst_208 = arith.constant 0.000000e+00 : f32
    %481 = vector.broadcast %cst_208 : f32 to vector<16x128xf32>
    %482 = arith.cmpf oge, %453, %481 : vector<16x128xf32>
    %cst_209 = arith.constant 0.000000e+00 : f32
    %483 = vector.broadcast %cst_209 : f32 to vector<16x128xf32>
    %484 = arith.subf %483, %480 : vector<16x128xf32>
    %485 = arith.select %482, %480, %484 : vector<16x128xi1>, vector<16x128xf32>
    %cst_210 = arith.constant 1.000000e+00 : f32
    %486 = vector.broadcast %cst_210 : f32 to vector<16x128xf32>
    %487 = arith.addf %486, %485 : vector<16x128xf32>
    %488 = arith.mulf %451, %487 : vector<16x128xf32>
    %489 = arith.truncf %488 : vector<16x128xf32> to vector<16x128xbf16>
    %c0_211 = arith.constant 0 : index
    %c0_212 = arith.constant 0 : index
    %490 = vector.load %arg25[%c0_211, %c0_212] : memref<128x256xbf16, #tpu.memory_space<vmem>>, vector<128x256xbf16>
    %cst_213 = arith.constant dense<0.000000e+00> : vector<16x256xf32>
    %491 = tpu.matmul %489, %490, %cst_213 {dimension_numbers = #tpu.dot_dimension_numbers<[1], [0], [0], [1], [0, 0, 1, 1], [], []>} : vector<16x128xbf16>, vector<128x256xbf16>, vector<16x256xf32> -> vector<16x256xf32>
    %c0_214 = arith.constant 0 : index
    %c0_215 = arith.constant 0 : index
    %492 = vector.load %arg26[%c0_214, %c0_215] : memref<1x256xf32, #tpu.memory_space<vmem>>, vector<1x256xf32>
    %493 = vector.broadcast %492 : vector<1x256xf32> to vector<16x256xf32>
    %494 = arith.addf %491, %493 : vector<16x256xf32>
    %c0_216 = arith.constant 0 : index
    %c0_217 = arith.constant 0 : index
    %c0_218 = arith.constant 0 : index
    %495 = vector.load %arg27[%c0_216, %c0_217, %c0_218] : memref<1x16x256xf32, #tpu.memory_space<vmem>>, vector<1x16x256xf32>
    %496 = vector.shape_cast %495 : vector<1x16x256xf32> to vector<16x256xf32>
    %497 = vector.shape_cast %494 : vector<16x256xf32> to vector<1x16x256xf32>
    tpu.vector_store %arg27[%c0_216, %c0_217, %c0_218], %497 {strides = array<i32>} : memref<1x16x256xf32, #tpu.memory_space<vmem>>, vector<1x16x256xf32>,
    return
  }
  func.func @transform_0(%arg0: i32) -> (i32, i32, i32) {
    %c0_i32 = arith.constant 0 : i32
    %c0_i32_0 = arith.constant 0 : i32
    %c0_i32_1 = arith.constant 0 : i32
    return %arg0, %c0_i32, %c0_i32_0 : i32, i32, i32
  }
  func.func @transform_1(%arg0: i32) -> (i32, i32) {
    %c0_i32 = arith.constant 0 : i32
    %c0_i32_0 = arith.constant 0 : i32
    %c0_i32_1 = arith.constant 0 : i32
    return %c0_i32, %c0_i32_0 : i32, i32
  }
  func.func @transform_2(%arg0: i32) -> (i32, i32) {
    %c0_i32 = arith.constant 0 : i32
    %c0_i32_0 = arith.constant 0 : i32
    %c0_i32_1 = arith.constant 0 : i32
    return %c0_i32, %c0_i32_0 : i32, i32
  }
  func.func @transform_3(%arg0: i32) -> (i32, i32) {
    %c0_i32 = arith.constant 0 : i32
    %c0_i32_0 = arith.constant 0 : i32
    %c0_i32_1 = arith.constant 0 : i32
    return %c0_i32, %c0_i32_0 : i32, i32
  }
  func.func @transform_4(%arg0: i32) -> (i32, i32, i32) {
    %c0_i32 = arith.constant 0 : i32
    %c0_i32_0 = arith.constant 0 : i32
    %c0_i32_1 = arith.constant 0 : i32
    %c0_i32_2 = arith.constant 0 : i32
    return %c0_i32, %c0_i32_0, %c0_i32_1 : i32, i32, i32
  }
  func.func @transform_5(%arg0: i32) -> (i32, i32, i32) {
    %c0_i32 = arith.constant 0 : i32
    %c0_i32_0 = arith.constant 0 : i32
    %c0_i32_1 = arith.constant 0 : i32
    %c0_i32_2 = arith.constant 0 : i32
    return %c0_i32, %c0_i32_0, %c0_i32_1 : i32, i32, i32
  }
  func.func @transform_6(%arg0: i32) -> (i32, i32, i32) {
    %c0_i32 = arith.constant 0 : i32
    %c0_i32_0 = arith.constant 0 : i32
    %c0_i32_1 = arith.constant 0 : i32
    %c0_i32_2 = arith.constant 0 : i32
    return %c0_i32, %c0_i32_0, %c0_i32_1 : i32, i32, i32
  }
  func.func @transform_7(%arg0: i32) -> (i32, i32, i32) {
    %c0_i32 = arith.constant 0 : i32
    %c0_i32_0 = arith.constant 0 : i32
    %c0_i32_1 = arith.constant 0 : i32
    %c0_i32_2 = arith.constant 0 : i32
    return %c0_i32, %c0_i32_0, %c0_i32_1 : i32, i32, i32
  }
  func.func @transform_8(%arg0: i32) -> (i32, i32, i32) {
    %c0_i32 = arith.constant 0 : i32
    %c0_i32_0 = arith.constant 0 : i32
    %c0_i32_1 = arith.constant 0 : i32
    %c0_i32_2 = arith.constant 0 : i32
    return %c0_i32, %c0_i32_0, %c0_i32_1 : i32, i32, i32
  }
  func.func @transform_9(%arg0: i32) -> (i32, i32, i32) {
    %c0_i32 = arith.constant 0 : i32
    %c0_i32_0 = arith.constant 0 : i32
    %c0_i32_1 = arith.constant 0 : i32
    %c0_i32_2 = arith.constant 0 : i32
    return %c0_i32, %c0_i32_0, %c0_i32_1 : i32, i32, i32
  }
  func.func @transform_10(%arg0: i32) -> (i32, i32, i32) {
    %c0_i32 = arith.constant 0 : i32
    %c0_i32_0 = arith.constant 0 : i32
    %c0_i32_1 = arith.constant 0 : i32
    %c0_i32_2 = arith.constant 0 : i32
    return %c0_i32, %c0_i32_0, %c0_i32_1 : i32, i32, i32
  }
  func.func @transform_11(%arg0: i32) -> (i32, i32, i32) {
    %c0_i32 = arith.constant 0 : i32
    %c0_i32_0 = arith.constant 0 : i32
    %c0_i32_1 = arith.constant 0 : i32
    %c0_i32_2 = arith.constant 0 : i32
    return %c0_i32, %c0_i32_0, %c0_i32_1 : i32, i32, i32
  }
  func.func @transform_12(%arg0: i32) -> (i32, i32, i32) {
    %c0_i32 = arith.constant 0 : i32
    %c0_i32_0 = arith.constant 0 : i32
    %c0_i32_1 = arith.constant 0 : i32
    %c0_i32_2 = arith.constant 0 : i32
    return %c0_i32, %c0_i32_0, %c0_i32_1 : i32, i32, i32
  }
  func.func @transform_13(%arg0: i32) -> (i32, i32, i32) {
    %c0_i32 = arith.constant 0 : i32
    %c0_i32_0 = arith.constant 0 : i32
    %c0_i32_1 = arith.constant 0 : i32
    %c0_i32_2 = arith.constant 0 : i32
    return %c0_i32, %c0_i32_0, %c0_i32_1 : i32, i32, i32
  }
  func.func @transform_14(%arg0: i32) -> (i32, i32, i32) {
    %c0_i32 = arith.constant 0 : i32
    %c0_i32_0 = arith.constant 0 : i32
    %c0_i32_1 = arith.constant 0 : i32
    %c0_i32_2 = arith.constant 0 : i32
    return %c0_i32, %c0_i32_0, %c0_i32_1 : i32, i32, i32
  }
  func.func @transform_15(%arg0: i32) -> (i32, i32, i32) {
    %c0_i32 = arith.constant 0 : i32
    %c0_i32_0 = arith.constant 0 : i32
    %c0_i32_1 = arith.constant 0 : i32
    %c0_i32_2 = arith.constant 0 : i32
    return %c0_i32, %c0_i32_0, %c0_i32_1 : i32, i32, i32
  }
  func.func @transform_16(%arg0: i32) -> (i32, i32) {
    %c0_i32 = arith.constant 0 : i32
    %c0_i32_0 = arith.constant 0 : i32
    %c0_i32_1 = arith.constant 0 : i32
    return %c0_i32, %c0_i32_0 : i32, i32
  }
  func.func @transform_17(%arg0: i32) -> (i32, i32) {
    %c0_i32 = arith.constant 0 : i32
    %c0_i32_0 = arith.constant 0 : i32
    %c0_i32_1 = arith.constant 0 : i32
    return %c0_i32, %c0_i32_0 : i32, i32
  }
  func.func @transform_18(%arg0: i32) -> (i32, i32) {
    %c0_i32 = arith.constant 0 : i32
    %c0_i32_0 = arith.constant 0 : i32
    %c0_i32_1 = arith.constant 0 : i32
    return %c0_i32, %c0_i32_0 : i32, i32
  }
  func.func @transform_19(%arg0: i32) -> (i32, i32) {
    %c0_i32 = arith.constant 0 : i32
    %c0_i32_0 = arith.constant 0 : i32
    %c0_i32_1 = arith.constant 0 : i32
    return %c0_i32, %c0_i32_0 : i32, i32
  }
  func.func @transform_20(%arg0: i32) -> (i32, i32) {
    %c0_i32 = arith.constant 0 : i32
    %c0_i32_0 = arith.constant 0 : i32
    %c0_i32_1 = arith.constant 0 : i32
    return %c0_i32, %c0_i32_0 : i32, i32
  }
  func.func @transform_21(%arg0: i32) -> (i32, i32) {
    %c0_i32 = arith.constant 0 : i32
    %c0_i32_0 = arith.constant 0 : i32
    %c0_i32_1 = arith.constant 0 : i32
    return %c0_i32, %c0_i32_0 : i32, i32
  }
  func.func @transform_22(%arg0: i32) -> (i32, i32) {
    %c0_i32 = arith.constant 0 : i32
    %c0_i32_0 = arith.constant 0 : i32
    %c0_i32_1 = arith.constant 0 : i32
    return %c0_i32, %c0_i32_0 : i32, i32
  }
  func.func @transform_23(%arg0: i32) -> (i32, i32) {
    %c0_i32 = arith.constant 0 : i32
    %c0_i32_0 = arith.constant 0 : i32
    %c0_i32_1 = arith.constant 0 : i32
    return %c0_i32, %c0_i32_0 : i32, i32
  }
  func.func @transform_24(%arg0: i32) -> (i32, i32) {
    %c0_i32 = arith.constant 0 : i32
    %c0_i32_0 = arith.constant 0 : i32
    %c0_i32_1 = arith.constant 0 : i32
    return %c0_i32, %c0_i32_0 : i32, i32
  }
  func.func @transform_25(%arg0: i32) -> (i32, i32) {
    %c0_i32 = arith.constant 0 : i32
    %c0_i32_0 = arith.constant 0 : i32
    %c0_i32_1 = arith.constant 0 : i32
    return %c0_i32, %c0_i32_0 : i32, i32
  }
  func.func @transform_26(%arg0: i32) -> (i32, i32, i32) {
    %c0_i32 = arith.constant 0 : i32
    %c0_i32_0 = arith.constant 0 : i32
    %c0_i32_1 = arith.constant 0 : i32
    return %arg0, %c0_i32, %c0_i32_0 : i32, i32, i32
  }
}

</mosaic_0001>

<llo_original>
// kernel: tile.9
$region0: #{tile.9}
  %s0 = inlined_call_operand.vmem [shape: f32[16,5,128], index: 0, kind: input, shape index: {}]
  %s1 = inlined_call_operand.vmem [shape: f32[80,128], index: 1, kind: output, shape index: {}]
  %v2 = vld [vmem:[%s0] sm:$0x1f]
  %3 = vst [vmem:[%s1] sm:$0x1f] %v2
  %s4 = scalar_lea.vmem %s0, 8
  %v5 = vld [vmem:[%s4] sm:$0x1f]
  %s6 = scalar_lea.vmem %s1, 5
  %7 = vst [vmem:[%s6] sm:$0x1f] %v5
  %s8 = scalar_lea.vmem %s0, 16
  %v9 = vld [vmem:[%s8] sm:$0x1f]
  %s10 = scalar_lea.vmem %s1, 10
  %11 = vst [vmem:[%s10] sm:$0x1f] %v9
  %s12 = scalar_lea.vmem %s0, 24
  %v13 = vld [vmem:[%s12] sm:$0x1f]
  %s14 = scalar_lea.vmem %s1, 15
  %15 = vst [vmem:[%s14] sm:$0x1f] %v13
  %s16 = scalar_lea.vmem %s0, 32
  %v17 = vld [vmem:[%s16] sm:$0x1f]
  %s18 = scalar_lea.vmem %s1, 20
  %19 = vst [vmem:[%s18] sm:$0x1f] %v17
  %s20 = scalar_lea.vmem %s0, 40
  %v21 = vld [vmem:[%s20] sm:$0x1f]
  %s22 = scalar_lea.vmem %s1, 25
  %23 = vst [vmem:[%s22] sm:$0x1f] %v21
  %s24 = scalar_lea.vmem %s0, 48
  %v25 = vld [vmem:[%s24] sm:$0x1f]
  %s26 = scalar_lea.vmem %s1, 30
  %27 = vst [vmem:[%s26] sm:$0x1f] %v25
  %s28 = scalar_lea.vmem %s0, 56
  %v29 = vld [vmem:[%s28] sm:$0x1f]
  %s30 = scalar_lea.vmem %s1, 35
  %31 = vst [vmem:[%s30] sm:$0x1f] %v29
  %s32 = scalar_lea.vmem %s0, 64
  %v33 = vld [vmem:[%s32] sm:$0x1f]
  %s34 = scalar_lea.vmem %s1, 40
  %35 = vst [vmem:[%s34] sm:$0x1f] %v33
  %s36 = scalar_lea.vmem %s0, 72
  %v37 = vld [vmem:[%s36] sm:$0x1f]
  %s38 = scalar_lea.vmem %s1, 45
  %39 = vst [vmem:[%s38] sm:$0x1f] %v37
  %s40 = scalar_lea.vmem %s0, 80
  %v41 = vld [vmem:[%s40] sm:$0x1f]
  %s42 = scalar_lea.vmem %s1, 50
  %43 = vst [vmem:[%s42] sm:$0x1f] %v41
  %s44 = scalar_lea.vmem %s0, 88
  %v45 = vld [vmem:[%s44] sm:$0x1f]
  %s46 = scalar_lea.vmem %s1, 55
  %47 = vst [vmem:[%s46] sm:$0x1f] %v45
  %s48 = scalar_lea.vmem %s0, 96
  %v49 = vld [vmem:[%s48] sm:$0x1f]
  %s50 = scalar_lea.vmem %s1, 60
  %51 = vst [vmem:[%s50] sm:$0x1f] %v49
  %s52 = scalar_lea.vmem %s0, 104
  %v53 = vld [vmem:[%s52] sm:$0x1f]
  %s54 = scalar_lea.vmem %s1, 65
  %55 = vst [vmem:[%s54] sm:$0x1f] %v53
  %s56 = scalar_lea.vmem %s0, 112
  %v57 = vld [vmem:[%s56] sm:$0x1f]
  %s58 = scalar_lea.vmem %s1, 70
  %59 = vst [vmem:[%s58] sm:$0x1f] %v57
  %s60 = scalar_lea.vmem %s0, 120
  %v61 = vld [vmem:[%s60] sm:$0x1f]
  %s62 = scalar_lea.vmem %s1, 75
  %63 = vst [vmem:[%s62] sm:$0x1f] %v61

// kernel: eq.8
$region0: #{eq.8}
  %s0 = inlined_call_operand.vmem [shape: s32[16,5], index: 0, kind: input, shape index: {}]
  %s1 = inlined_call_operand.vmem [shape: s32[80], index: 1, kind: output, shape index: {}]
  $region1: #{eq.8} parent=0
    #allocation0 [shape = 'u8[4096]{0}', space=vmem, size = 0x1000, scoped, tag = 'scoped mem for output reshape']
    %v2 = vld [vmem:[%s0] sm:$0x1]
    %vm3 = vcmask 39936
    %4 = vst.msk [vmem:[#allocation0] sm:$0x1] %vm3, %v2
    %s5 = scalar_lea.vmem %s0, 15
    %v6 = vld [vmem:[%s5] sm:$0x1]
    %7 = vrot.lane.b32.xlu0 %v6, 75
    %v8 = vpop.permute.xlu0 %7
    %vm9 = vcmask 654936
    %10 = vst.msk [vmem:[#allocation0] sm:$0x1] %vm9, %v8
    %s11 = scalar_lea.vmem %s0, 14
    %v12 = vld [vmem:[%s11] sm:$0x1]
    %13 = vrot.lane.b32.xlu0 %v12, 70
    %v14 = vpop.permute.xlu0 %13
    %vm15 = vcmask 613936
    %16 = vst.msk [vmem:[#allocation0] sm:$0x1] %vm15, %v14
    %s17 = scalar_lea.vmem %s0, 13
    %v18 = vld [vmem:[%s17] sm:$0x1]
    %19 = vrot.lane.b32.xlu0 %v18, 65
    %v20 = vpop.permute.xlu0 %19
    %vm21 = vcmask 572936
    %22 = vst.msk [vmem:[#allocation0] sm:$0x1] %vm21, %v20
    %s23 = scalar_lea.vmem %s0, 12
    %v24 = vld [vmem:[%s23] sm:$0x1]
    %25 = vrot.lane.b32.xlu0 %v24, 60
    %v26 = vpop.permute.xlu0 %25
    %vm27 = vcmask 531936
    %28 = vst.msk [vmem:[#allocation0] sm:$0x1] %vm27, %v26
    %s29 = scalar_lea.vmem %s0, 11
    %v30 = vld [vmem:[%s29] sm:$0x1]
    %31 = vrot.lane.b32.xlu0 %v30, 55
    %v32 = vpop.permute.xlu0 %31
    %vm33 = vcmask 490936
    %34 = vst.msk [vmem:[#allocation0] sm:$0x1] %vm33, %v32
    %s35 = scalar_lea.vmem %s0, 10
    %v36 = vld [vmem:[%s35] sm:$0x1]
    %37 = vrot.lane.b32.xlu0 %v36, 50
    %v38 = vpop.permute.xlu0 %37
    %vm39 = vcmask 449936
    %40 = vst.msk [vmem:[#allocation0] sm:$0x1] %vm39, %v38
    %s41 = scalar_lea.vmem %s0, 9
    %v42 = vld [vmem:[%s41] sm:$0x1]
    %43 = vrot.lane.b32.xlu0 %v42, 45
    %v44 = vpop.permute.xlu0 %43
    %vm45 = vcmask 408936
    %46 = vst.msk [vmem:[#allocation0] sm:$0x1] %vm45, %v44
    %s47 = scalar_lea.vmem %s0, 8
    %v48 = vld [vmem:[%s47] sm:$0x1]
    %49 = vrot.lane.b32.xlu0 %v48, 40
    %v50 = vpop.permute.xlu0 %49
    %vm51 = vcmask 367936
    %52 = vst.msk [vmem:[#allocation0] sm:$0x1] %vm51, %v50
    %s53 = scalar_lea.vmem %s0, 7
    %v54 = vld [vmem:[%s53] sm:$0x1]
    %55 = vrot.lane.b32.xlu0 %v54, 35
    %v56 = vpop.permute.xlu0 %55
    %vm57 = vcmask 326936
    %58 = vst.msk [vmem:[#allocation0] sm:$0x1] %vm57, %v56
    %s59 = scalar_lea.vmem %s0, 6
    %v60 = vld [vmem:[%s59] sm:$0x1]
    %61 = vrot.lane.b32.xlu0 %v60, 30
    %v62 = vpop.permute.xlu0 %61
    %vm63 = vcmask 285936
    %64 = vst.msk [vmem:[#allocation0] sm:$0x1] %vm63, %v62
    %s65 = scalar_lea.vmem %s0, 5
    %v66 = vld [vmem:[%s65] sm:$0x1]
    %67 = vrot.lane.b32.xlu0 %v66, 25
    %v68 = vpop.permute.xlu0 %67
    %vm69 = vcmask 244936
    %70 = vst.msk [vmem:[#allocation0] sm:$0x1] %vm69, %v68
    %s71 = scalar_lea.vmem %s0, 4
    %v72 = vld [vmem:[%s71] sm:$0x1]
    %73 = vrot.lane.b32.xlu0 %v72, 20
    %v74 = vpop.permute.xlu0 %73
    %vm75 = vcmask 203936
    %76 = vst.msk [vmem:[#allocation0] sm:$0x1] %vm75, %v74
    %s77 = scalar_lea.vmem %s0, 3
    %v78 = vld [vmem:[%s77] sm:$0x1]
    %79 = vrot.lane.b32.xlu0 %v78, 15
    %v80 = vpop.permute.xlu0 %79
    %vm81 = vcmask 162936
    %82 = vst.msk [vmem:[#allocation0] sm:$0x1] %vm81, %v80
    %s83 = scalar_lea.vmem %s0, 2
    %v84 = vld [vmem:[%s83] sm:$0x1]
    %85 = vrot.lane.b32.xlu0 %v84, 10
    %v86 = vpop.permute.xlu0 %85
    %vm87 = vcmask 121936
    %88 = vst.msk [vmem:[#allocation0] sm:$0x1] %vm87, %v86
    %s89 = scalar_lea.vmem %s0, 1
    %v90 = vld [vmem:[%s89] sm:$0x1]
    %91 = vrot.lane.b32.xlu0 %v90, 5
    %v92 = vpop.permute.xlu0 %91
    %vm93 = vcmask 80936
    %94 = vst.msk [vmem:[#allocation0] sm:$0x1] %vm93, %v92
    %s96 = ssub.s32 2, 1
    %v97 = vld [vmem:[#allocation0] sm:%s96]
    %s99 = ssub.s32 2, 1
    %100 = vst [vmem:[%s1] sm:%s99] %v97

// kernel: vit_forward.1
$region0: #{vit_forward.1}
  #allocation0 [shape = 'u32[]', space=smem, size = 0x4, offset = 0x4, fixed_abs, tag = 'smem constant byte address 0x4 - core index']
  #allocation1 [shape = 'u32[72,128]{1,0:T(1,128)}', space=vmem, size = 0x9000, scoped, tag = 'internal scratch']
  %s0 = inlined_call_operand.vmem [shape: f32[2,80,768], index: 0, kind: input, shape index: {}]
  %s1 = inlined_call_operand.vmem [shape: f32[80,128], index: 1, kind: input, shape index: {}]
  %s2 = inlined_call_operand.vmem [shape: f32[80,80], index: 2, kind: input, shape index: {}]
  %s3 = inlined_call_operand.vmem [shape: bf16[768,128], index: 3, kind: input, shape index: {}]
  %s4 = inlined_call_operand.vmem [shape: f32[2,1,128], index: 4, kind: input, shape index: {}]
  %s5 = inlined_call_operand.vmem [shape: f32[2,1,128], index: 5, kind: input, shape index: {}]
  %s6 = inlined_call_operand.vmem [shape: bf16[2,128,384], index: 6, kind: input, shape index: {}]
  %s7 = inlined_call_operand.vmem [shape: f32[2,1,384], index: 7, kind: input, shape index: {}]
  %s8 = inlined_call_operand.vmem [shape: bf16[2,128,128], index: 8, kind: input, shape index: {}]
  %s9 = inlined_call_operand.vmem [shape: f32[2,1,128], index: 9, kind: input, shape index: {}]
  %s10 = inlined_call_operand.vmem [shape: f32[2,1,128], index: 10, kind: input, shape index: {}]
  %s11 = inlined_call_operand.vmem [shape: f32[2,1,128], index: 11, kind: input, shape index: {}]
  %s12 = inlined_call_operand.vmem [shape: bf16[2,128,512], index: 12, kind: input, shape index: {}]
  %s13 = inlined_call_operand.vmem [shape: f32[2,1,512], index: 13, kind: input, shape index: {}]
  %s14 = inlined_call_operand.vmem [shape: bf16[2,512,128], index: 14, kind: input, shape index: {}]
  %s15 = inlined_call_operand.vmem [shape: f32[2,1,128], index: 15, kind: input, shape index: {}]
  %s16 = inlined_call_operand.vmem [shape: f32[1,128], index: 16, kind: input, shape index: {}]
  %s17 = inlined_call_operand.vmem [shape: f32[1,128], index: 17, kind: input, shape index: {}]
  %s18 = inlined_call_operand.vmem [shape: f32[1,128], index: 18, kind: input, shape index: {}]
  %s19 = inlined_call_operand.vmem [shape: f32[1,128], index: 19, kind: input, shape index: {}]
  %s20 = inlined_call_operand.vmem [shape: bf16[128,256], index: 20, kind: input, shape index: {}]
  %s21 = inlined_call_operand.vmem [shape: f32[1,256], index: 21, kind: input, shape index: {}]
  %s22 = inlined_call_operand.vmem [shape: bf16[256,128], index: 22, kind: input, shape index: {}]
  %s23 = inlined_call_operand.vmem [shape: f32[1,128], index: 23, kind: input, shape index: {}]
  %s24 = inlined_call_operand.vmem [shape: bf16[128,256], index: 24, kind: input, shape index: {}]
  %s25 = inlined_call_operand.vmem [shape: f32[1,256], index: 25, kind: input, shape index: {}]
  %s26 = inlined_call_operand.hbm [shape: f32[2,16,256], index: 26, kind: output, shape index: {}]
  %s27 = sld [smem:[#allocation0]]
  $region137: #{vit_forward.1} parent=0
    _
  %s29 = ssub.s32 1, %s27
  %s30 = scalar_select 0, %s29, %s27
  $region1: #{vit_forward.1} parent=0
    #allocation2 [shape = 'u8[32768]{0}', space=vmem, size = 0x8000, scoped, tag = 'output window, operand 0']
    #allocation3 [shape = 's32[2]{0}', space=sflag, size = 0x8, scoped, tag = 'scoped memory for vit_forward.1']
    %31 = vsyncpa [#allocation3], 0
    %s32 = scalar_lea.sflag [#allocation3], 1
    %33 = vsyncpa %s32, 0
    loop: start=0, step=1, limit=4
    $region2: #{vit_forward.1} parent=1 // loop_pre_header
      _
    $region3: #{vit_forward.1} parent=1 // loop_header
      %s35 = sphi 0, %s39
      %p36 = scmp.ge.s32.totalorder %s35, 4
      %s45 = sphi 0, %s47
      %s48 = sphi 0, %s45
      %s49 = sphi 0, %s48
      %s65 = sphi 0, %s49
      %s69 = sphi 0, %s69
      %s71 = sphi 0, %s69
      %s72 = sphi 0, %s71
      %s86 = sphi 0, %s72
      %s90 = sphi 0, %s90
      %s92 = sphi 0, %s90
      %s93 = sphi 0, %s92
      %s107 = sphi 0, %s93
      %s111 = sphi 0, %s111
      %s113 = sphi 0, %s111
      %s114 = sphi 0, %s113
      %s128 = sphi 0, %s114
      %s132 = sphi 0, %s132
      %s134 = sphi 0, %s132
      %s135 = sphi 0, %s134
      %s149 = sphi 0, %s135
      %s153 = sphi 0, %s153
      %s155 = sphi 0, %s153
      %s156 = sphi 0, %s155
      %s170 = sphi 0, %s156
      %s174 = sphi 0, %s174
      %s176 = sphi 0, %s174
      %s177 = sphi 0, %s176
      %s191 = sphi 0, %s177
      %s195 = sphi 0, %s195
      %s197 = sphi 0, %s195
      %s198 = sphi 0, %s197
      %s212 = sphi 0, %s198
      %s216 = sphi 0, %s216
      %s218 = sphi 0, %s216
      %s219 = sphi 0, %s218
      %s233 = sphi 0, %s219
      %s237 = sphi 0, %s237
      %s239 = sphi 0, %s237
      %s240 = sphi 0, %s239
      %s254 = sphi 0, %s240
      %s258 = sphi 0, %s258
      %s260 = sphi 0, %s258
      %s261 = sphi 0, %s260
      %s275 = sphi 0, %s261
      %s279 = sphi 0, %s279
      %s281 = sphi 0, %s279
      %s282 = sphi 0, %s281
      %s296 = sphi 0, %s282
      %s300 = sphi 0, %s300
      %s302 = sphi 0, %s300
      %s303 = sphi 0, %s302
      %s317 = sphi 0, %s303
      %s321 = sphi 0, %s321
      %s323 = sphi 0, %s321
      %s324 = sphi 0, %s323
      %s338 = sphi 0, %s324
      %s342 = sphi 0, %s342
      %s344 = sphi 0, %s342
      %s345 = sphi 0, %s344
      %s359 = sphi 0, %s345
      %s363 = sphi 0, %s363
      %s365 = sphi 0, %s363
      %s366 = sphi 0, %s365
      %s380 = sphi 0, %s366
      %s384 = sphi 0, %s384
      %s386 = sphi 0, %s384
      %s387 = sphi 0, %s386
      %s401 = sphi 0, %s387
      %s405 = sphi 0, %s405
      %s407 = sphi 0, %s405
      %s408 = sphi 0, %s407
      %s422 = sphi 0, %s408
      %s426 = sphi 0, %s426
      %s428 = sphi 0, %s426
      %s429 = sphi 0, %s428
      %s443 = sphi 0, %s429
      %s447 = sphi 0, %s447
      %s449 = sphi 0, %s447
      %s450 = sphi 0, %s449
      %s464 = sphi 0, %s450
      %s468 = sphi 0, %s468
      %s470 = sphi 0, %s468
      %s471 = sphi 0, %s470
      %s485 = sphi 0, %s471
      %s489 = sphi 0, %s489
      %s491 = sphi 0, %s489
      %s492 = sphi 0, %s491
      %s506 = sphi 0, %s492
      %s510 = sphi 0, %s510
      %s512 = sphi 0, %s510
      %s513 = sphi 0, %s512
      %s527 = sphi 0, %s513
      %s531 = sphi 0, %s531
      %s533 = sphi 0, %s531
      %s534 = sphi 0, %s533
      %s548 = sphi 0, %s534
      %s552 = sphi 0, %s552
      %s554 = sphi 0, %s552
      %s555 = sphi 0, %s554
      %s569 = sphi 0, %s555
      %s573 = sphi 0, %s573
      %s575 = sphi 0, %s573
      %s576 = sphi 0, %s575
      %s590 = sphi 0, %s576
      %s596 = sphi 0, %s598
      %s599 = sphi 0, %s596
      %s600 = sphi 0, %s599
      %s616 = sphi 0, %s600
    $region4: #{vit_forward.1} parent=1 // loop_header_branch
      %38 = sbr.rel (%p36) target = $region8
    $region5: #{vit_forward.1} parent=1 // loop_body
      %s40 = ssub.s32 %s35, 1
      %s41 = ssub.s32 %s35, 2
      %s42 = sadd.s32 %s35, 1
      %s43 = ssub.s32 %s35, %s42
      %p44 = scmp.eq.s32.totalorder %s43, 0
      %s46 = sadd.s32 %s45, 1
      %s47 = scalar_select %p44, %s45, %s46
      %p50 = pneg %p44
      %p51 = scmp.eq.s32.totalorder %s35, 1
      %p52 = por %p50, %p51
      %p53 = scmp.ne.s32.totalorder %s45, %s48
      %p54 = scmp.eq.s32.totalorder %s35, 0
      %p55 = por %p53, %p54
      %p56 = scmp.ne.s32.totalorder %s45, %s48
      %p57 = scmp.eq.s32.totalorder %s40, 1
      %p58 = por %p56, %p57
      %p59 = scmp.ne.s32.totalorder %s48, %s49
      %p60 = scmp.eq.s32.totalorder %s40, 0
      %p61 = por %p59, %p60
      %p62 = scmp.ne.s32.totalorder %s48, %s49
      %p63 = scmp.eq.s32.totalorder %s41, 1
      %p64 = por %p62, %p63
      %p66 = scmp.ne.s32.totalorder %s49, %s65
      %p67 = scmp.eq.s32.totalorder %s41, 0
      %p68 = por %p66, %p67
      %s70 = sadd.s32 %s69, 1
      %p73 = scmp.eq.s32.totalorder %s35, 1
      %p74 = scmp.ne.s32.totalorder %s69, %s71
      %p75 = scmp.eq.s32.totalorder %s35, 0
      %p76 = por %p74, %p75
      %p77 = scmp.ne.s32.totalorder %s69, %s71
      %p78 = scmp.eq.s32.totalorder %s40, 1
      %p79 = por %p77, %p78
      %p80 = scmp.ne.s32.totalorder %s71, %s72
      %p81 = scmp.eq.s32.totalorder %s40, 0
      %p82 = por %p80, %p81
      %p83 = scmp.ne.s32.totalorder %s71, %s72
      %p84 = scmp.eq.s32.totalorder %s41, 1
      %p85 = por %p83, %p84
      %p87 = scmp.ne.s32.totalorder %s72, %s86
      %p88 = scmp.eq.s32.totalorder %s41, 0
      %p89 = por %p87, %p88
      %s91 = sadd.s32 %s90, 1
      %p94 = scmp.eq.s32.totalorder %s35, 1
      %p95 = scmp.ne.s32.totalorder %s90, %s92
      %p96 = scmp.eq.s32.totalorder %s35, 0
      %p97 = por %p95, %p96
      %p98 = scmp.ne.s32.totalorder %s90, %s92
      %p99 = scmp.eq.s32.totalorder %s40, 1
      %p100 = por %p98, %p99
      %p101 = scmp.ne.s32.totalorder %s92, %s93
      %p102 = scmp.eq.s32.totalorder %s40, 0
      %p103 = por %p101, %p102
      %p104 = scmp.ne.s32.totalorder %s92, %s93
      %p105 = scmp.eq.s32.totalorder %s41, 1
      %p106 = por %p104, %p105
      %p108 = scmp.ne.s32.totalorder %s93, %s107
      %p109 = scmp.eq.s32.totalorder %s41, 0
      %p110 = por %p108, %p109
      %s112 = sadd.s32 %s111, 1
      %p115 = scmp.eq.s32.totalorder %s35, 1
      %p116 = scmp.ne.s32.totalorder %s111, %s113
      %p117 = scmp.eq.s32.totalorder %s35, 0
      %p118 = por %p116, %p117
      %p119 = scmp.ne.s32.totalorder %s111, %s113
      %p120 = scmp.eq.s32.totalorder %s40, 1
      %p121 = por %p119, %p120
      %p122 = scmp.ne.s32.totalorder %s113, %s114
      %p123 = scmp.eq.s32.totalorder %s40, 0
      %p124 = por %p122, %p123
      %p125 = scmp.ne.s32.totalorder %s113, %s114
      %p126 = scmp.eq.s32.totalorder %s41, 1
      %p127 = por %p125, %p126
      %p129 = scmp.ne.s32.totalorder %s114, %s128
      %p130 = scmp.eq.s32.totalorder %s41, 0
      %p131 = por %p129, %p130
      %s133 = sadd.s32 %s132, 1
      %p136 = scmp.eq.s32.totalorder %s35, 1
      %p137 = scmp.ne.s32.totalorder %s132, %s134
      %p138 = scmp.eq.s32.totalorder %s35, 0
      %p139 = por %p137, %p138
      %p140 = scmp.ne.s32.totalorder %s132, %s134
      %p141 = scmp.eq.s32.totalorder %s40, 1
      %p142 = por %p140, %p141
      %p143 = scmp.ne.s32.totalorder %s134, %s135
      %p144 = scmp.eq.s32.totalorder %s40, 0
      %p145 = por %p143, %p144
      %p146 = scmp.ne.s32.totalorder %s134, %s135
      %p147 = scmp.eq.s32.totalorder %s41, 1
      %p148 = por %p146, %p147
      %p150 = scmp.ne.s32.totalorder %s135, %s149
      %p151 = scmp.eq.s32.totalorder %s41, 0
      %p152 = por %p150, %p151
      %s154 = sadd.s32 %s153, 1
      %p157 = scmp.eq.s32.totalorder %s35, 1
      %p158 = scmp.ne.s32.totalorder %s153, %s155
      %p159 = scmp.eq.s32.totalorder %s35, 0
      %p160 = por %p158, %p159
      %p161 = scmp.ne.s32.totalorder %s153, %s155
      %p162 = scmp.eq.s32.totalorder %s40, 1
      %p163 = por %p161, %p162
      %p164 = scmp.ne.s32.totalorder %s155, %s156
      %p165 = scmp.eq.s32.totalorder %s40, 0
      %p166 = por %p164, %p165
      %p167 = scmp.ne.s32.totalorder %s155, %s156
      %p168 = scmp.eq.s32.totalorder %s41, 1
      %p169 = por %p167, %p168
      %p171 = scmp.ne.s32.totalorder %s156, %s170
      %p172 = scmp.eq.s32.totalorder %s41, 0
      %p173 = por %p171, %p172
      %s175 = sadd.s32 %s174, 1
      %p178 = scmp.eq.s32.totalorder %s35, 1
      %p179 = scmp.ne.s32.totalorder %s174, %s176
      %p180 = scmp.eq.s32.totalorder %s35, 0
      %p181 = por %p179, %p180
      %p182 = scmp.ne.s32.totalorder %s174, %s176
      %p183 = scmp.eq.s32.totalorder %s40, 1
      %p184 = por %p182, %p183
      %p185 = scmp.ne.s32.totalorder %s176, %s177
      %p186 = scmp.eq.s32.totalorder %s40, 0
      %p187 = por %p185, %p186
      %p188 = scmp.ne.s32.totalorder %s176, %s177
      %p189 = scmp.eq.s32.totalorder %s41, 1
      %p190 = por %p188, %p189
      %p192 = scmp.ne.s32.totalorder %s177, %s191
      %p193 = scmp.eq.s32.totalorder %s41, 0
      %p194 = por %p192, %p193
      %s196 = sadd.s32 %s195, 1
      %p199 = scmp.eq.s32.totalorder %s35, 1
      %p200 = scmp.ne.s32.totalorder %s195, %s197
      %p201 = scmp.eq.s32.totalorder %s35, 0
      %p202 = por %p200, %p201
      %p203 = scmp.ne.s32.totalorder %s195, %s197
      %p204 = scmp.eq.s32.totalorder %s40, 1
      %p205 = por %p203, %p204
      %p206 = scmp.ne.s32.totalorder %s197, %s198
      %p207 = scmp.eq.s32.totalorder %s40, 0
      %p208 = por %p206, %p207
      %p209 = scmp.ne.s32.totalorder %s197, %s198
      %p210 = scmp.eq.s32.totalorder %s41, 1
      %p211 = por %p209, %p210
      %p213 = scmp.ne.s32.totalorder %s198, %s212
      %p214 = scmp.eq.s32.totalorder %s41, 0
      %p215 = por %p213, %p214
      %s217 = sadd.s32 %s216, 1
      %p220 = scmp.eq.s32.totalorder %s35, 1
      %p221 = scmp.ne.s32.totalorder %s216, %s218
      %p222 = scmp.eq.s32.totalorder %s35, 0
      %p223 = por %p221, %p222
      %p224 = scmp.ne.s32.totalorder %s216, %s218
      %p225 = scmp.eq.s32.totalorder %s40, 1
      %p226 = por %p224, %p225
      %p227 = scmp.ne.s32.totalorder %s218, %s219
      %p228 = scmp.eq.s32.totalorder %s40, 0
      %p229 = por %p227, %p228
      %p230 = scmp.ne.s32.totalorder %s218, %s219
      %p231 = scmp.eq.s32.totalorder %s41, 1
      %p232 = por %p230, %p231
      %p234 = scmp.ne.s32.totalorder %s219, %s233
      %p235 = scmp.eq.s32.totalorder %s41, 0
      %p236 = por %p234, %p235
      %s238 = sadd.s32 %s237, 1
      %p241 = scmp.eq.s32.totalorder %s35, 1
      %p242 = scmp.ne.s32.totalorder %s237, %s239
      %p243 = scmp.eq.s32.totalorder %s35, 0
      %p244 = por %p242, %p243
      %p245 = scmp.ne.s32.totalorder %s237, %s239
      %p246 = scmp.eq.s32.totalorder %s40, 1
      %p247 = por %p245, %p246
      %p248 = scmp.ne.s32.totalorder %s239, %s240
      %p249 = scmp.eq.s32.totalorder %s40, 0
      %p250 = por %p248, %p249
      %p251 = scmp.ne.s32.totalorder %s239, %s240
      %p252 = scmp.eq.s32.totalorder %s41, 1
      %p253 = por %p251, %p252
      %p255 = scmp.ne.s32.totalorder %s240, %s254
      %p256 = scmp.eq.s32.totalorder %s41, 0
      %p257 = por %p255, %p256
      %s259 = sadd.s32 %s258, 1
      %p262 = scmp.eq.s32.totalorder %s35, 1
      %p263 = scmp.ne.s32.totalorder %s258, %s260
      %p264 = scmp.eq.s32.totalorder %s35, 0
      %p265 = por %p263, %p264
      %p266 = scmp.ne.s32.totalorder %s258, %s260
      %p267 = scmp.eq.s32.totalorder %s40, 1
      %p268 = por %p266, %p267
      %p269 = scmp.ne.s32.totalorder %s260, %s261
      %p270 = scmp.eq.s32.totalorder %s40, 0
      %p271 = por %p269, %p270
      %p272 = scmp.ne.s32.totalorder %s260, %s261
      %p273 = scmp.eq.s32.totalorder %s41, 1
      %p274 = por %p272, %p273
      %p276 = scmp.ne.s32.totalorder %s261, %s275
      %p277 = scmp.eq.s32.totalorder %s41, 0
      %p278 = por %p276, %p277
      %s280 = sadd.s32 %s279, 1
      %p283 = scmp.eq.s32.totalorder %s35, 1
      %p284 = scmp.ne.s32.totalorder %s279, %s281
      %p285 = scmp.eq.s32.totalorder %s35, 0
      %p286 = por %p284, %p285
      %p287 = scmp.ne.s32.totalorder %s279, %s281
      %p288 = scmp.eq.s32.totalorder %s40, 1
      %p289 = por %p287, %p288
      %p290 = scmp.ne.s32.totalorder %s281, %s282
      %p291 = scmp.eq.s32.totalorder %s40, 0
      %p292 = por %p290, %p291
      %p293 = scmp.ne.s32.totalorder %s281, %s282
      %p294 = scmp.eq.s32.totalorder %s41, 1
      %p295 = por %p293, %p294
      %p297 = scmp.ne.s32.totalorder %s282, %s296
      %p298 = scmp.eq.s32.totalorder %s41, 0
      %p299 = por %p297, %p298
      %s301 = sadd.s32 %s300, 1
      %p304 = scmp.eq.s32.totalorder %s35, 1
      %p305 = scmp.ne.s32.totalorder %s300, %s302
      %p306 = scmp.eq.s32.totalorder %s35, 0
      %p307 = por %p305, %p306
      %p308 = scmp.ne.s32.totalorder %s300, %s302
      %p309 = scmp.eq.s32.totalorder %s40, 1
      %p310 = por %p308, %p309
      %p311 = scmp.ne.s32.totalorder %s302, %s303
      %p312 = scmp.eq.s32.totalorder %s40, 0
      %p313 = por %p311, %p312
      %p314 = scmp.ne.s32.totalorder %s302, %s303
      %p315 = scmp.eq.s32.totalorder %s41, 1
      %p316 = por %p314, %p315
      %p318 = scmp.ne.s32.totalorder %s303, %s317
      %p319 = scmp.eq.s32.totalorder %s41, 0
      %p320 = por %p318, %p319
      %s322 = sadd.s32 %s321, 1
      %p325 = scmp.eq.s32.totalorder %s35, 1
      %p326 = scmp.ne.s32.totalorder %s321, %s323
      %p327 = scmp.eq.s32.totalorder %s35, 0
      %p328 = por %p326, %p327
      %p329 = scmp.ne.s32.totalorder %s321, %s323
      %p330 = scmp.eq.s32.totalorder %s40, 1
      %p331 = por %p329, %p330
      %p332 = scmp.ne.s32.totalorder %s323, %s324
      %p333 = scmp.eq.s32.totalorder %s40, 0
      %p334 = por %p332, %p333
      %p335 = scmp.ne.s32.totalorder %s323, %s324
      %p336 = scmp.eq.s32.totalorder %s41, 1
      %p337 = por %p335, %p336
      %p339 = scmp.ne.s32.totalorder %s324, %s338
      %p340 = scmp.eq.s32.totalorder %s41, 0
      %p341 = por %p339, %p340
      %s343 = sadd.s32 %s342, 1
      %p346 = scmp.eq.s32.totalorder %s35, 1
      %p347 = scmp.ne.s32.totalorder %s342, %s344
      %p348 = scmp.eq.s32.totalorder %s35, 0
      %p349 = por %p347, %p348
      %p350 = scmp.ne.s32.totalorder %s342, %s344
      %p351 = scmp.eq.s32.totalorder %s40, 1
      %p352 = por %p350, %p351
      %p353 = scmp.ne.s32.totalorder %s344, %s345
      %p354 = scmp.eq.s32.totalorder %s40, 0
      %p355 = por %p353, %p354
      %p356 = scmp.ne.s32.totalorder %s344, %s345
      %p357 = scmp.eq.s32.totalorder %s41, 1
      %p358 = por %p356, %p357
      %p360 = scmp.ne.s32.totalorder %s345, %s359
      %p361 = scmp.eq.s32.totalorder %s41, 0
      %p362 = por %p360, %p361
      %s364 = sadd.s32 %s363, 1
      %p367 = scmp.eq.s32.totalorder %s35, 1
      %p368 = scmp.ne.s32.totalorder %s363, %s365
      %p369 = scmp.eq.s32.totalorder %s35, 0
      %p370 = por %p368, %p369
      %p371 = scmp.ne.s32.totalorder %s363, %s365
      %p372 = scmp.eq.s32.totalorder %s40, 1
      %p373 = por %p371, %p372
      %p374 = scmp.ne.s32.totalorder %s365, %s366
      %p375 = scmp.eq.s32.totalorder %s40, 0
      %p376 = por %p374, %p375
      %p377 = scmp.ne.s32.totalorder %s365, %s366
      %p378 = scmp.eq.s32.totalorder %s41, 1
      %p379 = por %p377, %p378
      %p381 = scmp.ne.s32.totalorder %s366, %s380
      %p382 = scmp.eq.s32.totalorder %s41, 0
      %p383 = por %p381, %p382
      %s385 = sadd.s32 %s384, 1
      %p388 = scmp.eq.s32.totalorder %s35, 1
      %p389 = scmp.ne.s32.totalorder %s384, %s386
      %p390 = scmp.eq.s32.totalorder %s35, 0
      %p391 = por %p389, %p390
      %p392 = scmp.ne.s32.totalorder %s384, %s386
      %p393 = scmp.eq.s32.totalorder %s40, 1
      %p394 = por %p392, %p393
      %p395 = scmp.ne.s32.totalorder %s386, %s387
      %p396 = scmp.eq.s32.totalorder %s40, 0
      %p397 = por %p395, %p396
      %p398 = scmp.ne.s32.totalorder %s386, %s387
      %p399 = scmp.eq.s32.totalorder %s41, 1
      %p400 = por %p398, %p399
      %p402 = scmp.ne.s32.totalorder %s387, %s401
      %p403 = scmp.eq.s32.totalorder %s41, 0
      %p404 = por %p402, %p403
      %s406 = sadd.s32 %s405, 1
      %p409 = scmp.eq.s32.totalorder %s35, 1
      %p410 = scmp.ne.s32.totalorder %s405, %s407
      %p411 = scmp.eq.s32.totalorder %s35, 0
      %p412 = por %p410, %p411
      %p413 = scmp.ne.s32.totalorder %s405, %s407
      %p414 = scmp.eq.s32.totalorder %s40, 1
      %p415 = por %p413, %p414
      %p416 = scmp.ne.s32.totalorder %s407, %s408
      %p417 = scmp.eq.s32.totalorder %s40, 0
      %p418 = por %p416, %p417
      %p419 = scmp.ne.s32.totalorder %s407, %s408
      %p420 = scmp.eq.s32.totalorder %s41, 1
      %p421 = por %p419, %p420
      %p423 = scmp.ne.s32.totalorder %s408, %s422
      %p424 = scmp.eq.s32.totalorder %s41, 0
      %p425 = por %p423, %p424
      %s427 = sadd.s32 %s426, 1
      %p430 = scmp.eq.s32.totalorder %s35, 1
      %p431 = scmp.ne.s32.totalorder %s426, %s428
      %p432 = scmp.eq.s32.totalorder %s35, 0
      %p433 = por %p431, %p432
      %p434 = scmp.ne.s32.totalorder %s426, %s428
      %p435 = scmp.eq.s32.totalorder %s40, 1
      %p436 = por %p434, %p435
      %p437 = scmp.ne.s32.totalorder %s428, %s429
      %p438 = scmp.eq.s32.totalorder %s40, 0
      %p439 = por %p437, %p438
      %p440 = scmp.ne.s32.totalorder %s428, %s429
      %p441 = scmp.eq.s32.totalorder %s41, 1
      %p442 = por %p440, %p441
      %p444 = scmp.ne.s32.totalorder %s429, %s443
      %p445 = scmp.eq.s32.totalorder %s41, 0
      %p446 = por %p444, %p445
      %s448 = sadd.s32 %s447, 1
      %p451 = scmp.eq.s32.totalorder %s35, 1
      %p452 = scmp.ne.s32.totalorder %s447, %s449
      %p453 = scmp.eq.s32.totalorder %s35, 0
      %p454 = por %p452, %p453
      %p455 = scmp.ne.s32.totalorder %s447, %s449
      %p456 = scmp.eq.s32.totalorder %s40, 1
      %p457 = por %p455, %p456
      %p458 = scmp.ne.s32.totalorder %s449, %s450
      %p459 = scmp.eq.s32.totalorder %s40, 0
      %p460 = por %p458, %p459
      %p461 = scmp.ne.s32.totalorder %s449, %s450
      %p462 = scmp.eq.s32.totalorder %s41, 1
      %p463 = por %p461, %p462
      %p465 = scmp.ne.s32.totalorder %s450, %s464
      %p466 = scmp.eq.s32.totalorder %s41, 0
      %p467 = por %p465, %p466
      %s469 = sadd.s32 %s468, 1
      %p472 = scmp.eq.s32.totalorder %s35, 1
      %p473 = scmp.ne.s32.totalorder %s468, %s470
      %p474 = scmp.eq.s32.totalorder %s35, 0
      %p475 = por %p473, %p474
      %p476 = scmp.ne.s32.totalorder %s468, %s470
      %p477 = scmp.eq.s32.totalorder %s40, 1
      %p478 = por %p476, %p477
      %p479 = scmp.ne.s32.totalorder %s470, %s471
      %p480 = scmp.eq.s32.totalorder %s40, 0
      %p481 = por %p479, %p480
      %p482 = scmp.ne.s32.totalorder %s470, %s471
      %p483 = scmp.eq.s32.totalorder %s41, 1
      %p484 = por %p482, %p483
      %p486 = scmp.ne.s32.totalorder %s471, %s485
      %p487 = scmp.eq.s32.totalorder %s41, 0
      %p488 = por %p486, %p487
      %s490 = sadd.s32 %s489, 1
      %p493 = scmp.eq.s32.totalorder %s35, 1
      %p494 = scmp.ne.s32.totalorder %s489, %s491
      %p495 = scmp.eq.s32.totalorder %s35, 0
      %p496 = por %p494, %p495
      %p497 = scmp.ne.s32.totalorder %s489, %s491
      %p498 = scmp.eq.s32.totalorder %s40, 1
      %p499 = por %p497, %p498
      %p500 = scmp.ne.s32.totalorder %s491, %s492
      %p501 = scmp.eq.s32.totalorder %s40, 0
      %p502 = por %p500, %p501
      %p503 = scmp.ne.s32.totalorder %s491, %s492
      %p504 = scmp.eq.s32.totalorder %s41, 1
      %p505 = por %p503, %p504
      %p507 = scmp.ne.s32.totalorder %s492, %s506
      %p508 = scmp.eq.s32.totalorder %s41, 0
      %p509 = por %p507, %p508
      %s511 = sadd.s32 %s510, 1
      %p514 = scmp.eq.s32.totalorder %s35, 1
      %p515 = scmp.ne.s32.totalorder %s510, %s512
      %p516 = scmp.eq.s32.totalorder %s35, 0
      %p517 = por %p515, %p516
      %p518 = scmp.ne.s32.totalorder %s510, %s512
      %p519 = scmp.eq.s32.totalorder %s40, 1
      %p520 = por %p518, %p519
      %p521 = scmp.ne.s32.totalorder %s512, %s513
      %p522 = scmp.eq.s32.totalorder %s40, 0
      %p523 = por %p521, %p522
      %p524 = scmp.ne.s32.totalorder %s512, %s513
      %p525 = scmp.eq.s32.totalorder %s41, 1
      %p526 = por %p524, %p525
      %p528 = scmp.ne.s32.totalorder %s513, %s527
      %p529 = scmp.eq.s32.totalorder %s41, 0
      %p530 = por %p528, %p529
      %s532 = sadd.s32 %s531, 1
      %p535 = scmp.eq.s32.totalorder %s35, 1
      %p536 = scmp.ne.s32.totalorder %s531, %s533
      %p537 = scmp.eq.s32.totalorder %s35, 0
      %p538 = por %p536, %p537
      %p539 = scmp.ne.s32.totalorder %s531, %s533
      %p540 = scmp.eq.s32.totalorder %s40, 1
      %p541 = por %p539, %p540
      %p542 = scmp.ne.s32.totalorder %s533, %s534
      %p543 = scmp.eq.s32.totalorder %s40, 0
      %p544 = por %p542, %p543
      %p545 = scmp.ne.s32.totalorder %s533, %s534
      %p546 = scmp.eq.s32.totalorder %s41, 1
      %p547 = por %p545, %p546
      %p549 = scmp.ne.s32.totalorder %s534, %s548
      %p550 = scmp.eq.s32.totalorder %s41, 0
      %p551 = por %p549, %p550
      %s553 = sadd.s32 %s552, 1
      %p556 = scmp.eq.s32.totalorder %s35, 1
      %p557 = scmp.ne.s32.totalorder %s552, %s554
      %p558 = scmp.eq.s32.totalorder %s35, 0
      %p559 = por %p557, %p558
      %p560 = scmp.ne.s32.totalorder %s552, %s554
      %p561 = scmp.eq.s32.totalorder %s40, 1
      %p562 = por %p560, %p561
      %p563 = scmp.ne.s32.totalorder %s554, %s555
      %p564 = scmp.eq.s32.totalorder %s40, 0
      %p565 = por %p563, %p564
      %p566 = scmp.ne.s32.totalorder %s554, %s555
      %p567 = scmp.eq.s32.totalorder %s41, 1
      %p568 = por %p566, %p567
      %p570 = scmp.ne.s32.totalorder %s555, %s569
      %p571 = scmp.eq.s32.totalorder %s41, 0
      %p572 = por %p570, %p571
      %s574 = sadd.s32 %s573, 1
      %p577 = scmp.eq.s32.totalorder %s35, 1
      %p578 = scmp.ne.s32.totalorder %s573, %s575
      %p579 = scmp.eq.s32.totalorder %s35, 0
      %p580 = por %p578, %p579
      %p581 = scmp.ne.s32.totalorder %s573, %s575
      %p582 = scmp.eq.s32.totalorder %s40, 1
      %p583 = por %p581, %p582
      %p584 = scmp.ne.s32.totalorder %s575, %s576
      %p585 = scmp.eq.s32.totalorder %s40, 0
      %p586 = por %p584, %p585
      %p587 = scmp.ne.s32.totalorder %s575, %s576
      %p588 = scmp.eq.s32.totalorder %s41, 1
      %p589 = por %p587, %p588
      %p591 = scmp.ne.s32.totalorder %s576, %s590
      %p592 = scmp.eq.s32.totalorder %s41, 0
      %p593 = por %p591, %p592
      %s594 = ssub.s32 %s35, %s42
      %p595 = scmp.eq.s32.totalorder %s594, 0
      %s597 = sadd.s32 %s596, 1
      %s598 = scalar_select %p595, %s596, %s597
      %p601 = pneg %p595
      %p602 = scmp.eq.s32.totalorder %s35, 1
      %p603 = por %p601, %p602
      %p604 = scmp.ne.s32.totalorder %s596, %s599
      %p605 = scmp.eq.s32.totalorder %s35, 0
      %p606 = por %p604, %p605
      %p607 = scmp.ne.s32.totalorder %s596, %s599
      %p608 = scmp.eq.s32.totalorder %s40, 1
      %p609 = por %p607, %p608
      %p610 = scmp.ne.s32.totalorder %s599, %s600
      %p611 = scmp.eq.s32.totalorder %s40, 0
      %p612 = por %p610, %p611
      %p613 = scmp.ne.s32.totalorder %s599, %s600
      %p614 = scmp.eq.s32.totalorder %s41, 1
      %p615 = por %p613, %p614
      %p617 = scmp.ne.s32.totalorder %s600, %s616
      %p618 = scmp.eq.s32.totalorder %s41, 0
      %p619 = por %p617, %p618
      %p620 = scmp.le.s32.totalorder 1, %s35
      %p621 = scmp.lt.s32.totalorder %s35, 3
      %p622 = pnand %p620, %p621
      %p623 = pneg %p622
      // Predicated region
      $region9: #{vit_forward.1} parent=5 // pred_check
        _
      $region10: #{vit_forward.1} parent=5 // pred_check_branch
        %625 = sbr.rel (%p622) target = $region12
      $region11: #{vit_forward.1} parent=5 // pred_region
        %s626 = ssub.s32 %s35, 1
        // Predicated region
        $region13: #{vit_forward.1} parent=11 // pred_check
          %p627 = pneg %p82
        $region14: #{vit_forward.1} parent=11 // pred_check_branch
          %629 = sbr.rel (%p627) target = $region16
        $region15: #{vit_forward.1} parent=11 // pred_region
          _
        $region16: #{vit_forward.1} parent=11 // pred_fallthru
          _
        // Predicated region
        $region17: #{vit_forward.1} parent=11 // pred_check
          %p630 = pneg %p103
        $region18: #{vit_forward.1} parent=11 // pred_check_branch
          %632 = sbr.rel (%p630) target = $region20
        $region19: #{vit_forward.1} parent=11 // pred_region
          _
        $region20: #{vit_forward.1} parent=11 // pred_fallthru
          _
        // Predicated region
        $region21: #{vit_forward.1} parent=11 // pred_check
          %p633 = pneg %p124
        $region22: #{vit_forward.1} parent=11 // pred_check_branch
          %635 = sbr.rel (%p633) target = $region24
        $region23: #{vit_forward.1} parent=11 // pred_region
          _
        $region24: #{vit_forward.1} parent=11 // pred_fallthru
          _
        // Predicated region
        $region25: #{vit_forward.1} parent=11 // pred_check
          %p636 = pneg %p145
        $region26: #{vit_forward.1} parent=11 // pred_check_branch
          %638 = sbr.rel (%p636) target = $region28
        $region27: #{vit_forward.1} parent=11 // pred_region
          _
        $region28: #{vit_forward.1} parent=11 // pred_fallthru
          _
        // Predicated region
        $region29: #{vit_forward.1} parent=11 // pred_check
          %p639 = pneg %p166
        $region30: #{vit_forward.1} parent=11 // pred_check_branch
          %641 = sbr.rel (%p639) target = $region32
        $region31: #{vit_forward.1} parent=11 // pred_region
          _
        $region32: #{vit_forward.1} parent=11 // pred_fallthru
          _
        // Predicated region
        $region33: #{vit_forward.1} parent=11 // pred_check
          %p642 = pneg %p187
        $region34: #{vit_forward.1} parent=11 // pred_check_branch
          %644 = sbr.rel (%p642) target = $region36
        $region35: #{vit_forward.1} parent=11 // pred_region
          _
        $region36: #{vit_forward.1} parent=11 // pred_fallthru
          _
        // Predicated region
        $region37: #{vit_forward.1} parent=11 // pred_check
          %p645 = pneg %p208
        $region38: #{vit_forward.1} parent=11 // pred_check_branch
          %647 = sbr.rel (%p645) target = $region40
        $region39: #{vit_forward.1} parent=11 // pred_region
          _
        $region40: #{vit_forward.1} parent=11 // pred_fallthru
          _
        // Predicated region
        $region41: #{vit_forward.1} parent=11 // pred_check
          %p648 = pneg %p229
        $region42: #{vit_forward.1} parent=11 // pred_check_branch
          %650 = sbr.rel (%p648) target = $region44
        $region43: #{vit_forward.1} parent=11 // pred_region
          _
        $region44: #{vit_forward.1} parent=11 // pred_fallthru
          _
        // Predicated region
        $region45: #{vit_forward.1} parent=11 // pred_check
          %p651 = pneg %p250
        $region46: #{vit_forward.1} parent=11 // pred_check_branch
          %653 = sbr.rel (%p651) target = $region48
        $region47: #{vit_forward.1} parent=11 // pred_region
          _
        $region48: #{vit_forward.1} parent=11 // pred_fallthru
          _
        // Predicated region
        $region49: #{vit_forward.1} parent=11 // pred_check
          %p654 = pneg %p271
        $region50: #{vit_forward.1} parent=11 // pred_check_branch
          %656 = sbr.rel (%p654) target = $region52
        $region51: #{vit_forward.1} parent=11 // pred_region
          _
        $region52: #{vit_forward.1} parent=11 // pred_fallthru
          _
        // Predicated region
        $region53: #{vit_forward.1} parent=11 // pred_check
          %p657 = pneg %p292
        $region54: #{vit_forward.1} parent=11 // pred_check_branch
          %659 = sbr.rel (%p657) target = $region56
        $region55: #{vit_forward.1} parent=11 // pred_region
          _
        $region56: #{vit_forward.1} parent=11 // pred_fallthru
          _
        // Predicated region
        $region57: #{vit_forward.1} parent=11 // pred_check
          %p660 = pneg %p313
        $region58: #{vit_forward.1} parent=11 // pred_check_branch
          %662 = sbr.rel (%p660) target = $region60
        $region59: #{vit_forward.1} parent=11 // pred_region
          _
        $region60: #{vit_forward.1} parent=11 // pred_fallthru
          _
        // Predicated region
        $region61: #{vit_forward.1} parent=11 // pred_check
          %p663 = pneg %p334
        $region62: #{vit_forward.1} parent=11 // pred_check_branch
          %665 = sbr.rel (%p663) target = $region64
        $region63: #{vit_forward.1} parent=11 // pred_region
          _
        $region64: #{vit_forward.1} parent=11 // pred_fallthru
          _
        // Predicated region
        $region65: #{vit_forward.1} parent=11 // pred_check
          %p666 = pneg %p355
        $region66: #{vit_forward.1} parent=11 // pred_check_branch
          %668 = sbr.rel (%p666) target = $region68
        $region67: #{vit_forward.1} parent=11 // pred_region
          _
        $region68: #{vit_forward.1} parent=11 // pred_fallthru
          _
        // Predicated region
        $region69: #{vit_forward.1} parent=11 // pred_check
          %p669 = pneg %p376
        $region70: #{vit_forward.1} parent=11 // pred_check_branch
          %671 = sbr.rel (%p669) target = $region72
        $region71: #{vit_forward.1} parent=11 // pred_region
          _
        $region72: #{vit_forward.1} parent=11 // pred_fallthru
          _
        // Predicated region
        $region73: #{vit_forward.1} parent=11 // pred_check
          %p672 = pneg %p397
        $region74: #{vit_forward.1} parent=11 // pred_check_branch
          %674 = sbr.rel (%p672) target = $region76
        $region75: #{vit_forward.1} parent=11 // pred_region
          _
        $region76: #{vit_forward.1} parent=11 // pred_fallthru
          _
        // Predicated region
        $region77: #{vit_forward.1} parent=11 // pred_check
          %p675 = pneg %p418
        $region78: #{vit_forward.1} parent=11 // pred_check_branch
          %677 = sbr.rel (%p675) target = $region80
        $region79: #{vit_forward.1} parent=11 // pred_region
          _
        $region80: #{vit_forward.1} parent=11 // pred_fallthru
          _
        // Predicated region
        $region81: #{vit_forward.1} parent=11 // pred_check
          %p678 = pneg %p439
        $region82: #{vit_forward.1} parent=11 // pred_check_branch
          %680 = sbr.rel (%p678) target = $region84
        $region83: #{vit_forward.1} parent=11 // pred_region
          _
        $region84: #{vit_forward.1} parent=11 // pred_fallthru
          _
        // Predicated region
        $region85: #{vit_forward.1} parent=11 // pred_check
          %p681 = pneg %p460
        $region86: #{vit_forward.1} parent=11 // pred_check_branch
          %683 = sbr.rel (%p681) target = $region88
        $region87: #{vit_forward.1} parent=11 // pred_region
          _
        $region88: #{vit_forward.1} parent=11 // pred_fallthru
          _
        // Predicated region
        $region89: #{vit_forward.1} parent=11 // pred_check
          %p684 = pneg %p481
        $region90: #{vit_forward.1} parent=11 // pred_check_branch
          %686 = sbr.rel (%p684) target = $region92
        $region91: #{vit_forward.1} parent=11 // pred_region
          _
        $region92: #{vit_forward.1} parent=11 // pred_fallthru
          _
        // Predicated region
        $region93: #{vit_forward.1} parent=11 // pred_check
          %p687 = pneg %p502
        $region94: #{vit_forward.1} parent=11 // pred_check_branch
          %689 = sbr.rel (%p687) target = $region96
        $region95: #{vit_forward.1} parent=11 // pred_region
          _
        $region96: #{vit_forward.1} parent=11 // pred_fallthru
          _
        // Predicated region
        $region97: #{vit_forward.1} parent=11 // pred_check
          %p690 = pneg %p523
        $region98: #{vit_forward.1} parent=11 // pred_check_branch
          %692 = sbr.rel (%p690) target = $region100
        $region99: #{vit_forward.1} parent=11 // pred_region
          _
        $region100: #{vit_forward.1} parent=11 // pred_fallthru
          _
        // Predicated region
        $region101: #{vit_forward.1} parent=11 // pred_check
          %p693 = pneg %p544
        $region102: #{vit_forward.1} parent=11 // pred_check_branch
          %695 = sbr.rel (%p693) target = $region104
        $region103: #{vit_forward.1} parent=11 // pred_region
          _
        $region104: #{vit_forward.1} parent=11 // pred_fallthru
          _
        // Predicated region
        $region105: #{vit_forward.1} parent=11 // pred_check
          %p696 = pneg %p565
        $region106: #{vit_forward.1} parent=11 // pred_check_branch
          %698 = sbr.rel (%p696) target = $region108
        $region107: #{vit_forward.1} parent=11 // pred_region
          _
        $region108: #{vit_forward.1} parent=11 // pred_fallthru
          _
        // Predicated region
        $region109: #{vit_forward.1} parent=11 // pred_check
          %p699 = pneg %p586
        $region110: #{vit_forward.1} parent=11 // pred_check_branch
          %701 = sbr.rel (%p699) target = $region112
        $region111: #{vit_forward.1} parent=11 // pred_region
          _
        $region112: #{vit_forward.1} parent=11 // pred_fallthru
          _
      $region12: #{vit_forward.1} parent=5 // pred_fallthru
        _
      %p702 = scmp.lt.s32.totalorder %s35, 2
      // Predicated region
      $region113: #{vit_forward.1} parent=5 // pred_check
        %p703 = pneg %p702
      $region114: #{vit_forward.1} parent=5 // pred_check_branch
        %705 = sbr.rel (%p703) target = $region116
      $region115: #{vit_forward.1} parent=5 // pred_region
        // Predicated region
        $region117: #{vit_forward.1} parent=115 // pred_check
          %p706 = pneg %p55
        $region118: #{vit_forward.1} parent=115 // pred_check_branch
          %708 = sbr.rel (%p706) target = $region120
        $region119: #{vit_forward.1} parent=115 // pred_region
          %p709 = scmp.lt.s32.totalorder %s35, 1
          %s710 = scalar_select %p709, %s35, 1
          %s711 = smul.addr %s710, 60
          %s712 = smul.addr %s711, 8
          %s713 = scalar_lea.vmem %s0, %s712
        $region120: #{vit_forward.1} parent=115 // pred_fallthru
          _
      $region116: #{vit_forward.1} parent=5 // pred_fallthru
        _
      %p714 = scmp.le.s32.totalorder 1, %s35
      %p715 = scmp.lt.s32.totalorder %s35, 3
      %p716 = pnand %p714, %p715
      %p717 = pneg %p716
      // Predicated region
      $region121: #{vit_forward.1} parent=5 // pred_check
        _
      $region122: #{vit_forward.1} parent=5 // pred_check_branch
        %719 = sbr.rel (%p716) target = $region124
      $region123: #{vit_forward.1} parent=5 // pred_region
        %s720 = ssub.s32 %s35, 1
        %p721 = scmp.lt.s32.totalorder %s40, 1
        %s722 = scalar_select %p721, %s40, 1
        %s723 = smul.addr %s722, 60
        %s724 = smul.addr %s723, 8
        %s725 = scalar_lea.vmem %s0, %s724
        %p726 = pneg %p61
        %p727 = pneg %p58
        %p728 = pneg %p82
        %p729 = pneg %p79
        %p730 = pneg %p103
        %p731 = pneg %p100
        %p732 = pneg %p124
        %p733 = pneg %p121
        %p734 = pneg %p145
        %p735 = pneg %p142
        %p736 = pneg %p166
        %p737 = pneg %p163
        %p738 = pneg %p187
        %p739 = pneg %p184
        %p740 = pneg %p208
        %p741 = pneg %p205
        %p742 = pneg %p229
        %p743 = pneg %p226
        %p744 = pneg %p250
        %p745 = pneg %p247
        %p746 = pneg %p271
        %p747 = pneg %p268
        %p748 = pneg %p292
        %p749 = pneg %p289
        %p750 = pneg %p313
        %p751 = pneg %p310
        %p752 = pneg %p334
        %p753 = pneg %p331
        %p754 = pneg %p355
        %p755 = pneg %p352
        %p756 = pneg %p376
        %p757 = pneg %p373
        %p758 = pneg %p397
        %p759 = pneg %p394
        %p760 = pneg %p418
        %p761 = pneg %p415
        %p762 = pneg %p439
        %p763 = pneg %p436
        %p764 = pneg %p460
        %p765 = pneg %p457
        %p766 = pneg %p481
        %p767 = pneg %p478
        %p768 = pneg %p502
        %p769 = pneg %p499
        %p770 = pneg %p523
        %p771 = pneg %p520
        %p772 = pneg %p544
        %p773 = pneg %p541
        %p774 = pneg %p565
        %p775 = pneg %p562
        %p776 = pneg %p586
        %p777 = pneg %p583
        %p778 = pneg %p612
        %p779 = pneg %p609
        %s780 = sand.u32 %s599, 1
        %s781 = scalar_lea.sflag [#allocation3], %s780
        %s782 = sand.u32 %s599, 1
        %s783 = smul.addr %s782, 32
        %s784 = scalar_lea.vmem [#allocation2], %s783
        %p785 = scmp.lt.s32.totalorder %s40, 1
        %s786 = scalar_select %p785, %s40, 1
        %s787 = smul.addr %s786, 60
        %s788 = smul.addr %s787, 8
        %s789 = scalar_lea.vmem %s0, %s788
        %v791 = vld [vmem:[%s789] sm:$0xff]
        %v792 = vld [vmem:[%s789 + $0x8] sm:$0xff]
        %v793 = vld [vmem:[%s789 + $0x10] sm:$0xff]
        %v794 = vld [vmem:[%s789 + $0x18] sm:$0xff]
        %v795 = vld [vmem:[%s789 + $0x20] sm:$0xff]
        %v796 = vld [vmem:[%s789 + $0x28] sm:$0xff]
        %v797 = vld [vmem:[%s789 + $0x30] sm:$0xff]
        %v798 = vld [vmem:[%s789 + $0x38] sm:$0xff]
        %v799 = vld [vmem:[%s789 + $0x40] sm:$0xff]
        %v800 = vld [vmem:[%s789 + $0x48] sm:$0xff]
        %v801 = vld [vmem:[%s789 + $0x50] sm:$0xff]
        %v802 = vld [vmem:[%s789 + $0x58] sm:$0xff]
        %v803 = vld [vmem:[%s789 + $0x60] sm:$0xff]
        %v804 = vld [vmem:[%s789 + $0x68] sm:$0xff]
        %v805 = vld [vmem:[%s789 + $0x70] sm:$0xff]
        %v806 = vld [vmem:[%s789 + $0x78] sm:$0xff]
        %v807 = vld [vmem:[%s789 + $0x80] sm:$0xff]
        %v808 = vld [vmem:[%s789 + $0x88] sm:$0xff]
        %v809 = vld [vmem:[%s789 + $0x90] sm:$0xff]
        %v810 = vld [vmem:[%s789 + $0x98] sm:$0xff]
        %v811 = vld [vmem:[%s789 + $0xa0] sm:$0xff]
        %v812 = vld [vmem:[%s789 + $0xa8] sm:$0xff]
        %v813 = vld [vmem:[%s789 + $0xb0] sm:$0xff]
        %v814 = vld [vmem:[%s789 + $0xb8] sm:$0xff]
        %v815 = vld [vmem:[%s789 + $0xc0] sm:$0xff]
        %v816 = vld [vmem:[%s789 + $0xc8] sm:$0xff]
        %v817 = vld [vmem:[%s789 + $0xd0] sm:$0xff]
        %v818 = vld [vmem:[%s789 + $0xd8] sm:$0xff]
        %v819 = vld [vmem:[%s789 + $0xe0] sm:$0xff]
        %v820 = vld [vmem:[%s789 + $0xe8] sm:$0xff]
        %v821 = vld [vmem:[%s789 + $0xf0] sm:$0xff]
        %v822 = vld [vmem:[%s789 + $0xf8] sm:$0xff]
        %v823 = vld [vmem:[%s789 + $0x100] sm:$0xff]
        %v824 = vld [vmem:[%s789 + $0x108] sm:$0xff]
        %v825 = vld [vmem:[%s789 + $0x110] sm:$0xff]
        %v826 = vld [vmem:[%s789 + $0x118] sm:$0xff]
        %v827 = vld [vmem:[%s789 + $0x120] sm:$0xff]
        %v828 = vld [vmem:[%s789 + $0x128] sm:$0xff]
        %v829 = vld [vmem:[%s789 + $0x130] sm:$0xff]
        %v830 = vld [vmem:[%s789 + $0x138] sm:$0xff]
        %v831 = vld [vmem:[%s789 + $0x140] sm:$0xff]
        %v832 = vld [vmem:[%s789 + $0x148] sm:$0xff]
        %v833 = vld [vmem:[%s789 + $0x150] sm:$0xff]
        %v834 = vld [vmem:[%s789 + $0x158] sm:$0xff]
        %v835 = vld [vmem:[%s789 + $0x160] sm:$0xff]
        %v836 = vld [vmem:[%s789 + $0x168] sm:$0xff]
        %v837 = vld [vmem:[%s789 + $0x170] sm:$0xff]
        %v838 = vld [vmem:[%s789 + $0x178] sm:$0xff]
        %v839 = vld [vmem:[%s789 + $0x180] sm:$0xff]
        %v840 = vld [vmem:[%s789 + $0x188] sm:$0xff]
        %v841 = vld [vmem:[%s789 + $0x190] sm:$0xff]
        %v842 = vld [vmem:[%s789 + $0x198] sm:$0xff]
        %v843 = vld [vmem:[%s789 + $0x1a0] sm:$0xff]
        %v844 = vld [vmem:[%s789 + $0x1a8] sm:$0xff]
        %v845 = vld [vmem:[%s789 + $0x1b0] sm:$0xff]
        %v846 = vld [vmem:[%s789 + $0x1b8] sm:$0xff]
        %v847 = vld [vmem:[%s789 + $0x1c0] sm:$0xff]
        %v848 = vld [vmem:[%s789 + $0x1c8] sm:$0xff]
        %v849 = vld [vmem:[%s789 + $0x1d0] sm:$0xff]
        %v850 = vld [vmem:[%s789 + $0x1d8] sm:$0xff]
        %v851 = vpack.c.bf16 %v797, %v791
        %v852 = vpack.c.bf16 %v798, %v792
        %v853 = vpack.c.bf16 %v799, %v793
        %v854 = vpack.c.bf16 %v800, %v794
        %v855 = vpack.c.bf16 %v801, %v795
        %v856 = vpack.c.bf16 %v802, %v796
        %v857 = vpack.c.bf16 %v809, %v803
        %v858 = vpack.c.bf16 %v810, %v804
        %v859 = vpack.c.bf16 %v811, %v805
        %v860 = vpack.c.bf16 %v812, %v806
        %v861 = vpack.c.bf16 %v813, %v807
        %v862 = vpack.c.bf16 %v814, %v808
        %v863 = vpack.c.bf16 %v821, %v815
        %v864 = vpack.c.bf16 %v822, %v816
        %v865 = vpack.c.bf16 %v823, %v817
        %v866 = vpack.c.bf16 %v824, %v818
        %v867 = vpack.c.bf16 %v825, %v819
        %v868 = vpack.c.bf16 %v826, %v820
        %v869 = vpack.c.bf16 %v833, %v827
        %v870 = vpack.c.bf16 %v834, %v828
        %v871 = vpack.c.bf16 %v835, %v829
        %v872 = vpack.c.bf16 %v836, %v830
        %v873 = vpack.c.bf16 %v837, %v831
        %v874 = vpack.c.bf16 %v838, %v832
        %v875 = vpack.c.bf16 %v845, %v839
        %v876 = vpack.c.bf16 %v846, %v840
        %v877 = vpack.c.bf16 %v847, %v841
        %v878 = vpack.c.bf16 %v848, %v842
        %v879 = vpack.c.bf16 %v849, %v843
        %v880 = vpack.c.bf16 %v850, %v844
        %v881 = vld [vmem:[%s3] sm:$0xf]
        %v882 = vld [vmem:[%s3 + $0x4] sm:$0xf]
        %v883 = vld [vmem:[%s3 + $0x8] sm:$0xf]
        %v884 = vld [vmem:[%s3 + $0xc] sm:$0xf]
        %v885 = vld [vmem:[%s3 + $0x10] sm:$0xf]
        %v886 = vld [vmem:[%s3 + $0x14] sm:$0xf]
        %v887 = vld [vmem:[%s3 + $0x18] sm:$0xf]
        %v888 = vld [vmem:[%s3 + $0x1c] sm:$0xf]
        %v889 = vld [vmem:[%s3 + $0x20] sm:$0xf]
        %v890 = vld [vmem:[%s3 + $0x24] sm:$0xf]
        %v891 = vld [vmem:[%s3 + $0x28] sm:$0xf]
        %v892 = vld [vmem:[%s3 + $0x2c] sm:$0xf]
        %v893 = vld [vmem:[%s3 + $0x30] sm:$0xf]
        %v894 = vld [vmem:[%s3 + $0x34] sm:$0xf]
        %v895 = vld [vmem:[%s3 + $0x38] sm:$0xf]
        %v896 = vld [vmem:[%s3 + $0x3c] sm:$0xf]
        %v897 = vld [vmem:[%s3 + $0x40] sm:$0xf]
        %v898 = vld [vmem:[%s3 + $0x44] sm:$0xf]
        %v899 = vld [vmem:[%s3 + $0x48] sm:$0xf]
        %v900 = vld [vmem:[%s3 + $0x4c] sm:$0xf]
        %v901 = vld [vmem:[%s3 + $0x50] sm:$0xf]
        %v902 = vld [vmem:[%s3 + $0x54] sm:$0xf]
        %v903 = vld [vmem:[%s3 + $0x58] sm:$0xf]
        %v904 = vld [vmem:[%s3 + $0x5c] sm:$0xf]
        %v905 = vld [vmem:[%s3 + $0x60] sm:$0xf]
        %v906 = vld [vmem:[%s3 + $0x64] sm:$0xf]
        %v907 = vld [vmem:[%s3 + $0x68] sm:$0xf]
        %v908 = vld [vmem:[%s3 + $0x6c] sm:$0xf]
        %v909 = vld [vmem:[%s3 + $0x70] sm:$0xf]
        %v910 = vld [vmem:[%s3 + $0x74] sm:$0xf]
        %v911 = vld [vmem:[%s3 + $0x78] sm:$0xf]
        %v912 = vld [vmem:[%s3 + $0x7c] sm:$0xf]
        %v913 = vld [vmem:[%s3 + $0x80] sm:$0xf]
        %v914 = vld [vmem:[%s3 + $0x84] sm:$0xf]
        %v915 = vld [vmem:[%s3 + $0x88] sm:$0xf]
        %v916 = vld [vmem:[%s3 + $0x8c] sm:$0xf]
        %v917 = vld [vmem:[%s3 + $0x90] sm:$0xf]
        %v918 = vld [vmem:[%s3 + $0x94] sm:$0xf]
        %v919 = vld [vmem:[%s3 + $0x98] sm:$0xf]
        %v920 = vld [vmem:[%s3 + $0x9c] sm:$0xf]
        %v921 = vld [vmem:[%s3 + $0xa0] sm:$0xf]
        %v922 = vld [vmem:[%s3 + $0xa4] sm:$0xf]
        %v923 = vld [vmem:[%s3 + $0xa8] sm:$0xf]
        %v924 = vld [vmem:[%s3 + $0xac] sm:$0xf]
        %v925 = vld [vmem:[%s3 + $0xb0] sm:$0xf]
        %v926 = vld [vmem:[%s3 + $0xb4] sm:$0xf]
        %v927 = vld [vmem:[%s3 + $0xb8] sm:$0xf]
        %v928 = vld [vmem:[%s3 + $0xbc] sm:$0xf]
        %v929 = vld [vmem:[%s3 + $0xc0] sm:$0xf]
        %v930 = vld [vmem:[%s3 + $0xc4] sm:$0xf]
        %v931 = vld [vmem:[%s3 + $0xc8] sm:$0xf]
        %v932 = vld [vmem:[%s3 + $0xcc] sm:$0xf]
        %v933 = vld [vmem:[%s3 + $0xd0] sm:$0xf]
        %v934 = vld [vmem:[%s3 + $0xd4] sm:$0xf]
        %v935 = vld [vmem:[%s3 + $0xd8] sm:$0xf]
        %v936 = vld [vmem:[%s3 + $0xdc] sm:$0xf]
        %v937 = vld [vmem:[%s3 + $0xe0] sm:$0xf]
        %v938 = vld [vmem:[%s3 + $0xe4] sm:$0xf]
        %v939 = vld [vmem:[%s3 + $0xe8] sm:$0xf]
        %v940 = vld [vmem:[%s3 + $0xec] sm:$0xf]
        %v941 = vld [vmem:[%s3 + $0xf0] sm:$0xf]
        %v942 = vld [vmem:[%s3 + $0xf4] sm:$0xf]
        %v943 = vld [vmem:[%s3 + $0xf8] sm:$0xf]
        %v944 = vld [vmem:[%s3 + $0xfc] sm:$0xf]
        %v945 = vld [vmem:[%s3 + $0x100] sm:$0xf]
        %v946 = vld [vmem:[%s3 + $0x104] sm:$0xf]
        %v947 = vld [vmem:[%s3 + $0x108] sm:$0xf]
        %v948 = vld [vmem:[%s3 + $0x10c] sm:$0xf]
        %v949 = vld [vmem:[%s3 + $0x110] sm:$0xf]
        %v950 = vld [vmem:[%s3 + $0x114] sm:$0xf]
        %v951 = vld [vmem:[%s3 + $0x118] sm:$0xf]
        %v952 = vld [vmem:[%s3 + $0x11c] sm:$0xf]
        %v953 = vld [vmem:[%s3 + $0x120] sm:$0xf]
        %v954 = vld [vmem:[%s3 + $0x124] sm:$0xf]
        %v955 = vld [vmem:[%s3 + $0x128] sm:$0xf]
        %v956 = vld [vmem:[%s3 + $0x12c] sm:$0xf]
        %v957 = vld [vmem:[%s3 + $0x130] sm:$0xf]
        %v958 = vld [vmem:[%s3 + $0x134] sm:$0xf]
        %v959 = vld [vmem:[%s3 + $0x138] sm:$0xf]
        %v960 = vld [vmem:[%s3 + $0x13c] sm:$0xf]
        %v961 = vld [vmem:[%s3 + $0x140] sm:$0xf]
        %v962 = vld [vmem:[%s3 + $0x144] sm:$0xf]
        %v963 = vld [vmem:[%s3 + $0x148] sm:$0xf]
        %v964 = vld [vmem:[%s3 + $0x14c] sm:$0xf]
        %v965 = vld [vmem:[%s3 + $0x150] sm:$0xf]
        %v966 = vld [vmem:[%s3 + $0x154] sm:$0xf]
        %v967 = vld [vmem:[%s3 + $0x158] sm:$0xf]
        %v968 = vld [vmem:[%s3 + $0x15c] sm:$0xf]
        %v969 = vld [vmem:[%s3 + $0x160] sm:$0xf]
        %v970 = vld [vmem:[%s3 + $0x164] sm:$0xf]
        %v971 = vld [vmem:[%s3 + $0x168] sm:$0xf]
        %v972 = vld [vmem:[%s3 + $0x16c] sm:$0xf]
        %v973 = vld [vmem:[%s3 + $0x170] sm:$0xf]
        %v974 = vld [vmem:[%s3 + $0x174] sm:$0xf]
        %v975 = vld [vmem:[%s3 + $0x178] sm:$0xf]
        %v976 = vld [vmem:[%s3 + $0x17c] sm:$0xf]
        %v977 = vld [vmem:[%s1] sm:$0xff]
        %v978 = vld [vmem:[%s1 + $0x8] sm:$0xff]
        %v979 = vld [vmem:[%s1 + $0x10] sm:$0xff]
        %v980 = vld [vmem:[%s1 + $0x18] sm:$0xff]
        %v981 = vld [vmem:[%s1 + $0x20] sm:$0xff]
        %v982 = vld [vmem:[%s1 + $0x28] sm:$0xff]
        %v983 = vld [vmem:[%s1 + $0x30] sm:$0xff]
        %v984 = vld [vmem:[%s1 + $0x38] sm:$0xff]
        %v985 = vld [vmem:[%s1 + $0x40] sm:$0xff]
        %v986 = vld [vmem:[%s1 + $0x48] sm:$0xff]
        %v1083 = vunpack.c.l.b16 %v881
        %v1084 = vunpack.c.l.b16 %v882
        %v1085 = vunpack.c.l.b16 %v883
        %v1086 = vunpack.c.l.b16 %v884
        %v1087 = vunpack.c.l.b16 %v885
        %v1088 = vunpack.c.l.b16 %v886
        %v1089 = vunpack.c.l.b16 %v887
        %v1090 = vunpack.c.l.b16 %v888
        %v1091 = vunpack.c.l.b16 %v889
        %v1092 = vunpack.c.l.b16 %v890
        %v1093 = vunpack.c.l.b16 %v891
        %v1094 = vunpack.c.l.b16 %v892
        %v1095 = vunpack.c.l.b16 %v893
        %v1096 = vunpack.c.l.b16 %v894
        %v1097 = vunpack.c.l.b16 %v895
        %v1098 = vunpack.c.l.b16 %v896
        %v1099 = vunpack.c.l.b16 %v897
        %v1100 = vunpack.c.l.b16 %v898
        %v1101 = vunpack.c.l.b16 %v899
        %v1102 = vunpack.c.l.b16 %v900
        %v1103 = vunpack.c.l.b16 %v901
        %v1104 = vunpack.c.l.b16 %v902
        %v1105 = vunpack.c.l.b16 %v903
        %v1106 = vunpack.c.l.b16 %v904
        %v1107 = vunpack.c.l.b16 %v905
        %v1108 = vunpack.c.l.b16 %v906
        %v1109 = vunpack.c.l.b16 %v907
        %v1110 = vunpack.c.l.b16 %v908
        %v1111 = vunpack.c.l.b16 %v909
        %v1112 = vunpack.c.l.b16 %v910
        %v1113 = vunpack.c.l.b16 %v911
        %v1114 = vunpack.c.l.b16 %v912
        %v1115 = vunpack.c.l.b16 %v913
        %v1116 = vunpack.c.l.b16 %v914
        %v1117 = vunpack.c.l.b16 %v915
        %v1118 = vunpack.c.l.b16 %v916
        %v1119 = vunpack.c.l.b16 %v917
        %v1120 = vunpack.c.l.b16 %v918
        %v1121 = vunpack.c.l.b16 %v919
        %v1122 = vunpack.c.l.b16 %v920
        %v1123 = vunpack.c.l.b16 %v921
        %v1124 = vunpack.c.l.b16 %v922
        %v1125 = vunpack.c.l.b16 %v923
        %v1126 = vunpack.c.l.b16 %v924
        %v1127 = vunpack.c.l.b16 %v925
        %v1128 = vunpack.c.l.b16 %v926
        %v1129 = vunpack.c.l.b16 %v927
        %v1130 = vunpack.c.l.b16 %v928
        %v1131 = vunpack.c.l.b16 %v929
        %v1132 = vunpack.c.l.b16 %v930
        %v1133 = vunpack.c.l.b16 %v931
        %v1134 = vunpack.c.l.b16 %v932
        %v1135 = vunpack.c.l.b16 %v933
        %v1136 = vunpack.c.l.b16 %v934
        %v1137 = vunpack.c.l.b16 %v935
        %v1138 = vunpack.c.l.b16 %v936
        %v1139 = vunpack.c.l.b16 %v937
        %v1140 = vunpack.c.l.b16 %v938
        %v1141 = vunpack.c.l.b16 %v939
        %v1142 = vunpack.c.l.b16 %v940
        %v1143 = vunpack.c.l.b16 %v941
        %v1144 = vunpack.c.l.b16 %v942
        %v1145 = vunpack.c.l.b16 %v943
        %v1146 = vunpack.c.l.b16 %v944
        %v1147 = vunpack.c.l.b16 %v945
        %v1148 = vunpack.c.l.b16 %v946
        %v1149 = vunpack.c.l.b16 %v947
        %v1150 = vunpack.c.l.b16 %v948
        %v1151 = vunpack.c.l.b16 %v949
        %v1152 = vunpack.c.l.b16 %v950
        %v1153 = vunpack.c.l.b16 %v951
        %v1154 = vunpack.c.l.b16 %v952
        %v1155 = vunpack.c.l.b16 %v953
        %v1156 = vunpack.c.l.b16 %v954
        %v1157 = vunpack.c.l.b16 %v955
        %v1158 = vunpack.c.l.b16 %v956
        %v1159 = vunpack.c.l.b16 %v957
        %v1160 = vunpack.c.l.b16 %v958
        %v1161 = vunpack.c.l.b16 %v959
        %v1162 = vunpack.c.l.b16 %v960
        %v1163 = vunpack.c.l.b16 %v961
        %v1164 = vunpack.c.l.b16 %v962
        %v1165 = vunpack.c.l.b16 %v963
        %v1166 = vunpack.c.l.b16 %v964
        %v1167 = vunpack.c.l.b16 %v965
        %v1168 = vunpack.c.l.b16 %v966
        %v1169 = vunpack.c.l.b16 %v967
        %v1170 = vunpack.c.l.b16 %v968
        %v1171 = vunpack.c.l.b16 %v969
        %v1172 = vunpack.c.l.b16 %v970
        %v1173 = vunpack.c.l.b16 %v971
        %v1174 = vunpack.c.l.b16 %v972
        %v1175 = vunpack.c.l.b16 %v973
        %v1176 = vunpack.c.l.b16 %v974
        %v1177 = vunpack.c.l.b16 %v975
        %v1178 = vunpack.c.l.b16 %v976
        %v1179 = vpack.c.b16 %v1084, %v1083
        %v1180 = vpack.c.b16 %v1086, %v1085
        %v1181 = vpack.c.b16 %v1088, %v1087
        %v1182 = vpack.c.b16 %v1090, %v1089
        %v1183 = vpack.c.b16 %v1092, %v1091
        %v1184 = vpack.c.b16 %v1094, %v1093
        %v1185 = vpack.c.b16 %v1096, %v1095
        %v1186 = vpack.c.b16 %v1098, %v1097
        %v1187 = vpack.c.b16 %v1100, %v1099
        %v1188 = vpack.c.b16 %v1102, %v1101
        %v1189 = vpack.c.b16 %v1104, %v1103
        %v1190 = vpack.c.b16 %v1106, %v1105
        %v1191 = vpack.c.b16 %v1108, %v1107
        %v1192 = vpack.c.b16 %v1110, %v1109
        %v1193 = vpack.c.b16 %v1112, %v1111
        %v1194 = vpack.c.b16 %v1114, %v1113
        %v1195 = vpack.c.b16 %v1116, %v1115
        %v1196 = vpack.c.b16 %v1118, %v1117
        %v1197 = vpack.c.b16 %v1120, %v1119
        %v1198 = vpack.c.b16 %v1122, %v1121
        %v1199 = vpack.c.b16 %v1124, %v1123
        %v1200 = vpack.c.b16 %v1126, %v1125
        %v1201 = vpack.c.b16 %v1128, %v1127
        %v1202 = vpack.c.b16 %v1130, %v1129
        %v1203 = vpack.c.b16 %v1132, %v1131
        %v1204 = vpack.c.b16 %v1134, %v1133
        %v1205 = vpack.c.b16 %v1136, %v1135
        %v1206 = vpack.c.b16 %v1138, %v1137
        %v1207 = vpack.c.b16 %v1140, %v1139
        %v1208 = vpack.c.b16 %v1142, %v1141
        %v1209 = vpack.c.b16 %v1144, %v1143
        %v1210 = vpack.c.b16 %v1146, %v1145
        %v1211 = vpack.c.b16 %v1148, %v1147
        %v1212 = vpack.c.b16 %v1150, %v1149
        %v1213 = vpack.c.b16 %v1152, %v1151
        %v1214 = vpack.c.b16 %v1154, %v1153
        %v1215 = vpack.c.b16 %v1156, %v1155
        %v1216 = vpack.c.b16 %v1158, %v1157
        %v1217 = vpack.c.b16 %v1160, %v1159
        %v1218 = vpack.c.b16 %v1162, %v1161
        %v1219 = vpack.c.b16 %v1164, %v1163
        %v1220 = vpack.c.b16 %v1166, %v1165
        %v1221 = vpack.c.b16 %v1168, %v1167
        %v1222 = vpack.c.b16 %v1170, %v1169
        %v1223 = vpack.c.b16 %v1172, %v1171
        %v1224 = vpack.c.b16 %v1174, %v1173
        %v1225 = vpack.c.b16 %v1176, %v1175
        %v1226 = vpack.c.b16 %v1178, %v1177
        %1275 = vmatpush.bf16.msra.mxu0 %v1186
        %1276 = vmatpush.bf16.msra.mxu0 %v1185
        %1277 = vmatpush.bf16.msra.mxu0 %v1184
        %1278 = vmatpush.bf16.msra.mxu0 %v1183
        %1279 = vmatpush.bf16.msra.mxu0 %v1182
        %1280 = vmatpush.bf16.msra.mxu0 %v1181
        %1281 = vmatpush.bf16.msra.mxu0 %v1180
        %1282 = vmatpush.bf16.msra.mxu0 %v1179
        %1283 = vmatmul.bf16.gmra.mxu0 %v851
        %v1284 = vpop.f32.mrf.mxu0
        %v1285 = vadd.f32 %v977, %v1284
        %v1286 = vpop.f32.mrf.mxu0
        %v1287 = vadd.f32 %v978, %v1286
        %1288 = vmatmul.bf16.gmra.mxu0 %v857
        %v1289 = vpop.f32.mrf.mxu0
        %v1290 = vadd.f32 %v979, %v1289
        %v1291 = vpop.f32.mrf.mxu0
        %v1292 = vadd.f32 %v980, %v1291
        %1293 = vmatmul.bf16.gmra.mxu0 %v863
        %v1294 = vpop.f32.mrf.mxu0
        %v1295 = vadd.f32 %v981, %v1294
        %v1296 = vpop.f32.mrf.mxu0
        %v1297 = vadd.f32 %v982, %v1296
        %1298 = vmatmul.bf16.gmra.mxu0 %v869
        %v1299 = vpop.f32.mrf.mxu0
        %v1300 = vadd.f32 %v983, %v1299
        %v1301 = vpop.f32.mrf.mxu0
        %v1302 = vadd.f32 %v984, %v1301
        %1303 = vmatmul.bf16.gmra.mxu0 %v875
        %v1304 = vpop.f32.mrf.mxu0
        %v1305 = vadd.f32 %v985, %v1304
        %v1306 = vpop.f32.mrf.mxu0
        %v1307 = vadd.f32 %v986, %v1306
        %1308 = vdwg.mxu0
        %1309 = vmatpush.bf16.msra.mxu0 %v1194
        %1310 = vmatpush.bf16.msra.mxu0 %v1193
        %1311 = vmatpush.bf16.msra.mxu0 %v1192
        %1312 = vmatpush.bf16.msra.mxu0 %v1191
        %1313 = vmatpush.bf16.msra.mxu0 %v1190
        %1314 = vmatpush.bf16.msra.mxu0 %v1189
        %1315 = vmatpush.bf16.msra.mxu0 %v1188
        %1316 = vmatpush.bf16.msra.mxu0 %v1187
        %1317 = vmatmul.bf16.gmra.mxu0 %v852
        %v1318 = vpop.f32.mrf.mxu0
        %v1319 = vadd.f32 %v1285, %v1318
        %v1320 = vpop.f32.mrf.mxu0
        %v1321 = vadd.f32 %v1287, %v1320
        %1322 = vmatmul.bf16.gmra.mxu0 %v858
        %v1323 = vpop.f32.mrf.mxu0
        %v1324 = vadd.f32 %v1290, %v1323
        %v1325 = vpop.f32.mrf.mxu0
        %v1326 = vadd.f32 %v1292, %v1325
        %1327 = vmatmul.bf16.gmra.mxu0 %v864
        %v1328 = vpop.f32.mrf.mxu0
        %v1329 = vadd.f32 %v1295, %v1328
        %v1330 = vpop.f32.mrf.mxu0
        %v1331 = vadd.f32 %v1297, %v1330
        %1332 = vmatmul.bf16.gmra.mxu0 %v870
        %v1333 = vpop.f32.mrf.mxu0
        %v1334 = vadd.f32 %v1300, %v1333
        %v1335 = vpop.f32.mrf.mxu0
        %v1336 = vadd.f32 %v1302, %v1335
        %1337 = vmatmul.bf16.gmra.mxu0 %v876
        %v1338 = vpop.f32.mrf.mxu0
        %v1339 = vadd.f32 %v1305, %v1338
        %v1340 = vpop.f32.mrf.mxu0
        %v1341 = vadd.f32 %v1307, %v1340
        %1342 = vdwg.mxu0
        %1343 = vmatpush.bf16.msra.mxu0 %v1202
        %1344 = vmatpush.bf16.msra.mxu0 %v1201
        %1345 = vmatpush.bf16.msra.mxu0 %v1200
        %1346 = vmatpush.bf16.msra.mxu0 %v1199
        %1347 = vmatpush.bf16.msra.mxu0 %v1198
        %1348 = vmatpush.bf16.msra.mxu0 %v1197
        %1349 = vmatpush.bf16.msra.mxu0 %v1196
        %1350 = vmatpush.bf16.msra.mxu0 %v1195
        %1351 = vmatmul.bf16.gmra.mxu0 %v853
        %v1352 = vpop.f32.mrf.mxu0
        %v1353 = vadd.f32 %v1319, %v1352
        %v1354 = vpop.f32.mrf.mxu0
        %v1355 = vadd.f32 %v1321, %v1354
        %1356 = vmatmul.bf16.gmra.mxu0 %v859
        %v1357 = vpop.f32.mrf.mxu0
        %v1358 = vadd.f32 %v1324, %v1357
        %v1359 = vpop.f32.mrf.mxu0
        %v1360 = vadd.f32 %v1326, %v1359
        %1361 = vmatmul.bf16.gmra.mxu0 %v865
        %v1362 = vpop.f32.mrf.mxu0
        %v1363 = vadd.f32 %v1329, %v1362
        %v1364 = vpop.f32.mrf.mxu0
        %v1365 = vadd.f32 %v1331, %v1364
        %1366 = vmatmul.bf16.gmra.mxu0 %v871
        %v1367 = vpop.f32.mrf.mxu0
        %v1368 = vadd.f32 %v1334, %v1367
        %v1369 = vpop.f32.mrf.mxu0
        %v1370 = vadd.f32 %v1336, %v1369
        %1371 = vmatmul.bf16.gmra.mxu0 %v877
        %v1372 = vpop.f32.mrf.mxu0
        %v1373 = vadd.f32 %v1339, %v1372
        %v1374 = vpop.f32.mrf.mxu0
        %v1375 = vadd.f32 %v1341, %v1374
        %1376 = vdwg.mxu0
        %1377 = vmatpush.bf16.msra.mxu0 %v1210
        %1378 = vmatpush.bf16.msra.mxu0 %v1209
        %1379 = vmatpush.bf16.msra.mxu0 %v1208
        %1380 = vmatpush.bf16.msra.mxu0 %v1207
        %1381 = vmatpush.bf16.msra.mxu0 %v1206
        %1382 = vmatpush.bf16.msra.mxu0 %v1205
        %1383 = vmatpush.bf16.msra.mxu0 %v1204
        %1384 = vmatpush.bf16.msra.mxu0 %v1203
        %1385 = vmatmul.bf16.gmra.mxu0 %v854
        %v1386 = vpop.f32.mrf.mxu0
        %v1387 = vadd.f32 %v1353, %v1386
        %v1388 = vpop.f32.mrf.mxu0
        %v1389 = vadd.f32 %v1355, %v1388
        %1390 = vmatmul.bf16.gmra.mxu0 %v860
        %v1391 = vpop.f32.mrf.mxu0
        %v1392 = vadd.f32 %v1358, %v1391
        %v1393 = vpop.f32.mrf.mxu0
        %v1394 = vadd.f32 %v1360, %v1393
        %1395 = vmatmul.bf16.gmra.mxu0 %v866
        %v1396 = vpop.f32.mrf.mxu0
        %v1397 = vadd.f32 %v1363, %v1396
        %v1398 = vpop.f32.mrf.mxu0
        %v1399 = vadd.f32 %v1365, %v1398
        %1400 = vmatmul.bf16.gmra.mxu0 %v872
        %v1401 = vpop.f32.mrf.mxu0
        %v1402 = vadd.f32 %v1368, %v1401
        %v1403 = vpop.f32.mrf.mxu0
        %v1404 = vadd.f32 %v1370, %v1403
        %1405 = vmatmul.bf16.gmra.mxu0 %v878
        %v1406 = vpop.f32.mrf.mxu0
        %v1407 = vadd.f32 %v1373, %v1406
        %v1408 = vpop.f32.mrf.mxu0
        %v1409 = vadd.f32 %v1375, %v1408
        %1410 = vdwg.mxu0
        %1411 = vmatpush.bf16.msra.mxu0 %v1218
        %1412 = vmatpush.bf16.msra.mxu0 %v1217
        %1413 = vmatpush.bf16.msra.mxu0 %v1216
        %1414 = vmatpush.bf16.msra.mxu0 %v1215
        %1415 = vmatpush.bf16.msra.mxu0 %v1214
        %1416 = vmatpush.bf16.msra.mxu0 %v1213
        %1417 = vmatpush.bf16.msra.mxu0 %v1212
        %1418 = vmatpush.bf16.msra.mxu0 %v1211
        %1419 = vmatmul.bf16.gmra.mxu0 %v855
        %v1420 = vpop.f32.mrf.mxu0
        %v1421 = vadd.f32 %v1387, %v1420
        %v1422 = vpop.f32.mrf.mxu0
        %v1423 = vadd.f32 %v1389, %v1422
        %1424 = vmatmul.bf16.gmra.mxu0 %v861
        %v1425 = vpop.f32.mrf.mxu0
        %v1426 = vadd.f32 %v1392, %v1425
        %v1427 = vpop.f32.mrf.mxu0
        %v1428 = vadd.f32 %v1394, %v1427
        %1429 = vmatmul.bf16.gmra.mxu0 %v867
        %v1430 = vpop.f32.mrf.mxu0
        %v1431 = vadd.f32 %v1397, %v1430
        %v1432 = vpop.f32.mrf.mxu0
        %v1433 = vadd.f32 %v1399, %v1432
        %1434 = vmatmul.bf16.gmra.mxu0 %v873
        %v1435 = vpop.f32.mrf.mxu0
        %v1436 = vadd.f32 %v1402, %v1435
        %v1437 = vpop.f32.mrf.mxu0
        %v1438 = vadd.f32 %v1404, %v1437
        %1439 = vmatmul.bf16.gmra.mxu0 %v879
        %v1440 = vpop.f32.mrf.mxu0
        %v1441 = vadd.f32 %v1407, %v1440
        %v1442 = vpop.f32.mrf.mxu0
        %v1443 = vadd.f32 %v1409, %v1442
        %1444 = vdwg.mxu0
        %1445 = vmatpush.bf16.msra.mxu0 %v1226
        %1446 = vmatpush.bf16.msra.mxu0 %v1225
        %1447 = vmatpush.bf16.msra.mxu0 %v1224
        %1448 = vmatpush.bf16.msra.mxu0 %v1223
        %1449 = vmatpush.bf16.msra.mxu0 %v1222
        %1450 = vmatpush.bf16.msra.mxu0 %v1221
        %1451 = vmatpush.bf16.msra.mxu0 %v1220
        %1452 = vmatpush.bf16.msra.mxu0 %v1219
        %1453 = vmatmul.bf16.gmra.mxu0 %v856
        %v1454 = vpop.f32.mrf.mxu0
        %v1455 = vadd.f32 %v1421, %v1454
        %v1456 = vpop.f32.mrf.mxu0
        %v1457 = vadd.f32 %v1423, %v1456
        %1458 = vmatmul.bf16.gmra.mxu0 %v862
        %v1459 = vpop.f32.mrf.mxu0
        %v1460 = vadd.f32 %v1426, %v1459
        %v1461 = vpop.f32.mrf.mxu0
        %v1462 = vadd.f32 %v1428, %v1461
        %1463 = vmatmul.bf16.gmra.mxu0 %v868
        %v1464 = vpop.f32.mrf.mxu0
        %v1465 = vadd.f32 %v1431, %v1464
        %v1466 = vpop.f32.mrf.mxu0
        %v1467 = vadd.f32 %v1433, %v1466
        %1468 = vmatmul.bf16.gmra.mxu0 %v874
        %v1469 = vpop.f32.mrf.mxu0
        %v1470 = vadd.f32 %v1436, %v1469
        %v1471 = vpop.f32.mrf.mxu0
        %v1472 = vadd.f32 %v1438, %v1471
        %1473 = vmatmul.bf16.gmra.mxu0 %v880
        %v1474 = vpop.f32.mrf.mxu0
        %v1475 = vadd.f32 %v1441, %v1474
        %v1476 = vpop.f32.mrf.mxu0
        %v1477 = vadd.f32 %v1443, %v1476
        %1478 = vdwg.mxu0
        %v1479 = vld [vmem:[%s2] sm:$0xff]
        %v1480 = vld [vmem:[%s2 + $0x8] sm:$0xff]
        %v1481 = vld [vmem:[%s2 + $0x10] sm:$0xff]
        %v1482 = vld [vmem:[%s2 + $0x18] sm:$0xff]
        %v1483 = vld [vmem:[%s2 + $0x20] sm:$0xff]
        %v1484 = vld [vmem:[%s2 + $0x28] sm:$0xff]
        %v1485 = vld [vmem:[%s2 + $0x30] sm:$0xff]
        %v1486 = vld [vmem:[%s2 + $0x38] sm:$0xff]
        %v1487 = vld [vmem:[%s2 + $0x40] sm:$0xff]
        %v1488 = vld [vmem:[%s2 + $0x48] sm:$0xff]
        %v1489 = vld [vmem:[%s4] sm:$0x1]
        %v1490 = vld [vmem:[%s5] sm:$0x1]
        %1491 = vadd.xlane.f32.xlu0 %v1455
        %v1492 = vpop.xlane.xlu0 %1491
        %1493 = vadd.xlane.f32.xlu0 %v1457
        %v1494 = vpop.xlane.xlu0 %1493
        %1495 = vadd.xlane.f32.xlu0 %v1460
        %v1496 = vpop.xlane.xlu0 %1495
        %1497 = vadd.xlane.f32.xlu0 %v1462
        %v1498 = vpop.xlane.xlu0 %1497
        %1499 = vadd.xlane.f32.xlu0 %v1465
        %v1500 = vpop.xlane.xlu0 %1499
        %1501 = vadd.xlane.f32.xlu0 %v1467
        %v1502 = vpop.xlane.xlu0 %1501
        %1503 = vadd.xlane.f32.xlu0 %v1470
        %v1504 = vpop.xlane.xlu0 %1503
        %1505 = vadd.xlane.f32.xlu0 %v1472
        %v1506 = vpop.xlane.xlu0 %1505
        %1507 = vadd.xlane.f32.xlu0 %v1475
        %v1508 = vpop.xlane.xlu0 %1507
        %1509 = vadd.xlane.f32.xlu0 %v1477
        %v1510 = vpop.xlane.xlu0 %1509
        %v1511 = vrcp.pop 128.0
        %v1512 = vmul.f32 128.0, %v1511
        %v1513 = vsub.f32 1.0, %v1512
        %v1514 = vmul.f32 %v1511, %v1513
        %v1515 = vadd.f32 %v1511, %v1514
        %vm1516 = vweird.f32 %v1511
        %v1517 = vsel %vm1516, %v1511, %v1515
        %v1518 = vmul.f32 %v1492, %v1517
        %v1519 = vmul.f32 %v1494, %v1517
        %v1520 = vmul.f32 %v1496, %v1517
        %v1521 = vmul.f32 %v1498, %v1517
        %v1522 = vmul.f32 %v1500, %v1517
        %v1523 = vmul.f32 %v1502, %v1517
        %v1524 = vmul.f32 %v1504, %v1517
        %v1525 = vmul.f32 %v1506, %v1517
        %v1526 = vmul.f32 %v1508, %v1517
        %v1527 = vmul.f32 %v1510, %v1517
        %v1528 = vsub.f32 %v1455, %v1518
        %v1529 = vsub.f32 %v1457, %v1519
        %v1530 = vsub.f32 %v1460, %v1520
        %v1531 = vsub.f32 %v1462, %v1521
        %v1532 = vsub.f32 %v1465, %v1522
        %v1533 = vsub.f32 %v1467, %v1523
        %v1534 = vsub.f32 %v1470, %v1524
        %v1535 = vsub.f32 %v1472, %v1525
        %v1536 = vsub.f32 %v1475, %v1526
        %v1537 = vsub.f32 %v1477, %v1527
        %v1538 = vmul.f32 %v1528, %v1528
        %v1539 = vmul.f32 %v1529, %v1529
        %v1540 = vmul.f32 %v1530, %v1530
        %v1541 = vmul.f32 %v1531, %v1531
        %v1542 = vmul.f32 %v1532, %v1532
        %v1543 = vmul.f32 %v1533, %v1533
        %v1544 = vmul.f32 %v1534, %v1534
        %v1545 = vmul.f32 %v1535, %v1535
        %v1546 = vmul.f32 %v1536, %v1536
        %v1547 = vmul.f32 %v1537, %v1537
        %1548 = vadd.xlane.f32.xlu0 %v1538
        %v1549 = vpop.xlane.xlu0 %1548
        %1550 = vadd.xlane.f32.xlu0 %v1539
        %v1551 = vpop.xlane.xlu0 %1550
        %1552 = vadd.xlane.f32.xlu0 %v1540
        %v1553 = vpop.xlane.xlu0 %1552
        %1554 = vadd.xlane.f32.xlu0 %v1541
        %v1555 = vpop.xlane.xlu0 %1554
        %1556 = vadd.xlane.f32.xlu0 %v1542
        %v1557 = vpop.xlane.xlu0 %1556
        %1558 = vadd.xlane.f32.xlu0 %v1543
        %v1559 = vpop.xlane.xlu0 %1558
        %1560 = vadd.xlane.f32.xlu0 %v1544
        %v1561 = vpop.xlane.xlu0 %1560
        %1562 = vadd.xlane.f32.xlu0 %v1545
        %v1563 = vpop.xlane.xlu0 %1562
        %1564 = vadd.xlane.f32.xlu0 %v1546
        %v1565 = vpop.xlane.xlu0 %1564
        %1566 = vadd.xlane.f32.xlu0 %v1547
        %v1567 = vpop.xlane.xlu0 %1566
        %v1568 = vmul.f32 %v1549, %v1517
        %v1569 = vmul.f32 %v1551, %v1517
        %v1570 = vmul.f32 %v1553, %v1517
        %v1571 = vmul.f32 %v1555, %v1517
        %v1572 = vmul.f32 %v1557, %v1517
        %v1573 = vmul.f32 %v1559, %v1517
        %v1574 = vmul.f32 %v1561, %v1517
        %v1575 = vmul.f32 %v1563, %v1517
        %v1576 = vmul.f32 %v1565, %v1517
        %v1577 = vmul.f32 %v1567, %v1517
        %v1578 = vadd.f32 %v1568, 1e-06
        %v1579 = vadd.f32 %v1569, 1e-06
        %v1580 = vadd.f32 %v1570, 1e-06
        %v1581 = vadd.f32 %v1571, 1e-06
        %v1582 = vadd.f32 %v1572, 1e-06
        %v1583 = vadd.f32 %v1573, 1e-06
        %v1584 = vadd.f32 %v1574, 1e-06
        %v1585 = vadd.f32 %v1575, 1e-06
        %v1586 = vadd.f32 %v1576, 1e-06
        %v1587 = vadd.f32 %v1577, 1e-06
        %v1588 = vrsqrt.pop %v1578
        %v1589 = vmul.f32 %v1588, %v1578
        %v1590 = vmul.f32 %v1589, %v1588
        %v1591 = vmul.f32 0.5, %v1590
        %v1592 = vsub.f32 1.5, %v1591
        %v1593 = vmul.f32 %v1588, %v1592
        %vm1594 = vweird.f32 %v1578
        %vm1595 = vweird.f32 %v1588
        %vm1596 = vmor %vm1594, %vm1595
        %v1597 = vsel %vm1596, %v1588, %v1593
        %v1598 = vrsqrt.pop %v1579
        %v1599 = vmul.f32 %v1598, %v1579
        %v1600 = vmul.f32 %v1599, %v1598
        %v1601 = vmul.f32 0.5, %v1600
        %v1602 = vsub.f32 1.5, %v1601
        %v1603 = vmul.f32 %v1598, %v1602
        %vm1604 = vweird.f32 %v1579
        %vm1605 = vweird.f32 %v1598
        %vm1606 = vmor %vm1604, %vm1605
        %v1607 = vsel %vm1606, %v1598, %v1603
        %v1608 = vrsqrt.pop %v1580
        %v1609 = vmul.f32 %v1608, %v1580
        %v1610 = vmul.f32 %v1609, %v1608
        %v1611 = vmul.f32 0.5, %v1610
        %v1612 = vsub.f32 1.5, %v1611
        %v1613 = vmul.f32 %v1608, %v1612
        %vm1614 = vweird.f32 %v1580
        %vm1615 = vweird.f32 %v1608
        %vm1616 = vmor %vm1614, %vm1615
        %v1617 = vsel %vm1616, %v1608, %v1613
        %v1618 = vrsqrt.pop %v1581
        %v1619 = vmul.f32 %v1618, %v1581
        %v1620 = vmul.f32 %v1619, %v1618
        %v1621 = vmul.f32 0.5, %v1620
        %v1622 = vsub.f32 1.5, %v1621
        %v1623 = vmul.f32 %v1618, %v1622
        %vm1624 = vweird.f32 %v1581
        %vm1625 = vweird.f32 %v1618
        %vm1626 = vmor %vm1624, %vm1625
        %v1627 = vsel %vm1626, %v1618, %v1623
        %v1628 = vrsqrt.pop %v1582
        %v1629 = vmul.f32 %v1628, %v1582
        %v1630 = vmul.f32 %v1629, %v1628
        %v1631 = vmul.f32 0.5, %v1630
        %v1632 = vsub.f32 1.5, %v1631
        %v1633 = vmul.f32 %v1628, %v1632
        %vm1634 = vweird.f32 %v1582
        %vm1635 = vweird.f32 %v1628
        %vm1636 = vmor %vm1634, %vm1635
        %v1637 = vsel %vm1636, %v1628, %v1633
        %v1638 = vrsqrt.pop %v1583
        %v1639 = vmul.f32 %v1638, %v1583
        %v1640 = vmul.f32 %v1639, %v1638
        %v1641 = vmul.f32 0.5, %v1640
        %v1642 = vsub.f32 1.5, %v1641
        %v1643 = vmul.f32 %v1638, %v1642
        %vm1644 = vweird.f32 %v1583
        %vm1645 = vweird.f32 %v1638
        %vm1646 = vmor %vm1644, %vm1645
        %v1647 = vsel %vm1646, %v1638, %v1643
        %v1648 = vrsqrt.pop %v1584
        %v1649 = vmul.f32 %v1648, %v1584
        %v1650 = vmul.f32 %v1649, %v1648
        %v1651 = vmul.f32 0.5, %v1650
        %v1652 = vsub.f32 1.5, %v1651
        %v1653 = vmul.f32 %v1648, %v1652
        %vm1654 = vweird.f32 %v1584
        %vm1655 = vweird.f32 %v1648
        %vm1656 = vmor %vm1654, %vm1655
        %v1657 = vsel %vm1656, %v1648, %v1653
        %v1658 = vrsqrt.pop %v1585
        %v1659 = vmul.f32 %v1658, %v1585
        %v1660 = vmul.f32 %v1659, %v1658
        %v1661 = vmul.f32 0.5, %v1660
        %v1662 = vsub.f32 1.5, %v1661
        %v1663 = vmul.f32 %v1658, %v1662
        %vm1664 = vweird.f32 %v1585
        %vm1665 = vweird.f32 %v1658
        %vm1666 = vmor %vm1664, %vm1665
        %v1667 = vsel %vm1666, %v1658, %v1663
        %v1668 = vrsqrt.pop %v1586
        %v1669 = vmul.f32 %v1668, %v1586
        %v1670 = vmul.f32 %v1669, %v1668
        %v1671 = vmul.f32 0.5, %v1670
        %v1672 = vsub.f32 1.5, %v1671
        %v1673 = vmul.f32 %v1668, %v1672
        %vm1674 = vweird.f32 %v1586
        %vm1675 = vweird.f32 %v1668
        %vm1676 = vmor %vm1674, %vm1675
        %v1677 = vsel %vm1676, %v1668, %v1673
        %v1678 = vrsqrt.pop %v1587
        %v1679 = vmul.f32 %v1678, %v1587
        %v1680 = vmul.f32 %v1679, %v1678
        %v1681 = vmul.f32 0.5, %v1680
        %v1682 = vsub.f32 1.5, %v1681
        %v1683 = vmul.f32 %v1678, %v1682
        %vm1684 = vweird.f32 %v1587
        %vm1685 = vweird.f32 %v1678
        %vm1686 = vmor %vm1684, %vm1685
        %v1687 = vsel %vm1686, %v1678, %v1683
        %v1688 = vmul.f32 %v1528, %v1597
        %v1689 = vmul.f32 %v1529, %v1607
        %v1690 = vmul.f32 %v1530, %v1617
        %v1691 = vmul.f32 %v1531, %v1627
        %v1692 = vmul.f32 %v1532, %v1637
        %v1693 = vmul.f32 %v1533, %v1647
        %v1694 = vmul.f32 %v1534, %v1657
        %v1695 = vmul.f32 %v1535, %v1667
        %v1696 = vmul.f32 %v1536, %v1677
        %v1697 = vmul.f32 %v1537, %v1687
        %v1699 = vperm.slane %v1489, 0
        %v1701 = vmul.f32 %v1688, %v1699
        %v1702 = vmul.f32 %v1689, %v1699
        %v1703 = vmul.f32 %v1690, %v1699
        %v1704 = vmul.f32 %v1691, %v1699
        %v1705 = vmul.f32 %v1692, %v1699
        %v1706 = vmul.f32 %v1693, %v1699
        %v1707 = vmul.f32 %v1694, %v1699
        %v1708 = vmul.f32 %v1695, %v1699
        %v1709 = vmul.f32 %v1696, %v1699
        %v1710 = vmul.f32 %v1697, %v1699
        %v1712 = vperm.slane %v1490, 0
        %v1714 = vadd.f32 %v1701, %v1712
        %v1715 = vadd.f32 %v1702, %v1712
        %v1716 = vadd.f32 %v1703, %v1712
        %v1717 = vadd.f32 %v1704, %v1712
        %v1718 = vadd.f32 %v1705, %v1712
        %v1719 = vadd.f32 %v1706, %v1712
        %v1720 = vadd.f32 %v1707, %v1712
        %v1721 = vadd.f32 %v1708, %v1712
        %v1722 = vadd.f32 %v1709, %v1712
        %v1723 = vadd.f32 %v1710, %v1712
        %v1724 = vpack.c.bf16 %v1715, %v1714
        %v1725 = vpack.c.bf16 %v1717, %v1716
        %v1726 = vpack.c.bf16 %v1719, %v1718
        %v1727 = vpack.c.bf16 %v1721, %v1720
        %v1728 = vpack.c.bf16 %v1723, %v1722
        %v1729 = vld [vmem:[%s6] sm:$0xff]
        %v1730 = vld [vmem:[%s6 + $0x8] sm:$0xf]
        %v1731 = vld [vmem:[%s6 + $0xc] sm:$0xff]
        %v1732 = vld [vmem:[%s6 + $0x14] sm:$0xf]
        %v1733 = vld [vmem:[%s6 + $0x18] sm:$0xff]
        %v1734 = vld [vmem:[%s6 + $0x20] sm:$0xf]
        %v1735 = vld [vmem:[%s6 + $0x24] sm:$0xff]
        %v1736 = vld [vmem:[%s6 + $0x2c] sm:$0xf]
        %v1737 = vld [vmem:[%s6 + $0x30] sm:$0xff]
        %v1738 = vld [vmem:[%s6 + $0x38] sm:$0xf]
        %v1739 = vld [vmem:[%s6 + $0x3c] sm:$0xff]
        %v1740 = vld [vmem:[%s6 + $0x44] sm:$0xf]
        %v1741 = vld [vmem:[%s6 + $0x48] sm:$0xff]
        %v1742 = vld [vmem:[%s6 + $0x50] sm:$0xf]
        %v1743 = vld [vmem:[%s6 + $0x54] sm:$0xff]
        %v1744 = vld [vmem:[%s6 + $0x5c] sm:$0xf]
        %v1745 = vld [vmem:[%s6 + $0x60] sm:$0xff]
        %v1746 = vld [vmem:[%s6 + $0x68] sm:$0xf]
        %v1747 = vld [vmem:[%s6 + $0x6c] sm:$0xff]
        %v1748 = vld [vmem:[%s6 + $0x74] sm:$0xf]
        %v1749 = vld [vmem:[%s6 + $0x78] sm:$0xff]
        %v1750 = vld [vmem:[%s6 + $0x80] sm:$0xf]
        %v1751 = vld [vmem:[%s6 + $0x84] sm:$0xff]
        %v1752 = vld [vmem:[%s6 + $0x8c] sm:$0xf]
        %v1753 = vld [vmem:[%s6 + $0x90] sm:$0xff]
        %v1754 = vld [vmem:[%s6 + $0x98] sm:$0xf]
        %v1755 = vld [vmem:[%s6 + $0x9c] sm:$0xff]
        %v1756 = vld [vmem:[%s6 + $0xa4] sm:$0xf]
        %v1757 = vld [vmem:[%s6 + $0xa8] sm:$0xff]
        %v1758 = vld [vmem:[%s6 + $0xb0] sm:$0xf]
        %v1759 = vld [vmem:[%s6 + $0xb4] sm:$0xff]
        %v1760 = vld [vmem:[%s6 + $0xbc] sm:$0xf]
        %v1761 = vld [vmem:[%s7] sm:$0x7]
        %v1763 = vperm.slane %v1761, 0
        %v1764 = vperm.slane %v1761, 1
        %v1765 = vperm.slane %v1761, 2
        %v1801 = vunpack.c.l.b16 %v1729
        %v1802 = vunpack.c.h.b16 %v1729
        %v1803 = vunpack.c.l.b16 %v1730
        %v1804 = vunpack.c.l.b16 %v1731
        %v1805 = vunpack.c.h.b16 %v1731
        %v1806 = vunpack.c.l.b16 %v1732
        %v1807 = vunpack.c.l.b16 %v1733
        %v1808 = vunpack.c.h.b16 %v1733
        %v1809 = vunpack.c.l.b16 %v1734
        %v1810 = vunpack.c.l.b16 %v1735
        %v1811 = vunpack.c.h.b16 %v1735
        %v1812 = vunpack.c.l.b16 %v1736
        %v1813 = vunpack.c.l.b16 %v1737
        %v1814 = vunpack.c.h.b16 %v1737
        %v1815 = vunpack.c.l.b16 %v1738
        %v1816 = vunpack.c.l.b16 %v1739
        %v1817 = vunpack.c.h.b16 %v1739
        %v1818 = vunpack.c.l.b16 %v1740
        %v1819 = vunpack.c.l.b16 %v1741
        %v1820 = vunpack.c.h.b16 %v1741
        %v1821 = vunpack.c.l.b16 %v1742
        %v1822 = vunpack.c.l.b16 %v1743
        %v1823 = vunpack.c.h.b16 %v1743
        %v1824 = vunpack.c.l.b16 %v1744
        %v1825 = vunpack.c.l.b16 %v1745
        %v1826 = vunpack.c.h.b16 %v1745
        %v1827 = vunpack.c.l.b16 %v1746
        %v1828 = vunpack.c.l.b16 %v1747
        %v1829 = vunpack.c.h.b16 %v1747
        %v1830 = vunpack.c.l.b16 %v1748
        %v1831 = vunpack.c.l.b16 %v1749
        %v1832 = vunpack.c.h.b16 %v1749
        %v1833 = vunpack.c.l.b16 %v1750
        %v1834 = vunpack.c.l.b16 %v1751
        %v1835 = vunpack.c.h.b16 %v1751
        %v1836 = vunpack.c.l.b16 %v1752
        %v1837 = vunpack.c.l.b16 %v1753
        %v1838 = vunpack.c.h.b16 %v1753
        %v1839 = vunpack.c.l.b16 %v1754
        %v1840 = vunpack.c.l.b16 %v1755
        %v1841 = vunpack.c.h.b16 %v1755
        %v1842 = vunpack.c.l.b16 %v1756
        %v1843 = vunpack.c.l.b16 %v1757
        %v1844 = vunpack.c.h.b16 %v1757
        %v1845 = vunpack.c.l.b16 %v1758
        %v1846 = vunpack.c.l.b16 %v1759
        %v1847 = vunpack.c.h.b16 %v1759
        %v1848 = vunpack.c.l.b16 %v1760
        %v1849 = vpack.c.b16 %v1804, %v1801
        %v1850 = vpack.c.b16 %v1805, %v1802
        %v1851 = vpack.c.b16 %v1806, %v1803
        %v1852 = vpack.c.b16 %v1810, %v1807
        %v1853 = vpack.c.b16 %v1811, %v1808
        %v1854 = vpack.c.b16 %v1812, %v1809
        %v1855 = vpack.c.b16 %v1816, %v1813
        %v1856 = vpack.c.b16 %v1817, %v1814
        %v1857 = vpack.c.b16 %v1818, %v1815
        %v1858 = vpack.c.b16 %v1822, %v1819
        %v1859 = vpack.c.b16 %v1823, %v1820
        %v1860 = vpack.c.b16 %v1824, %v1821
        %v1861 = vpack.c.b16 %v1828, %v1825
        %v1862 = vpack.c.b16 %v1829, %v1826
        %v1863 = vpack.c.b16 %v1830, %v1827
        %v1864 = vpack.c.b16 %v1834, %v1831
        %v1865 = vpack.c.b16 %v1835, %v1832
        %v1866 = vpack.c.b16 %v1836, %v1833
        %v1867 = vpack.c.b16 %v1840, %v1837
        %v1868 = vpack.c.b16 %v1841, %v1838
        %v1869 = vpack.c.b16 %v1842, %v1839
        %v1870 = vpack.c.b16 %v1846, %v1843
        %v1871 = vpack.c.b16 %v1847, %v1844
        %v1872 = vpack.c.b16 %v1848, %v1845
        %1897 = vmatpush.bf16.msra.mxu0 %v1870
        %1898 = vmatpush.bf16.msra.mxu0 %v1867
        %1899 = vmatpush.bf16.msra.mxu0 %v1864
        %1900 = vmatpush.bf16.msra.mxu0 %v1861
        %1901 = vmatpush.bf16.msra.mxu0 %v1858
        %1902 = vmatpush.bf16.msra.mxu0 %v1855
        %1903 = vmatpush.bf16.msra.mxu0 %v1852
        %1904 = vmatpush.bf16.msra.mxu0 %v1849
        %1905 = vmatmul.bf16.gmra.mxu0 %v1724
        %v1906 = vpop.f32.mrf.mxu0
        %v1907 = vadd.f32 %v1763, %v1906
        %v1908 = vpop.f32.mrf.mxu0
        %v1909 = vadd.f32 %v1763, %v1908
        %1910 = vmatmul.bf16.gmra.mxu0 %v1725
        %v1911 = vpop.f32.mrf.mxu0
        %v1912 = vadd.f32 %v1763, %v1911
        %v1913 = vpop.f32.mrf.mxu0
        %v1914 = vadd.f32 %v1763, %v1913
        %1915 = vmatmul.bf16.gmra.mxu0 %v1726
        %v1916 = vpop.f32.mrf.mxu0
        %v1917 = vadd.f32 %v1763, %v1916
        %v1918 = vpop.f32.mrf.mxu0
        %v1919 = vadd.f32 %v1763, %v1918
        %1920 = vmatmul.bf16.gmra.mxu0 %v1727
        %v1921 = vpop.f32.mrf.mxu0
        %v1922 = vadd.f32 %v1763, %v1921
        %v1923 = vpop.f32.mrf.mxu0
        %v1924 = vadd.f32 %v1763, %v1923
        %1925 = vmatmul.bf16.gmra.mxu0 %v1728
        %v1926 = vpop.f32.mrf.mxu0
        %v1927 = vadd.f32 %v1763, %v1926
        %v1928 = vpop.f32.mrf.mxu0
        %v1929 = vadd.f32 %v1763, %v1928
        %1930 = vdwg.mxu0
        %1931 = vmatpush.bf16.msra.mxu0 %v1871
        %1932 = vmatpush.bf16.msra.mxu0 %v1868
        %1933 = vmatpush.bf16.msra.mxu0 %v1865
        %1934 = vmatpush.bf16.msra.mxu0 %v1862
        %1935 = vmatpush.bf16.msra.mxu0 %v1859
        %1936 = vmatpush.bf16.msra.mxu0 %v1856
        %1937 = vmatpush.bf16.msra.mxu0 %v1853
        %1938 = vmatpush.bf16.msra.mxu0 %v1850
        %1939 = vmatmul.bf16.gmra.mxu0 %v1724
        %v1940 = vpop.f32.mrf.mxu0
        %v1941 = vadd.f32 %v1764, %v1940
        %v1942 = vpop.f32.mrf.mxu0
        %v1943 = vadd.f32 %v1764, %v1942
        %1944 = vmatmul.bf16.gmra.mxu0 %v1725
        %v1945 = vpop.f32.mrf.mxu0
        %v1946 = vadd.f32 %v1764, %v1945
        %v1947 = vpop.f32.mrf.mxu0
        %v1948 = vadd.f32 %v1764, %v1947
        %1949 = vmatmul.bf16.gmra.mxu0 %v1726
        %v1950 = vpop.f32.mrf.mxu0
        %v1951 = vadd.f32 %v1764, %v1950
        %v1952 = vpop.f32.mrf.mxu0
        %v1953 = vadd.f32 %v1764, %v1952
        %1954 = vmatmul.bf16.gmra.mxu0 %v1727
        %v1955 = vpop.f32.mrf.mxu0
        %v1956 = vadd.f32 %v1764, %v1955
        %v1957 = vpop.f32.mrf.mxu0
        %v1958 = vadd.f32 %v1764, %v1957
        %1959 = vmatmul.bf16.gmra.mxu0 %v1728
        %v1960 = vpop.f32.mrf.mxu0
        %v1961 = vadd.f32 %v1764, %v1960
        %v1962 = vpop.f32.mrf.mxu0
        %v1963 = vadd.f32 %v1764, %v1962
        %1964 = vdwg.mxu0
        %1965 = vmatpush.bf16.msra.mxu0 %v1872
        %1966 = vmatpush.bf16.msra.mxu0 %v1869
        %1967 = vmatpush.bf16.msra.mxu0 %v1866
        %1968 = vmatpush.bf16.msra.mxu0 %v1863
        %1969 = vmatpush.bf16.msra.mxu0 %v1860
        %1970 = vmatpush.bf16.msra.mxu0 %v1857
        %1971 = vmatpush.bf16.msra.mxu0 %v1854
        %1972 = vmatpush.bf16.msra.mxu0 %v1851
        %1973 = vmatmul.bf16.gmra.mxu0 %v1724
        %v1974 = vpop.f32.mrf.mxu0
        %v1975 = vadd.f32 %v1765, %v1974
        %v1976 = vpop.f32.mrf.mxu0
        %v1977 = vadd.f32 %v1765, %v1976
        %1978 = vmatmul.bf16.gmra.mxu0 %v1725
        %v1979 = vpop.f32.mrf.mxu0
        %v1980 = vadd.f32 %v1765, %v1979
        %v1981 = vpop.f32.mrf.mxu0
        %v1982 = vadd.f32 %v1765, %v1981
        %1983 = vmatmul.bf16.gmra.mxu0 %v1726
        %v1984 = vpop.f32.mrf.mxu0
        %v1985 = vadd.f32 %v1765, %v1984
        %v1986 = vpop.f32.mrf.mxu0
        %v1987 = vadd.f32 %v1765, %v1986
        %1988 = vmatmul.bf16.gmra.mxu0 %v1727
        %v1989 = vpop.f32.mrf.mxu0
        %v1990 = vadd.f32 %v1765, %v1989
        %v1991 = vpop.f32.mrf.mxu0
        %v1992 = vadd.f32 %v1765, %v1991
        %1993 = vmatmul.bf16.gmra.mxu0 %v1728
        %v1994 = vpop.f32.mrf.mxu0
        %v1995 = vadd.f32 %v1765, %v1994
        %v1996 = vpop.f32.mrf.mxu0
        %v1997 = vadd.f32 %v1765, %v1996
        %1998 = vdwg.mxu0
        %v1999 = vpack.c.bf16 %v1909, %v1907
        %v2000 = vpack.c.bf16 %v1914, %v1912
        %v2001 = vpack.c.bf16 %v1919, %v1917
        %v2002 = vpack.c.bf16 %v1924, %v1922
        %v2003 = vpack.c.bf16 %v1929, %v1927
        %v2004 = vpack.c.bf16 %v1943, %v1941
        %v2005 = vpack.c.bf16 %v1948, %v1946
        %v2006 = vpack.c.bf16 %v1953, %v1951
        %v2007 = vpack.c.bf16 %v1958, %v1956
        %v2008 = vpack.c.bf16 %v1963, %v1961
        %vm2009 = vcmask 523264
        %v2011 = vsel %vm2009, %v1999, 0
        %v2014 = vsel %vm2009, %v2000, 0
        %v2017 = vsel %vm2009, %v2001, 0
        %v2020 = vsel %vm2009, %v2002, 0
        %v2023 = vsel %vm2009, %v2003, 0
        %v2026 = vsel %vm2009, %v2004, 0
        %v2029 = vsel %vm2009, %v2005, 0
        %v2032 = vsel %vm2009, %v2006, 0
        %v2035 = vsel %vm2009, %v2007, 0
        %v2038 = vsel %vm2009, %v2008, 0
        %2040 = vmatpush.bf16.xpose.msra.mxu0 0
        %2041 = vmatpush.bf16.xpose.msra.mxu0 0
        %2042 = vmatpush.bf16.xpose.msra.mxu0 0
        %2043 = vmatpush.bf16.xpose.msra.mxu0 %v2038
        %2044 = vmatpush.bf16.xpose.msra.mxu0 %v2035
        %2045 = vmatpush.bf16.xpose.msra.mxu0 %v2032
        %2046 = vmatpush.bf16.xpose.msra.mxu0 %v2029
        %2047 = vmatpush.bf16.xpose.msra.mxu0 %v2026
        %2048 = vmatmul.bf16.gmra.mxu0 %v2011
        %v2049 = vpop.f32.mrf.mxu0
        %v2050 = vadd.f32 0.0, %v2049
        %v2051 = vpop.f32.mrf.mxu0
        %v2052 = vadd.f32 0.0, %v2051
        %2053 = vmatmul.bf16.gmra.mxu0 %v2014
        %v2054 = vpop.f32.mrf.mxu0
        %v2055 = vadd.f32 0.0, %v2054
        %v2056 = vpop.f32.mrf.mxu0
        %v2057 = vadd.f32 0.0, %v2056
        %2058 = vmatmul.bf16.gmra.mxu0 %v2017
        %v2059 = vpop.f32.mrf.mxu0
        %v2060 = vadd.f32 0.0, %v2059
        %v2061 = vpop.f32.mrf.mxu0
        %v2062 = vadd.f32 0.0, %v2061
        %2063 = vmatmul.bf16.gmra.mxu0 %v2020
        %v2064 = vpop.f32.mrf.mxu0
        %v2065 = vadd.f32 0.0, %v2064
        %v2066 = vpop.f32.mrf.mxu0
        %v2067 = vadd.f32 0.0, %v2066
        %2068 = vmatmul.bf16.gmra.mxu0 %v2023
        %v2069 = vpop.f32.mrf.mxu0
        %v2070 = vadd.f32 0.0, %v2069
        %v2071 = vpop.f32.mrf.mxu0
        %v2072 = vadd.f32 0.0, %v2071
        %2073 = vdwg.mxu0
        %v2074 = vmul.f32 %v2050, 0.125
        %v2075 = vmul.f32 %v2052, 0.125
        %v2076 = vmul.f32 %v2055, 0.125
        %v2077 = vmul.f32 %v2057, 0.125
        %v2078 = vmul.f32 %v2060, 0.125
        %v2079 = vmul.f32 %v2062, 0.125
        %v2080 = vmul.f32 %v2065, 0.125
        %v2081 = vmul.f32 %v2067, 0.125
        %v2082 = vmul.f32 %v2070, 0.125
        %v2083 = vmul.f32 %v2072, 0.125
        %v2084 = vadd.f32 %v2074, %v1479
        %v2085 = vadd.f32 %v2075, %v1480
        %v2086 = vadd.f32 %v2076, %v1481
        %v2087 = vadd.f32 %v2077, %v1482
        %v2088 = vadd.f32 %v2078, %v1483
        %v2089 = vadd.f32 %v2079, %v1484
        %v2090 = vadd.f32 %v2080, %v1485
        %v2091 = vadd.f32 %v2081, %v1486
        %v2092 = vadd.f32 %v2082, %v1487
        %v2093 = vadd.f32 %v2083, %v1488
        %vm2094 = vcmask 654336
        %v2095 = vsel %vm2094, %v2084, -inf
        %2096 = vmax.xlane.f32.xlu0 %v2095
        %v2097 = vpop.xlane.xlu0 %2096
        %v2098 = vsel %vm2094, %v2085, -inf
        %2099 = vmax.xlane.f32.xlu0 %v2098
        %v2100 = vpop.xlane.xlu0 %2099
        %v2101 = vsel %vm2094, %v2086, -inf
        %2102 = vmax.xlane.f32.xlu0 %v2101
        %v2103 = vpop.xlane.xlu0 %2102
        %v2104 = vsel %vm2094, %v2087, -inf
        %2105 = vmax.xlane.f32.xlu0 %v2104
        %v2106 = vpop.xlane.xlu0 %2105
        %v2107 = vsel %vm2094, %v2088, -inf
        %2108 = vmax.xlane.f32.xlu0 %v2107
        %v2109 = vpop.xlane.xlu0 %2108
        %v2110 = vsel %vm2094, %v2089, -inf
        %2111 = vmax.xlane.f32.xlu0 %v2110
        %v2112 = vpop.xlane.xlu0 %2111
        %v2113 = vsel %vm2094, %v2090, -inf
        %2114 = vmax.xlane.f32.xlu0 %v2113
        %v2115 = vpop.xlane.xlu0 %2114
        %v2116 = vsel %vm2094, %v2091, -inf
        %2117 = vmax.xlane.f32.xlu0 %v2116
        %v2118 = vpop.xlane.xlu0 %2117
        %v2119 = vsel %vm2094, %v2092, -inf
        %2120 = vmax.xlane.f32.xlu0 %v2119
        %v2121 = vpop.xlane.xlu0 %2120
        %v2122 = vsel %vm2094, %v2093, -inf
        %2123 = vmax.xlane.f32.xlu0 %v2122
        %v2124 = vpop.xlane.xlu0 %2123
        %v2125 = vsub.f32 %v2084, %v2097
        %v2126 = vsub.f32 %v2085, %v2100
        %v2127 = vsub.f32 %v2086, %v2103
        %v2128 = vsub.f32 %v2087, %v2106
        %v2129 = vsub.f32 %v2088, %v2109
        %v2130 = vsub.f32 %v2089, %v2112
        %v2131 = vsub.f32 %v2090, %v2115
        %v2132 = vsub.f32 %v2091, %v2118
        %v2133 = vsub.f32 %v2092, %v2121
        %v2134 = vsub.f32 %v2093, %v2124
        %v2135 = vmul.f32 %v2125, 1.442695
        %v2136 = vpow.pop %v2135
        %v2137 = vmul.f32 %v2126, 1.442695
        %v2138 = vpow.pop %v2137
        %v2139 = vmul.f32 %v2127, 1.442695
        %v2140 = vpow.pop %v2139
        %v2141 = vmul.f32 %v2128, 1.442695
        %v2142 = vpow.pop %v2141
        %v2143 = vmul.f32 %v2129, 1.442695
        %v2144 = vpow.pop %v2143
        %v2145 = vmul.f32 %v2130, 1.442695
        %v2146 = vpow.pop %v2145
        %v2147 = vmul.f32 %v2131, 1.442695
        %v2148 = vpow.pop %v2147
        %v2149 = vmul.f32 %v2132, 1.442695
        %v2150 = vpow.pop %v2149
        %v2151 = vmul.f32 %v2133, 1.442695
        %v2152 = vpow.pop %v2151
        %v2153 = vmul.f32 %v2134, 1.442695
        %v2154 = vpow.pop %v2153
        %v2155 = vsel %vm2094, %v2136, 0.0
        %2156 = vadd.xlane.f32.xlu0 %v2155
        %v2157 = vpop.xlane.xlu0 %2156
        %v2158 = vsel %vm2094, %v2138, 0.0
        %2159 = vadd.xlane.f32.xlu0 %v2158
        %v2160 = vpop.xlane.xlu0 %2159
        %v2161 = vsel %vm2094, %v2140, 0.0
        %2162 = vadd.xlane.f32.xlu0 %v2161
        %v2163 = vpop.xlane.xlu0 %2162
        %v2164 = vsel %vm2094, %v2142, 0.0
        %2165 = vadd.xlane.f32.xlu0 %v2164
        %v2166 = vpop.xlane.xlu0 %2165
        %v2167 = vsel %vm2094, %v2144, 0.0
        %2168 = vadd.xlane.f32.xlu0 %v2167
        %v2169 = vpop.xlane.xlu0 %2168
        %v2170 = vsel %vm2094, %v2146, 0.0
        %2171 = vadd.xlane.f32.xlu0 %v2170
        %v2172 = vpop.xlane.xlu0 %2171
        %v2173 = vsel %vm2094, %v2148, 0.0
        %2174 = vadd.xlane.f32.xlu0 %v2173
        %v2175 = vpop.xlane.xlu0 %2174
        %v2176 = vsel %vm2094, %v2150, 0.0
        %2177 = vadd.xlane.f32.xlu0 %v2176
        %v2178 = vpop.xlane.xlu0 %2177
        %v2179 = vsel %vm2094, %v2152, 0.0
        %2180 = vadd.xlane.f32.xlu0 %v2179
        %v2181 = vpop.xlane.xlu0 %2180
        %v2182 = vsel %vm2094, %v2154, 0.0
        %2183 = vadd.xlane.f32.xlu0 %v2182
        %v2184 = vpop.xlane.xlu0 %2183
        %v2185 = vrcp.pop %v2157
        %v2186 = vrcp.pop %v2160
        %v2187 = vrcp.pop %v2163
        %v2188 = vrcp.pop %v2166
        %v2189 = vrcp.pop %v2169
        %v2190 = vrcp.pop %v2172
        %v2191 = vrcp.pop %v2175
        %v2192 = vrcp.pop %v2178
        %v2193 = vrcp.pop %v2181
        %v2194 = vrcp.pop %v2184
        %v2195 = vmul.f32 %v2136, %v2185
        %v2196 = vmul.f32 %v2138, %v2186
        %v2197 = vmul.f32 %v2140, %v2187
        %v2198 = vmul.f32 %v2142, %v2188
        %v2199 = vmul.f32 %v2144, %v2189
        %v2200 = vmul.f32 %v2146, %v2190
        %v2201 = vmul.f32 %v2148, %v2191
        %v2202 = vmul.f32 %v2150, %v2192
        %v2203 = vmul.f32 %v2152, %v2193
        %v2204 = vmul.f32 %v2154, %v2194
        %v2205 = vpack.c.bf16 %v2196, %v2195
        %v2206 = vpack.c.bf16 %v2198, %v2197
        %v2207 = vpack.c.bf16 %v2200, %v2199
        %v2208 = vpack.c.bf16 %v2202, %v2201
        %v2209 = vpack.c.bf16 %v2204, %v2203
        %v2210 = vpack.c.bf16 %v1977, %v1975
        %v2211 = vpack.c.bf16 %v1982, %v1980
        %v2212 = vpack.c.bf16 %v1987, %v1985
        %v2213 = vpack.c.bf16 %v1992, %v1990
        %v2214 = vpack.c.bf16 %v1997, %v1995
        %v2216 = vsel %vm2094, %v2205, 0
        %v2219 = vsel %vm2094, %v2206, 0
        %v2222 = vsel %vm2094, %v2207, 0
        %v2225 = vsel %vm2094, %v2208, 0
        %v2228 = vsel %vm2094, %v2209, 0
        %2230 = vmatpush.bf16.msra.mxu0 0
        %2231 = vmatpush.bf16.msra.mxu0 0
        %2232 = vmatpush.bf16.msra.mxu0 0
        %2233 = vmatpush.bf16.msra.mxu0 %v2214
        %2234 = vmatpush.bf16.msra.mxu0 %v2213
        %2235 = vmatpush.bf16.msra.mxu0 %v2212
        %2236 = vmatpush.bf16.msra.mxu0 %v2211
        %2237 = vmatpush.bf16.msra.mxu0 %v2210
        %2238 = vmatmul.bf16.gmra.mxu0 %v2216
        %v2239 = vpop.f32.mrf.mxu0
        %v2240 = vadd.f32 0.0, %v2239
        %v2241 = vpop.f32.mrf.mxu0
        %v2242 = vadd.f32 0.0, %v2241
        %2243 = vmatmul.bf16.gmra.mxu0 %v2219
        %v2244 = vpop.f32.mrf.mxu0
        %v2245 = vadd.f32 0.0, %v2244
        %v2246 = vpop.f32.mrf.mxu0
        %v2247 = vadd.f32 0.0, %v2246
        %2248 = vmatmul.bf16.gmra.mxu0 %v2222
        %v2249 = vpop.f32.mrf.mxu0
        %v2250 = vadd.f32 0.0, %v2249
        %v2251 = vpop.f32.mrf.mxu0
        %v2252 = vadd.f32 0.0, %v2251
        %2253 = vmatmul.bf16.gmra.mxu0 %v2225
        %v2254 = vpop.f32.mrf.mxu0
        %v2255 = vadd.f32 0.0, %v2254
        %v2256 = vpop.f32.mrf.mxu0
        %v2257 = vadd.f32 0.0, %v2256
        %2258 = vmatmul.bf16.gmra.mxu0 %v2228
        %v2259 = vpop.f32.mrf.mxu0
        %v2260 = vadd.f32 0.0, %v2259
        %v2261 = vpop.f32.mrf.mxu0
        %v2262 = vadd.f32 0.0, %v2261
        %2263 = vdwg.mxu0
        %2269 = vrot.lane.b32.xlu0 %v1999, 64
        %v2270 = vpop.permute.xlu0 %2269
        %2271 = vrot.lane.b32.xlu0 %v2000, 64
        %v2272 = vpop.permute.xlu0 %2271
        %2273 = vrot.lane.b32.xlu0 %v2001, 64
        %v2274 = vpop.permute.xlu0 %2273
        %2275 = vrot.lane.b32.xlu0 %v2002, 64
        %v2276 = vpop.permute.xlu0 %2275
        %2277 = vrot.lane.b32.xlu0 %v2003, 64
        %v2278 = vpop.permute.xlu0 %2277
        %2284 = vrot.lane.b32.xlu0 %v2004, 64
        %v2285 = vpop.permute.xlu0 %2284
        %2286 = vrot.lane.b32.xlu0 %v2005, 64
        %v2287 = vpop.permute.xlu0 %2286
        %2288 = vrot.lane.b32.xlu0 %v2006, 64
        %v2289 = vpop.permute.xlu0 %2288
        %2290 = vrot.lane.b32.xlu0 %v2007, 64
        %v2291 = vpop.permute.xlu0 %2290
        %2292 = vrot.lane.b32.xlu0 %v2008, 64
        %v2293 = vpop.permute.xlu0 %2292
        %v2295 = vsel %vm2009, %v2270, 0
        %v2298 = vsel %vm2009, %v2272, 0
        %v2301 = vsel %vm2009, %v2274, 0
        %v2304 = vsel %vm2009, %v2276, 0
        %v2307 = vsel %vm2009, %v2278, 0
        %v2310 = vsel %vm2009, %v2285, 0
        %v2313 = vsel %vm2009, %v2287, 0
        %v2316 = vsel %vm2009, %v2289, 0
        %v2319 = vsel %vm2009, %v2291, 0
        %v2322 = vsel %vm2009, %v2293, 0
        %2324 = vmatpush.bf16.xpose.msra.mxu0 0
        %2325 = vmatpush.bf16.xpose.msra.mxu0 0
        %2326 = vmatpush.bf16.xpose.msra.mxu0 0
        %2327 = vmatpush.bf16.xpose.msra.mxu0 %v2322
        %2328 = vmatpush.bf16.xpose.msra.mxu0 %v2319
        %2329 = vmatpush.bf16.xpose.msra.mxu0 %v2316
        %2330 = vmatpush.bf16.xpose.msra.mxu0 %v2313
        %2331 = vmatpush.bf16.xpose.msra.mxu0 %v2310
        %2332 = vmatmul.bf16.gmra.mxu0 %v2295
        %v2333 = vpop.f32.mrf.mxu0
        %v2334 = vadd.f32 0.0, %v2333
        %v2335 = vpop.f32.mrf.mxu0
        %v2336 = vadd.f32 0.0, %v2335
        %2337 = vmatmul.bf16.gmra.mxu0 %v2298
        %v2338 = vpop.f32.mrf.mxu0
        %v2339 = vadd.f32 0.0, %v2338
        %v2340 = vpop.f32.mrf.mxu0
        %v2341 = vadd.f32 0.0, %v2340
        %2342 = vmatmul.bf16.gmra.mxu0 %v2301
        %v2343 = vpop.f32.mrf.mxu0
        %v2344 = vadd.f32 0.0, %v2343
        %v2345 = vpop.f32.mrf.mxu0
        %v2346 = vadd.f32 0.0, %v2345
        %2347 = vmatmul.bf16.gmra.mxu0 %v2304
        %v2348 = vpop.f32.mrf.mxu0
        %v2349 = vadd.f32 0.0, %v2348
        %v2350 = vpop.f32.mrf.mxu0
        %v2351 = vadd.f32 0.0, %v2350
        %2352 = vmatmul.bf16.gmra.mxu0 %v2307
        %v2353 = vpop.f32.mrf.mxu0
        %v2354 = vadd.f32 0.0, %v2353
        %v2355 = vpop.f32.mrf.mxu0
        %v2356 = vadd.f32 0.0, %v2355
        %2357 = vdwg.mxu0
        %v2358 = vmul.f32 %v2334, 0.125
        %v2359 = vmul.f32 %v2336, 0.125
        %v2360 = vmul.f32 %v2339, 0.125
        %v2361 = vmul.f32 %v2341, 0.125
        %v2362 = vmul.f32 %v2344, 0.125
        %v2363 = vmul.f32 %v2346, 0.125
        %v2364 = vmul.f32 %v2349, 0.125
        %v2365 = vmul.f32 %v2351, 0.125
        %v2366 = vmul.f32 %v2354, 0.125
        %v2367 = vmul.f32 %v2356, 0.125
        %v2368 = vadd.f32 %v2358, %v1479
        %v2369 = vadd.f32 %v2359, %v1480
        %v2370 = vadd.f32 %v2360, %v1481
        %v2371 = vadd.f32 %v2361, %v1482
        %v2372 = vadd.f32 %v2362, %v1483
        %v2373 = vadd.f32 %v2363, %v1484
        %v2374 = vadd.f32 %v2364, %v1485
        %v2375 = vadd.f32 %v2365, %v1486
        %v2376 = vadd.f32 %v2366, %v1487
        %v2377 = vadd.f32 %v2367, %v1488
        %v2378 = vsel %vm2094, %v2368, -inf
        %2379 = vmax.xlane.f32.xlu0 %v2378
        %v2380 = vpop.xlane.xlu0 %2379
        %v2381 = vsel %vm2094, %v2369, -inf
        %2382 = vmax.xlane.f32.xlu0 %v2381
        %v2383 = vpop.xlane.xlu0 %2382
        %v2384 = vsel %vm2094, %v2370, -inf
        %2385 = vmax.xlane.f32.xlu0 %v2384
        %v2386 = vpop.xlane.xlu0 %2385
        %v2387 = vsel %vm2094, %v2371, -inf
        %2388 = vmax.xlane.f32.xlu0 %v2387
        %v2389 = vpop.xlane.xlu0 %2388
        %v2390 = vsel %vm2094, %v2372, -inf
        %2391 = vmax.xlane.f32.xlu0 %v2390
        %v2392 = vpop.xlane.xlu0 %2391
        %v2393 = vsel %vm2094, %v2373, -inf
        %2394 = vmax.xlane.f32.xlu0 %v2393
        %v2395 = vpop.xlane.xlu0 %2394
        %v2396 = vsel %vm2094, %v2374, -inf
        %2397 = vmax.xlane.f32.xlu0 %v2396
        %v2398 = vpop.xlane.xlu0 %2397
        %v2399 = vsel %vm2094, %v2375, -inf
        %2400 = vmax.xlane.f32.xlu0 %v2399
        %v2401 = vpop.xlane.xlu0 %2400
        %v2402 = vsel %vm2094, %v2376, -inf
        %2403 = vmax.xlane.f32.xlu0 %v2402
        %v2404 = vpop.xlane.xlu0 %2403
        %v2405 = vsel %vm2094, %v2377, -inf
        %2406 = vmax.xlane.f32.xlu0 %v2405
        %v2407 = vpop.xlane.xlu0 %2406
        %v2408 = vsub.f32 %v2368, %v2380
        %v2409 = vsub.f32 %v2369, %v2383
        %v2410 = vsub.f32 %v2370, %v2386
        %v2411 = vsub.f32 %v2371, %v2389
        %v2412 = vsub.f32 %v2372, %v2392
        %v2413 = vsub.f32 %v2373, %v2395
        %v2414 = vsub.f32 %v2374, %v2398
        %v2415 = vsub.f32 %v2375, %v2401
        %v2416 = vsub.f32 %v2376, %v2404
        %v2417 = vsub.f32 %v2377, %v2407
        %v2418 = vmul.f32 %v2408, 1.442695
        %v2419 = vpow.pop %v2418
        %v2420 = vmul.f32 %v2409, 1.442695
        %v2421 = vpow.pop %v2420
        %v2422 = vmul.f32 %v2410, 1.442695
        %v2423 = vpow.pop %v2422
        %v2424 = vmul.f32 %v2411, 1.442695
        %v2425 = vpow.pop %v2424
        %v2426 = vmul.f32 %v2412, 1.442695
        %v2427 = vpow.pop %v2426
        %v2428 = vmul.f32 %v2413, 1.442695
        %v2429 = vpow.pop %v2428
        %v2430 = vmul.f32 %v2414, 1.442695
        %v2431 = vpow.pop %v2430
        %v2432 = vmul.f32 %v2415, 1.442695
        %v2433 = vpow.pop %v2432
        %v2434 = vmul.f32 %v2416, 1.442695
        %v2435 = vpow.pop %v2434
        %v2436 = vmul.f32 %v2417, 1.442695
        %v2437 = vpow.pop %v2436
        %v2438 = vsel %vm2094, %v2419, 0.0
        %2439 = vadd.xlane.f32.xlu0 %v2438
        %v2440 = vpop.xlane.xlu0 %2439
        %v2441 = vsel %vm2094, %v2421, 0.0
        %2442 = vadd.xlane.f32.xlu0 %v2441
        %v2443 = vpop.xlane.xlu0 %2442
        %v2444 = vsel %vm2094, %v2423, 0.0
        %2445 = vadd.xlane.f32.xlu0 %v2444
        %v2446 = vpop.xlane.xlu0 %2445
        %v2447 = vsel %vm2094, %v2425, 0.0
        %2448 = vadd.xlane.f32.xlu0 %v2447
        %v2449 = vpop.xlane.xlu0 %2448
        %v2450 = vsel %vm2094, %v2427, 0.0
        %2451 = vadd.xlane.f32.xlu0 %v2450
        %v2452 = vpop.xlane.xlu0 %2451
        %v2453 = vsel %vm2094, %v2429, 0.0
        %2454 = vadd.xlane.f32.xlu0 %v2453
        %v2455 = vpop.xlane.xlu0 %2454
        %v2456 = vsel %vm2094, %v2431, 0.0
        %2457 = vadd.xlane.f32.xlu0 %v2456
        %v2458 = vpop.xlane.xlu0 %2457
        %v2459 = vsel %vm2094, %v2433, 0.0
        %2460 = vadd.xlane.f32.xlu0 %v2459
        %v2461 = vpop.xlane.xlu0 %2460
        %v2462 = vsel %vm2094, %v2435, 0.0
        %2463 = vadd.xlane.f32.xlu0 %v2462
        %v2464 = vpop.xlane.xlu0 %2463
        %v2465 = vsel %vm2094, %v2437, 0.0
        %2466 = vadd.xlane.f32.xlu0 %v2465
        %v2467 = vpop.xlane.xlu0 %2466
        %v2468 = vrcp.pop %v2440
        %v2469 = vrcp.pop %v2443
        %v2470 = vrcp.pop %v2446
        %v2471 = vrcp.pop %v2449
        %v2472 = vrcp.pop %v2452
        %v2473 = vrcp.pop %v2455
        %v2474 = vrcp.pop %v2458
        %v2475 = vrcp.pop %v2461
        %v2476 = vrcp.pop %v2464
        %v2477 = vrcp.pop %v2467
        %v2478 = vmul.f32 %v2419, %v2468
        %v2479 = vmul.f32 %v2421, %v2469
        %v2480 = vmul.f32 %v2423, %v2470
        %v2481 = vmul.f32 %v2425, %v2471
        %v2482 = vmul.f32 %v2427, %v2472
        %v2483 = vmul.f32 %v2429, %v2473
        %v2484 = vmul.f32 %v2431, %v2474
        %v2485 = vmul.f32 %v2433, %v2475
        %v2486 = vmul.f32 %v2435, %v2476
        %v2487 = vmul.f32 %v2437, %v2477
        %v2488 = vpack.c.bf16 %v2479, %v2478
        %v2489 = vpack.c.bf16 %v2481, %v2480
        %v2490 = vpack.c.bf16 %v2483, %v2482
        %v2491 = vpack.c.bf16 %v2485, %v2484
        %v2492 = vpack.c.bf16 %v2487, %v2486
        %2498 = vrot.lane.b32.xlu0 %v2210, 64
        %v2499 = vpop.permute.xlu0 %2498
        %2500 = vrot.lane.b32.xlu0 %v2211, 64
        %v2501 = vpop.permute.xlu0 %2500
        %2502 = vrot.lane.b32.xlu0 %v2212, 64
        %v2503 = vpop.permute.xlu0 %2502
        %2504 = vrot.lane.b32.xlu0 %v2213, 64
        %v2505 = vpop.permute.xlu0 %2504
        %2506 = vrot.lane.b32.xlu0 %v2214, 64
        %v2507 = vpop.permute.xlu0 %2506
        %v2514 = vsel %vm2094, %v2488, 0
        %v2517 = vsel %vm2094, %v2489, 0
        %v2520 = vsel %vm2094, %v2490, 0
        %v2523 = vsel %vm2094, %v2491, 0
        %v2526 = vsel %vm2094, %v2492, 0
        %2528 = vmatpush.bf16.msra.mxu0 0
        %2529 = vmatpush.bf16.msra.mxu0 0
        %2530 = vmatpush.bf16.msra.mxu0 0
        %2531 = vmatpush.bf16.msra.mxu0 %v2507
        %2532 = vmatpush.bf16.msra.mxu0 %v2505
        %2533 = vmatpush.bf16.msra.mxu0 %v2503
        %2534 = vmatpush.bf16.msra.mxu0 %v2501
        %2535 = vmatpush.bf16.msra.mxu0 %v2499
        %2536 = vmatmul.bf16.gmra.mxu0 %v2514
        %v2537 = vpop.f32.mrf.mxu0
        %v2538 = vadd.f32 0.0, %v2537
        %v2539 = vpop.f32.mrf.mxu0
        %v2540 = vadd.f32 0.0, %v2539
        %2541 = vmatmul.bf16.gmra.mxu0 %v2517
        %v2542 = vpop.f32.mrf.mxu0
        %v2543 = vadd.f32 0.0, %v2542
        %v2544 = vpop.f32.mrf.mxu0
        %v2545 = vadd.f32 0.0, %v2544
        %2546 = vmatmul.bf16.gmra.mxu0 %v2520
        %v2547 = vpop.f32.mrf.mxu0
        %v2548 = vadd.f32 0.0, %v2547
        %v2549 = vpop.f32.mrf.mxu0
        %v2550 = vadd.f32 0.0, %v2549
        %2551 = vmatmul.bf16.gmra.mxu0 %v2523
        %v2552 = vpop.f32.mrf.mxu0
        %v2553 = vadd.f32 0.0, %v2552
        %v2554 = vpop.f32.mrf.mxu0
        %v2555 = vadd.f32 0.0, %v2554
        %2556 = vmatmul.bf16.gmra.mxu0 %v2526
        %v2557 = vpop.f32.mrf.mxu0
        %v2558 = vadd.f32 0.0, %v2557
        %v2559 = vpop.f32.mrf.mxu0
        %v2560 = vadd.f32 0.0, %v2559
        %2561 = vdwg.mxu0
        %2572 = vrot.lane.b32.xlu0 %v2538, 64
        %v2573 = vpop.permute.xlu0 %2572
        %2574 = vrot.lane.b32.xlu0 %v2540, 64
        %v2575 = vpop.permute.xlu0 %2574
        %2576 = vrot.lane.b32.xlu0 %v2543, 64
        %v2577 = vpop.permute.xlu0 %2576
        %2578 = vrot.lane.b32.xlu0 %v2545, 64
        %v2579 = vpop.permute.xlu0 %2578
        %2580 = vrot.lane.b32.xlu0 %v2548, 64
        %v2581 = vpop.permute.xlu0 %2580
        %2582 = vrot.lane.b32.xlu0 %v2550, 64
        %v2583 = vpop.permute.xlu0 %2582
        %2584 = vrot.lane.b32.xlu0 %v2553, 64
        %v2585 = vpop.permute.xlu0 %2584
        %2586 = vrot.lane.b32.xlu0 %v2555, 64
        %v2587 = vpop.permute.xlu0 %2586
        %2588 = vrot.lane.b32.xlu0 %v2558, 64
        %v2589 = vpop.permute.xlu0 %2588
        %2590 = vrot.lane.b32.xlu0 %v2560, 64
        %v2591 = vpop.permute.xlu0 %2590
        %v2602 = vsel %vm2009, %v2240, %v2573
        %v2603 = vsel %vm2009, %v2242, %v2575
        %v2604 = vsel %vm2009, %v2245, %v2577
        %v2605 = vsel %vm2009, %v2247, %v2579
        %v2606 = vsel %vm2009, %v2250, %v2581
        %v2607 = vsel %vm2009, %v2252, %v2583
        %v2608 = vsel %vm2009, %v2255, %v2585
        %v2609 = vsel %vm2009, %v2257, %v2587
        %v2610 = vsel %vm2009, %v2260, %v2589
        %v2611 = vsel %vm2009, %v2262, %v2591
        %v2612 = vpack.c.bf16 %v2603, %v2602
        %v2613 = vpack.c.bf16 %v2605, %v2604
        %v2614 = vpack.c.bf16 %v2607, %v2606
        %v2615 = vpack.c.bf16 %v2609, %v2608
        %v2616 = vpack.c.bf16 %v2611, %v2610
        %v2617 = vld [vmem:[%s8] sm:$0xf]
        %v2618 = vld [vmem:[%s8 + $0x4] sm:$0xf]
        %v2619 = vld [vmem:[%s8 + $0x8] sm:$0xf]
        %v2620 = vld [vmem:[%s8 + $0xc] sm:$0xf]
        %v2621 = vld [vmem:[%s8 + $0x10] sm:$0xf]
        %v2622 = vld [vmem:[%s8 + $0x14] sm:$0xf]
        %v2623 = vld [vmem:[%s8 + $0x18] sm:$0xf]
        %v2624 = vld [vmem:[%s8 + $0x1c] sm:$0xf]
        %v2625 = vld [vmem:[%s8 + $0x20] sm:$0xf]
        %v2626 = vld [vmem:[%s8 + $0x24] sm:$0xf]
        %v2627 = vld [vmem:[%s8 + $0x28] sm:$0xf]
        %v2628 = vld [vmem:[%s8 + $0x2c] sm:$0xf]
        %v2629 = vld [vmem:[%s8 + $0x30] sm:$0xf]
        %v2630 = vld [vmem:[%s8 + $0x34] sm:$0xf]
        %v2631 = vld [vmem:[%s8 + $0x38] sm:$0xf]
        %v2632 = vld [vmem:[%s8 + $0x3c] sm:$0xf]
        %v2633 = vld [vmem:[%s9] sm:$0x1]
        %v2635 = vperm.slane %v2633, 0
        %v2653 = vunpack.c.l.b16 %v2617
        %v2654 = vunpack.c.l.b16 %v2618
        %v2655 = vunpack.c.l.b16 %v2619
        %v2656 = vunpack.c.l.b16 %v2620
        %v2657 = vunpack.c.l.b16 %v2621
        %v2658 = vunpack.c.l.b16 %v2622
        %v2659 = vunpack.c.l.b16 %v2623
        %v2660 = vunpack.c.l.b16 %v2624
        %v2661 = vunpack.c.l.b16 %v2625
        %v2662 = vunpack.c.l.b16 %v2626
        %v2663 = vunpack.c.l.b16 %v2627
        %v2664 = vunpack.c.l.b16 %v2628
        %v2665 = vunpack.c.l.b16 %v2629
        %v2666 = vunpack.c.l.b16 %v2630
        %v2667 = vunpack.c.l.b16 %v2631
        %v2668 = vunpack.c.l.b16 %v2632
        %v2669 = vpack.c.b16 %v2654, %v2653
        %v2670 = vpack.c.b16 %v2656, %v2655
        %v2671 = vpack.c.b16 %v2658, %v2657
        %v2672 = vpack.c.b16 %v2660, %v2659
        %v2673 = vpack.c.b16 %v2662, %v2661
        %v2674 = vpack.c.b16 %v2664, %v2663
        %v2675 = vpack.c.b16 %v2666, %v2665
        %v2676 = vpack.c.b16 %v2668, %v2667
        %2685 = vmatpush.bf16.msra.mxu0 %v2676
        %2686 = vmatpush.bf16.msra.mxu0 %v2675
        %2687 = vmatpush.bf16.msra.mxu0 %v2674
        %2688 = vmatpush.bf16.msra.mxu0 %v2673
        %2689 = vmatpush.bf16.msra.mxu0 %v2672
        %2690 = vmatpush.bf16.msra.mxu0 %v2671
        %2691 = vmatpush.bf16.msra.mxu0 %v2670
        %2692 = vmatpush.bf16.msra.mxu0 %v2669
        %2693 = vmatmul.bf16.gmra.mxu0 %v2612
        %v2694 = vpop.f32.mrf.mxu0
        %v2695 = vadd.f32 %v2635, %v2694
        %v2696 = vpop.f32.mrf.mxu0
        %v2697 = vadd.f32 %v2635, %v2696
        %2698 = vmatmul.bf16.gmra.mxu0 %v2613
        %v2699 = vpop.f32.mrf.mxu0
        %v2700 = vadd.f32 %v2635, %v2699
        %v2701 = vpop.f32.mrf.mxu0
        %v2702 = vadd.f32 %v2635, %v2701
        %2703 = vmatmul.bf16.gmra.mxu0 %v2614
        %v2704 = vpop.f32.mrf.mxu0
        %v2705 = vadd.f32 %v2635, %v2704
        %v2706 = vpop.f32.mrf.mxu0
        %v2707 = vadd.f32 %v2635, %v2706
        %2708 = vmatmul.bf16.gmra.mxu0 %v2615
        %v2709 = vpop.f32.mrf.mxu0
        %v2710 = vadd.f32 %v2635, %v2709
        %v2711 = vpop.f32.mrf.mxu0
        %v2712 = vadd.f32 %v2635, %v2711
        %2713 = vmatmul.bf16.gmra.mxu0 %v2616
        %v2714 = vpop.f32.mrf.mxu0
        %v2715 = vadd.f32 %v2635, %v2714
        %v2716 = vpop.f32.mrf.mxu0
        %v2717 = vadd.f32 %v2635, %v2716
        %2718 = vdwg.mxu0
        %v2719 = vadd.f32 %v1455, %v2695
        %v2720 = vadd.f32 %v1457, %v2697
        %v2721 = vadd.f32 %v1460, %v2700
        %v2722 = vadd.f32 %v1462, %v2702
        %v2723 = vadd.f32 %v1465, %v2705
        %v2724 = vadd.f32 %v1467, %v2707
        %v2725 = vadd.f32 %v1470, %v2710
        %v2726 = vadd.f32 %v1472, %v2712
        %v2727 = vadd.f32 %v1475, %v2715
        %v2728 = vadd.f32 %v1477, %v2717
        %v2729 = vld [vmem:[%s10] sm:$0x1]
        %v2730 = vld [vmem:[%s11] sm:$0x1]
        %2731 = vadd.xlane.f32.xlu0 %v2719
        %v2732 = vpop.xlane.xlu0 %2731
        %2733 = vadd.xlane.f32.xlu0 %v2720
        %v2734 = vpop.xlane.xlu0 %2733
        %2735 = vadd.xlane.f32.xlu0 %v2721
        %v2736 = vpop.xlane.xlu0 %2735
        %2737 = vadd.xlane.f32.xlu0 %v2722
        %v2738 = vpop.xlane.xlu0 %2737
        %2739 = vadd.xlane.f32.xlu0 %v2723
        %v2740 = vpop.xlane.xlu0 %2739
        %2741 = vadd.xlane.f32.xlu0 %v2724
        %v2742 = vpop.xlane.xlu0 %2741
        %2743 = vadd.xlane.f32.xlu0 %v2725
        %v2744 = vpop.xlane.xlu0 %2743
        %2745 = vadd.xlane.f32.xlu0 %v2726
        %v2746 = vpop.xlane.xlu0 %2745
        %2747 = vadd.xlane.f32.xlu0 %v2727
        %v2748 = vpop.xlane.xlu0 %2747
        %2749 = vadd.xlane.f32.xlu0 %v2728
        %v2750 = vpop.xlane.xlu0 %2749
        %v2751 = vmul.f32 %v2732, %v1517
        %v2752 = vmul.f32 %v2734, %v1517
        %v2753 = vmul.f32 %v2736, %v1517
        %v2754 = vmul.f32 %v2738, %v1517
        %v2755 = vmul.f32 %v2740, %v1517
        %v2756 = vmul.f32 %v2742, %v1517
        %v2757 = vmul.f32 %v2744, %v1517
        %v2758 = vmul.f32 %v2746, %v1517
        %v2759 = vmul.f32 %v2748, %v1517
        %v2760 = vmul.f32 %v2750, %v1517
        %v2761 = vsub.f32 %v2719, %v2751
        %v2762 = vsub.f32 %v2720, %v2752
        %v2763 = vsub.f32 %v2721, %v2753
        %v2764 = vsub.f32 %v2722, %v2754
        %v2765 = vsub.f32 %v2723, %v2755
        %v2766 = vsub.f32 %v2724, %v2756
        %v2767 = vsub.f32 %v2725, %v2757
        %v2768 = vsub.f32 %v2726, %v2758
        %v2769 = vsub.f32 %v2727, %v2759
        %v2770 = vsub.f32 %v2728, %v2760
        %v2771 = vmul.f32 %v2761, %v2761
        %v2772 = vmul.f32 %v2762, %v2762
        %v2773 = vmul.f32 %v2763, %v2763
        %v2774 = vmul.f32 %v2764, %v2764
        %v2775 = vmul.f32 %v2765, %v2765
        %v2776 = vmul.f32 %v2766, %v2766
        %v2777 = vmul.f32 %v2767, %v2767
        %v2778 = vmul.f32 %v2768, %v2768
        %v2779 = vmul.f32 %v2769, %v2769
        %v2780 = vmul.f32 %v2770, %v2770
        %2781 = vadd.xlane.f32.xlu0 %v2771
        %v2782 = vpop.xlane.xlu0 %2781
        %2783 = vadd.xlane.f32.xlu0 %v2772
        %v2784 = vpop.xlane.xlu0 %2783
        %2785 = vadd.xlane.f32.xlu0 %v2773
        %v2786 = vpop.xlane.xlu0 %2785
        %2787 = vadd.xlane.f32.xlu0 %v2774
        %v2788 = vpop.xlane.xlu0 %2787
        %2789 = vadd.xlane.f32.xlu0 %v2775
        %v2790 = vpop.xlane.xlu0 %2789
        %2791 = vadd.xlane.f32.xlu0 %v2776
        %v2792 = vpop.xlane.xlu0 %2791
        %2793 = vadd.xlane.f32.xlu0 %v2777
        %v2794 = vpop.xlane.xlu0 %2793
        %2795 = vadd.xlane.f32.xlu0 %v2778
        %v2796 = vpop.xlane.xlu0 %2795
        %2797 = vadd.xlane.f32.xlu0 %v2779
        %v2798 = vpop.xlane.xlu0 %2797
        %2799 = vadd.xlane.f32.xlu0 %v2780
        %v2800 = vpop.xlane.xlu0 %2799
        %v2801 = vmul.f32 %v2782, %v1517
        %v2802 = vmul.f32 %v2784, %v1517
        %v2803 = vmul.f32 %v2786, %v1517
        %v2804 = vmul.f32 %v2788, %v1517
        %v2805 = vmul.f32 %v2790, %v1517
        %v2806 = vmul.f32 %v2792, %v1517
        %v2807 = vmul.f32 %v2794, %v1517
        %v2808 = vmul.f32 %v2796, %v1517
        %v2809 = vmul.f32 %v2798, %v1517
        %v2810 = vmul.f32 %v2800, %v1517
        %v2811 = vadd.f32 %v2801, 1e-06
        %v2812 = vadd.f32 %v2802, 1e-06
        %v2813 = vadd.f32 %v2803, 1e-06
        %v2814 = vadd.f32 %v2804, 1e-06
        %v2815 = vadd.f32 %v2805, 1e-06
        %v2816 = vadd.f32 %v2806, 1e-06
        %v2817 = vadd.f32 %v2807, 1e-06
        %v2818 = vadd.f32 %v2808, 1e-06
        %v2819 = vadd.f32 %v2809, 1e-06
        %v2820 = vadd.f32 %v2810, 1e-06
        %v2821 = vrsqrt.pop %v2811
        %v2822 = vmul.f32 %v2821, %v2811
        %v2823 = vmul.f32 %v2822, %v2821
        %v2824 = vmul.f32 0.5, %v2823
        %v2825 = vsub.f32 1.5, %v2824
        %v2826 = vmul.f32 %v2821, %v2825
        %vm2827 = vweird.f32 %v2811
        %vm2828 = vweird.f32 %v2821
        %vm2829 = vmor %vm2827, %vm2828
        %v2830 = vsel %vm2829, %v2821, %v2826
        %v2831 = vrsqrt.pop %v2812
        %v2832 = vmul.f32 %v2831, %v2812
        %v2833 = vmul.f32 %v2832, %v2831
        %v2834 = vmul.f32 0.5, %v2833
        %v2835 = vsub.f32 1.5, %v2834
        %v2836 = vmul.f32 %v2831, %v2835
        %vm2837 = vweird.f32 %v2812
        %vm2838 = vweird.f32 %v2831
        %vm2839 = vmor %vm2837, %vm2838
        %v2840 = vsel %vm2839, %v2831, %v2836
        %v2841 = vrsqrt.pop %v2813
        %v2842 = vmul.f32 %v2841, %v2813
        %v2843 = vmul.f32 %v2842, %v2841
        %v2844 = vmul.f32 0.5, %v2843
        %v2845 = vsub.f32 1.5, %v2844
        %v2846 = vmul.f32 %v2841, %v2845
        %vm2847 = vweird.f32 %v2813
        %vm2848 = vweird.f32 %v2841
        %vm2849 = vmor %vm2847, %vm2848
        %v2850 = vsel %vm2849, %v2841, %v2846
        %v2851 = vrsqrt.pop %v2814
        %v2852 = vmul.f32 %v2851, %v2814
        %v2853 = vmul.f32 %v2852, %v2851
        %v2854 = vmul.f32 0.5, %v2853
        %v2855 = vsub.f32 1.5, %v2854
        %v2856 = vmul.f32 %v2851, %v2855
        %vm2857 = vweird.f32 %v2814
        %vm2858 = vweird.f32 %v2851
        %vm2859 = vmor %vm2857, %vm2858
        %v2860 = vsel %vm2859, %v2851, %v2856
        %v2861 = vrsqrt.pop %v2815
        %v2862 = vmul.f32 %v2861, %v2815
        %v2863 = vmul.f32 %v2862, %v2861
        %v2864 = vmul.f32 0.5, %v2863
        %v2865 = vsub.f32 1.5, %v2864
        %v2866 = vmul.f32 %v2861, %v2865
        %vm2867 = vweird.f32 %v2815
        %vm2868 = vweird.f32 %v2861
        %vm2869 = vmor %vm2867, %vm2868
        %v2870 = vsel %vm2869, %v2861, %v2866
        %v2871 = vrsqrt.pop %v2816
        %v2872 = vmul.f32 %v2871, %v2816
        %v2873 = vmul.f32 %v2872, %v2871
        %v2874 = vmul.f32 0.5, %v2873
        %v2875 = vsub.f32 1.5, %v2874
        %v2876 = vmul.f32 %v2871, %v2875
        %vm2877 = vweird.f32 %v2816
        %vm2878 = vweird.f32 %v2871
        %vm2879 = vmor %vm2877, %vm2878
        %v2880 = vsel %vm2879, %v2871, %v2876
        %v2881 = vrsqrt.pop %v2817
        %v2882 = vmul.f32 %v2881, %v2817
        %v2883 = vmul.f32 %v2882, %v2881
        %v2884 = vmul.f32 0.5, %v2883
        %v2885 = vsub.f32 1.5, %v2884
        %v2886 = vmul.f32 %v2881, %v2885
        %vm2887 = vweird.f32 %v2817
        %vm2888 = vweird.f32 %v2881
        %vm2889 = vmor %vm2887, %vm2888
        %v2890 = vsel %vm2889, %v2881, %v2886
        %v2891 = vrsqrt.pop %v2818
        %v2892 = vmul.f32 %v2891, %v2818
        %v2893 = vmul.f32 %v2892, %v2891
        %v2894 = vmul.f32 0.5, %v2893
        %v2895 = vsub.f32 1.5, %v2894
        %v2896 = vmul.f32 %v2891, %v2895
        %vm2897 = vweird.f32 %v2818
        %vm2898 = vweird.f32 %v2891
        %vm2899 = vmor %vm2897, %vm2898
        %v2900 = vsel %vm2899, %v2891, %v2896
        %v2901 = vrsqrt.pop %v2819
        %v2902 = vmul.f32 %v2901, %v2819
        %v2903 = vmul.f32 %v2902, %v2901
        %v2904 = vmul.f32 0.5, %v2903
        %v2905 = vsub.f32 1.5, %v2904
        %v2906 = vmul.f32 %v2901, %v2905
        %vm2907 = vweird.f32 %v2819
        %vm2908 = vweird.f32 %v2901
        %vm2909 = vmor %vm2907, %vm2908
        %v2910 = vsel %vm2909, %v2901, %v2906
        %v2911 = vrsqrt.pop %v2820
        %v2912 = vmul.f32 %v2911, %v2820
        %v2913 = vmul.f32 %v2912, %v2911
        %v2914 = vmul.f32 0.5, %v2913
        %v2915 = vsub.f32 1.5, %v2914
        %v2916 = vmul.f32 %v2911, %v2915
        %vm2917 = vweird.f32 %v2820
        %vm2918 = vweird.f32 %v2911
        %vm2919 = vmor %vm2917, %vm2918
        %v2920 = vsel %vm2919, %v2911, %v2916
        %v2921 = vmul.f32 %v2761, %v2830
        %v2922 = vmul.f32 %v2762, %v2840
        %v2923 = vmul.f32 %v2763, %v2850
        %v2924 = vmul.f32 %v2764, %v2860
        %v2925 = vmul.f32 %v2765, %v2870
        %v2926 = vmul.f32 %v2766, %v2880
        %v2927 = vmul.f32 %v2767, %v2890
        %v2928 = vmul.f32 %v2768, %v2900
        %v2929 = vmul.f32 %v2769, %v2910
        %v2930 = vmul.f32 %v2770, %v2920
        %v2932 = vperm.slane %v2729, 0
        %v2934 = vmul.f32 %v2921, %v2932
        %v2935 = vmul.f32 %v2922, %v2932
        %v2936 = vmul.f32 %v2923, %v2932
        %v2937 = vmul.f32 %v2924, %v2932
        %v2938 = vmul.f32 %v2925, %v2932
        %v2939 = vmul.f32 %v2926, %v2932
        %v2940 = vmul.f32 %v2927, %v2932
        %v2941 = vmul.f32 %v2928, %v2932
        %v2942 = vmul.f32 %v2929, %v2932
        %v2943 = vmul.f32 %v2930, %v2932
        %v2945 = vperm.slane %v2730, 0
        %v2947 = vadd.f32 %v2934, %v2945
        %v2948 = vadd.f32 %v2935, %v2945
        %v2949 = vadd.f32 %v2936, %v2945
        %v2950 = vadd.f32 %v2937, %v2945
        %v2951 = vadd.f32 %v2938, %v2945
        %v2952 = vadd.f32 %v2939, %v2945
        %v2953 = vadd.f32 %v2940, %v2945
        %v2954 = vadd.f32 %v2941, %v2945
        %v2955 = vadd.f32 %v2942, %v2945
        %v2956 = vadd.f32 %v2943, %v2945
        %v2957 = vpack.c.bf16 %v2948, %v2947
        %v2958 = vpack.c.bf16 %v2950, %v2949
        %v2959 = vpack.c.bf16 %v2952, %v2951
        %v2960 = vpack.c.bf16 %v2954, %v2953
        %v2961 = vpack.c.bf16 %v2956, %v2955
        %v2962 = vld [vmem:[%s12] sm:$0xff]
        %v2963 = vld [vmem:[%s12 + $0x8] sm:$0xff]
        %v2964 = vld [vmem:[%s12 + $0x10] sm:$0xff]
        %v2965 = vld [vmem:[%s12 + $0x18] sm:$0xff]
        %v2966 = vld [vmem:[%s12 + $0x20] sm:$0xff]
        %v2967 = vld [vmem:[%s12 + $0x28] sm:$0xff]
        %v2968 = vld [vmem:[%s12 + $0x30] sm:$0xff]
        %v2969 = vld [vmem:[%s12 + $0x38] sm:$0xff]
        %v2970 = vld [vmem:[%s12 + $0x40] sm:$0xff]
        %v2971 = vld [vmem:[%s12 + $0x48] sm:$0xff]
        %v2972 = vld [vmem:[%s12 + $0x50] sm:$0xff]
        %v2973 = vld [vmem:[%s12 + $0x58] sm:$0xff]
        %v2974 = vld [vmem:[%s12 + $0x60] sm:$0xff]
        %v2975 = vld [vmem:[%s12 + $0x68] sm:$0xff]
        %v2976 = vld [vmem:[%s12 + $0x70] sm:$0xff]
        %v2977 = vld [vmem:[%s12 + $0x78] sm:$0xff]
        %v2978 = vld [vmem:[%s12 + $0x80] sm:$0xff]
        %v2979 = vld [vmem:[%s12 + $0x88] sm:$0xff]
        %v2980 = vld [vmem:[%s12 + $0x90] sm:$0xff]
        %v2981 = vld [vmem:[%s12 + $0x98] sm:$0xff]
        %v2982 = vld [vmem:[%s12 + $0xa0] sm:$0xff]
        %v2983 = vld [vmem:[%s12 + $0xa8] sm:$0xff]
        %v2984 = vld [vmem:[%s12 + $0xb0] sm:$0xff]
        %v2985 = vld [vmem:[%s12 + $0xb8] sm:$0xff]
        %v2986 = vld [vmem:[%s12 + $0xc0] sm:$0xff]
        %v2987 = vld [vmem:[%s12 + $0xc8] sm:$0xff]
        %v2988 = vld [vmem:[%s12 + $0xd0] sm:$0xff]
        %v2989 = vld [vmem:[%s12 + $0xd8] sm:$0xff]
        %v2990 = vld [vmem:[%s12 + $0xe0] sm:$0xff]
        %v2991 = vld [vmem:[%s12 + $0xe8] sm:$0xff]
        %v2992 = vld [vmem:[%s12 + $0xf0] sm:$0xff]
        %v2993 = vld [vmem:[%s12 + $0xf8] sm:$0xff]
        %v2994 = vld [vmem:[%s13] sm:$0xf]
        %v2996 = vperm.slane %v2994, 0
        %v2997 = vperm.slane %v2994, 1
        %v2998 = vperm.slane %v2994, 2
        %v2999 = vperm.slane %v2994, 3
        %v3036 = vunpack.c.l.b16 %v2962
        %v3037 = vunpack.c.h.b16 %v2962
        %v3038 = vunpack.c.l.b16 %v2963
        %v3039 = vunpack.c.h.b16 %v2963
        %v3040 = vunpack.c.l.b16 %v2964
        %v3041 = vunpack.c.h.b16 %v2964
        %v3042 = vunpack.c.l.b16 %v2965
        %v3043 = vunpack.c.h.b16 %v2965
        %v3044 = vunpack.c.l.b16 %v2966
        %v3045 = vunpack.c.h.b16 %v2966
        %v3046 = vunpack.c.l.b16 %v2967
        %v3047 = vunpack.c.h.b16 %v2967
        %v3048 = vunpack.c.l.b16 %v2968
        %v3049 = vunpack.c.h.b16 %v2968
        %v3050 = vunpack.c.l.b16 %v2969
        %v3051 = vunpack.c.h.b16 %v2969
        %v3052 = vunpack.c.l.b16 %v2970
        %v3053 = vunpack.c.h.b16 %v2970
        %v3054 = vunpack.c.l.b16 %v2971
        %v3055 = vunpack.c.h.b16 %v2971
        %v3056 = vunpack.c.l.b16 %v2972
        %v3057 = vunpack.c.h.b16 %v2972
        %v3058 = vunpack.c.l.b16 %v2973
        %v3059 = vunpack.c.h.b16 %v2973
        %v3060 = vunpack.c.l.b16 %v2974
        %v3061 = vunpack.c.h.b16 %v2974
        %v3062 = vunpack.c.l.b16 %v2975
        %v3063 = vunpack.c.h.b16 %v2975
        %v3064 = vunpack.c.l.b16 %v2976
        %v3065 = vunpack.c.h.b16 %v2976
        %v3066 = vunpack.c.l.b16 %v2977
        %v3067 = vunpack.c.h.b16 %v2977
        %v3068 = vunpack.c.l.b16 %v2978
        %v3069 = vunpack.c.h.b16 %v2978
        %v3070 = vunpack.c.l.b16 %v2979
        %v3071 = vunpack.c.h.b16 %v2979
        %v3072 = vunpack.c.l.b16 %v2980
        %v3073 = vunpack.c.h.b16 %v2980
        %v3074 = vunpack.c.l.b16 %v2981
        %v3075 = vunpack.c.h.b16 %v2981
        %v3076 = vunpack.c.l.b16 %v2982
        %v3077 = vunpack.c.h.b16 %v2982
        %v3078 = vunpack.c.l.b16 %v2983
        %v3079 = vunpack.c.h.b16 %v2983
        %v3080 = vunpack.c.l.b16 %v2984
        %v3081 = vunpack.c.h.b16 %v2984
        %v3082 = vunpack.c.l.b16 %v2985
        %v3083 = vunpack.c.h.b16 %v2985
        %v3084 = vunpack.c.l.b16 %v2986
        %v3085 = vunpack.c.h.b16 %v2986
        %v3086 = vunpack.c.l.b16 %v2987
        %v3087 = vunpack.c.h.b16 %v2987
        %v3088 = vunpack.c.l.b16 %v2988
        %v3089 = vunpack.c.h.b16 %v2988
        %v3090 = vunpack.c.l.b16 %v2989
        %v3091 = vunpack.c.h.b16 %v2989
        %v3092 = vunpack.c.l.b16 %v2990
        %v3093 = vunpack.c.h.b16 %v2990
        %v3094 = vunpack.c.l.b16 %v2991
        %v3095 = vunpack.c.h.b16 %v2991
        %v3096 = vunpack.c.l.b16 %v2992
        %v3097 = vunpack.c.h.b16 %v2992
        %v3098 = vunpack.c.l.b16 %v2993
        %v3099 = vunpack.c.h.b16 %v2993
        %v3100 = vpack.c.b16 %v3040, %v3036
        %v3101 = vpack.c.b16 %v3041, %v3037
        %v3102 = vpack.c.b16 %v3042, %v3038
        %v3103 = vpack.c.b16 %v3043, %v3039
        %v3104 = vpack.c.b16 %v3048, %v3044
        %v3105 = vpack.c.b16 %v3049, %v3045
        %v3106 = vpack.c.b16 %v3050, %v3046
        %v3107 = vpack.c.b16 %v3051, %v3047
        %v3108 = vpack.c.b16 %v3056, %v3052
        %v3109 = vpack.c.b16 %v3057, %v3053
        %v3110 = vpack.c.b16 %v3058, %v3054
        %v3111 = vpack.c.b16 %v3059, %v3055
        %v3112 = vpack.c.b16 %v3064, %v3060
        %v3113 = vpack.c.b16 %v3065, %v3061
        %v3114 = vpack.c.b16 %v3066, %v3062
        %v3115 = vpack.c.b16 %v3067, %v3063
        %v3116 = vpack.c.b16 %v3072, %v3068
        %v3117 = vpack.c.b16 %v3073, %v3069
        %v3118 = vpack.c.b16 %v3074, %v3070
        %v3119 = vpack.c.b16 %v3075, %v3071
        %v3120 = vpack.c.b16 %v3080, %v3076
        %v3121 = vpack.c.b16 %v3081, %v3077
        %v3122 = vpack.c.b16 %v3082, %v3078
        %v3123 = vpack.c.b16 %v3083, %v3079
        %v3124 = vpack.c.b16 %v3088, %v3084
        %v3125 = vpack.c.b16 %v3089, %v3085
        %v3126 = vpack.c.b16 %v3090, %v3086
        %v3127 = vpack.c.b16 %v3091, %v3087
        %v3128 = vpack.c.b16 %v3096, %v3092
        %v3129 = vpack.c.b16 %v3097, %v3093
        %v3130 = vpack.c.b16 %v3098, %v3094
        %v3131 = vpack.c.b16 %v3099, %v3095
        %3164 = vmatpush.bf16.msra.mxu0 %v3128
        %3165 = vmatpush.bf16.msra.mxu0 %v3124
        %3166 = vmatpush.bf16.msra.mxu0 %v3120
        %3167 = vmatpush.bf16.msra.mxu0 %v3116
        %3168 = vmatpush.bf16.msra.mxu0 %v3112
        %3169 = vmatpush.bf16.msra.mxu0 %v3108
        %3170 = vmatpush.bf16.msra.mxu0 %v3104
        %3171 = vmatpush.bf16.msra.mxu0 %v3100
        %3172 = vmatmul.bf16.gmra.mxu0 %v2957
        %v3173 = vpop.f32.mrf.mxu0
        %v3174 = vadd.f32 %v2996, %v3173
        %v3175 = vpop.f32.mrf.mxu0
        %v3176 = vadd.f32 %v2996, %v3175
        %3177 = vmatmul.bf16.gmra.mxu0 %v2958
        %v3178 = vpop.f32.mrf.mxu0
        %v3179 = vadd.f32 %v2996, %v3178
        %v3180 = vpop.f32.mrf.mxu0
        %v3181 = vadd.f32 %v2996, %v3180
        %3182 = vmatmul.bf16.gmra.mxu0 %v2959
        %v3183 = vpop.f32.mrf.mxu0
        %v3184 = vadd.f32 %v2996, %v3183
        %v3185 = vpop.f32.mrf.mxu0
        %v3186 = vadd.f32 %v2996, %v3185
        %3187 = vmatmul.bf16.gmra.mxu0 %v2960
        %v3188 = vpop.f32.mrf.mxu0
        %v3189 = vadd.f32 %v2996, %v3188
        %v3190 = vpop.f32.mrf.mxu0
        %v3191 = vadd.f32 %v2996, %v3190
        %3192 = vmatmul.bf16.gmra.mxu0 %v2961
        %v3193 = vpop.f32.mrf.mxu0
        %v3194 = vadd.f32 %v2996, %v3193
        %v3195 = vpop.f32.mrf.mxu0
        %v3196 = vadd.f32 %v2996, %v3195
        %3197 = vdwg.mxu0
        %3198 = vmatpush.bf16.msra.mxu0 %v3129
        %3199 = vmatpush.bf16.msra.mxu0 %v3125
        %3200 = vmatpush.bf16.msra.mxu0 %v3121
        %3201 = vmatpush.bf16.msra.mxu0 %v3117
        %3202 = vmatpush.bf16.msra.mxu0 %v3113
        %3203 = vmatpush.bf16.msra.mxu0 %v3109
        %3204 = vmatpush.bf16.msra.mxu0 %v3105
        %3205 = vmatpush.bf16.msra.mxu0 %v3101
        %3206 = vmatmul.bf16.gmra.mxu0 %v2957
        %v3207 = vpop.f32.mrf.mxu0
        %v3208 = vadd.f32 %v2997, %v3207
        %v3209 = vpop.f32.mrf.mxu0
        %v3210 = vadd.f32 %v2997, %v3209
        %3211 = vmatmul.bf16.gmra.mxu0 %v2958
        %v3212 = vpop.f32.mrf.mxu0
        %v3213 = vadd.f32 %v2997, %v3212
        %v3214 = vpop.f32.mrf.mxu0
        %v3215 = vadd.f32 %v2997, %v3214
        %3216 = vmatmul.bf16.gmra.mxu0 %v2959
        %v3217 = vpop.f32.mrf.mxu0
        %v3218 = vadd.f32 %v2997, %v3217
        %v3219 = vpop.f32.mrf.mxu0
        %v3220 = vadd.f32 %v2997, %v3219
        %3221 = vmatmul.bf16.gmra.mxu0 %v2960
        %v3222 = vpop.f32.mrf.mxu0
        %v3223 = vadd.f32 %v2997, %v3222
        %v3224 = vpop.f32.mrf.mxu0
        %v3225 = vadd.f32 %v2997, %v3224
        %3226 = vmatmul.bf16.gmra.mxu0 %v2961
        %v3227 = vpop.f32.mrf.mxu0
        %v3228 = vadd.f32 %v2997, %v3227
        %v3229 = vpop.f32.mrf.mxu0
        %v3230 = vadd.f32 %v2997, %v3229
        %3231 = vdwg.mxu0
        %3232 = vmatpush.bf16.msra.mxu0 %v3130
        %3233 = vmatpush.bf16.msra.mxu0 %v3126
        %3234 = vmatpush.bf16.msra.mxu0 %v3122
        %3235 = vmatpush.bf16.msra.mxu0 %v3118
        %3236 = vmatpush.bf16.msra.mxu0 %v3114
        %3237 = vmatpush.bf16.msra.mxu0 %v3110
        %3238 = vmatpush.bf16.msra.mxu0 %v3106
        %3239 = vmatpush.bf16.msra.mxu0 %v3102
        %3240 = vmatmul.bf16.gmra.mxu0 %v2957
        %v3241 = vpop.f32.mrf.mxu0
        %v3242 = vadd.f32 %v2998, %v3241
        %v3243 = vpop.f32.mrf.mxu0
        %v3244 = vadd.f32 %v2998, %v3243
        %3245 = vmatmul.bf16.gmra.mxu0 %v2958
        %v3246 = vpop.f32.mrf.mxu0
        %v3247 = vadd.f32 %v2998, %v3246
        %v3248 = vpop.f32.mrf.mxu0
        %v3249 = vadd.f32 %v2998, %v3248
        %3250 = vmatmul.bf16.gmra.mxu0 %v2959
        %v3251 = vpop.f32.mrf.mxu0
        %v3252 = vadd.f32 %v2998, %v3251
        %v3253 = vpop.f32.mrf.mxu0
        %v3254 = vadd.f32 %v2998, %v3253
        %3255 = vmatmul.bf16.gmra.mxu0 %v2960
        %v3256 = vpop.f32.mrf.mxu0
        %v3257 = vadd.f32 %v2998, %v3256
        %v3258 = vpop.f32.mrf.mxu0
        %v3259 = vadd.f32 %v2998, %v3258
        %3260 = vmatmul.bf16.gmra.mxu0 %v2961
        %v3261 = vpop.f32.mrf.mxu0
        %v3262 = vadd.f32 %v2998, %v3261
        %v3263 = vpop.f32.mrf.mxu0
        %v3264 = vadd.f32 %v2998, %v3263
        %3265 = vdwg.mxu0
        %3266 = vmatpush.bf16.msra.mxu0 %v3131
        %3267 = vmatpush.bf16.msra.mxu0 %v3127
        %3268 = vmatpush.bf16.msra.mxu0 %v3123
        %3269 = vmatpush.bf16.msra.mxu0 %v3119
        %3270 = vmatpush.bf16.msra.mxu0 %v3115
        %3271 = vmatpush.bf16.msra.mxu0 %v3111
        %3272 = vmatpush.bf16.msra.mxu0 %v3107
        %3273 = vmatpush.bf16.msra.mxu0 %v3103
        %3274 = vmatmul.bf16.gmra.mxu0 %v2957
        %v3275 = vpop.f32.mrf.mxu0
        %v3276 = vadd.f32 %v2999, %v3275
        %v3277 = vpop.f32.mrf.mxu0
        %v3278 = vadd.f32 %v2999, %v3277
        %3279 = vmatmul.bf16.gmra.mxu0 %v2958
        %v3280 = vpop.f32.mrf.mxu0
        %v3281 = vadd.f32 %v2999, %v3280
        %v3282 = vpop.f32.mrf.mxu0
        %v3283 = vadd.f32 %v2999, %v3282
        %3284 = vmatmul.bf16.gmra.mxu0 %v2959
        %v3285 = vpop.f32.mrf.mxu0
        %v3286 = vadd.f32 %v2999, %v3285
        %v3287 = vpop.f32.mrf.mxu0
        %v3288 = vadd.f32 %v2999, %v3287
        %3289 = vmatmul.bf16.gmra.mxu0 %v2960
        %v3290 = vpop.f32.mrf.mxu0
        %v3291 = vadd.f32 %v2999, %v3290
        %v3292 = vpop.f32.mrf.mxu0
        %v3293 = vadd.f32 %v2999, %v3292
        %3294 = vmatmul.bf16.gmra.mxu0 %v2961
        %v3295 = vpop.f32.mrf.mxu0
        %v3296 = vadd.f32 %v2999, %v3295
        %v3297 = vpop.f32.mrf.mxu0
        %v3298 = vadd.f32 %v2999, %v3297
        %3299 = vdwg.mxu0
        %v3300 = vmul.f32 %v3174, 0.5
        %v3301 = vmul.f32 %v3208, 0.5
        %v3302 = vmul.f32 %v3242, 0.5
        %v3303 = vmul.f32 %v3276, 0.5
        %v3304 = vmul.f32 %v3176, 0.5
        %v3305 = vmul.f32 %v3210, 0.5
        %v3306 = vmul.f32 %v3244, 0.5
        %v3307 = vmul.f32 %v3278, 0.5
        %v3308 = vmul.f32 %v3179, 0.5
        %v3309 = vmul.f32 %v3213, 0.5
        %v3310 = vmul.f32 %v3247, 0.5
        %v3311 = vmul.f32 %v3281, 0.5
        %v3312 = vmul.f32 %v3181, 0.5
        %v3313 = vmul.f32 %v3215, 0.5
        %v3314 = vmul.f32 %v3249, 0.5
        %v3315 = vmul.f32 %v3283, 0.5
        %v3316 = vmul.f32 %v3184, 0.5
        %v3317 = vmul.f32 %v3218, 0.5
        %v3318 = vmul.f32 %v3252, 0.5
        %v3319 = vmul.f32 %v3286, 0.5
        %v3320 = vmul.f32 %v3186, 0.5
        %v3321 = vmul.f32 %v3220, 0.5
        %v3322 = vmul.f32 %v3254, 0.5
        %v3323 = vmul.f32 %v3288, 0.5
        %v3324 = vmul.f32 %v3189, 0.5
        %v3325 = vmul.f32 %v3223, 0.5
        %v3326 = vmul.f32 %v3257, 0.5
        %v3327 = vmul.f32 %v3291, 0.5
        %v3328 = vmul.f32 %v3191, 0.5
        %v3329 = vmul.f32 %v3225, 0.5
        %v3330 = vmul.f32 %v3259, 0.5
        %v3331 = vmul.f32 %v3293, 0.5
        %v3332 = vmul.f32 %v3194, 0.5
        %v3333 = vmul.f32 %v3228, 0.5
        %v3334 = vmul.f32 %v3262, 0.5
        %v3335 = vmul.f32 %v3296, 0.5
        %v3336 = vmul.f32 %v3196, 0.5
        %v3337 = vmul.f32 %v3230, 0.5
        %v3338 = vmul.f32 %v3264, 0.5
        %v3339 = vmul.f32 %v3298, 0.5
        %v3340 = vmul.f32 %v3174, 0.70710677
        %v3341 = vmul.f32 %v3208, 0.70710677
        %v3342 = vmul.f32 %v3242, 0.70710677
        %v3343 = vmul.f32 %v3276, 0.70710677
        %v3344 = vmul.f32 %v3176, 0.70710677
        %v3345 = vmul.f32 %v3210, 0.70710677
        %v3346 = vmul.f32 %v3244, 0.70710677
        %v3347 = vmul.f32 %v3278, 0.70710677
        %v3348 = vmul.f32 %v3179, 0.70710677
        %v3349 = vmul.f32 %v3213, 0.70710677
        %v3350 = vmul.f32 %v3247, 0.70710677
        %v3351 = vmul.f32 %v3281, 0.70710677
        %v3352 = vmul.f32 %v3181, 0.70710677
        %v3353 = vmul.f32 %v3215, 0.70710677
        %v3354 = vmul.f32 %v3249, 0.70710677
        %v3355 = vmul.f32 %v3283, 0.70710677
        %v3356 = vmul.f32 %v3184, 0.70710677
        %v3357 = vmul.f32 %v3218, 0.70710677
        %v3358 = vmul.f32 %v3252, 0.70710677
        %v3359 = vmul.f32 %v3286, 0.70710677
        %v3360 = vmul.f32 %v3186, 0.70710677
        %v3361 = vmul.f32 %v3220, 0.70710677
        %v3362 = vmul.f32 %v3254, 0.70710677
        %v3363 = vmul.f32 %v3288, 0.70710677
        %v3364 = vmul.f32 %v3189, 0.70710677
        %v3365 = vmul.f32 %v3223, 0.70710677
        %v3366 = vmul.f32 %v3257, 0.70710677
        %v3367 = vmul.f32 %v3291, 0.70710677
        %v3368 = vmul.f32 %v3191, 0.70710677
        %v3369 = vmul.f32 %v3225, 0.70710677
        %v3370 = vmul.f32 %v3259, 0.70710677
        %v3371 = vmul.f32 %v3293, 0.70710677
        %v3372 = vmul.f32 %v3194, 0.70710677
        %v3373 = vmul.f32 %v3228, 0.70710677
        %v3374 = vmul.f32 %v3262, 0.70710677
        %v3375 = vmul.f32 %v3296, 0.70710677
        %v3376 = vmul.f32 %v3196, 0.70710677
        %v3377 = vmul.f32 %v3230, 0.70710677
        %v3378 = vmul.f32 %v3264, 0.70710677
        %v3379 = vmul.f32 %v3298, 0.70710677
        %v3380 = vand.u32 2147483647, %v3340
        %v3381 = vand.u32 2147483647, %v3341
        %v3382 = vand.u32 2147483647, %v3342
        %v3383 = vand.u32 2147483647, %v3343
        %v3384 = vand.u32 2147483647, %v3344
        %v3385 = vand.u32 2147483647, %v3345
        %v3386 = vand.u32 2147483647, %v3346
        %v3387 = vand.u32 2147483647, %v3347
        %v3388 = vand.u32 2147483647, %v3348
        %v3389 = vand.u32 2147483647, %v3349
        %v3390 = vand.u32 2147483647, %v3350
        %v3391 = vand.u32 2147483647, %v3351
        %v3392 = vand.u32 2147483647, %v3352
        %v3393 = vand.u32 2147483647, %v3353
        %v3394 = vand.u32 2147483647, %v3354
        %v3395 = vand.u32 2147483647, %v3355
        %v3396 = vand.u32 2147483647, %v3356
        %v3397 = vand.u32 2147483647, %v3357
        %v3398 = vand.u32 2147483647, %v3358
        %v3399 = vand.u32 2147483647, %v3359
        %v3400 = vand.u32 2147483647, %v3360
        %v3401 = vand.u32 2147483647, %v3361
        %v3402 = vand.u32 2147483647, %v3362
        %v3403 = vand.u32 2147483647, %v3363
        %v3404 = vand.u32 2147483647, %v3364
        %v3405 = vand.u32 2147483647, %v3365
        %v3406 = vand.u32 2147483647, %v3366
        %v3407 = vand.u32 2147483647, %v3367
        %v3408 = vand.u32 2147483647, %v3368
        %v3409 = vand.u32 2147483647, %v3369
        %v3410 = vand.u32 2147483647, %v3370
        %v3411 = vand.u32 2147483647, %v3371
        %v3412 = vand.u32 2147483647, %v3372
        %v3413 = vand.u32 2147483647, %v3373
        %v3414 = vand.u32 2147483647, %v3374
        %v3415 = vand.u32 2147483647, %v3375
        %v3416 = vand.u32 2147483647, %v3376
        %v3417 = vand.u32 2147483647, %v3377
        %v3418 = vand.u32 2147483647, %v3378
        %v3419 = vand.u32 2147483647, %v3379
        %v3420 = vmul.f32 %v3380, 0.3275911
        %v3421 = vmul.f32 %v3381, 0.3275911
        %v3422 = vmul.f32 %v3382, 0.3275911
        %v3423 = vmul.f32 %v3383, 0.3275911
        %v3424 = vmul.f32 %v3384, 0.3275911
        %v3425 = vmul.f32 %v3385, 0.3275911
        %v3426 = vmul.f32 %v3386, 0.3275911
        %v3427 = vmul.f32 %v3387, 0.3275911
        %v3428 = vmul.f32 %v3388, 0.3275911
        %v3429 = vmul.f32 %v3389, 0.3275911
        %v3430 = vmul.f32 %v3390, 0.3275911
        %v3431 = vmul.f32 %v3391, 0.3275911
        %v3432 = vmul.f32 %v3392, 0.3275911
        %v3433 = vmul.f32 %v3393, 0.3275911
        %v3434 = vmul.f32 %v3394, 0.3275911
        %v3435 = vmul.f32 %v3395, 0.3275911
        %v3436 = vmul.f32 %v3396, 0.3275911
        %v3437 = vmul.f32 %v3397, 0.3275911
        %v3438 = vmul.f32 %v3398, 0.3275911
        %v3439 = vmul.f32 %v3399, 0.3275911
        %v3440 = vmul.f32 %v3400, 0.3275911
        %v3441 = vmul.f32 %v3401, 0.3275911
        %v3442 = vmul.f32 %v3402, 0.3275911
        %v3443 = vmul.f32 %v3403, 0.3275911
        %v3444 = vmul.f32 %v3404, 0.3275911
        %v3445 = vmul.f32 %v3405, 0.3275911
        %v3446 = vmul.f32 %v3406, 0.3275911
        %v3447 = vmul.f32 %v3407, 0.3275911
        %v3448 = vmul.f32 %v3408, 0.3275911
        %v3449 = vmul.f32 %v3409, 0.3275911
        %v3450 = vmul.f32 %v3410, 0.3275911
        %v3451 = vmul.f32 %v3411, 0.3275911
        %v3452 = vmul.f32 %v3412, 0.3275911
        %v3453 = vmul.f32 %v3413, 0.3275911
        %v3454 = vmul.f32 %v3414, 0.3275911
        %v3455 = vmul.f32 %v3415, 0.3275911
        %v3456 = vmul.f32 %v3416, 0.3275911
        %v3457 = vmul.f32 %v3417, 0.3275911
        %v3458 = vmul.f32 %v3418, 0.3275911
        %v3459 = vmul.f32 %v3419, 0.3275911
        %v3460 = vadd.f32 %v3420, 1.0
        %v3461 = vadd.f32 %v3421, 1.0
        %v3462 = vadd.f32 %v3422, 1.0
        %v3463 = vadd.f32 %v3423, 1.0
        %v3464 = vadd.f32 %v3424, 1.0
        %v3465 = vadd.f32 %v3425, 1.0
        %v3466 = vadd.f32 %v3426, 1.0
        %v3467 = vadd.f32 %v3427, 1.0
        %v3468 = vadd.f32 %v3428, 1.0
        %v3469 = vadd.f32 %v3429, 1.0
        %v3470 = vadd.f32 %v3430, 1.0
        %v3471 = vadd.f32 %v3431, 1.0
        %v3472 = vadd.f32 %v3432, 1.0
        %v3473 = vadd.f32 %v3433, 1.0
        %v3474 = vadd.f32 %v3434, 1.0
        %v3475 = vadd.f32 %v3435, 1.0
        %v3476 = vadd.f32 %v3436, 1.0
        %v3477 = vadd.f32 %v3437, 1.0
        %v3478 = vadd.f32 %v3438, 1.0
        %v3479 = vadd.f32 %v3439, 1.0
        %v3480 = vadd.f32 %v3440, 1.0
        %v3481 = vadd.f32 %v3441, 1.0
        %v3482 = vadd.f32 %v3442, 1.0
        %v3483 = vadd.f32 %v3443, 1.0
        %v3484 = vadd.f32 %v3444, 1.0
        %v3485 = vadd.f32 %v3445, 1.0
        %v3486 = vadd.f32 %v3446, 1.0
        %v3487 = vadd.f32 %v3447, 1.0
        %v3488 = vadd.f32 %v3448, 1.0
        %v3489 = vadd.f32 %v3449, 1.0
        %v3490 = vadd.f32 %v3450, 1.0
        %v3491 = vadd.f32 %v3451, 1.0
        %v3492 = vadd.f32 %v3452, 1.0
        %v3493 = vadd.f32 %v3453, 1.0
        %v3494 = vadd.f32 %v3454, 1.0
        %v3495 = vadd.f32 %v3455, 1.0
        %v3496 = vadd.f32 %v3456, 1.0
        %v3497 = vadd.f32 %v3457, 1.0
        %v3498 = vadd.f32 %v3458, 1.0
        %v3499 = vadd.f32 %v3459, 1.0
        %v3500 = vrcp.pop %v3460
        %v3501 = vrcp.pop %v3461
        %v3502 = vrcp.pop %v3462
        %v3503 = vrcp.pop %v3463
        %v3504 = vrcp.pop %v3464
        %v3505 = vrcp.pop %v3465
        %v3506 = vrcp.pop %v3466
        %v3507 = vrcp.pop %v3467
        %v3508 = vrcp.pop %v3468
        %v3509 = vrcp.pop %v3469
        %v3510 = vrcp.pop %v3470
        %v3511 = vrcp.pop %v3471
        %v3512 = vrcp.pop %v3472
        %v3513 = vrcp.pop %v3473
        %v3514 = vrcp.pop %v3474
        %v3515 = vrcp.pop %v3475
        %v3516 = vrcp.pop %v3476
        %v3517 = vrcp.pop %v3477
        %v3518 = vrcp.pop %v3478
        %v3519 = vrcp.pop %v3479
        %v3520 = vrcp.pop %v3480
        %v3521 = vrcp.pop %v3481
        %v3522 = vrcp.pop %v3482
        %v3523 = vrcp.pop %v3483
        %v3524 = vrcp.pop %v3484
        %v3525 = vrcp.pop %v3485
        %v3526 = vrcp.pop %v3486
        %v3527 = vrcp.pop %v3487
        %v3528 = vrcp.pop %v3488
        %v3529 = vrcp.pop %v3489
        %v3530 = vrcp.pop %v3490
        %v3531 = vrcp.pop %v3491
        %v3532 = vrcp.pop %v3492
        %v3533 = vrcp.pop %v3493
        %v3534 = vrcp.pop %v3494
        %v3535 = vrcp.pop %v3495
        %v3536 = vrcp.pop %v3496
        %v3537 = vrcp.pop %v3497
        %v3538 = vrcp.pop %v3498
        %v3539 = vrcp.pop %v3499
        %v3540 = vmul.f32 %v3500, 1.0614054
        %v3541 = vmul.f32 %v3501, 1.0614054
        %v3542 = vmul.f32 %v3502, 1.0614054
        %v3543 = vmul.f32 %v3503, 1.0614054
        %v3544 = vmul.f32 %v3504, 1.0614054
        %v3545 = vmul.f32 %v3505, 1.0614054
        %v3546 = vmul.f32 %v3506, 1.0614054
        %v3547 = vmul.f32 %v3507, 1.0614054
        %v3548 = vmul.f32 %v3508, 1.0614054
        %v3549 = vmul.f32 %v3509, 1.0614054
        %v3550 = vmul.f32 %v3510, 1.0614054
        %v3551 = vmul.f32 %v3511, 1.0614054
        %v3552 = vmul.f32 %v3512, 1.0614054
        %v3553 = vmul.f32 %v3513, 1.0614054
        %v3554 = vmul.f32 %v3514, 1.0614054
        %v3555 = vmul.f32 %v3515, 1.0614054
        %v3556 = vmul.f32 %v3516, 1.0614054
        %v3557 = vmul.f32 %v3517, 1.0614054
        %v3558 = vmul.f32 %v3518, 1.0614054
        %v3559 = vmul.f32 %v3519, 1.0614054
        %v3560 = vmul.f32 %v3520, 1.0614054
        %v3561 = vmul.f32 %v3521, 1.0614054
        %v3562 = vmul.f32 %v3522, 1.0614054
        %v3563 = vmul.f32 %v3523, 1.0614054
        %v3564 = vmul.f32 %v3524, 1.0614054
        %v3565 = vmul.f32 %v3525, 1.0614054
        %v3566 = vmul.f32 %v3526, 1.0614054
        %v3567 = vmul.f32 %v3527, 1.0614054
        %v3568 = vmul.f32 %v3528, 1.0614054
        %v3569 = vmul.f32 %v3529, 1.0614054
        %v3570 = vmul.f32 %v3530, 1.0614054
        %v3571 = vmul.f32 %v3531, 1.0614054
        %v3572 = vmul.f32 %v3532, 1.0614054
        %v3573 = vmul.f32 %v3533, 1.0614054
        %v3574 = vmul.f32 %v3534, 1.0614054
        %v3575 = vmul.f32 %v3535, 1.0614054
        %v3576 = vmul.f32 %v3536, 1.0614054
        %v3577 = vmul.f32 %v3537, 1.0614054
        %v3578 = vmul.f32 %v3538, 1.0614054
        %v3579 = vmul.f32 %v3539, 1.0614054
        %v3580 = vadd.f32 %v3540, -1.4531521
        %v3581 = vadd.f32 %v3541, -1.4531521
        %v3582 = vadd.f32 %v3542, -1.4531521
        %v3583 = vadd.f32 %v3543, -1.4531521
        %v3584 = vadd.f32 %v3544, -1.4531521
        %v3585 = vadd.f32 %v3545, -1.4531521
        %v3586 = vadd.f32 %v3546, -1.4531521
        %v3587 = vadd.f32 %v3547, -1.4531521
        %v3588 = vadd.f32 %v3548, -1.4531521
        %v3589 = vadd.f32 %v3549, -1.4531521
        %v3590 = vadd.f32 %v3550, -1.4531521
        %v3591 = vadd.f32 %v3551, -1.4531521
        %v3592 = vadd.f32 %v3552, -1.4531521
        %v3593 = vadd.f32 %v3553, -1.4531521
        %v3594 = vadd.f32 %v3554, -1.4531521
        %v3595 = vadd.f32 %v3555, -1.4531521
        %v3596 = vadd.f32 %v3556, -1.4531521
        %v3597 = vadd.f32 %v3557, -1.4531521
        %v3598 = vadd.f32 %v3558, -1.4531521
        %v3599 = vadd.f32 %v3559, -1.4531521
        %v3600 = vadd.f32 %v3560, -1.4531521
        %v3601 = vadd.f32 %v3561, -1.4531521
        %v3602 = vadd.f32 %v3562, -1.4531521
        %v3603 = vadd.f32 %v3563, -1.4531521
        %v3604 = vadd.f32 %v3564, -1.4531521
        %v3605 = vadd.f32 %v3565, -1.4531521
        %v3606 = vadd.f32 %v3566, -1.4531521
        %v3607 = vadd.f32 %v3567, -1.4531521
        %v3608 = vadd.f32 %v3568, -1.4531521
        %v3609 = vadd.f32 %v3569, -1.4531521
        %v3610 = vadd.f32 %v3570, -1.4531521
        %v3611 = vadd.f32 %v3571, -1.4531521
        %v3612 = vadd.f32 %v3572, -1.4531521
        %v3613 = vadd.f32 %v3573, -1.4531521
        %v3614 = vadd.f32 %v3574, -1.4531521
        %v3615 = vadd.f32 %v3575, -1.4531521
        %v3616 = vadd.f32 %v3576, -1.4531521
        %v3617 = vadd.f32 %v3577, -1.4531521
        %v3618 = vadd.f32 %v3578, -1.4531521
        %v3619 = vadd.f32 %v3579, -1.4531521
        %v3620 = vmul.f32 %v3580, %v3500
        %v3621 = vmul.f32 %v3581, %v3501
        %v3622 = vmul.f32 %v3582, %v3502
        %v3623 = vmul.f32 %v3583, %v3503
        %v3624 = vmul.f32 %v3584, %v3504
        %v3625 = vmul.f32 %v3585, %v3505
        %v3626 = vmul.f32 %v3586, %v3506
        %v3627 = vmul.f32 %v3587, %v3507
        %v3628 = vmul.f32 %v3588, %v3508
        %v3629 = vmul.f32 %v3589, %v3509
        %v3630 = vmul.f32 %v3590, %v3510
        %v3631 = vmul.f32 %v3591, %v3511
        %v3632 = vmul.f32 %v3592, %v3512
        %v3633 = vmul.f32 %v3593, %v3513
        %v3634 = vmul.f32 %v3594, %v3514
        %v3635 = vmul.f32 %v3595, %v3515
        %v3636 = vmul.f32 %v3596, %v3516
        %v3637 = vmul.f32 %v3597, %v3517
        %v3638 = vmul.f32 %v3598, %v3518
        %v3639 = vmul.f32 %v3599, %v3519
        %v3640 = vmul.f32 %v3600, %v3520
        %v3641 = vmul.f32 %v3601, %v3521
        %v3642 = vmul.f32 %v3602, %v3522
        %v3643 = vmul.f32 %v3603, %v3523
        %v3644 = vmul.f32 %v3604, %v3524
        %v3645 = vmul.f32 %v3605, %v3525
        %v3646 = vmul.f32 %v3606, %v3526
        %v3647 = vmul.f32 %v3607, %v3527
        %v3648 = vmul.f32 %v3608, %v3528
        %v3649 = vmul.f32 %v3609, %v3529
        %v3650 = vmul.f32 %v3610, %v3530
        %v3651 = vmul.f32 %v3611, %v3531
        %v3652 = vmul.f32 %v3612, %v3532
        %v3653 = vmul.f32 %v3613, %v3533
        %v3654 = vmul.f32 %v3614, %v3534
        %v3655 = vmul.f32 %v3615, %v3535
        %v3656 = vmul.f32 %v3616, %v3536
        %v3657 = vmul.f32 %v3617, %v3537
        %v3658 = vmul.f32 %v3618, %v3538
        %v3659 = vmul.f32 %v3619, %v3539
        %v3660 = vadd.f32 %v3620, 1.4214138
        %v3661 = vadd.f32 %v3621, 1.4214138
        %v3662 = vadd.f32 %v3622, 1.4214138
        %v3663 = vadd.f32 %v3623, 1.4214138
        %v3664 = vadd.f32 %v3624, 1.4214138
        %v3665 = vadd.f32 %v3625, 1.4214138
        %v3666 = vadd.f32 %v3626, 1.4214138
        %v3667 = vadd.f32 %v3627, 1.4214138
        %v3668 = vadd.f32 %v3628, 1.4214138
        %v3669 = vadd.f32 %v3629, 1.4214138
        %v3670 = vadd.f32 %v3630, 1.4214138
        %v3671 = vadd.f32 %v3631, 1.4214138
        %v3672 = vadd.f32 %v3632, 1.4214138
        %v3673 = vadd.f32 %v3633, 1.4214138
        %v3674 = vadd.f32 %v3634, 1.4214138
        %v3675 = vadd.f32 %v3635, 1.4214138
        %v3676 = vadd.f32 %v3636, 1.4214138
        %v3677 = vadd.f32 %v3637, 1.4214138
        %v3678 = vadd.f32 %v3638, 1.4214138
        %v3679 = vadd.f32 %v3639, 1.4214138
        %v3680 = vadd.f32 %v3640, 1.4214138
        %v3681 = vadd.f32 %v3641, 1.4214138
        %v3682 = vadd.f32 %v3642, 1.4214138
        %v3683 = vadd.f32 %v3643, 1.4214138
        %v3684 = vadd.f32 %v3644, 1.4214138
        %v3685 = vadd.f32 %v3645, 1.4214138
        %v3686 = vadd.f32 %v3646, 1.4214138
        %v3687 = vadd.f32 %v3647, 1.4214138
        %v3688 = vadd.f32 %v3648, 1.4214138
        %v3689 = vadd.f32 %v3649, 1.4214138
        %v3690 = vadd.f32 %v3650, 1.4214138
        %v3691 = vadd.f32 %v3651, 1.4214138
        %v3692 = vadd.f32 %v3652, 1.4214138
        %v3693 = vadd.f32 %v3653, 1.4214138
        %v3694 = vadd.f32 %v3654, 1.4214138
        %v3695 = vadd.f32 %v3655, 1.4214138
        %v3696 = vadd.f32 %v3656, 1.4214138
        %v3697 = vadd.f32 %v3657, 1.4214138
        %v3698 = vadd.f32 %v3658, 1.4214138
        %v3699 = vadd.f32 %v3659, 1.4214138
        %v3700 = vmul.f32 %v3660, %v3500
        %v3701 = vmul.f32 %v3661, %v3501
        %v3702 = vmul.f32 %v3662, %v3502
        %v3703 = vmul.f32 %v3663, %v3503
        %v3704 = vmul.f32 %v3664, %v3504
        %v3705 = vmul.f32 %v3665, %v3505
        %v3706 = vmul.f32 %v3666, %v3506
        %v3707 = vmul.f32 %v3667, %v3507
        %v3708 = vmul.f32 %v3668, %v3508
        %v3709 = vmul.f32 %v3669, %v3509
        %v3710 = vmul.f32 %v3670, %v3510
        %v3711 = vmul.f32 %v3671, %v3511
        %v3712 = vmul.f32 %v3672, %v3512
        %v3713 = vmul.f32 %v3673, %v3513
        %v3714 = vmul.f32 %v3674, %v3514
        %v3715 = vmul.f32 %v3675, %v3515
        %v3716 = vmul.f32 %v3676, %v3516
        %v3717 = vmul.f32 %v3677, %v3517
        %v3718 = vmul.f32 %v3678, %v3518
        %v3719 = vmul.f32 %v3679, %v3519
        %v3720 = vmul.f32 %v3680, %v3520
        %v3721 = vmul.f32 %v3681, %v3521
        %v3722 = vmul.f32 %v3682, %v3522
        %v3723 = vmul.f32 %v3683, %v3523
        %v3724 = vmul.f32 %v3684, %v3524
        %v3725 = vmul.f32 %v3685, %v3525
        %v3726 = vmul.f32 %v3686, %v3526
        %v3727 = vmul.f32 %v3687, %v3527
        %v3728 = vmul.f32 %v3688, %v3528
        %v3729 = vmul.f32 %v3689, %v3529
        %v3730 = vmul.f32 %v3690, %v3530
        %v3731 = vmul.f32 %v3691, %v3531
        %v3732 = vmul.f32 %v3692, %v3532
        %v3733 = vmul.f32 %v3693, %v3533
        %v3734 = vmul.f32 %v3694, %v3534
        %v3735 = vmul.f32 %v3695, %v3535
        %v3736 = vmul.f32 %v3696, %v3536
        %v3737 = vmul.f32 %v3697, %v3537
        %v3738 = vmul.f32 %v3698, %v3538
        %v3739 = vmul.f32 %v3699, %v3539
        %v3740 = vadd.f32 %v3700, -0.28449672
        %v3741 = vadd.f32 %v3701, -0.28449672
        %v3742 = vadd.f32 %v3702, -0.28449672
        %v3743 = vadd.f32 %v3703, -0.28449672
        %v3744 = vadd.f32 %v3704, -0.28449672
        %v3745 = vadd.f32 %v3705, -0.28449672
        %v3746 = vadd.f32 %v3706, -0.28449672
        %v3747 = vadd.f32 %v3707, -0.28449672
        %v3748 = vadd.f32 %v3708, -0.28449672
        %v3749 = vadd.f32 %v3709, -0.28449672
        %v3750 = vadd.f32 %v3710, -0.28449672
        %v3751 = vadd.f32 %v3711, -0.28449672
        %v3752 = vadd.f32 %v3712, -0.28449672
        %v3753 = vadd.f32 %v3713, -0.28449672
        %v3754 = vadd.f32 %v3714, -0.28449672
        %v3755 = vadd.f32 %v3715, -0.28449672
        %v3756 = vadd.f32 %v3716, -0.28449672
        %v3757 = vadd.f32 %v3717, -0.28449672
        %v3758 = vadd.f32 %v3718, -0.28449672
        %v3759 = vadd.f32 %v3719, -0.28449672
        %v3760 = vadd.f32 %v3720, -0.28449672
        %v3761 = vadd.f32 %v3721, -0.28449672
        %v3762 = vadd.f32 %v3722, -0.28449672
        %v3763 = vadd.f32 %v3723, -0.28449672
        %v3764 = vadd.f32 %v3724, -0.28449672
        %v3765 = vadd.f32 %v3725, -0.28449672
        %v3766 = vadd.f32 %v3726, -0.28449672
        %v3767 = vadd.f32 %v3727, -0.28449672
        %v3768 = vadd.f32 %v3728, -0.28449672
        %v3769 = vadd.f32 %v3729, -0.28449672
        %v3770 = vadd.f32 %v3730, -0.28449672
        %v3771 = vadd.f32 %v3731, -0.28449672
        %v3772 = vadd.f32 %v3732, -0.28449672
        %v3773 = vadd.f32 %v3733, -0.28449672
        %v3774 = vadd.f32 %v3734, -0.28449672
        %v3775 = vadd.f32 %v3735, -0.28449672
        %v3776 = vadd.f32 %v3736, -0.28449672
        %v3777 = vadd.f32 %v3737, -0.28449672
        %v3778 = vadd.f32 %v3738, -0.28449672
        %v3779 = vadd.f32 %v3739, -0.28449672
        %v3780 = vmul.f32 %v3740, %v3500
        %v3781 = vmul.f32 %v3741, %v3501
        %v3782 = vmul.f32 %v3742, %v3502
        %v3783 = vmul.f32 %v3743, %v3503
        %v3784 = vmul.f32 %v3744, %v3504
        %v3785 = vmul.f32 %v3745, %v3505
        %v3786 = vmul.f32 %v3746, %v3506
        %v3787 = vmul.f32 %v3747, %v3507
        %v3788 = vmul.f32 %v3748, %v3508
        %v3789 = vmul.f32 %v3749, %v3509
        %v3790 = vmul.f32 %v3750, %v3510
        %v3791 = vmul.f32 %v3751, %v3511
        %v3792 = vmul.f32 %v3752, %v3512
        %v3793 = vmul.f32 %v3753, %v3513
        %v3794 = vmul.f32 %v3754, %v3514
        %v3795 = vmul.f32 %v3755, %v3515
        %v3796 = vmul.f32 %v3756, %v3516
        %v3797 = vmul.f32 %v3757, %v3517
        %v3798 = vmul.f32 %v3758, %v3518
        %v3799 = vmul.f32 %v3759, %v3519
        %v3800 = vmul.f32 %v3760, %v3520
        %v3801 = vmul.f32 %v3761, %v3521
        %v3802 = vmul.f32 %v3762, %v3522
        %v3803 = vmul.f32 %v3763, %v3523
        %v3804 = vmul.f32 %v3764, %v3524
        %v3805 = vmul.f32 %v3765, %v3525
        %v3806 = vmul.f32 %v3766, %v3526
        %v3807 = vmul.f32 %v3767, %v3527
        %v3808 = vmul.f32 %v3768, %v3528
        %v3809 = vmul.f32 %v3769, %v3529
        %v3810 = vmul.f32 %v3770, %v3530
        %v3811 = vmul.f32 %v3771, %v3531
        %v3812 = vmul.f32 %v3772, %v3532
        %v3813 = vmul.f32 %v3773, %v3533
        %v3814 = vmul.f32 %v3774, %v3534
        %v3815 = vmul.f32 %v3775, %v3535
        %v3816 = vmul.f32 %v3776, %v3536
        %v3817 = vmul.f32 %v3777, %v3537
        %v3818 = vmul.f32 %v3778, %v3538
        %v3819 = vmul.f32 %v3779, %v3539
        %v3820 = vadd.f32 %v3780, 0.2548296
        %v3821 = vadd.f32 %v3781, 0.2548296
        %v3822 = vadd.f32 %v3782, 0.2548296
        %v3823 = vadd.f32 %v3783, 0.2548296
        %v3824 = vadd.f32 %v3784, 0.2548296
        %v3825 = vadd.f32 %v3785, 0.2548296
        %v3826 = vadd.f32 %v3786, 0.2548296
        %v3827 = vadd.f32 %v3787, 0.2548296
        %v3828 = vadd.f32 %v3788, 0.2548296
        %v3829 = vadd.f32 %v3789, 0.2548296
        %v3830 = vadd.f32 %v3790, 0.2548296
        %v3831 = vadd.f32 %v3791, 0.2548296
        %v3832 = vadd.f32 %v3792, 0.2548296
        %v3833 = vadd.f32 %v3793, 0.2548296
        %v3834 = vadd.f32 %v3794, 0.2548296
        %v3835 = vadd.f32 %v3795, 0.2548296
        %v3836 = vadd.f32 %v3796, 0.2548296
        %v3837 = vadd.f32 %v3797, 0.2548296
        %v3838 = vadd.f32 %v3798, 0.2548296
        %v3839 = vadd.f32 %v3799, 0.2548296
        %v3840 = vadd.f32 %v3800, 0.2548296
        %v3841 = vadd.f32 %v3801, 0.2548296
        %v3842 = vadd.f32 %v3802, 0.2548296
        %v3843 = vadd.f32 %v3803, 0.2548296
        %v3844 = vadd.f32 %v3804, 0.2548296
        %v3845 = vadd.f32 %v3805, 0.2548296
        %v3846 = vadd.f32 %v3806, 0.2548296
        %v3847 = vadd.f32 %v3807, 0.2548296
        %v3848 = vadd.f32 %v3808, 0.2548296
        %v3849 = vadd.f32 %v3809, 0.2548296
        %v3850 = vadd.f32 %v3810, 0.2548296
        %v3851 = vadd.f32 %v3811, 0.2548296
        %v3852 = vadd.f32 %v3812, 0.2548296
        %v3853 = vadd.f32 %v3813, 0.2548296
        %v3854 = vadd.f32 %v3814, 0.2548296
        %v3855 = vadd.f32 %v3815, 0.2548296
        %v3856 = vadd.f32 %v3816, 0.2548296
        %v3857 = vadd.f32 %v3817, 0.2548296
        %v3858 = vadd.f32 %v3818, 0.2548296
        %v3859 = vadd.f32 %v3819, 0.2548296
        %v3860 = vmul.f32 %v3820, %v3500
        %v3861 = vmul.f32 %v3821, %v3501
        %v3862 = vmul.f32 %v3822, %v3502
        %v3863 = vmul.f32 %v3823, %v3503
        %v3864 = vmul.f32 %v3824, %v3504
        %v3865 = vmul.f32 %v3825, %v3505
        %v3866 = vmul.f32 %v3826, %v3506
        %v3867 = vmul.f32 %v3827, %v3507
        %v3868 = vmul.f32 %v3828, %v3508
        %v3869 = vmul.f32 %v3829, %v3509
        %v3870 = vmul.f32 %v3830, %v3510
        %v3871 = vmul.f32 %v3831, %v3511
        %v3872 = vmul.f32 %v3832, %v3512
        %v3873 = vmul.f32 %v3833, %v3513
        %v3874 = vmul.f32 %v3834, %v3514
        %v3875 = vmul.f32 %v3835, %v3515
        %v3876 = vmul.f32 %v3836, %v3516
        %v3877 = vmul.f32 %v3837, %v3517
        %v3878 = vmul.f32 %v3838, %v3518
        %v3879 = vmul.f32 %v3839, %v3519
        %v3880 = vmul.f32 %v3840, %v3520
        %v3881 = vmul.f32 %v3841, %v3521
        %v3882 = vmul.f32 %v3842, %v3522
        %v3883 = vmul.f32 %v3843, %v3523
        %v3884 = vmul.f32 %v3844, %v3524
        %v3885 = vmul.f32 %v3845, %v3525
        %v3886 = vmul.f32 %v3846, %v3526
        %v3887 = vmul.f32 %v3847, %v3527
        %v3888 = vmul.f32 %v3848, %v3528
        %v3889 = vmul.f32 %v3849, %v3529
        %v3890 = vmul.f32 %v3850, %v3530
        %v3891 = vmul.f32 %v3851, %v3531
        %v3892 = vmul.f32 %v3852, %v3532
        %v3893 = vmul.f32 %v3853, %v3533
        %v3894 = vmul.f32 %v3854, %v3534
        %v3895 = vmul.f32 %v3855, %v3535
        %v3896 = vmul.f32 %v3856, %v3536
        %v3897 = vmul.f32 %v3857, %v3537
        %v3898 = vmul.f32 %v3858, %v3538
        %v3899 = vmul.f32 %v3859, %v3539
        %v3900 = vsub.f32 0.0, %v3380
        %v3901 = vsub.f32 0.0, %v3381
        %v3902 = vsub.f32 0.0, %v3382
        %v3903 = vsub.f32 0.0, %v3383
        %v3904 = vsub.f32 0.0, %v3384
        %v3905 = vsub.f32 0.0, %v3385
        %v3906 = vsub.f32 0.0, %v3386
        %v3907 = vsub.f32 0.0, %v3387
        %v3908 = vsub.f32 0.0, %v3388
        %v3909 = vsub.f32 0.0, %v3389
        %v3910 = vsub.f32 0.0, %v3390
        %v3911 = vsub.f32 0.0, %v3391
        %v3912 = vsub.f32 0.0, %v3392
        %v3913 = vsub.f32 0.0, %v3393
        %v3914 = vsub.f32 0.0, %v3394
        %v3915 = vsub.f32 0.0, %v3395
        %v3916 = vsub.f32 0.0, %v3396
        %v3917 = vsub.f32 0.0, %v3397
        %v3918 = vsub.f32 0.0, %v3398
        %v3919 = vsub.f32 0.0, %v3399
        %v3920 = vsub.f32 0.0, %v3400
        %v3921 = vsub.f32 0.0, %v3401
        %v3922 = vsub.f32 0.0, %v3402
        %v3923 = vsub.f32 0.0, %v3403
        %v3924 = vsub.f32 0.0, %v3404
        %v3925 = vsub.f32 0.0, %v3405
        %v3926 = vsub.f32 0.0, %v3406
        %v3927 = vsub.f32 0.0, %v3407
        %v3928 = vsub.f32 0.0, %v3408
        %v3929 = vsub.f32 0.0, %v3409
        %v3930 = vsub.f32 0.0, %v3410
        %v3931 = vsub.f32 0.0, %v3411
        %v3932 = vsub.f32 0.0, %v3412
        %v3933 = vsub.f32 0.0, %v3413
        %v3934 = vsub.f32 0.0, %v3414
        %v3935 = vsub.f32 0.0, %v3415
        %v3936 = vsub.f32 0.0, %v3416
        %v3937 = vsub.f32 0.0, %v3417
        %v3938 = vsub.f32 0.0, %v3418
        %v3939 = vsub.f32 0.0, %v3419
        %v3940 = vmul.f32 %v3900, %v3380
        %v3941 = vmul.f32 %v3901, %v3381
        %v3942 = vmul.f32 %v3902, %v3382
        %v3943 = vmul.f32 %v3903, %v3383
        %v3944 = vmul.f32 %v3904, %v3384
        %v3945 = vmul.f32 %v3905, %v3385
        %v3946 = vmul.f32 %v3906, %v3386
        %v3947 = vmul.f32 %v3907, %v3387
        %v3948 = vmul.f32 %v3908, %v3388
        %v3949 = vmul.f32 %v3909, %v3389
        %v3950 = vmul.f32 %v3910, %v3390
        %v3951 = vmul.f32 %v3911, %v3391
        %v3952 = vmul.f32 %v3912, %v3392
        %v3953 = vmul.f32 %v3913, %v3393
        %v3954 = vmul.f32 %v3914, %v3394
        %v3955 = vmul.f32 %v3915, %v3395
        %v3956 = vmul.f32 %v3916, %v3396
        %v3957 = vmul.f32 %v3917, %v3397
        %v3958 = vmul.f32 %v3918, %v3398
        %v3959 = vmul.f32 %v3919, %v3399
        %v3960 = vmul.f32 %v3920, %v3400
        %v3961 = vmul.f32 %v3921, %v3401
        %v3962 = vmul.f32 %v3922, %v3402
        %v3963 = vmul.f32 %v3923, %v3403
        %v3964 = vmul.f32 %v3924, %v3404
        %v3965 = vmul.f32 %v3925, %v3405
        %v3966 = vmul.f32 %v3926, %v3406
        %v3967 = vmul.f32 %v3927, %v3407
        %v3968 = vmul.f32 %v3928, %v3408
        %v3969 = vmul.f32 %v3929, %v3409
        %v3970 = vmul.f32 %v3930, %v3410
        %v3971 = vmul.f32 %v3931, %v3411
        %v3972 = vmul.f32 %v3932, %v3412
        %v3973 = vmul.f32 %v3933, %v3413
        %v3974 = vmul.f32 %v3934, %v3414
        %v3975 = vmul.f32 %v3935, %v3415
        %v3976 = vmul.f32 %v3936, %v3416
        %v3977 = vmul.f32 %v3937, %v3417
        %v3978 = vmul.f32 %v3938, %v3418
        %v3979 = vmul.f32 %v3939, %v3419
        %v3980 = vmul.f32 %v3940, 1.442695
        %v3981 = vpow.pop %v3980
        %v3982 = vmul.f32 %v3941, 1.442695
        %v3983 = vpow.pop %v3982
        %v3984 = vmul.f32 %v3942, 1.442695
        %v3985 = vpow.pop %v3984
        %v3986 = vmul.f32 %v3943, 1.442695
        %v3987 = vpow.pop %v3986
        %v3988 = vmul.f32 %v3944, 1.442695
        %v3989 = vpow.pop %v3988
        %v3990 = vmul.f32 %v3945, 1.442695
        %v3991 = vpow.pop %v3990
        %v3992 = vmul.f32 %v3946, 1.442695
        %v3993 = vpow.pop %v3992
        %v3994 = vmul.f32 %v3947, 1.442695
        %v3995 = vpow.pop %v3994
        %v3996 = vmul.f32 %v3948, 1.442695
        %v3997 = vpow.pop %v3996
        %v3998 = vmul.f32 %v3949, 1.442695
        %v3999 = vpow.pop %v3998
        %v4000 = vmul.f32 %v3950, 1.442695
        %v4001 = vpow.pop %v4000
        %v4002 = vmul.f32 %v3951, 1.442695
        %v4003 = vpow.pop %v4002
        %v4004 = vmul.f32 %v3952, 1.442695
        %v4005 = vpow.pop %v4004
        %v4006 = vmul.f32 %v3953, 1.442695
        %v4007 = vpow.pop %v4006
        %v4008 = vmul.f32 %v3954, 1.442695
        %v4009 = vpow.pop %v4008
        %v4010 = vmul.f32 %v3955, 1.442695
        %v4011 = vpow.pop %v4010
        %v4012 = vmul.f32 %v3956, 1.442695
        %v4013 = vpow.pop %v4012
        %v4014 = vmul.f32 %v3957, 1.442695
        %v4015 = vpow.pop %v4014
        %v4016 = vmul.f32 %v3958, 1.442695
        %v4017 = vpow.pop %v4016
        %v4018 = vmul.f32 %v3959, 1.442695
        %v4019 = vpow.pop %v4018
        %v4020 = vmul.f32 %v3960, 1.442695
        %v4021 = vpow.pop %v4020
        %v4022 = vmul.f32 %v3961, 1.442695
        %v4023 = vpow.pop %v4022
        %v4024 = vmul.f32 %v3962, 1.442695
        %v4025 = vpow.pop %v4024
        %v4026 = vmul.f32 %v3963, 1.442695
        %v4027 = vpow.pop %v4026
        %v4028 = vmul.f32 %v3964, 1.442695
        %v4029 = vpow.pop %v4028
        %v4030 = vmul.f32 %v3965, 1.442695
        %v4031 = vpow.pop %v4030
        %v4032 = vmul.f32 %v3966, 1.442695
        %v4033 = vpow.pop %v4032
        %v4034 = vmul.f32 %v3967, 1.442695
        %v4035 = vpow.pop %v4034
        %v4036 = vmul.f32 %v3968, 1.442695
        %v4037 = vpow.pop %v4036
        %v4038 = vmul.f32 %v3969, 1.442695
        %v4039 = vpow.pop %v4038
        %v4040 = vmul.f32 %v3970, 1.442695
        %v4041 = vpow.pop %v4040
        %v4042 = vmul.f32 %v3971, 1.442695
        %v4043 = vpow.pop %v4042
        %v4044 = vmul.f32 %v3972, 1.442695
        %v4045 = vpow.pop %v4044
        %v4046 = vmul.f32 %v3973, 1.442695
        %v4047 = vpow.pop %v4046
        %v4048 = vmul.f32 %v3974, 1.442695
        %v4049 = vpow.pop %v4048
        %v4050 = vmul.f32 %v3975, 1.442695
        %v4051 = vpow.pop %v4050
        %v4052 = vmul.f32 %v3976, 1.442695
        %v4053 = vpow.pop %v4052
        %v4054 = vmul.f32 %v3977, 1.442695
        %v4055 = vpow.pop %v4054
        %v4056 = vmul.f32 %v3978, 1.442695
        %v4057 = vpow.pop %v4056
        %v4058 = vmul.f32 %v3979, 1.442695
        %v4059 = vpow.pop %v4058
        %v4060 = vmul.f32 %v3860, %v3981
        %v4061 = vmul.f32 %v3861, %v3983
        %v4062 = vmul.f32 %v3862, %v3985
        %v4063 = vmul.f32 %v3863, %v3987
        %v4064 = vmul.f32 %v3864, %v3989
        %v4065 = vmul.f32 %v3865, %v3991
        %v4066 = vmul.f32 %v3866, %v3993
        %v4067 = vmul.f32 %v3867, %v3995
        %v4068 = vmul.f32 %v3868, %v3997
        %v4069 = vmul.f32 %v3869, %v3999
        %v4070 = vmul.f32 %v3870, %v4001
        %v4071 = vmul.f32 %v3871, %v4003
        %v4072 = vmul.f32 %v3872, %v4005
        %v4073 = vmul.f32 %v3873, %v4007
        %v4074 = vmul.f32 %v3874, %v4009
        %v4075 = vmul.f32 %v3875, %v4011
        %v4076 = vmul.f32 %v3876, %v4013
        %v4077 = vmul.f32 %v3877, %v4015
        %v4078 = vmul.f32 %v3878, %v4017
        %v4079 = vmul.f32 %v3879, %v4019
        %v4080 = vmul.f32 %v3880, %v4021
        %v4081 = vmul.f32 %v3881, %v4023
        %v4082 = vmul.f32 %v3882, %v4025
        %v4083 = vmul.f32 %v3883, %v4027
        %v4084 = vmul.f32 %v3884, %v4029
        %v4085 = vmul.f32 %v3885, %v4031
        %v4086 = vmul.f32 %v3886, %v4033
        %v4087 = vmul.f32 %v3887, %v4035
        %v4088 = vmul.f32 %v3888, %v4037
        %v4089 = vmul.f32 %v3889, %v4039
        %v4090 = vmul.f32 %v3890, %v4041
        %v4091 = vmul.f32 %v3891, %v4043
        %v4092 = vmul.f32 %v3892, %v4045
        %v4093 = vmul.f32 %v3893, %v4047
        %v4094 = vmul.f32 %v3894, %v4049
        %v4095 = vmul.f32 %v3895, %v4051
        %v4096 = vmul.f32 %v3896, %v4053
        %v4097 = vmul.f32 %v3897, %v4055
        %v4098 = vmul.f32 %v3898, %v4057
        %v4099 = vmul.f32 %v3899, %v4059
        %v4100 = vsub.f32 1.0, %v4060
        %v4101 = vsub.f32 1.0, %v4061
        %v4102 = vsub.f32 1.0, %v4062
        %v4103 = vsub.f32 1.0, %v4063
        %v4104 = vsub.f32 1.0, %v4064
        %v4105 = vsub.f32 1.0, %v4065
        %v4106 = vsub.f32 1.0, %v4066
        %v4107 = vsub.f32 1.0, %v4067
        %v4108 = vsub.f32 1.0, %v4068
        %v4109 = vsub.f32 1.0, %v4069
        %v4110 = vsub.f32 1.0, %v4070
        %v4111 = vsub.f32 1.0, %v4071
        %v4112 = vsub.f32 1.0, %v4072
        %v4113 = vsub.f32 1.0, %v4073
        %v4114 = vsub.f32 1.0, %v4074
        %v4115 = vsub.f32 1.0, %v4075
        %v4116 = vsub.f32 1.0, %v4076
        %v4117 = vsub.f32 1.0, %v4077
        %v4118 = vsub.f32 1.0, %v4078
        %v4119 = vsub.f32 1.0, %v4079
        %v4120 = vsub.f32 1.0, %v4080
        %v4121 = vsub.f32 1.0, %v4081
        %v4122 = vsub.f32 1.0, %v4082
        %v4123 = vsub.f32 1.0, %v4083
        %v4124 = vsub.f32 1.0, %v4084
        %v4125 = vsub.f32 1.0, %v4085
        %v4126 = vsub.f32 1.0, %v4086
        %v4127 = vsub.f32 1.0, %v4087
        %v4128 = vsub.f32 1.0, %v4088
        %v4129 = vsub.f32 1.0, %v4089
        %v4130 = vsub.f32 1.0, %v4090
        %v4131 = vsub.f32 1.0, %v4091
        %v4132 = vsub.f32 1.0, %v4092
        %v4133 = vsub.f32 1.0, %v4093
        %v4134 = vsub.f32 1.0, %v4094
        %v4135 = vsub.f32 1.0, %v4095
        %v4136 = vsub.f32 1.0, %v4096
        %v4137 = vsub.f32 1.0, %v4097
        %v4138 = vsub.f32 1.0, %v4098
        %v4139 = vsub.f32 1.0, %v4099
        %vm4140 = vcmp.ge.f32.partialorder %v3340, 0.0
        %vm4141 = vcmp.ge.f32.partialorder %v3341, 0.0
        %vm4142 = vcmp.ge.f32.partialorder %v3342, 0.0
        %vm4143 = vcmp.ge.f32.partialorder %v3343, 0.0
        %vm4144 = vcmp.ge.f32.partialorder %v3344, 0.0
        %vm4145 = vcmp.ge.f32.partialorder %v3345, 0.0
        %vm4146 = vcmp.ge.f32.partialorder %v3346, 0.0
        %vm4147 = vcmp.ge.f32.partialorder %v3347, 0.0
        %vm4148 = vcmp.ge.f32.partialorder %v3348, 0.0
        %vm4149 = vcmp.ge.f32.partialorder %v3349, 0.0
        %vm4150 = vcmp.ge.f32.partialorder %v3350, 0.0
        %vm4151 = vcmp.ge.f32.partialorder %v3351, 0.0
        %vm4152 = vcmp.ge.f32.partialorder %v3352, 0.0
        %vm4153 = vcmp.ge.f32.partialorder %v3353, 0.0
        %vm4154 = vcmp.ge.f32.partialorder %v3354, 0.0
        %vm4155 = vcmp.ge.f32.partialorder %v3355, 0.0
        %vm4156 = vcmp.ge.f32.partialorder %v3356, 0.0
        %vm4157 = vcmp.ge.f32.partialorder %v3357, 0.0
        %vm4158 = vcmp.ge.f32.partialorder %v3358, 0.0
        %vm4159 = vcmp.ge.f32.partialorder %v3359, 0.0
        %vm4160 = vcmp.ge.f32.partialorder %v3360, 0.0
        %vm4161 = vcmp.ge.f32.partialorder %v3361, 0.0
        %vm4162 = vcmp.ge.f32.partialorder %v3362, 0.0
        %vm4163 = vcmp.ge.f32.partialorder %v3363, 0.0
        %vm4164 = vcmp.ge.f32.partialorder %v3364, 0.0
        %vm4165 = vcmp.ge.f32.partialorder %v3365, 0.0
        %vm4166 = vcmp.ge.f32.partialorder %v3366, 0.0
        %vm4167 = vcmp.ge.f32.partialorder %v3367, 0.0
        %vm4168 = vcmp.ge.f32.partialorder %v3368, 0.0
        %vm4169 = vcmp.ge.f32.partialorder %v3369, 0.0
        %vm4170 = vcmp.ge.f32.partialorder %v3370, 0.0
        %vm4171 = vcmp.ge.f32.partialorder %v3371, 0.0
        %vm4172 = vcmp.ge.f32.partialorder %v3372, 0.0
        %vm4173 = vcmp.ge.f32.partialorder %v3373, 0.0
        %vm4174 = vcmp.ge.f32.partialorder %v3374, 0.0
        %vm4175 = vcmp.ge.f32.partialorder %v3375, 0.0
        %vm4176 = vcmp.ge.f32.partialorder %v3376, 0.0
        %vm4177 = vcmp.ge.f32.partialorder %v3377, 0.0
        %vm4178 = vcmp.ge.f32.partialorder %v3378, 0.0
        %vm4179 = vcmp.ge.f32.partialorder %v3379, 0.0
        %v4180 = vsub.f32 0.0, %v4100
        %v4181 = vsub.f32 0.0, %v4101
        %v4182 = vsub.f32 0.0, %v4102
        %v4183 = vsub.f32 0.0, %v4103
        %v4184 = vsub.f32 0.0, %v4104
        %v4185 = vsub.f32 0.0, %v4105
        %v4186 = vsub.f32 0.0, %v4106
        %v4187 = vsub.f32 0.0, %v4107
        %v4188 = vsub.f32 0.0, %v4108
        %v4189 = vsub.f32 0.0, %v4109
        %v4190 = vsub.f32 0.0, %v4110
        %v4191 = vsub.f32 0.0, %v4111
        %v4192 = vsub.f32 0.0, %v4112
        %v4193 = vsub.f32 0.0, %v4113
        %v4194 = vsub.f32 0.0, %v4114
        %v4195 = vsub.f32 0.0, %v4115
        %v4196 = vsub.f32 0.0, %v4116
        %v4197 = vsub.f32 0.0, %v4117
        %v4198 = vsub.f32 0.0, %v4118
        %v4199 = vsub.f32 0.0, %v4119
        %v4200 = vsub.f32 0.0, %v4120
        %v4201 = vsub.f32 0.0, %v4121
        %v4202 = vsub.f32 0.0, %v4122
        %v4203 = vsub.f32 0.0, %v4123
        %v4204 = vsub.f32 0.0, %v4124
        %v4205 = vsub.f32 0.0, %v4125
        %v4206 = vsub.f32 0.0, %v4126
        %v4207 = vsub.f32 0.0, %v4127
        %v4208 = vsub.f32 0.0, %v4128
        %v4209 = vsub.f32 0.0, %v4129
        %v4210 = vsub.f32 0.0, %v4130
        %v4211 = vsub.f32 0.0, %v4131
        %v4212 = vsub.f32 0.0, %v4132
        %v4213 = vsub.f32 0.0, %v4133
        %v4214 = vsub.f32 0.0, %v4134
        %v4215 = vsub.f32 0.0, %v4135
        %v4216 = vsub.f32 0.0, %v4136
        %v4217 = vsub.f32 0.0, %v4137
        %v4218 = vsub.f32 0.0, %v4138
        %v4219 = vsub.f32 0.0, %v4139
        %v4220 = vsel %vm4140, %v4100, %v4180
        %v4221 = vsel %vm4141, %v4101, %v4181
        %v4222 = vsel %vm4142, %v4102, %v4182
        %v4223 = vsel %vm4143, %v4103, %v4183
        %v4224 = vsel %vm4144, %v4104, %v4184
        %v4225 = vsel %vm4145, %v4105, %v4185
        %v4226 = vsel %vm4146, %v4106, %v4186
        %v4227 = vsel %vm4147, %v4107, %v4187
        %v4228 = vsel %vm4148, %v4108, %v4188
        %v4229 = vsel %vm4149, %v4109, %v4189
        %v4230 = vsel %vm4150, %v4110, %v4190
        %v4231 = vsel %vm4151, %v4111, %v4191
        %v4232 = vsel %vm4152, %v4112, %v4192
        %v4233 = vsel %vm4153, %v4113, %v4193
        %v4234 = vsel %vm4154, %v4114, %v4194
        %v4235 = vsel %vm4155, %v4115, %v4195
        %v4236 = vsel %vm4156, %v4116, %v4196
        %v4237 = vsel %vm4157, %v4117, %v4197
        %v4238 = vsel %vm4158, %v4118, %v4198
        %v4239 = vsel %vm4159, %v4119, %v4199
        %v4240 = vsel %vm4160, %v4120, %v4200
        %v4241 = vsel %vm4161, %v4121, %v4201
        %v4242 = vsel %vm4162, %v4122, %v4202
        %v4243 = vsel %vm4163, %v4123, %v4203
        %v4244 = vsel %vm4164, %v4124, %v4204
        %v4245 = vsel %vm4165, %v4125, %v4205
        %v4246 = vsel %vm4166, %v4126, %v4206
        %v4247 = vsel %vm4167, %v4127, %v4207
        %v4248 = vsel %vm4168, %v4128, %v4208
        %v4249 = vsel %vm4169, %v4129, %v4209
        %v4250 = vsel %vm4170, %v4130, %v4210
        %v4251 = vsel %vm4171, %v4131, %v4211
        %v4252 = vsel %vm4172, %v4132, %v4212
        %v4253 = vsel %vm4173, %v4133, %v4213
        %v4254 = vsel %vm4174, %v4134, %v4214
        %v4255 = vsel %vm4175, %v4135, %v4215
        %v4256 = vsel %vm4176, %v4136, %v4216
        %v4257 = vsel %vm4177, %v4137, %v4217
        %v4258 = vsel %vm4178, %v4138, %v4218
        %v4259 = vsel %vm4179, %v4139, %v4219
        %v4260 = vadd.f32 %v4220, 1.0
        %v4261 = vadd.f32 %v4221, 1.0
        %v4262 = vadd.f32 %v4222, 1.0
        %v4263 = vadd.f32 %v4223, 1.0
        %v4264 = vadd.f32 %v4224, 1.0
        %v4265 = vadd.f32 %v4225, 1.0
        %v4266 = vadd.f32 %v4226, 1.0
        %v4267 = vadd.f32 %v4227, 1.0
        %v4268 = vadd.f32 %v4228, 1.0
        %v4269 = vadd.f32 %v4229, 1.0
        %v4270 = vadd.f32 %v4230, 1.0
        %v4271 = vadd.f32 %v4231, 1.0
        %v4272 = vadd.f32 %v4232, 1.0
        %v4273 = vadd.f32 %v4233, 1.0
        %v4274 = vadd.f32 %v4234, 1.0
        %v4275 = vadd.f32 %v4235, 1.0
        %v4276 = vadd.f32 %v4236, 1.0
        %v4277 = vadd.f32 %v4237, 1.0
        %v4278 = vadd.f32 %v4238, 1.0
        %v4279 = vadd.f32 %v4239, 1.0
        %v4280 = vadd.f32 %v4240, 1.0
        %v4281 = vadd.f32 %v4241, 1.0
        %v4282 = vadd.f32 %v4242, 1.0
        %v4283 = vadd.f32 %v4243, 1.0
        %v4284 = vadd.f32 %v4244, 1.0
        %v4285 = vadd.f32 %v4245, 1.0
        %v4286 = vadd.f32 %v4246, 1.0
        %v4287 = vadd.f32 %v4247, 1.0
        %v4288 = vadd.f32 %v4248, 1.0
        %v4289 = vadd.f32 %v4249, 1.0
        %v4290 = vadd.f32 %v4250, 1.0
        %v4291 = vadd.f32 %v4251, 1.0
        %v4292 = vadd.f32 %v4252, 1.0
        %v4293 = vadd.f32 %v4253, 1.0
        %v4294 = vadd.f32 %v4254, 1.0
        %v4295 = vadd.f32 %v4255, 1.0
        %v4296 = vadd.f32 %v4256, 1.0
        %v4297 = vadd.f32 %v4257, 1.0
        %v4298 = vadd.f32 %v4258, 1.0
        %v4299 = vadd.f32 %v4259, 1.0
        %v4300 = vmul.f32 %v3300, %v4260
        %v4301 = vmul.f32 %v3301, %v4261
        %v4302 = vmul.f32 %v3302, %v4262
        %v4303 = vmul.f32 %v3303, %v4263
        %v4304 = vmul.f32 %v3304, %v4264
        %v4305 = vmul.f32 %v3305, %v4265
        %v4306 = vmul.f32 %v3306, %v4266
        %v4307 = vmul.f32 %v3307, %v4267
        %v4308 = vmul.f32 %v3308, %v4268
        %v4309 = vmul.f32 %v3309, %v4269
        %v4310 = vmul.f32 %v3310, %v4270
        %v4311 = vmul.f32 %v3311, %v4271
        %v4312 = vmul.f32 %v3312, %v4272
        %v4313 = vmul.f32 %v3313, %v4273
        %v4314 = vmul.f32 %v3314, %v4274
        %v4315 = vmul.f32 %v3315, %v4275
        %v4316 = vmul.f32 %v3316, %v4276
        %v4317 = vmul.f32 %v3317, %v4277
        %v4318 = vmul.f32 %v3318, %v4278
        %v4319 = vmul.f32 %v3319, %v4279
        %v4320 = vmul.f32 %v3320, %v4280
        %v4321 = vmul.f32 %v3321, %v4281
        %v4322 = vmul.f32 %v3322, %v4282
        %v4323 = vmul.f32 %v3323, %v4283
        %v4324 = vmul.f32 %v3324, %v4284
        %v4325 = vmul.f32 %v3325, %v4285
        %v4326 = vmul.f32 %v3326, %v4286
        %v4327 = vmul.f32 %v3327, %v4287
        %v4328 = vmul.f32 %v3328, %v4288
        %v4329 = vmul.f32 %v3329, %v4289
        %v4330 = vmul.f32 %v3330, %v4290
        %v4331 = vmul.f32 %v3331, %v4291
        %v4332 = vmul.f32 %v3332, %v4292
        %v4333 = vmul.f32 %v3333, %v4293
        %v4334 = vmul.f32 %v3334, %v4294
        %v4335 = vmul.f32 %v3335, %v4295
        %v4336 = vmul.f32 %v3336, %v4296
        %v4337 = vmul.f32 %v3337, %v4297
        %v4338 = vmul.f32 %v3338, %v4298
        %v4339 = vmul.f32 %v3339, %v4299
        %v4340 = vpack.c.bf16 %v4304, %v4300
        %v4341 = vpack.c.bf16 %v4305, %v4301
        %v4342 = vpack.c.bf16 %v4306, %v4302
        %v4343 = vpack.c.bf16 %v4307, %v4303
        %v4344 = vpack.c.bf16 %v4312, %v4308
        %v4345 = vpack.c.bf16 %v4313, %v4309
        %v4346 = vpack.c.bf16 %v4314, %v4310
        %v4347 = vpack.c.bf16 %v4315, %v4311
        %v4348 = vpack.c.bf16 %v4320, %v4316
        %v4349 = vpack.c.bf16 %v4321, %v4317
        %v4350 = vpack.c.bf16 %v4322, %v4318
        %v4351 = vpack.c.bf16 %v4323, %v4319
        %v4352 = vpack.c.bf16 %v4328, %v4324
        %v4353 = vpack.c.bf16 %v4329, %v4325
        %v4354 = vpack.c.bf16 %v4330, %v4326
        %v4355 = vpack.c.bf16 %v4331, %v4327
        %v4356 = vpack.c.bf16 %v4336, %v4332
        %v4357 = vpack.c.bf16 %v4337, %v4333
        %v4358 = vpack.c.bf16 %v4338, %v4334
        %v4359 = vpack.c.bf16 %v4339, %v4335
        %v4360 = vld [vmem:[%s14] sm:$0xf]
        %v4361 = vld [vmem:[%s14 + $0x4] sm:$0xf]
        %v4362 = vld [vmem:[%s14 + $0x8] sm:$0xf]
        %v4363 = vld [vmem:[%s14 + $0xc] sm:$0xf]
        %v4364 = vld [vmem:[%s14 + $0x10] sm:$0xf]
        %v4365 = vld [vmem:[%s14 + $0x14] sm:$0xf]
        %v4366 = vld [vmem:[%s14 + $0x18] sm:$0xf]
        %v4367 = vld [vmem:[%s14 + $0x1c] sm:$0xf]
        %v4368 = vld [vmem:[%s14 + $0x20] sm:$0xf]
        %v4369 = vld [vmem:[%s14 + $0x24] sm:$0xf]
        %v4370 = vld [vmem:[%s14 + $0x28] sm:$0xf]
        %v4371 = vld [vmem:[%s14 + $0x2c] sm:$0xf]
        %v4372 = vld [vmem:[%s14 + $0x30] sm:$0xf]
        %v4373 = vld [vmem:[%s14 + $0x34] sm:$0xf]
        %v4374 = vld [vmem:[%s14 + $0x38] sm:$0xf]
        %v4375 = vld [vmem:[%s14 + $0x3c] sm:$0xf]
        %v4376 = vld [vmem:[%s14 + $0x40] sm:$0xf]
        %v4377 = vld [vmem:[%s14 + $0x44] sm:$0xf]
        %v4378 = vld [vmem:[%s14 + $0x48] sm:$0xf]
        %v4379 = vld [vmem:[%s14 + $0x4c] sm:$0xf]
        %v4380 = vld [vmem:[%s14 + $0x50] sm:$0xf]
        %v4381 = vld [vmem:[%s14 + $0x54] sm:$0xf]
        %v4382 = vld [vmem:[%s14 + $0x58] sm:$0xf]
        %v4383 = vld [vmem:[%s14 + $0x5c] sm:$0xf]
        %v4384 = vld [vmem:[%s14 + $0x60] sm:$0xf]
        %v4385 = vld [vmem:[%s14 + $0x64] sm:$0xf]
        %v4386 = vld [vmem:[%s14 + $0x68] sm:$0xf]
        %v4387 = vld [vmem:[%s14 + $0x6c] sm:$0xf]
        %v4388 = vld [vmem:[%s14 + $0x70] sm:$0xf]
        %v4389 = vld [vmem:[%s14 + $0x74] sm:$0xf]
        %v4390 = vld [vmem:[%s14 + $0x78] sm:$0xf]
        %v4391 = vld [vmem:[%s14 + $0x7c] sm:$0xf]
        %v4392 = vld [vmem:[%s14 + $0x80] sm:$0xf]
        %v4393 = vld [vmem:[%s14 + $0x84] sm:$0xf]
        %v4394 = vld [vmem:[%s14 + $0x88] sm:$0xf]
        %v4395 = vld [vmem:[%s14 + $0x8c] sm:$0xf]
        %v4396 = vld [vmem:[%s14 + $0x90] sm:$0xf]
        %v4397 = vld [vmem:[%s14 + $0x94] sm:$0xf]
        %v4398 = vld [vmem:[%s14 + $0x98] sm:$0xf]
        %v4399 = vld [vmem:[%s14 + $0x9c] sm:$0xf]
        %v4400 = vld [vmem:[%s14 + $0xa0] sm:$0xf]
        %v4401 = vld [vmem:[%s14 + $0xa4] sm:$0xf]
        %v4402 = vld [vmem:[%s14 + $0xa8] sm:$0xf]
        %v4403 = vld [vmem:[%s14 + $0xac] sm:$0xf]
        %v4404 = vld [vmem:[%s14 + $0xb0] sm:$0xf]
        %v4405 = vld [vmem:[%s14 + $0xb4] sm:$0xf]
        %v4406 = vld [vmem:[%s14 + $0xb8] sm:$0xf]
        %v4407 = vld [vmem:[%s14 + $0xbc] sm:$0xf]
        %v4408 = vld [vmem:[%s14 + $0xc0] sm:$0xf]
        %v4409 = vld [vmem:[%s14 + $0xc4] sm:$0xf]
        %v4410 = vld [vmem:[%s14 + $0xc8] sm:$0xf]
        %v4411 = vld [vmem:[%s14 + $0xcc] sm:$0xf]
        %v4412 = vld [vmem:[%s14 + $0xd0] sm:$0xf]
        %v4413 = vld [vmem:[%s14 + $0xd4] sm:$0xf]
        %v4414 = vld [vmem:[%s14 + $0xd8] sm:$0xf]
        %v4415 = vld [vmem:[%s14 + $0xdc] sm:$0xf]
        %v4416 = vld [vmem:[%s14 + $0xe0] sm:$0xf]
        %v4417 = vld [vmem:[%s14 + $0xe4] sm:$0xf]
        %v4418 = vld [vmem:[%s14 + $0xe8] sm:$0xf]
        %v4419 = vld [vmem:[%s14 + $0xec] sm:$0xf]
        %v4420 = vld [vmem:[%s14 + $0xf0] sm:$0xf]
        %v4421 = vld [vmem:[%s14 + $0xf4] sm:$0xf]
        %v4422 = vld [vmem:[%s14 + $0xf8] sm:$0xf]
        %v4423 = vld [vmem:[%s14 + $0xfc] sm:$0xf]
        %v4424 = vld [vmem:[%s15] sm:$0x1]
        %v4426 = vperm.slane %v4424, 0
        %v4492 = vunpack.c.l.b16 %v4360
        %v4493 = vunpack.c.l.b16 %v4361
        %v4494 = vunpack.c.l.b16 %v4362
        %v4495 = vunpack.c.l.b16 %v4363
        %v4496 = vunpack.c.l.b16 %v4364
        %v4497 = vunpack.c.l.b16 %v4365
        %v4498 = vunpack.c.l.b16 %v4366
        %v4499 = vunpack.c.l.b16 %v4367
        %v4500 = vunpack.c.l.b16 %v4368
        %v4501 = vunpack.c.l.b16 %v4369
        %v4502 = vunpack.c.l.b16 %v4370
        %v4503 = vunpack.c.l.b16 %v4371
        %v4504 = vunpack.c.l.b16 %v4372
        %v4505 = vunpack.c.l.b16 %v4373
        %v4506 = vunpack.c.l.b16 %v4374
        %v4507 = vunpack.c.l.b16 %v4375
        %v4508 = vunpack.c.l.b16 %v4376
        %v4509 = vunpack.c.l.b16 %v4377
        %v4510 = vunpack.c.l.b16 %v4378
        %v4511 = vunpack.c.l.b16 %v4379
        %v4512 = vunpack.c.l.b16 %v4380
        %v4513 = vunpack.c.l.b16 %v4381
        %v4514 = vunpack.c.l.b16 %v4382
        %v4515 = vunpack.c.l.b16 %v4383
        %v4516 = vunpack.c.l.b16 %v4384
        %v4517 = vunpack.c.l.b16 %v4385
        %v4518 = vunpack.c.l.b16 %v4386
        %v4519 = vunpack.c.l.b16 %v4387
        %v4520 = vunpack.c.l.b16 %v4388
        %v4521 = vunpack.c.l.b16 %v4389
        %v4522 = vunpack.c.l.b16 %v4390
        %v4523 = vunpack.c.l.b16 %v4391
        %v4524 = vunpack.c.l.b16 %v4392
        %v4525 = vunpack.c.l.b16 %v4393
        %v4526 = vunpack.c.l.b16 %v4394
        %v4527 = vunpack.c.l.b16 %v4395
        %v4528 = vunpack.c.l.b16 %v4396
        %v4529 = vunpack.c.l.b16 %v4397
        %v4530 = vunpack.c.l.b16 %v4398
        %v4531 = vunpack.c.l.b16 %v4399
        %v4532 = vunpack.c.l.b16 %v4400
        %v4533 = vunpack.c.l.b16 %v4401
        %v4534 = vunpack.c.l.b16 %v4402
        %v4535 = vunpack.c.l.b16 %v4403
        %v4536 = vunpack.c.l.b16 %v4404
        %v4537 = vunpack.c.l.b16 %v4405
        %v4538 = vunpack.c.l.b16 %v4406
        %v4539 = vunpack.c.l.b16 %v4407
        %v4540 = vunpack.c.l.b16 %v4408
        %v4541 = vunpack.c.l.b16 %v4409
        %v4542 = vunpack.c.l.b16 %v4410
        %v4543 = vunpack.c.l.b16 %v4411
        %v4544 = vunpack.c.l.b16 %v4412
        %v4545 = vunpack.c.l.b16 %v4413
        %v4546 = vunpack.c.l.b16 %v4414
        %v4547 = vunpack.c.l.b16 %v4415
        %v4548 = vunpack.c.l.b16 %v4416
        %v4549 = vunpack.c.l.b16 %v4417
        %v4550 = vunpack.c.l.b16 %v4418
        %v4551 = vunpack.c.l.b16 %v4419
        %v4552 = vunpack.c.l.b16 %v4420
        %v4553 = vunpack.c.l.b16 %v4421
        %v4554 = vunpack.c.l.b16 %v4422
        %v4555 = vunpack.c.l.b16 %v4423
        %v4556 = vpack.c.b16 %v4493, %v4492
        %v4557 = vpack.c.b16 %v4495, %v4494
        %v4558 = vpack.c.b16 %v4497, %v4496
        %v4559 = vpack.c.b16 %v4499, %v4498
        %v4560 = vpack.c.b16 %v4501, %v4500
        %v4561 = vpack.c.b16 %v4503, %v4502
        %v4562 = vpack.c.b16 %v4505, %v4504
        %v4563 = vpack.c.b16 %v4507, %v4506
        %v4564 = vpack.c.b16 %v4509, %v4508
        %v4565 = vpack.c.b16 %v4511, %v4510
        %v4566 = vpack.c.b16 %v4513, %v4512
        %v4567 = vpack.c.b16 %v4515, %v4514
        %v4568 = vpack.c.b16 %v4517, %v4516
        %v4569 = vpack.c.b16 %v4519, %v4518
        %v4570 = vpack.c.b16 %v4521, %v4520
        %v4571 = vpack.c.b16 %v4523, %v4522
        %v4572 = vpack.c.b16 %v4525, %v4524
        %v4573 = vpack.c.b16 %v4527, %v4526
        %v4574 = vpack.c.b16 %v4529, %v4528
        %v4575 = vpack.c.b16 %v4531, %v4530
        %v4576 = vpack.c.b16 %v4533, %v4532
        %v4577 = vpack.c.b16 %v4535, %v4534
        %v4578 = vpack.c.b16 %v4537, %v4536
        %v4579 = vpack.c.b16 %v4539, %v4538
        %v4580 = vpack.c.b16 %v4541, %v4540
        %v4581 = vpack.c.b16 %v4543, %v4542
        %v4582 = vpack.c.b16 %v4545, %v4544
        %v4583 = vpack.c.b16 %v4547, %v4546
        %v4584 = vpack.c.b16 %v4549, %v4548
        %v4585 = vpack.c.b16 %v4551, %v4550
        %v4586 = vpack.c.b16 %v4553, %v4552
        %v4587 = vpack.c.b16 %v4555, %v4554
        %4620 = vmatpush.bf16.msra.mxu0 %v4563
        %4621 = vmatpush.bf16.msra.mxu0 %v4562
        %4622 = vmatpush.bf16.msra.mxu0 %v4561
        %4623 = vmatpush.bf16.msra.mxu0 %v4560
        %4624 = vmatpush.bf16.msra.mxu0 %v4559
        %4625 = vmatpush.bf16.msra.mxu0 %v4558
        %4626 = vmatpush.bf16.msra.mxu0 %v4557
        %4627 = vmatpush.bf16.msra.mxu0 %v4556
        %4628 = vmatmul.bf16.gmra.mxu0 %v4340
        %v4629 = vpop.f32.mrf.mxu0
        %v4630 = vadd.f32 %v4426, %v4629
        %v4631 = vpop.f32.mrf.mxu0
        %v4632 = vadd.f32 %v4426, %v4631
        %4633 = vmatmul.bf16.gmra.mxu0 %v4344
        %v4634 = vpop.f32.mrf.mxu0
        %v4635 = vadd.f32 %v4426, %v4634
        %v4636 = vpop.f32.mrf.mxu0
        %v4637 = vadd.f32 %v4426, %v4636
        %4638 = vmatmul.bf16.gmra.mxu0 %v4348
        %v4639 = vpop.f32.mrf.mxu0
        %v4640 = vadd.f32 %v4426, %v4639
        %v4641 = vpop.f32.mrf.mxu0
        %v4642 = vadd.f32 %v4426, %v4641
        %4643 = vmatmul.bf16.gmra.mxu0 %v4352
        %v4644 = vpop.f32.mrf.mxu0
        %v4645 = vadd.f32 %v4426, %v4644
        %v4646 = vpop.f32.mrf.mxu0
        %v4647 = vadd.f32 %v4426, %v4646
        %4648 = vmatmul.bf16.gmra.mxu0 %v4356
        %v4649 = vpop.f32.mrf.mxu0
        %v4650 = vadd.f32 %v4426, %v4649
        %v4651 = vpop.f32.mrf.mxu0
        %v4652 = vadd.f32 %v4426, %v4651
        %4653 = vdwg.mxu0
        %4654 = vmatpush.bf16.msra.mxu0 %v4571
        %4655 = vmatpush.bf16.msra.mxu0 %v4570
        %4656 = vmatpush.bf16.msra.mxu0 %v4569
        %4657 = vmatpush.bf16.msra.mxu0 %v4568
        %4658 = vmatpush.bf16.msra.mxu0 %v4567
        %4659 = vmatpush.bf16.msra.mxu0 %v4566
        %4660 = vmatpush.bf16.msra.mxu0 %v4565
        %4661 = vmatpush.bf16.msra.mxu0 %v4564
        %4662 = vmatmul.bf16.gmra.mxu0 %v4341
        %v4663 = vpop.f32.mrf.mxu0
        %v4664 = vadd.f32 %v4630, %v4663
        %v4665 = vpop.f32.mrf.mxu0
        %v4666 = vadd.f32 %v4632, %v4665
        %4667 = vmatmul.bf16.gmra.mxu0 %v4345
        %v4668 = vpop.f32.mrf.mxu0
        %v4669 = vadd.f32 %v4635, %v4668
        %v4670 = vpop.f32.mrf.mxu0
        %v4671 = vadd.f32 %v4637, %v4670
        %4672 = vmatmul.bf16.gmra.mxu0 %v4349
        %v4673 = vpop.f32.mrf.mxu0
        %v4674 = vadd.f32 %v4640, %v4673
        %v4675 = vpop.f32.mrf.mxu0
        %v4676 = vadd.f32 %v4642, %v4675
        %4677 = vmatmul.bf16.gmra.mxu0 %v4353
        %v4678 = vpop.f32.mrf.mxu0
        %v4679 = vadd.f32 %v4645, %v4678
        %v4680 = vpop.f32.mrf.mxu0
        %v4681 = vadd.f32 %v4647, %v4680
        %4682 = vmatmul.bf16.gmra.mxu0 %v4357
        %v4683 = vpop.f32.mrf.mxu0
        %v4684 = vadd.f32 %v4650, %v4683
        %v4685 = vpop.f32.mrf.mxu0
        %v4686 = vadd.f32 %v4652, %v4685
        %4687 = vdwg.mxu0
        %4688 = vmatpush.bf16.msra.mxu0 %v4579
        %4689 = vmatpush.bf16.msra.mxu0 %v4578
        %4690 = vmatpush.bf16.msra.mxu0 %v4577
        %4691 = vmatpush.bf16.msra.mxu0 %v4576
        %4692 = vmatpush.bf16.msra.mxu0 %v4575
        %4693 = vmatpush.bf16.msra.mxu0 %v4574
        %4694 = vmatpush.bf16.msra.mxu0 %v4573
        %4695 = vmatpush.bf16.msra.mxu0 %v4572
        %4696 = vmatmul.bf16.gmra.mxu0 %v4342
        %v4697 = vpop.f32.mrf.mxu0
        %v4698 = vadd.f32 %v4664, %v4697
        %v4699 = vpop.f32.mrf.mxu0
        %v4700 = vadd.f32 %v4666, %v4699
        %4701 = vmatmul.bf16.gmra.mxu0 %v4346
        %v4702 = vpop.f32.mrf.mxu0
        %v4703 = vadd.f32 %v4669, %v4702
        %v4704 = vpop.f32.mrf.mxu0
        %v4705 = vadd.f32 %v4671, %v4704
        %4706 = vmatmul.bf16.gmra.mxu0 %v4350
        %v4707 = vpop.f32.mrf.mxu0
        %v4708 = vadd.f32 %v4674, %v4707
        %v4709 = vpop.f32.mrf.mxu0
        %v4710 = vadd.f32 %v4676, %v4709
        %4711 = vmatmul.bf16.gmra.mxu0 %v4354
        %v4712 = vpop.f32.mrf.mxu0
        %v4713 = vadd.f32 %v4679, %v4712
        %v4714 = vpop.f32.mrf.mxu0
        %v4715 = vadd.f32 %v4681, %v4714
        %4716 = vmatmul.bf16.gmra.mxu0 %v4358
        %v4717 = vpop.f32.mrf.mxu0
        %v4718 = vadd.f32 %v4684, %v4717
        %v4719 = vpop.f32.mrf.mxu0
        %v4720 = vadd.f32 %v4686, %v4719
        %4721 = vdwg.mxu0
        %4722 = vmatpush.bf16.msra.mxu0 %v4587
        %4723 = vmatpush.bf16.msra.mxu0 %v4586
        %4724 = vmatpush.bf16.msra.mxu0 %v4585
        %4725 = vmatpush.bf16.msra.mxu0 %v4584
        %4726 = vmatpush.bf16.msra.mxu0 %v4583
        %4727 = vmatpush.bf16.msra.mxu0 %v4582
        %4728 = vmatpush.bf16.msra.mxu0 %v4581
        %4729 = vmatpush.bf16.msra.mxu0 %v4580
        %4730 = vmatmul.bf16.gmra.mxu0 %v4343
        %v4731 = vpop.f32.mrf.mxu0
        %v4732 = vadd.f32 %v4698, %v4731
        %v4733 = vpop.f32.mrf.mxu0
        %v4734 = vadd.f32 %v4700, %v4733
        %4735 = vmatmul.bf16.gmra.mxu0 %v4347
        %v4736 = vpop.f32.mrf.mxu0
        %v4737 = vadd.f32 %v4703, %v4736
        %v4738 = vpop.f32.mrf.mxu0
        %v4739 = vadd.f32 %v4705, %v4738
        %4740 = vmatmul.bf16.gmra.mxu0 %v4351
        %v4741 = vpop.f32.mrf.mxu0
        %v4742 = vadd.f32 %v4708, %v4741
        %v4743 = vpop.f32.mrf.mxu0
        %v4744 = vadd.f32 %v4710, %v4743
        %4745 = vmatmul.bf16.gmra.mxu0 %v4355
        %v4746 = vpop.f32.mrf.mxu0
        %v4747 = vadd.f32 %v4713, %v4746
        %v4748 = vpop.f32.mrf.mxu0
        %v4749 = vadd.f32 %v4715, %v4748
        %4750 = vmatmul.bf16.gmra.mxu0 %v4359
        %v4751 = vpop.f32.mrf.mxu0
        %v4752 = vadd.f32 %v4718, %v4751
        %v4753 = vpop.f32.mrf.mxu0
        %v4754 = vadd.f32 %v4720, %v4753
        %4755 = vdwg.mxu0
        %v4756 = vadd.f32 %v2719, %v4732
        %v4757 = vadd.f32 %v2720, %v4734
        %v4758 = vadd.f32 %v2721, %v4737
        %v4759 = vadd.f32 %v2722, %v4739
        %v4760 = vadd.f32 %v2723, %v4742
        %v4761 = vadd.f32 %v2724, %v4744
        %v4762 = vadd.f32 %v2725, %v4747
        %v4763 = vadd.f32 %v2726, %v4749
        %v4764 = vadd.f32 %v2727, %v4752
        %v4765 = vadd.f32 %v2728, %v4754
        %s4766 = scalar_lea.vmem %s4, 1
        %v4767 = vld [vmem:[%s4766] sm:$0x1]
        %s4768 = scalar_lea.vmem %s5, 1
        %v4769 = vld [vmem:[%s4768] sm:$0x1]
        %4770 = vadd.xlane.f32.xlu0 %v4756
        %v4771 = vpop.xlane.xlu0 %4770
        %4772 = vadd.xlane.f32.xlu0 %v4757
        %v4773 = vpop.xlane.xlu0 %4772
        %4774 = vadd.xlane.f32.xlu0 %v4758
        %v4775 = vpop.xlane.xlu0 %4774
        %4776 = vadd.xlane.f32.xlu0 %v4759
        %v4777 = vpop.xlane.xlu0 %4776
        %4778 = vadd.xlane.f32.xlu0 %v4760
        %v4779 = vpop.xlane.xlu0 %4778
        %4780 = vadd.xlane.f32.xlu0 %v4761
        %v4781 = vpop.xlane.xlu0 %4780
        %4782 = vadd.xlane.f32.xlu0 %v4762
        %v4783 = vpop.xlane.xlu0 %4782
        %4784 = vadd.xlane.f32.xlu0 %v4763
        %v4785 = vpop.xlane.xlu0 %4784
        %4786 = vadd.xlane.f32.xlu0 %v4764
        %v4787 = vpop.xlane.xlu0 %4786
        %4788 = vadd.xlane.f32.xlu0 %v4765
        %v4789 = vpop.xlane.xlu0 %4788
        %v4790 = vmul.f32 %v4771, %v1517
        %v4791 = vmul.f32 %v4773, %v1517
        %v4792 = vmul.f32 %v4775, %v1517
        %v4793 = vmul.f32 %v4777, %v1517
        %v4794 = vmul.f32 %v4779, %v1517
        %v4795 = vmul.f32 %v4781, %v1517
        %v4796 = vmul.f32 %v4783, %v1517
        %v4797 = vmul.f32 %v4785, %v1517
        %v4798 = vmul.f32 %v4787, %v1517
        %v4799 = vmul.f32 %v4789, %v1517
        %v4800 = vsub.f32 %v4756, %v4790
        %v4801 = vsub.f32 %v4757, %v4791
        %v4802 = vsub.f32 %v4758, %v4792
        %v4803 = vsub.f32 %v4759, %v4793
        %v4804 = vsub.f32 %v4760, %v4794
        %v4805 = vsub.f32 %v4761, %v4795
        %v4806 = vsub.f32 %v4762, %v4796
        %v4807 = vsub.f32 %v4763, %v4797
        %v4808 = vsub.f32 %v4764, %v4798
        %v4809 = vsub.f32 %v4765, %v4799
        %v4810 = vmul.f32 %v4800, %v4800
        %v4811 = vmul.f32 %v4801, %v4801
        %v4812 = vmul.f32 %v4802, %v4802
        %v4813 = vmul.f32 %v4803, %v4803
        %v4814 = vmul.f32 %v4804, %v4804
        %v4815 = vmul.f32 %v4805, %v4805
        %v4816 = vmul.f32 %v4806, %v4806
        %v4817 = vmul.f32 %v4807, %v4807
        %v4818 = vmul.f32 %v4808, %v4808
        %v4819 = vmul.f32 %v4809, %v4809
        %4820 = vadd.xlane.f32.xlu0 %v4810
        %v4821 = vpop.xlane.xlu0 %4820
        %4822 = vadd.xlane.f32.xlu0 %v4811
        %v4823 = vpop.xlane.xlu0 %4822
        %4824 = vadd.xlane.f32.xlu0 %v4812
        %v4825 = vpop.xlane.xlu0 %4824
        %4826 = vadd.xlane.f32.xlu0 %v4813
        %v4827 = vpop.xlane.xlu0 %4826
        %4828 = vadd.xlane.f32.xlu0 %v4814
        %v4829 = vpop.xlane.xlu0 %4828
        %4830 = vadd.xlane.f32.xlu0 %v4815
        %v4831 = vpop.xlane.xlu0 %4830
        %4832 = vadd.xlane.f32.xlu0 %v4816
        %v4833 = vpop.xlane.xlu0 %4832
        %4834 = vadd.xlane.f32.xlu0 %v4817
        %v4835 = vpop.xlane.xlu0 %4834
        %4836 = vadd.xlane.f32.xlu0 %v4818
        %v4837 = vpop.xlane.xlu0 %4836
        %4838 = vadd.xlane.f32.xlu0 %v4819
        %v4839 = vpop.xlane.xlu0 %4838
        %v4840 = vmul.f32 %v4821, %v1517
        %v4841 = vmul.f32 %v4823, %v1517
        %v4842 = vmul.f32 %v4825, %v1517
        %v4843 = vmul.f32 %v4827, %v1517
        %v4844 = vmul.f32 %v4829, %v1517
        %v4845 = vmul.f32 %v4831, %v1517
        %v4846 = vmul.f32 %v4833, %v1517
        %v4847 = vmul.f32 %v4835, %v1517
        %v4848 = vmul.f32 %v4837, %v1517
        %v4849 = vmul.f32 %v4839, %v1517
        %v4850 = vadd.f32 %v4840, 1e-06
        %v4851 = vadd.f32 %v4841, 1e-06
        %v4852 = vadd.f32 %v4842, 1e-06
        %v4853 = vadd.f32 %v4843, 1e-06
        %v4854 = vadd.f32 %v4844, 1e-06
        %v4855 = vadd.f32 %v4845, 1e-06
        %v4856 = vadd.f32 %v4846, 1e-06
        %v4857 = vadd.f32 %v4847, 1e-06
        %v4858 = vadd.f32 %v4848, 1e-06
        %v4859 = vadd.f32 %v4849, 1e-06
        %v4860 = vrsqrt.pop %v4850
        %v4861 = vmul.f32 %v4860, %v4850
        %v4862 = vmul.f32 %v4861, %v4860
        %v4863 = vmul.f32 0.5, %v4862
        %v4864 = vsub.f32 1.5, %v4863
        %v4865 = vmul.f32 %v4860, %v4864
        %vm4866 = vweird.f32 %v4850
        %vm4867 = vweird.f32 %v4860
        %vm4868 = vmor %vm4866, %vm4867
        %v4869 = vsel %vm4868, %v4860, %v4865
        %v4870 = vrsqrt.pop %v4851
        %v4871 = vmul.f32 %v4870, %v4851
        %v4872 = vmul.f32 %v4871, %v4870
        %v4873 = vmul.f32 0.5, %v4872
        %v4874 = vsub.f32 1.5, %v4873
        %v4875 = vmul.f32 %v4870, %v4874
        %vm4876 = vweird.f32 %v4851
        %vm4877 = vweird.f32 %v4870
        %vm4878 = vmor %vm4876, %vm4877
        %v4879 = vsel %vm4878, %v4870, %v4875
        %v4880 = vrsqrt.pop %v4852
        %v4881 = vmul.f32 %v4880, %v4852
        %v4882 = vmul.f32 %v4881, %v4880
        %v4883 = vmul.f32 0.5, %v4882
        %v4884 = vsub.f32 1.5, %v4883
        %v4885 = vmul.f32 %v4880, %v4884
        %vm4886 = vweird.f32 %v4852
        %vm4887 = vweird.f32 %v4880
        %vm4888 = vmor %vm4886, %vm4887
        %v4889 = vsel %vm4888, %v4880, %v4885
        %v4890 = vrsqrt.pop %v4853
        %v4891 = vmul.f32 %v4890, %v4853
        %v4892 = vmul.f32 %v4891, %v4890
        %v4893 = vmul.f32 0.5, %v4892
        %v4894 = vsub.f32 1.5, %v4893
        %v4895 = vmul.f32 %v4890, %v4894
        %vm4896 = vweird.f32 %v4853
        %vm4897 = vweird.f32 %v4890
        %vm4898 = vmor %vm4896, %vm4897
        %v4899 = vsel %vm4898, %v4890, %v4895
        %v4900 = vrsqrt.pop %v4854
        %v4901 = vmul.f32 %v4900, %v4854
        %v4902 = vmul.f32 %v4901, %v4900
        %v4903 = vmul.f32 0.5, %v4902
        %v4904 = vsub.f32 1.5, %v4903
        %v4905 = vmul.f32 %v4900, %v4904
        %vm4906 = vweird.f32 %v4854
        %vm4907 = vweird.f32 %v4900
        %vm4908 = vmor %vm4906, %vm4907
        %v4909 = vsel %vm4908, %v4900, %v4905
        %v4910 = vrsqrt.pop %v4855
        %v4911 = vmul.f32 %v4910, %v4855
        %v4912 = vmul.f32 %v4911, %v4910
        %v4913 = vmul.f32 0.5, %v4912
        %v4914 = vsub.f32 1.5, %v4913
        %v4915 = vmul.f32 %v4910, %v4914
        %vm4916 = vweird.f32 %v4855
        %vm4917 = vweird.f32 %v4910
        %vm4918 = vmor %vm4916, %vm4917
        %v4919 = vsel %vm4918, %v4910, %v4915
        %v4920 = vrsqrt.pop %v4856
        %v4921 = vmul.f32 %v4920, %v4856
        %v4922 = vmul.f32 %v4921, %v4920
        %v4923 = vmul.f32 0.5, %v4922
        %v4924 = vsub.f32 1.5, %v4923
        %v4925 = vmul.f32 %v4920, %v4924
        %vm4926 = vweird.f32 %v4856
        %vm4927 = vweird.f32 %v4920
        %vm4928 = vmor %vm4926, %vm4927
        %v4929 = vsel %vm4928, %v4920, %v4925
        %v4930 = vrsqrt.pop %v4857
        %v4931 = vmul.f32 %v4930, %v4857
        %v4932 = vmul.f32 %v4931, %v4930
        %v4933 = vmul.f32 0.5, %v4932
        %v4934 = vsub.f32 1.5, %v4933
        %v4935 = vmul.f32 %v4930, %v4934
        %vm4936 = vweird.f32 %v4857
        %vm4937 = vweird.f32 %v4930
        %vm4938 = vmor %vm4936, %vm4937
        %v4939 = vsel %vm4938, %v4930, %v4935
        %v4940 = vrsqrt.pop %v4858
        %v4941 = vmul.f32 %v4940, %v4858
        %v4942 = vmul.f32 %v4941, %v4940
        %v4943 = vmul.f32 0.5, %v4942
        %v4944 = vsub.f32 1.5, %v4943
        %v4945 = vmul.f32 %v4940, %v4944
        %vm4946 = vweird.f32 %v4858
        %vm4947 = vweird.f32 %v4940
        %vm4948 = vmor %vm4946, %vm4947
        %v4949 = vsel %vm4948, %v4940, %v4945
        %v4950 = vrsqrt.pop %v4859
        %v4951 = vmul.f32 %v4950, %v4859
        %v4952 = vmul.f32 %v4951, %v4950
        %v4953 = vmul.f32 0.5, %v4952
        %v4954 = vsub.f32 1.5, %v4953
        %v4955 = vmul.f32 %v4950, %v4954
        %vm4956 = vweird.f32 %v4859
        %vm4957 = vweird.f32 %v4950
        %vm4958 = vmor %vm4956, %vm4957
        %v4959 = vsel %vm4958, %v4950, %v4955
        %v4960 = vmul.f32 %v4800, %v4869
        %v4961 = vmul.f32 %v4801, %v4879
        %v4962 = vmul.f32 %v4802, %v4889
        %v4963 = vmul.f32 %v4803, %v4899
        %v4964 = vmul.f32 %v4804, %v4909
        %v4965 = vmul.f32 %v4805, %v4919
        %v4966 = vmul.f32 %v4806, %v4929
        %v4967 = vmul.f32 %v4807, %v4939
        %v4968 = vmul.f32 %v4808, %v4949
        %v4969 = vmul.f32 %v4809, %v4959
        %v4971 = vperm.slane %v4767, 0
        %v4973 = vmul.f32 %v4960, %v4971
        %v4974 = vmul.f32 %v4961, %v4971
        %v4975 = vmul.f32 %v4962, %v4971
        %v4976 = vmul.f32 %v4963, %v4971
        %v4977 = vmul.f32 %v4964, %v4971
        %v4978 = vmul.f32 %v4965, %v4971
        %v4979 = vmul.f32 %v4966, %v4971
        %v4980 = vmul.f32 %v4967, %v4971
        %v4981 = vmul.f32 %v4968, %v4971
        %v4982 = vmul.f32 %v4969, %v4971
        %v4984 = vperm.slane %v4769, 0
        %v4986 = vadd.f32 %v4973, %v4984
        %v4987 = vadd.f32 %v4974, %v4984
        %v4988 = vadd.f32 %v4975, %v4984
        %v4989 = vadd.f32 %v4976, %v4984
        %v4990 = vadd.f32 %v4977, %v4984
        %v4991 = vadd.f32 %v4978, %v4984
        %v4992 = vadd.f32 %v4979, %v4984
        %v4993 = vadd.f32 %v4980, %v4984
        %v4994 = vadd.f32 %v4981, %v4984
        %v4995 = vadd.f32 %v4982, %v4984
        %v4996 = vpack.c.bf16 %v4987, %v4986
        %v4997 = vpack.c.bf16 %v4989, %v4988
        %v4998 = vpack.c.bf16 %v4991, %v4990
        %v4999 = vpack.c.bf16 %v4993, %v4992
        %v5000 = vpack.c.bf16 %v4995, %v4994
        %s5001 = scalar_lea.vmem %s6, 192
        %v5002 = vld [vmem:[%s5001] sm:$0xff]
        %v5003 = vld [vmem:[%s5001 + $0x8] sm:$0xf]
        %v5004 = vld [vmem:[%s5001 + $0xc] sm:$0xff]
        %v5005 = vld [vmem:[%s5001 + $0x14] sm:$0xf]
        %v5006 = vld [vmem:[%s5001 + $0x18] sm:$0xff]
        %v5007 = vld [vmem:[%s5001 + $0x20] sm:$0xf]
        %v5008 = vld [vmem:[%s5001 + $0x24] sm:$0xff]
        %v5009 = vld [vmem:[%s5001 + $0x2c] sm:$0xf]
        %v5010 = vld [vmem:[%s5001 + $0x30] sm:$0xff]
        %v5011 = vld [vmem:[%s5001 + $0x38] sm:$0xf]
        %v5012 = vld [vmem:[%s5001 + $0x3c] sm:$0xff]
        %v5013 = vld [vmem:[%s5001 + $0x44] sm:$0xf]
        %v5014 = vld [vmem:[%s5001 + $0x48] sm:$0xff]
        %v5015 = vld [vmem:[%s5001 + $0x50] sm:$0xf]
        %v5016 = vld [vmem:[%s5001 + $0x54] sm:$0xff]
        %v5017 = vld [vmem:[%s5001 + $0x5c] sm:$0xf]
        %v5018 = vld [vmem:[%s5001 + $0x60] sm:$0xff]
        %v5019 = vld [vmem:[%s5001 + $0x68] sm:$0xf]
        %v5020 = vld [vmem:[%s5001 + $0x6c] sm:$0xff]
        %v5021 = vld [vmem:[%s5001 + $0x74] sm:$0xf]
        %v5022 = vld [vmem:[%s5001 + $0x78] sm:$0xff]
        %v5023 = vld [vmem:[%s5001 + $0x80] sm:$0xf]
        %v5024 = vld [vmem:[%s5001 + $0x84] sm:$0xff]
        %v5025 = vld [vmem:[%s5001 + $0x8c] sm:$0xf]
        %v5026 = vld [vmem:[%s5001 + $0x90] sm:$0xff]
        %v5027 = vld [vmem:[%s5001 + $0x98] sm:$0xf]
        %v5028 = vld [vmem:[%s5001 + $0x9c] sm:$0xff]
        %v5029 = vld [vmem:[%s5001 + $0xa4] sm:$0xf]
        %v5030 = vld [vmem:[%s5001 + $0xa8] sm:$0xff]
        %v5031 = vld [vmem:[%s5001 + $0xb0] sm:$0xf]
        %v5032 = vld [vmem:[%s5001 + $0xb4] sm:$0xff]
        %v5033 = vld [vmem:[%s5001 + $0xbc] sm:$0xf]
        %s5034 = scalar_lea.vmem %s7, 3
        %v5035 = vld [vmem:[%s5034] sm:$0x7]
        %v5037 = vperm.slane %v5035, 0
        %v5038 = vperm.slane %v5035, 1
        %v5039 = vperm.slane %v5035, 2
        %v5075 = vunpack.c.l.b16 %v5002
        %v5076 = vunpack.c.h.b16 %v5002
        %v5077 = vunpack.c.l.b16 %v5003
        %v5078 = vunpack.c.l.b16 %v5004
        %v5079 = vunpack.c.h.b16 %v5004
        %v5080 = vunpack.c.l.b16 %v5005
        %v5081 = vunpack.c.l.b16 %v5006
        %v5082 = vunpack.c.h.b16 %v5006
        %v5083 = vunpack.c.l.b16 %v5007
        %v5084 = vunpack.c.l.b16 %v5008
        %v5085 = vunpack.c.h.b16 %v5008
        %v5086 = vunpack.c.l.b16 %v5009
        %v5087 = vunpack.c.l.b16 %v5010
        %v5088 = vunpack.c.h.b16 %v5010
        %v5089 = vunpack.c.l.b16 %v5011
        %v5090 = vunpack.c.l.b16 %v5012
        %v5091 = vunpack.c.h.b16 %v5012
        %v5092 = vunpack.c.l.b16 %v5013
        %v5093 = vunpack.c.l.b16 %v5014
        %v5094 = vunpack.c.h.b16 %v5014
        %v5095 = vunpack.c.l.b16 %v5015
        %v5096 = vunpack.c.l.b16 %v5016
        %v5097 = vunpack.c.h.b16 %v5016
        %v5098 = vunpack.c.l.b16 %v5017
        %v5099 = vunpack.c.l.b16 %v5018
        %v5100 = vunpack.c.h.b16 %v5018
        %v5101 = vunpack.c.l.b16 %v5019
        %v5102 = vunpack.c.l.b16 %v5020
        %v5103 = vunpack.c.h.b16 %v5020
        %v5104 = vunpack.c.l.b16 %v5021
        %v5105 = vunpack.c.l.b16 %v5022
        %v5106 = vunpack.c.h.b16 %v5022
        %v5107 = vunpack.c.l.b16 %v5023
        %v5108 = vunpack.c.l.b16 %v5024
        %v5109 = vunpack.c.h.b16 %v5024
        %v5110 = vunpack.c.l.b16 %v5025
        %v5111 = vunpack.c.l.b16 %v5026
        %v5112 = vunpack.c.h.b16 %v5026
        %v5113 = vunpack.c.l.b16 %v5027
        %v5114 = vunpack.c.l.b16 %v5028
        %v5115 = vunpack.c.h.b16 %v5028
        %v5116 = vunpack.c.l.b16 %v5029
        %v5117 = vunpack.c.l.b16 %v5030
        %v5118 = vunpack.c.h.b16 %v5030
        %v5119 = vunpack.c.l.b16 %v5031
        %v5120 = vunpack.c.l.b16 %v5032
        %v5121 = vunpack.c.h.b16 %v5032
        %v5122 = vunpack.c.l.b16 %v5033
        %v5123 = vpack.c.b16 %v5078, %v5075
        %v5124 = vpack.c.b16 %v5079, %v5076
        %v5125 = vpack.c.b16 %v5080, %v5077
        %v5126 = vpack.c.b16 %v5084, %v5081
        %v5127 = vpack.c.b16 %v5085, %v5082
        %v5128 = vpack.c.b16 %v5086, %v5083
        %v5129 = vpack.c.b16 %v5090, %v5087
        %v5130 = vpack.c.b16 %v5091, %v5088
        %v5131 = vpack.c.b16 %v5092, %v5089
        %v5132 = vpack.c.b16 %v5096, %v5093
        %v5133 = vpack.c.b16 %v5097, %v5094
        %v5134 = vpack.c.b16 %v5098, %v5095
        %v5135 = vpack.c.b16 %v5102, %v5099
        %v5136 = vpack.c.b16 %v5103, %v5100
        %v5137 = vpack.c.b16 %v5104, %v5101
        %v5138 = vpack.c.b16 %v5108, %v5105
        %v5139 = vpack.c.b16 %v5109, %v5106
        %v5140 = vpack.c.b16 %v5110, %v5107
        %v5141 = vpack.c.b16 %v5114, %v5111
        %v5142 = vpack.c.b16 %v5115, %v5112
        %v5143 = vpack.c.b16 %v5116, %v5113
        %v5144 = vpack.c.b16 %v5120, %v5117
        %v5145 = vpack.c.b16 %v5121, %v5118
        %v5146 = vpack.c.b16 %v5122, %v5119
        %5171 = vmatpush.bf16.msra.mxu0 %v5144
        %5172 = vmatpush.bf16.msra.mxu0 %v5141
        %5173 = vmatpush.bf16.msra.mxu0 %v5138
        %5174 = vmatpush.bf16.msra.mxu0 %v5135
        %5175 = vmatpush.bf16.msra.mxu0 %v5132
        %5176 = vmatpush.bf16.msra.mxu0 %v5129
        %5177 = vmatpush.bf16.msra.mxu0 %v5126
        %5178 = vmatpush.bf16.msra.mxu0 %v5123
        %5179 = vmatmul.bf16.gmra.mxu0 %v4996
        %v5180 = vpop.f32.mrf.mxu0
        %v5181 = vadd.f32 %v5037, %v5180
        %v5182 = vpop.f32.mrf.mxu0
        %v5183 = vadd.f32 %v5037, %v5182
        %5184 = vmatmul.bf16.gmra.mxu0 %v4997
        %v5185 = vpop.f32.mrf.mxu0
        %v5186 = vadd.f32 %v5037, %v5185
        %v5187 = vpop.f32.mrf.mxu0
        %v5188 = vadd.f32 %v5037, %v5187
        %5189 = vmatmul.bf16.gmra.mxu0 %v4998
        %v5190 = vpop.f32.mrf.mxu0
        %v5191 = vadd.f32 %v5037, %v5190
        %v5192 = vpop.f32.mrf.mxu0
        %v5193 = vadd.f32 %v5037, %v5192
        %5194 = vmatmul.bf16.gmra.mxu0 %v4999
        %v5195 = vpop.f32.mrf.mxu0
        %v5196 = vadd.f32 %v5037, %v5195
        %v5197 = vpop.f32.mrf.mxu0
        %v5198 = vadd.f32 %v5037, %v5197
        %5199 = vmatmul.bf16.gmra.mxu0 %v5000
        %v5200 = vpop.f32.mrf.mxu0
        %v5201 = vadd.f32 %v5037, %v5200
        %v5202 = vpop.f32.mrf.mxu0
        %v5203 = vadd.f32 %v5037, %v5202
        %5204 = vdwg.mxu0
        %5205 = vmatpush.bf16.msra.mxu0 %v5145
        %5206 = vmatpush.bf16.msra.mxu0 %v5142
        %5207 = vmatpush.bf16.msra.mxu0 %v5139
        %5208 = vmatpush.bf16.msra.mxu0 %v5136
        %5209 = vmatpush.bf16.msra.mxu0 %v5133
        %5210 = vmatpush.bf16.msra.mxu0 %v5130
        %5211 = vmatpush.bf16.msra.mxu0 %v5127
        %5212 = vmatpush.bf16.msra.mxu0 %v5124
        %5213 = vmatmul.bf16.gmra.mxu0 %v4996
        %v5214 = vpop.f32.mrf.mxu0
        %v5215 = vadd.f32 %v5038, %v5214
        %v5216 = vpop.f32.mrf.mxu0
        %v5217 = vadd.f32 %v5038, %v5216
        %5218 = vmatmul.bf16.gmra.mxu0 %v4997
        %v5219 = vpop.f32.mrf.mxu0
        %v5220 = vadd.f32 %v5038, %v5219
        %v5221 = vpop.f32.mrf.mxu0
        %v5222 = vadd.f32 %v5038, %v5221
        %5223 = vmatmul.bf16.gmra.mxu0 %v4998
        %v5224 = vpop.f32.mrf.mxu0
        %v5225 = vadd.f32 %v5038, %v5224
        %v5226 = vpop.f32.mrf.mxu0
        %v5227 = vadd.f32 %v5038, %v5226
        %5228 = vmatmul.bf16.gmra.mxu0 %v4999
        %v5229 = vpop.f32.mrf.mxu0
        %v5230 = vadd.f32 %v5038, %v5229
        %v5231 = vpop.f32.mrf.mxu0
        %v5232 = vadd.f32 %v5038, %v5231
        %5233 = vmatmul.bf16.gmra.mxu0 %v5000
        %v5234 = vpop.f32.mrf.mxu0
        %v5235 = vadd.f32 %v5038, %v5234
        %v5236 = vpop.f32.mrf.mxu0
        %v5237 = vadd.f32 %v5038, %v5236
        %5238 = vdwg.mxu0
        %5239 = vmatpush.bf16.msra.mxu0 %v5146
        %5240 = vmatpush.bf16.msra.mxu0 %v5143
        %5241 = vmatpush.bf16.msra.mxu0 %v5140
        %5242 = vmatpush.bf16.msra.mxu0 %v5137
        %5243 = vmatpush.bf16.msra.mxu0 %v5134
        %5244 = vmatpush.bf16.msra.mxu0 %v5131
        %5245 = vmatpush.bf16.msra.mxu0 %v5128
        %5246 = vmatpush.bf16.msra.mxu0 %v5125
        %5247 = vmatmul.bf16.gmra.mxu0 %v4996
        %v5248 = vpop.f32.mrf.mxu0
        %v5249 = vadd.f32 %v5039, %v5248
        %v5250 = vpop.f32.mrf.mxu0
        %v5251 = vadd.f32 %v5039, %v5250
        %5252 = vmatmul.bf16.gmra.mxu0 %v4997
        %v5253 = vpop.f32.mrf.mxu0
        %v5254 = vadd.f32 %v5039, %v5253
        %v5255 = vpop.f32.mrf.mxu0
        %v5256 = vadd.f32 %v5039, %v5255
        %5257 = vmatmul.bf16.gmra.mxu0 %v4998
        %v5258 = vpop.f32.mrf.mxu0
        %v5259 = vadd.f32 %v5039, %v5258
        %v5260 = vpop.f32.mrf.mxu0
        %v5261 = vadd.f32 %v5039, %v5260
        %5262 = vmatmul.bf16.gmra.mxu0 %v4999
        %v5263 = vpop.f32.mrf.mxu0
        %v5264 = vadd.f32 %v5039, %v5263
        %v5265 = vpop.f32.mrf.mxu0
        %v5266 = vadd.f32 %v5039, %v5265
        %5267 = vmatmul.bf16.gmra.mxu0 %v5000
        %v5268 = vpop.f32.mrf.mxu0
        %v5269 = vadd.f32 %v5039, %v5268
        %v5270 = vpop.f32.mrf.mxu0
        %v5271 = vadd.f32 %v5039, %v5270
        %5272 = vdwg.mxu0
        %v5273 = vpack.c.bf16 %v5183, %v5181
        %v5274 = vpack.c.bf16 %v5188, %v5186
        %v5275 = vpack.c.bf16 %v5193, %v5191
        %v5276 = vpack.c.bf16 %v5198, %v5196
        %v5277 = vpack.c.bf16 %v5203, %v5201
        %v5278 = vpack.c.bf16 %v5217, %v5215
        %v5279 = vpack.c.bf16 %v5222, %v5220
        %v5280 = vpack.c.bf16 %v5227, %v5225
        %v5281 = vpack.c.bf16 %v5232, %v5230
        %v5282 = vpack.c.bf16 %v5237, %v5235
        %v5284 = vsel %vm2009, %v5273, 0
        %v5287 = vsel %vm2009, %v5274, 0
        %v5290 = vsel %vm2009, %v5275, 0
        %v5293 = vsel %vm2009, %v5276, 0
        %v5296 = vsel %vm2009, %v5277, 0
        %v5299 = vsel %vm2009, %v5278, 0
        %v5302 = vsel %vm2009, %v5279, 0
        %v5305 = vsel %vm2009, %v5280, 0
        %v5308 = vsel %vm2009, %v5281, 0
        %v5311 = vsel %vm2009, %v5282, 0
        %5313 = vmatpush.bf16.xpose.msra.mxu0 0
        %5314 = vmatpush.bf16.xpose.msra.mxu0 0
        %5315 = vmatpush.bf16.xpose.msra.mxu0 0
        %5316 = vmatpush.bf16.xpose.msra.mxu0 %v5311
        %5317 = vmatpush.bf16.xpose.msra.mxu0 %v5308
        %5318 = vmatpush.bf16.xpose.msra.mxu0 %v5305
        %5319 = vmatpush.bf16.xpose.msra.mxu0 %v5302
        %5320 = vmatpush.bf16.xpose.msra.mxu0 %v5299
        %5321 = vmatmul.bf16.gmra.mxu0 %v5284
        %v5322 = vpop.f32.mrf.mxu0
        %v5323 = vadd.f32 0.0, %v5322
        %v5324 = vpop.f32.mrf.mxu0
        %v5325 = vadd.f32 0.0, %v5324
        %5326 = vmatmul.bf16.gmra.mxu0 %v5287
        %v5327 = vpop.f32.mrf.mxu0
        %v5328 = vadd.f32 0.0, %v5327
        %v5329 = vpop.f32.mrf.mxu0
        %v5330 = vadd.f32 0.0, %v5329
        %5331 = vmatmul.bf16.gmra.mxu0 %v5290
        %v5332 = vpop.f32.mrf.mxu0
        %v5333 = vadd.f32 0.0, %v5332
        %v5334 = vpop.f32.mrf.mxu0
        %v5335 = vadd.f32 0.0, %v5334
        %5336 = vmatmul.bf16.gmra.mxu0 %v5293
        %v5337 = vpop.f32.mrf.mxu0
        %v5338 = vadd.f32 0.0, %v5337
        %v5339 = vpop.f32.mrf.mxu0
        %v5340 = vadd.f32 0.0, %v5339
        %5341 = vmatmul.bf16.gmra.mxu0 %v5296
        %v5342 = vpop.f32.mrf.mxu0
        %v5343 = vadd.f32 0.0, %v5342
        %v5344 = vpop.f32.mrf.mxu0
        %v5345 = vadd.f32 0.0, %v5344
        %5346 = vdwg.mxu0
        %v5347 = vmul.f32 %v5323, 0.125
        %v5348 = vmul.f32 %v5325, 0.125
        %v5349 = vmul.f32 %v5328, 0.125
        %v5350 = vmul.f32 %v5330, 0.125
        %v5351 = vmul.f32 %v5333, 0.125
        %v5352 = vmul.f32 %v5335, 0.125
        %v5353 = vmul.f32 %v5338, 0.125
        %v5354 = vmul.f32 %v5340, 0.125
        %v5355 = vmul.f32 %v5343, 0.125
        %v5356 = vmul.f32 %v5345, 0.125
        %v5357 = vadd.f32 %v5347, %v1479
        %v5358 = vadd.f32 %v5348, %v1480
        %v5359 = vadd.f32 %v5349, %v1481
        %v5360 = vadd.f32 %v5350, %v1482
        %v5361 = vadd.f32 %v5351, %v1483
        %v5362 = vadd.f32 %v5352, %v1484
        %v5363 = vadd.f32 %v5353, %v1485
        %v5364 = vadd.f32 %v5354, %v1486
        %v5365 = vadd.f32 %v5355, %v1487
        %v5366 = vadd.f32 %v5356, %v1488
        %v5367 = vsel %vm2094, %v5357, -inf
        %5368 = vmax.xlane.f32.xlu0 %v5367
        %v5369 = vpop.xlane.xlu0 %5368
        %v5370 = vsel %vm2094, %v5358, -inf
        %5371 = vmax.xlane.f32.xlu0 %v5370
        %v5372 = vpop.xlane.xlu0 %5371
        %v5373 = vsel %vm2094, %v5359, -inf
        %5374 = vmax.xlane.f32.xlu0 %v5373
        %v5375 = vpop.xlane.xlu0 %5374
        %v5376 = vsel %vm2094, %v5360, -inf
        %5377 = vmax.xlane.f32.xlu0 %v5376
        %v5378 = vpop.xlane.xlu0 %5377
        %v5379 = vsel %vm2094, %v5361, -inf
        %5380 = vmax.xlane.f32.xlu0 %v5379
        %v5381 = vpop.xlane.xlu0 %5380
        %v5382 = vsel %vm2094, %v5362, -inf
        %5383 = vmax.xlane.f32.xlu0 %v5382
        %v5384 = vpop.xlane.xlu0 %5383
        %v5385 = vsel %vm2094, %v5363, -inf
        %5386 = vmax.xlane.f32.xlu0 %v5385
        %v5387 = vpop.xlane.xlu0 %5386
        %v5388 = vsel %vm2094, %v5364, -inf
        %5389 = vmax.xlane.f32.xlu0 %v5388
        %v5390 = vpop.xlane.xlu0 %5389
        %v5391 = vsel %vm2094, %v5365, -inf
        %5392 = vmax.xlane.f32.xlu0 %v5391
        %v5393 = vpop.xlane.xlu0 %5392
        %v5394 = vsel %vm2094, %v5366, -inf
        %5395 = vmax.xlane.f32.xlu0 %v5394
        %v5396 = vpop.xlane.xlu0 %5395
        %v5397 = vsub.f32 %v5357, %v5369
        %v5398 = vsub.f32 %v5358, %v5372
        %v5399 = vsub.f32 %v5359, %v5375
        %v5400 = vsub.f32 %v5360, %v5378
        %v5401 = vsub.f32 %v5361, %v5381
        %v5402 = vsub.f32 %v5362, %v5384
        %v5403 = vsub.f32 %v5363, %v5387
        %v5404 = vsub.f32 %v5364, %v5390
        %v5405 = vsub.f32 %v5365, %v5393
        %v5406 = vsub.f32 %v5366, %v5396
        %v5407 = vmul.f32 %v5397, 1.442695
        %v5408 = vpow.pop %v5407
        %v5409 = vmul.f32 %v5398, 1.442695
        %v5410 = vpow.pop %v5409
        %v5411 = vmul.f32 %v5399, 1.442695
        %v5412 = vpow.pop %v5411
        %v5413 = vmul.f32 %v5400, 1.442695
        %v5414 = vpow.pop %v5413
        %v5415 = vmul.f32 %v5401, 1.442695
        %v5416 = vpow.pop %v5415
        %v5417 = vmul.f32 %v5402, 1.442695
        %v5418 = vpow.pop %v5417
        %v5419 = vmul.f32 %v5403, 1.442695
        %v5420 = vpow.pop %v5419
        %v5421 = vmul.f32 %v5404, 1.442695
        %v5422 = vpow.pop %v5421
        %v5423 = vmul.f32 %v5405, 1.442695
        %v5424 = vpow.pop %v5423
        %v5425 = vmul.f32 %v5406, 1.442695
        %v5426 = vpow.pop %v5425
        %v5427 = vsel %vm2094, %v5408, 0.0
        %5428 = vadd.xlane.f32.xlu0 %v5427
        %v5429 = vpop.xlane.xlu0 %5428
        %v5430 = vsel %vm2094, %v5410, 0.0
        %5431 = vadd.xlane.f32.xlu0 %v5430
        %v5432 = vpop.xlane.xlu0 %5431
        %v5433 = vsel %vm2094, %v5412, 0.0
        %5434 = vadd.xlane.f32.xlu0 %v5433
        %v5435 = vpop.xlane.xlu0 %5434
        %v5436 = vsel %vm2094, %v5414, 0.0
        %5437 = vadd.xlane.f32.xlu0 %v5436
        %v5438 = vpop.xlane.xlu0 %5437
        %v5439 = vsel %vm2094, %v5416, 0.0
        %5440 = vadd.xlane.f32.xlu0 %v5439
        %v5441 = vpop.xlane.xlu0 %5440
        %v5442 = vsel %vm2094, %v5418, 0.0
        %5443 = vadd.xlane.f32.xlu0 %v5442
        %v5444 = vpop.xlane.xlu0 %5443
        %v5445 = vsel %vm2094, %v5420, 0.0
        %5446 = vadd.xlane.f32.xlu0 %v5445
        %v5447 = vpop.xlane.xlu0 %5446
        %v5448 = vsel %vm2094, %v5422, 0.0
        %5449 = vadd.xlane.f32.xlu0 %v5448
        %v5450 = vpop.xlane.xlu0 %5449
        %v5451 = vsel %vm2094, %v5424, 0.0
        %5452 = vadd.xlane.f32.xlu0 %v5451
        %v5453 = vpop.xlane.xlu0 %5452
        %v5454 = vsel %vm2094, %v5426, 0.0
        %5455 = vadd.xlane.f32.xlu0 %v5454
        %v5456 = vpop.xlane.xlu0 %5455
        %v5457 = vrcp.pop %v5429
        %v5458 = vrcp.pop %v5432
        %v5459 = vrcp.pop %v5435
        %v5460 = vrcp.pop %v5438
        %v5461 = vrcp.pop %v5441
        %v5462 = vrcp.pop %v5444
        %v5463 = vrcp.pop %v5447
        %v5464 = vrcp.pop %v5450
        %v5465 = vrcp.pop %v5453
        %v5466 = vrcp.pop %v5456
        %v5467 = vmul.f32 %v5408, %v5457
        %v5468 = vmul.f32 %v5410, %v5458
        %v5469 = vmul.f32 %v5412, %v5459
        %v5470 = vmul.f32 %v5414, %v5460
        %v5471 = vmul.f32 %v5416, %v5461
        %v5472 = vmul.f32 %v5418, %v5462
        %v5473 = vmul.f32 %v5420, %v5463
        %v5474 = vmul.f32 %v5422, %v5464
        %v5475 = vmul.f32 %v5424, %v5465
        %v5476 = vmul.f32 %v5426, %v5466
        %v5477 = vpack.c.bf16 %v5468, %v5467
        %v5478 = vpack.c.bf16 %v5470, %v5469
        %v5479 = vpack.c.bf16 %v5472, %v5471
        %v5480 = vpack.c.bf16 %v5474, %v5473
        %v5481 = vpack.c.bf16 %v5476, %v5475
        %v5482 = vpack.c.bf16 %v5251, %v5249
        %v5483 = vpack.c.bf16 %v5256, %v5254
        %v5484 = vpack.c.bf16 %v5261, %v5259
        %v5485 = vpack.c.bf16 %v5266, %v5264
        %v5486 = vpack.c.bf16 %v5271, %v5269
        %v5488 = vsel %vm2094, %v5477, 0
        %v5491 = vsel %vm2094, %v5478, 0
        %v5494 = vsel %vm2094, %v5479, 0
        %v5497 = vsel %vm2094, %v5480, 0
        %v5500 = vsel %vm2094, %v5481, 0
        %5502 = vmatpush.bf16.msra.mxu0 0
        %5503 = vmatpush.bf16.msra.mxu0 0
        %5504 = vmatpush.bf16.msra.mxu0 0
        %5505 = vmatpush.bf16.msra.mxu0 %v5486
        %5506 = vmatpush.bf16.msra.mxu0 %v5485
        %5507 = vmatpush.bf16.msra.mxu0 %v5484
        %5508 = vmatpush.bf16.msra.mxu0 %v5483
        %5509 = vmatpush.bf16.msra.mxu0 %v5482
        %5510 = vmatmul.bf16.gmra.mxu0 %v5488
        %v5511 = vpop.f32.mrf.mxu0
        %v5512 = vadd.f32 0.0, %v5511
        %v5513 = vpop.f32.mrf.mxu0
        %v5514 = vadd.f32 0.0, %v5513
        %5515 = vmatmul.bf16.gmra.mxu0 %v5491
        %v5516 = vpop.f32.mrf.mxu0
        %v5517 = vadd.f32 0.0, %v5516
        %v5518 = vpop.f32.mrf.mxu0
        %v5519 = vadd.f32 0.0, %v5518
        %5520 = vmatmul.bf16.gmra.mxu0 %v5494
        %v5521 = vpop.f32.mrf.mxu0
        %v5522 = vadd.f32 0.0, %v5521
        %v5523 = vpop.f32.mrf.mxu0
        %v5524 = vadd.f32 0.0, %v5523
        %5525 = vmatmul.bf16.gmra.mxu0 %v5497
        %v5526 = vpop.f32.mrf.mxu0
        %v5527 = vadd.f32 0.0, %v5526
        %v5528 = vpop.f32.mrf.mxu0
        %v5529 = vadd.f32 0.0, %v5528
        %5530 = vmatmul.bf16.gmra.mxu0 %v5500
        %v5531 = vpop.f32.mrf.mxu0
        %v5532 = vadd.f32 0.0, %v5531
        %v5533 = vpop.f32.mrf.mxu0
        %v5534 = vadd.f32 0.0, %v5533
        %5535 = vdwg.mxu0
        %5541 = vrot.lane.b32.xlu0 %v5273, 64
        %v5542 = vpop.permute.xlu0 %5541
        %5543 = vrot.lane.b32.xlu0 %v5274, 64
        %v5544 = vpop.permute.xlu0 %5543
        %5545 = vrot.lane.b32.xlu0 %v5275, 64
        %v5546 = vpop.permute.xlu0 %5545
        %5547 = vrot.lane.b32.xlu0 %v5276, 64
        %v5548 = vpop.permute.xlu0 %5547
        %5549 = vrot.lane.b32.xlu0 %v5277, 64
        %v5550 = vpop.permute.xlu0 %5549
        %5556 = vrot.lane.b32.xlu0 %v5278, 64
        %v5557 = vpop.permute.xlu0 %5556
        %5558 = vrot.lane.b32.xlu0 %v5279, 64
        %v5559 = vpop.permute.xlu0 %5558
        %5560 = vrot.lane.b32.xlu0 %v5280, 64
        %v5561 = vpop.permute.xlu0 %5560
        %5562 = vrot.lane.b32.xlu0 %v5281, 64
        %v5563 = vpop.permute.xlu0 %5562
        %5564 = vrot.lane.b32.xlu0 %v5282, 64
        %v5565 = vpop.permute.xlu0 %5564
        %v5567 = vsel %vm2009, %v5542, 0
        %v5570 = vsel %vm2009, %v5544, 0
        %v5573 = vsel %vm2009, %v5546, 0
        %v5576 = vsel %vm2009, %v5548, 0
        %v5579 = vsel %vm2009, %v5550, 0
        %v5582 = vsel %vm2009, %v5557, 0
        %v5585 = vsel %vm2009, %v5559, 0
        %v5588 = vsel %vm2009, %v5561, 0
        %v5591 = vsel %vm2009, %v5563, 0
        %v5594 = vsel %vm2009, %v5565, 0
        %5596 = vmatpush.bf16.xpose.msra.mxu0 0
        %5597 = vmatpush.bf16.xpose.msra.mxu0 0
        %5598 = vmatpush.bf16.xpose.msra.mxu0 0
        %5599 = vmatpush.bf16.xpose.msra.mxu0 %v5594
        %5600 = vmatpush.bf16.xpose.msra.mxu0 %v5591
        %5601 = vmatpush.bf16.xpose.msra.mxu0 %v5588
        %5602 = vmatpush.bf16.xpose.msra.mxu0 %v5585
        %5603 = vmatpush.bf16.xpose.msra.mxu0 %v5582
        %5604 = vmatmul.bf16.gmra.mxu0 %v5567
        %v5605 = vpop.f32.mrf.mxu0
        %v5606 = vadd.f32 0.0, %v5605
        %v5607 = vpop.f32.mrf.mxu0
        %v5608 = vadd.f32 0.0, %v5607
        %5609 = vmatmul.bf16.gmra.mxu0 %v5570
        %v5610 = vpop.f32.mrf.mxu0
        %v5611 = vadd.f32 0.0, %v5610
        %v5612 = vpop.f32.mrf.mxu0
        %v5613 = vadd.f32 0.0, %v5612
        %5614 = vmatmul.bf16.gmra.mxu0 %v5573
        %v5615 = vpop.f32.mrf.mxu0
        %v5616 = vadd.f32 0.0, %v5615
        %v5617 = vpop.f32.mrf.mxu0
        %v5618 = vadd.f32 0.0, %v5617
        %5619 = vmatmul.bf16.gmra.mxu0 %v5576
        %v5620 = vpop.f32.mrf.mxu0
        %v5621 = vadd.f32 0.0, %v5620
        %v5622 = vpop.f32.mrf.mxu0
        %v5623 = vadd.f32 0.0, %v5622
        %5624 = vmatmul.bf16.gmra.mxu0 %v5579
        %v5625 = vpop.f32.mrf.mxu0
        %v5626 = vadd.f32 0.0, %v5625
        %v5627 = vpop.f32.mrf.mxu0
        %v5628 = vadd.f32 0.0, %v5627
        %5629 = vdwg.mxu0
        %v5630 = vmul.f32 %v5606, 0.125
        %v5631 = vmul.f32 %v5608, 0.125
        %v5632 = vmul.f32 %v5611, 0.125
        %v5633 = vmul.f32 %v5613, 0.125
        %v5634 = vmul.f32 %v5616, 0.125
        %v5635 = vmul.f32 %v5618, 0.125
        %v5636 = vmul.f32 %v5621, 0.125
        %v5637 = vmul.f32 %v5623, 0.125
        %v5638 = vmul.f32 %v5626, 0.125
        %v5639 = vmul.f32 %v5628, 0.125
        %v5640 = vadd.f32 %v5630, %v1479
        %v5641 = vadd.f32 %v5631, %v1480
        %v5642 = vadd.f32 %v5632, %v1481
        %v5643 = vadd.f32 %v5633, %v1482
        %v5644 = vadd.f32 %v5634, %v1483
        %v5645 = vadd.f32 %v5635, %v1484
        %v5646 = vadd.f32 %v5636, %v1485
        %v5647 = vadd.f32 %v5637, %v1486
        %v5648 = vadd.f32 %v5638, %v1487
        %v5649 = vadd.f32 %v5639, %v1488
        %v5650 = vsel %vm2094, %v5640, -inf
        %5651 = vmax.xlane.f32.xlu0 %v5650
        %v5652 = vpop.xlane.xlu0 %5651
        %v5653 = vsel %vm2094, %v5641, -inf
        %5654 = vmax.xlane.f32.xlu0 %v5653
        %v5655 = vpop.xlane.xlu0 %5654
        %v5656 = vsel %vm2094, %v5642, -inf
        %5657 = vmax.xlane.f32.xlu0 %v5656
        %v5658 = vpop.xlane.xlu0 %5657
        %v5659 = vsel %vm2094, %v5643, -inf
        %5660 = vmax.xlane.f32.xlu0 %v5659
        %v5661 = vpop.xlane.xlu0 %5660
        %v5662 = vsel %vm2094, %v5644, -inf
        %5663 = vmax.xlane.f32.xlu0 %v5662
        %v5664 = vpop.xlane.xlu0 %5663
        %v5665 = vsel %vm2094, %v5645, -inf
        %5666 = vmax.xlane.f32.xlu0 %v5665
        %v5667 = vpop.xlane.xlu0 %5666
        %v5668 = vsel %vm2094, %v5646, -inf
        %5669 = vmax.xlane.f32.xlu0 %v5668
        %v5670 = vpop.xlane.xlu0 %5669
        %v5671 = vsel %vm2094, %v5647, -inf
        %5672 = vmax.xlane.f32.xlu0 %v5671
        %v5673 = vpop.xlane.xlu0 %5672
        %v5674 = vsel %vm2094, %v5648, -inf
        %5675 = vmax.xlane.f32.xlu0 %v5674
        %v5676 = vpop.xlane.xlu0 %5675
        %v5677 = vsel %vm2094, %v5649, -inf
        %5678 = vmax.xlane.f32.xlu0 %v5677
        %v5679 = vpop.xlane.xlu0 %5678
        %v5680 = vsub.f32 %v5640, %v5652
        %v5681 = vsub.f32 %v5641, %v5655
        %v5682 = vsub.f32 %v5642, %v5658
        %v5683 = vsub.f32 %v5643, %v5661
        %v5684 = vsub.f32 %v5644, %v5664
        %v5685 = vsub.f32 %v5645, %v5667
        %v5686 = vsub.f32 %v5646, %v5670
        %v5687 = vsub.f32 %v5647, %v5673
        %v5688 = vsub.f32 %v5648, %v5676
        %v5689 = vsub.f32 %v5649, %v5679
        %v5690 = vmul.f32 %v5680, 1.442695
        %v5691 = vpow.pop %v5690
        %v5692 = vmul.f32 %v5681, 1.442695
        %v5693 = vpow.pop %v5692
        %v5694 = vmul.f32 %v5682, 1.442695
        %v5695 = vpow.pop %v5694
        %v5696 = vmul.f32 %v5683, 1.442695
        %v5697 = vpow.pop %v5696
        %v5698 = vmul.f32 %v5684, 1.442695
        %v5699 = vpow.pop %v5698
        %v5700 = vmul.f32 %v5685, 1.442695
        %v5701 = vpow.pop %v5700
        %v5702 = vmul.f32 %v5686, 1.442695
        %v5703 = vpow.pop %v5702
        %v5704 = vmul.f32 %v5687, 1.442695
        %v5705 = vpow.pop %v5704
        %v5706 = vmul.f32 %v5688, 1.442695
        %v5707 = vpow.pop %v5706
        %v5708 = vmul.f32 %v5689, 1.442695
        %v5709 = vpow.pop %v5708
        %v5710 = vsel %vm2094, %v5691, 0.0
        %5711 = vadd.xlane.f32.xlu0 %v5710
        %v5712 = vpop.xlane.xlu0 %5711
        %v5713 = vsel %vm2094, %v5693, 0.0
        %5714 = vadd.xlane.f32.xlu0 %v5713
        %v5715 = vpop.xlane.xlu0 %5714
        %v5716 = vsel %vm2094, %v5695, 0.0
        %5717 = vadd.xlane.f32.xlu0 %v5716
        %v5718 = vpop.xlane.xlu0 %5717
        %v5719 = vsel %vm2094, %v5697, 0.0
        %5720 = vadd.xlane.f32.xlu0 %v5719
        %v5721 = vpop.xlane.xlu0 %5720
        %v5722 = vsel %vm2094, %v5699, 0.0
        %5723 = vadd.xlane.f32.xlu0 %v5722
        %v5724 = vpop.xlane.xlu0 %5723
        %v5725 = vsel %vm2094, %v5701, 0.0
        %5726 = vadd.xlane.f32.xlu0 %v5725
        %v5727 = vpop.xlane.xlu0 %5726
        %v5728 = vsel %vm2094, %v5703, 0.0
        %5729 = vadd.xlane.f32.xlu0 %v5728
        %v5730 = vpop.xlane.xlu0 %5729
        %v5731 = vsel %vm2094, %v5705, 0.0
        %5732 = vadd.xlane.f32.xlu0 %v5731
        %v5733 = vpop.xlane.xlu0 %5732
        %v5734 = vsel %vm2094, %v5707, 0.0
        %5735 = vadd.xlane.f32.xlu0 %v5734
        %v5736 = vpop.xlane.xlu0 %5735
        %v5737 = vsel %vm2094, %v5709, 0.0
        %5738 = vadd.xlane.f32.xlu0 %v5737
        %v5739 = vpop.xlane.xlu0 %5738
        %v5740 = vrcp.pop %v5712
        %v5741 = vrcp.pop %v5715
        %v5742 = vrcp.pop %v5718
        %v5743 = vrcp.pop %v5721
        %v5744 = vrcp.pop %v5724
        %v5745 = vrcp.pop %v5727
        %v5746 = vrcp.pop %v5730
        %v5747 = vrcp.pop %v5733
        %v5748 = vrcp.pop %v5736
        %v5749 = vrcp.pop %v5739
        %v5750 = vmul.f32 %v5691, %v5740
        %v5751 = vmul.f32 %v5693, %v5741
        %v5752 = vmul.f32 %v5695, %v5742
        %v5753 = vmul.f32 %v5697, %v5743
        %v5754 = vmul.f32 %v5699, %v5744
        %v5755 = vmul.f32 %v5701, %v5745
        %v5756 = vmul.f32 %v5703, %v5746
        %v5757 = vmul.f32 %v5705, %v5747
        %v5758 = vmul.f32 %v5707, %v5748
        %v5759 = vmul.f32 %v5709, %v5749
        %v5760 = vpack.c.bf16 %v5751, %v5750
        %v5761 = vpack.c.bf16 %v5753, %v5752
        %v5762 = vpack.c.bf16 %v5755, %v5754
        %v5763 = vpack.c.bf16 %v5757, %v5756
        %v5764 = vpack.c.bf16 %v5759, %v5758
        %5770 = vrot.lane.b32.xlu0 %v5482, 64
        %v5771 = vpop.permute.xlu0 %5770
        %5772 = vrot.lane.b32.xlu0 %v5483, 64
        %v5773 = vpop.permute.xlu0 %5772
        %5774 = vrot.lane.b32.xlu0 %v5484, 64
        %v5775 = vpop.permute.xlu0 %5774
        %5776 = vrot.lane.b32.xlu0 %v5485, 64
        %v5777 = vpop.permute.xlu0 %5776
        %5778 = vrot.lane.b32.xlu0 %v5486, 64
        %v5779 = vpop.permute.xlu0 %5778
        %v5786 = vsel %vm2094, %v5760, 0
        %v5789 = vsel %vm2094, %v5761, 0
        %v5792 = vsel %vm2094, %v5762, 0
        %v5795 = vsel %vm2094, %v5763, 0
        %v5798 = vsel %vm2094, %v5764, 0
        %5800 = vmatpush.bf16.msra.mxu0 0
        %5801 = vmatpush.bf16.msra.mxu0 0
        %5802 = vmatpush.bf16.msra.mxu0 0
        %5803 = vmatpush.bf16.msra.mxu0 %v5779
        %5804 = vmatpush.bf16.msra.mxu0 %v5777
        %5805 = vmatpush.bf16.msra.mxu0 %v5775
        %5806 = vmatpush.bf16.msra.mxu0 %v5773
        %5807 = vmatpush.bf16.msra.mxu0 %v5771
        %5808 = vmatmul.bf16.gmra.mxu0 %v5786
        %v5809 = vpop.f32.mrf.mxu0
        %v5810 = vadd.f32 0.0, %v5809
        %v5811 = vpop.f32.mrf.mxu0
        %v5812 = vadd.f32 0.0, %v5811
        %5813 = vmatmul.bf16.gmra.mxu0 %v5789
        %v5814 = vpop.f32.mrf.mxu0
        %v5815 = vadd.f32 0.0, %v5814
        %v5816 = vpop.f32.mrf.mxu0
        %v5817 = vadd.f32 0.0, %v5816
        %5818 = vmatmul.bf16.gmra.mxu0 %v5792
        %v5819 = vpop.f32.mrf.mxu0
        %v5820 = vadd.f32 0.0, %v5819
        %v5821 = vpop.f32.mrf.mxu0
        %v5822 = vadd.f32 0.0, %v5821
        %5823 = vmatmul.bf16.gmra.mxu0 %v5795
        %v5824 = vpop.f32.mrf.mxu0
        %v5825 = vadd.f32 0.0, %v5824
        %v5826 = vpop.f32.mrf.mxu0
        %v5827 = vadd.f32 0.0, %v5826
        %5828 = vmatmul.bf16.gmra.mxu0 %v5798
        %v5829 = vpop.f32.mrf.mxu0
        %v5830 = vadd.f32 0.0, %v5829
        %v5831 = vpop.f32.mrf.mxu0
        %v5832 = vadd.f32 0.0, %v5831
        %5833 = vdwg.mxu0
        %5844 = vrot.lane.b32.xlu0 %v5810, 64
        %v5845 = vpop.permute.xlu0 %5844
        %5846 = vrot.lane.b32.xlu0 %v5812, 64
        %v5847 = vpop.permute.xlu0 %5846
        %5848 = vrot.lane.b32.xlu0 %v5815, 64
        %v5849 = vpop.permute.xlu0 %5848
        %5850 = vrot.lane.b32.xlu0 %v5817, 64
        %v5851 = vpop.permute.xlu0 %5850
        %5852 = vrot.lane.b32.xlu0 %v5820, 64
        %v5853 = vpop.permute.xlu0 %5852
        %5854 = vrot.lane.b32.xlu0 %v5822, 64
        %v5855 = vpop.permute.xlu0 %5854
        %5856 = vrot.lane.b32.xlu0 %v5825, 64
        %v5857 = vpop.permute.xlu0 %5856
        %5858 = vrot.lane.b32.xlu0 %v5827, 64
        %v5859 = vpop.permute.xlu0 %5858
        %5860 = vrot.lane.b32.xlu0 %v5830, 64
        %v5861 = vpop.permute.xlu0 %5860
        %5862 = vrot.lane.b32.xlu0 %v5832, 64
        %v5863 = vpop.permute.xlu0 %5862
        %v5874 = vsel %vm2009, %v5512, %v5845
        %v5875 = vsel %vm2009, %v5514, %v5847
        %v5876 = vsel %vm2009, %v5517, %v5849
        %v5877 = vsel %vm2009, %v5519, %v5851
        %v5878 = vsel %vm2009, %v5522, %v5853
        %v5879 = vsel %vm2009, %v5524, %v5855
        %v5880 = vsel %vm2009, %v5527, %v5857
        %v5881 = vsel %vm2009, %v5529, %v5859
        %v5882 = vsel %vm2009, %v5532, %v5861
        %v5883 = vsel %vm2009, %v5534, %v5863
        %v5884 = vpack.c.bf16 %v5875, %v5874
        %v5885 = vpack.c.bf16 %v5877, %v5876
        %v5886 = vpack.c.bf16 %v5879, %v5878
        %v5887 = vpack.c.bf16 %v5881, %v5880
        %v5888 = vpack.c.bf16 %v5883, %v5882
        %s5889 = scalar_lea.vmem %s8, 64
        %v5890 = vld [vmem:[%s5889] sm:$0xf]
        %v5891 = vld [vmem:[%s5889 + $0x4] sm:$0xf]
        %v5892 = vld [vmem:[%s5889 + $0x8] sm:$0xf]
        %v5893 = vld [vmem:[%s5889 + $0xc] sm:$0xf]
        %v5894 = vld [vmem:[%s5889 + $0x10] sm:$0xf]
        %v5895 = vld [vmem:[%s5889 + $0x14] sm:$0xf]
        %v5896 = vld [vmem:[%s5889 + $0x18] sm:$0xf]
        %v5897 = vld [vmem:[%s5889 + $0x1c] sm:$0xf]
        %v5898 = vld [vmem:[%s5889 + $0x20] sm:$0xf]
        %v5899 = vld [vmem:[%s5889 + $0x24] sm:$0xf]
        %v5900 = vld [vmem:[%s5889 + $0x28] sm:$0xf]
        %v5901 = vld [vmem:[%s5889 + $0x2c] sm:$0xf]
        %v5902 = vld [vmem:[%s5889 + $0x30] sm:$0xf]
        %v5903 = vld [vmem:[%s5889 + $0x34] sm:$0xf]
        %v5904 = vld [vmem:[%s5889 + $0x38] sm:$0xf]
        %v5905 = vld [vmem:[%s5889 + $0x3c] sm:$0xf]
        %s5906 = scalar_lea.vmem %s9, 1
        %v5907 = vld [vmem:[%s5906] sm:$0x1]
        %v5909 = vperm.slane %v5907, 0
        %v5927 = vunpack.c.l.b16 %v5890
        %v5928 = vunpack.c.l.b16 %v5891
        %v5929 = vunpack.c.l.b16 %v5892
        %v5930 = vunpack.c.l.b16 %v5893
        %v5931 = vunpack.c.l.b16 %v5894
        %v5932 = vunpack.c.l.b16 %v5895
        %v5933 = vunpack.c.l.b16 %v5896
        %v5934 = vunpack.c.l.b16 %v5897
        %v5935 = vunpack.c.l.b16 %v5898
        %v5936 = vunpack.c.l.b16 %v5899
        %v5937 = vunpack.c.l.b16 %v5900
        %v5938 = vunpack.c.l.b16 %v5901
        %v5939 = vunpack.c.l.b16 %v5902
        %v5940 = vunpack.c.l.b16 %v5903
        %v5941 = vunpack.c.l.b16 %v5904
        %v5942 = vunpack.c.l.b16 %v5905
        %v5943 = vpack.c.b16 %v5928, %v5927
        %v5944 = vpack.c.b16 %v5930, %v5929
        %v5945 = vpack.c.b16 %v5932, %v5931
        %v5946 = vpack.c.b16 %v5934, %v5933
        %v5947 = vpack.c.b16 %v5936, %v5935
        %v5948 = vpack.c.b16 %v5938, %v5937
        %v5949 = vpack.c.b16 %v5940, %v5939
        %v5950 = vpack.c.b16 %v5942, %v5941
        %5959 = vmatpush.bf16.msra.mxu0 %v5950
        %5960 = vmatpush.bf16.msra.mxu0 %v5949
        %5961 = vmatpush.bf16.msra.mxu0 %v5948
        %5962 = vmatpush.bf16.msra.mxu0 %v5947
        %5963 = vmatpush.bf16.msra.mxu0 %v5946
        %5964 = vmatpush.bf16.msra.mxu0 %v5945
        %5965 = vmatpush.bf16.msra.mxu0 %v5944
        %5966 = vmatpush.bf16.msra.mxu0 %v5943
        %5967 = vmatmul.bf16.gmra.mxu0 %v5884
        %v5968 = vpop.f32.mrf.mxu0
        %v5969 = vadd.f32 %v5909, %v5968
        %v5970 = vpop.f32.mrf.mxu0
        %v5971 = vadd.f32 %v5909, %v5970
        %5972 = vmatmul.bf16.gmra.mxu0 %v5885
        %v5973 = vpop.f32.mrf.mxu0
        %v5974 = vadd.f32 %v5909, %v5973
        %v5975 = vpop.f32.mrf.mxu0
        %v5976 = vadd.f32 %v5909, %v5975
        %5977 = vmatmul.bf16.gmra.mxu0 %v5886
        %v5978 = vpop.f32.mrf.mxu0
        %v5979 = vadd.f32 %v5909, %v5978
        %v5980 = vpop.f32.mrf.mxu0
        %v5981 = vadd.f32 %v5909, %v5980
        %5982 = vmatmul.bf16.gmra.mxu0 %v5887
        %v5983 = vpop.f32.mrf.mxu0
        %v5984 = vadd.f32 %v5909, %v5983
        %v5985 = vpop.f32.mrf.mxu0
        %v5986 = vadd.f32 %v5909, %v5985
        %5987 = vmatmul.bf16.gmra.mxu0 %v5888
        %v5988 = vpop.f32.mrf.mxu0
        %v5989 = vadd.f32 %v5909, %v5988
        %v5990 = vpop.f32.mrf.mxu0
        %v5991 = vadd.f32 %v5909, %v5990
        %5992 = vdwg.mxu0
        %v5993 = vadd.f32 %v4756, %v5969
        %v5994 = vadd.f32 %v4757, %v5971
        %v5995 = vadd.f32 %v4758, %v5974
        %v5996 = vadd.f32 %v4759, %v5976
        %v5997 = vadd.f32 %v4760, %v5979
        %v5998 = vadd.f32 %v4761, %v5981
        %v5999 = vadd.f32 %v4762, %v5984
        %v6000 = vadd.f32 %v4763, %v5986
        %v6001 = vadd.f32 %v4764, %v5989
        %v6002 = vadd.f32 %v4765, %v5991
        %s6003 = scalar_lea.vmem %s10, 1
        %v6004 = vld [vmem:[%s6003] sm:$0x1]
        %s6005 = scalar_lea.vmem %s11, 1
        %v6006 = vld [vmem:[%s6005] sm:$0x1]
        %6007 = vadd.xlane.f32.xlu0 %v5993
        %v6008 = vpop.xlane.xlu0 %6007
        %6009 = vadd.xlane.f32.xlu0 %v5994
        %v6010 = vpop.xlane.xlu0 %6009
        %6011 = vadd.xlane.f32.xlu0 %v5995
        %v6012 = vpop.xlane.xlu0 %6011
        %6013 = vadd.xlane.f32.xlu0 %v5996
        %v6014 = vpop.xlane.xlu0 %6013
        %6015 = vadd.xlane.f32.xlu0 %v5997
        %v6016 = vpop.xlane.xlu0 %6015
        %6017 = vadd.xlane.f32.xlu0 %v5998
        %v6018 = vpop.xlane.xlu0 %6017
        %6019 = vadd.xlane.f32.xlu0 %v5999
        %v6020 = vpop.xlane.xlu0 %6019
        %6021 = vadd.xlane.f32.xlu0 %v6000
        %v6022 = vpop.xlane.xlu0 %6021
        %6023 = vadd.xlane.f32.xlu0 %v6001
        %v6024 = vpop.xlane.xlu0 %6023
        %6025 = vadd.xlane.f32.xlu0 %v6002
        %v6026 = vpop.xlane.xlu0 %6025
        %v6027 = vmul.f32 %v6008, %v1517
        %v6028 = vmul.f32 %v6010, %v1517
        %v6029 = vmul.f32 %v6012, %v1517
        %v6030 = vmul.f32 %v6014, %v1517
        %v6031 = vmul.f32 %v6016, %v1517
        %v6032 = vmul.f32 %v6018, %v1517
        %v6033 = vmul.f32 %v6020, %v1517
        %v6034 = vmul.f32 %v6022, %v1517
        %v6035 = vmul.f32 %v6024, %v1517
        %v6036 = vmul.f32 %v6026, %v1517
        %v6037 = vsub.f32 %v5993, %v6027
        %v6038 = vsub.f32 %v5994, %v6028
        %v6039 = vsub.f32 %v5995, %v6029
        %v6040 = vsub.f32 %v5996, %v6030
        %v6041 = vsub.f32 %v5997, %v6031
        %v6042 = vsub.f32 %v5998, %v6032
        %v6043 = vsub.f32 %v5999, %v6033
        %v6044 = vsub.f32 %v6000, %v6034
        %v6045 = vsub.f32 %v6001, %v6035
        %v6046 = vsub.f32 %v6002, %v6036
        %v6047 = vmul.f32 %v6037, %v6037
        %v6048 = vmul.f32 %v6038, %v6038
        %v6049 = vmul.f32 %v6039, %v6039
        %v6050 = vmul.f32 %v6040, %v6040
        %v6051 = vmul.f32 %v6041, %v6041
        %v6052 = vmul.f32 %v6042, %v6042
        %v6053 = vmul.f32 %v6043, %v6043
        %v6054 = vmul.f32 %v6044, %v6044
        %v6055 = vmul.f32 %v6045, %v6045
        %v6056 = vmul.f32 %v6046, %v6046
        %6057 = vadd.xlane.f32.xlu0 %v6047
        %v6058 = vpop.xlane.xlu0 %6057
        %6059 = vadd.xlane.f32.xlu0 %v6048
        %v6060 = vpop.xlane.xlu0 %6059
        %6061 = vadd.xlane.f32.xlu0 %v6049
        %v6062 = vpop.xlane.xlu0 %6061
        %6063 = vadd.xlane.f32.xlu0 %v6050
        %v6064 = vpop.xlane.xlu0 %6063
        %6065 = vadd.xlane.f32.xlu0 %v6051
        %v6066 = vpop.xlane.xlu0 %6065
        %6067 = vadd.xlane.f32.xlu0 %v6052
        %v6068 = vpop.xlane.xlu0 %6067
        %6069 = vadd.xlane.f32.xlu0 %v6053
        %v6070 = vpop.xlane.xlu0 %6069
        %6071 = vadd.xlane.f32.xlu0 %v6054
        %v6072 = vpop.xlane.xlu0 %6071
        %6073 = vadd.xlane.f32.xlu0 %v6055
        %v6074 = vpop.xlane.xlu0 %6073
        %6075 = vadd.xlane.f32.xlu0 %v6056
        %v6076 = vpop.xlane.xlu0 %6075
        %v6077 = vmul.f32 %v6058, %v1517
        %v6078 = vmul.f32 %v6060, %v1517
        %v6079 = vmul.f32 %v6062, %v1517
        %v6080 = vmul.f32 %v6064, %v1517
        %v6081 = vmul.f32 %v6066, %v1517
        %v6082 = vmul.f32 %v6068, %v1517
        %v6083 = vmul.f32 %v6070, %v1517
        %v6084 = vmul.f32 %v6072, %v1517
        %v6085 = vmul.f32 %v6074, %v1517
        %v6086 = vmul.f32 %v6076, %v1517
        %v6087 = vadd.f32 %v6077, 1e-06
        %v6088 = vadd.f32 %v6078, 1e-06
        %v6089 = vadd.f32 %v6079, 1e-06
        %v6090 = vadd.f32 %v6080, 1e-06
        %v6091 = vadd.f32 %v6081, 1e-06
        %v6092 = vadd.f32 %v6082, 1e-06
        %v6093 = vadd.f32 %v6083, 1e-06
        %v6094 = vadd.f32 %v6084, 1e-06
        %v6095 = vadd.f32 %v6085, 1e-06
        %v6096 = vadd.f32 %v6086, 1e-06
        %v6097 = vrsqrt.pop %v6087
        %v6098 = vmul.f32 %v6097, %v6087
        %v6099 = vmul.f32 %v6098, %v6097
        %v6100 = vmul.f32 0.5, %v6099
        %v6101 = vsub.f32 1.5, %v6100
        %v6102 = vmul.f32 %v6097, %v6101
        %vm6103 = vweird.f32 %v6087
        %vm6104 = vweird.f32 %v6097
        %vm6105 = vmor %vm6103, %vm6104
        %v6106 = vsel %vm6105, %v6097, %v6102
        %v6107 = vrsqrt.pop %v6088
        %v6108 = vmul.f32 %v6107, %v6088
        %v6109 = vmul.f32 %v6108, %v6107
        %v6110 = vmul.f32 0.5, %v6109
        %v6111 = vsub.f32 1.5, %v6110
        %v6112 = vmul.f32 %v6107, %v6111
        %vm6113 = vweird.f32 %v6088
        %vm6114 = vweird.f32 %v6107
        %vm6115 = vmor %vm6113, %vm6114
        %v6116 = vsel %vm6115, %v6107, %v6112
        %v6117 = vrsqrt.pop %v6089
        %v6118 = vmul.f32 %v6117, %v6089
        %v6119 = vmul.f32 %v6118, %v6117
        %v6120 = vmul.f32 0.5, %v6119
        %v6121 = vsub.f32 1.5, %v6120
        %v6122 = vmul.f32 %v6117, %v6121
        %vm6123 = vweird.f32 %v6089
        %vm6124 = vweird.f32 %v6117
        %vm6125 = vmor %vm6123, %vm6124
        %v6126 = vsel %vm6125, %v6117, %v6122
        %v6127 = vrsqrt.pop %v6090
        %v6128 = vmul.f32 %v6127, %v6090
        %v6129 = vmul.f32 %v6128, %v6127
        %v6130 = vmul.f32 0.5, %v6129
        %v6131 = vsub.f32 1.5, %v6130
        %v6132 = vmul.f32 %v6127, %v6131
        %vm6133 = vweird.f32 %v6090
        %vm6134 = vweird.f32 %v6127
        %vm6135 = vmor %vm6133, %vm6134
        %v6136 = vsel %vm6135, %v6127, %v6132
        %v6137 = vrsqrt.pop %v6091
        %v6138 = vmul.f32 %v6137, %v6091
        %v6139 = vmul.f32 %v6138, %v6137
        %v6140 = vmul.f32 0.5, %v6139
        %v6141 = vsub.f32 1.5, %v6140
        %v6142 = vmul.f32 %v6137, %v6141
        %vm6143 = vweird.f32 %v6091
        %vm6144 = vweird.f32 %v6137
        %vm6145 = vmor %vm6143, %vm6144
        %v6146 = vsel %vm6145, %v6137, %v6142
        %v6147 = vrsqrt.pop %v6092
        %v6148 = vmul.f32 %v6147, %v6092
        %v6149 = vmul.f32 %v6148, %v6147
        %v6150 = vmul.f32 0.5, %v6149
        %v6151 = vsub.f32 1.5, %v6150
        %v6152 = vmul.f32 %v6147, %v6151
        %vm6153 = vweird.f32 %v6092
        %vm6154 = vweird.f32 %v6147
        %vm6155 = vmor %vm6153, %vm6154
        %v6156 = vsel %vm6155, %v6147, %v6152
        %v6157 = vrsqrt.pop %v6093
        %v6158 = vmul.f32 %v6157, %v6093
        %v6159 = vmul.f32 %v6158, %v6157
        %v6160 = vmul.f32 0.5, %v6159
        %v6161 = vsub.f32 1.5, %v6160
        %v6162 = vmul.f32 %v6157, %v6161
        %vm6163 = vweird.f32 %v6093
        %vm6164 = vweird.f32 %v6157
        %vm6165 = vmor %vm6163, %vm6164
        %v6166 = vsel %vm6165, %v6157, %v6162
        %v6167 = vrsqrt.pop %v6094
        %v6168 = vmul.f32 %v6167, %v6094
        %v6169 = vmul.f32 %v6168, %v6167
        %v6170 = vmul.f32 0.5, %v6169
        %v6171 = vsub.f32 1.5, %v6170
        %v6172 = vmul.f32 %v6167, %v6171
        %vm6173 = vweird.f32 %v6094
        %vm6174 = vweird.f32 %v6167
        %vm6175 = vmor %vm6173, %vm6174
        %v6176 = vsel %vm6175, %v6167, %v6172
        %v6177 = vrsqrt.pop %v6095
        %v6178 = vmul.f32 %v6177, %v6095
        %v6179 = vmul.f32 %v6178, %v6177
        %v6180 = vmul.f32 0.5, %v6179
        %v6181 = vsub.f32 1.5, %v6180
        %v6182 = vmul.f32 %v6177, %v6181
        %vm6183 = vweird.f32 %v6095
        %vm6184 = vweird.f32 %v6177
        %vm6185 = vmor %vm6183, %vm6184
        %v6186 = vsel %vm6185, %v6177, %v6182
        %v6187 = vrsqrt.pop %v6096
        %v6188 = vmul.f32 %v6187, %v6096
        %v6189 = vmul.f32 %v6188, %v6187
        %v6190 = vmul.f32 0.5, %v6189
        %v6191 = vsub.f32 1.5, %v6190
        %v6192 = vmul.f32 %v6187, %v6191
        %vm6193 = vweird.f32 %v6096
        %vm6194 = vweird.f32 %v6187
        %vm6195 = vmor %vm6193, %vm6194
        %v6196 = vsel %vm6195, %v6187, %v6192
        %v6197 = vmul.f32 %v6037, %v6106
        %v6198 = vmul.f32 %v6038, %v6116
        %v6199 = vmul.f32 %v6039, %v6126
        %v6200 = vmul.f32 %v6040, %v6136
        %v6201 = vmul.f32 %v6041, %v6146
        %v6202 = vmul.f32 %v6042, %v6156
        %v6203 = vmul.f32 %v6043, %v6166
        %v6204 = vmul.f32 %v6044, %v6176
        %v6205 = vmul.f32 %v6045, %v6186
        %v6206 = vmul.f32 %v6046, %v6196
        %v6208 = vperm.slane %v6004, 0
        %v6210 = vmul.f32 %v6197, %v6208
        %v6211 = vmul.f32 %v6198, %v6208
        %v6212 = vmul.f32 %v6199, %v6208
        %v6213 = vmul.f32 %v6200, %v6208
        %v6214 = vmul.f32 %v6201, %v6208
        %v6215 = vmul.f32 %v6202, %v6208
        %v6216 = vmul.f32 %v6203, %v6208
        %v6217 = vmul.f32 %v6204, %v6208
        %v6218 = vmul.f32 %v6205, %v6208
        %v6219 = vmul.f32 %v6206, %v6208
        %v6221 = vperm.slane %v6006, 0
        %v6223 = vadd.f32 %v6210, %v6221
        %v6224 = vadd.f32 %v6211, %v6221
        %v6225 = vadd.f32 %v6212, %v6221
        %v6226 = vadd.f32 %v6213, %v6221
        %v6227 = vadd.f32 %v6214, %v6221
        %v6228 = vadd.f32 %v6215, %v6221
        %v6229 = vadd.f32 %v6216, %v6221
        %v6230 = vadd.f32 %v6217, %v6221
        %v6231 = vadd.f32 %v6218, %v6221
        %v6232 = vadd.f32 %v6219, %v6221
        %v6233 = vpack.c.bf16 %v6224, %v6223
        %v6234 = vpack.c.bf16 %v6226, %v6225
        %v6235 = vpack.c.bf16 %v6228, %v6227
        %v6236 = vpack.c.bf16 %v6230, %v6229
        %v6237 = vpack.c.bf16 %v6232, %v6231
        %s6238 = scalar_lea.vmem %s12, 256
        %v6239 = vld [vmem:[%s6238] sm:$0xff]
        %v6240 = vld [vmem:[%s6238 + $0x8] sm:$0xff]
        %v6241 = vld [vmem:[%s6238 + $0x10] sm:$0xff]
        %v6242 = vld [vmem:[%s6238 + $0x18] sm:$0xff]
        %v6243 = vld [vmem:[%s6238 + $0x20] sm:$0xff]
        %v6244 = vld [vmem:[%s6238 + $0x28] sm:$0xff]
        %v6245 = vld [vmem:[%s6238 + $0x30] sm:$0xff]
        %v6246 = vld [vmem:[%s6238 + $0x38] sm:$0xff]
        %v6247 = vld [vmem:[%s6238 + $0x40] sm:$0xff]
        %v6248 = vld [vmem:[%s6238 + $0x48] sm:$0xff]
        %v6249 = vld [vmem:[%s6238 + $0x50] sm:$0xff]
        %v6250 = vld [vmem:[%s6238 + $0x58] sm:$0xff]
        %v6251 = vld [vmem:[%s6238 + $0x60] sm:$0xff]
        %v6252 = vld [vmem:[%s6238 + $0x68] sm:$0xff]
        %v6253 = vld [vmem:[%s6238 + $0x70] sm:$0xff]
        %v6254 = vld [vmem:[%s6238 + $0x78] sm:$0xff]
        %v6255 = vld [vmem:[%s6238 + $0x80] sm:$0xff]
        %v6256 = vld [vmem:[%s6238 + $0x88] sm:$0xff]
        %v6257 = vld [vmem:[%s6238 + $0x90] sm:$0xff]
        %v6258 = vld [vmem:[%s6238 + $0x98] sm:$0xff]
        %v6259 = vld [vmem:[%s6238 + $0xa0] sm:$0xff]
        %v6260 = vld [vmem:[%s6238 + $0xa8] sm:$0xff]
        %v6261 = vld [vmem:[%s6238 + $0xb0] sm:$0xff]
        %v6262 = vld [vmem:[%s6238 + $0xb8] sm:$0xff]
        %v6263 = vld [vmem:[%s6238 + $0xc0] sm:$0xff]
        %v6264 = vld [vmem:[%s6238 + $0xc8] sm:$0xff]
        %v6265 = vld [vmem:[%s6238 + $0xd0] sm:$0xff]
        %v6266 = vld [vmem:[%s6238 + $0xd8] sm:$0xff]
        %v6267 = vld [vmem:[%s6238 + $0xe0] sm:$0xff]
        %v6268 = vld [vmem:[%s6238 + $0xe8] sm:$0xff]
        %v6269 = vld [vmem:[%s6238 + $0xf0] sm:$0xff]
        %v6270 = vld [vmem:[%s6238 + $0xf8] sm:$0xff]
        %s6271 = scalar_lea.vmem %s13, 4
        %v6272 = vld [vmem:[%s6271] sm:$0xf]
        %v6274 = vperm.slane %v6272, 0
        %v6275 = vperm.slane %v6272, 1
        %v6276 = vperm.slane %v6272, 2
        %v6277 = vperm.slane %v6272, 3
        %v6314 = vunpack.c.l.b16 %v6239
        %v6315 = vunpack.c.h.b16 %v6239
        %v6316 = vunpack.c.l.b16 %v6240
        %v6317 = vunpack.c.h.b16 %v6240
        %v6318 = vunpack.c.l.b16 %v6241
        %v6319 = vunpack.c.h.b16 %v6241
        %v6320 = vunpack.c.l.b16 %v6242
        %v6321 = vunpack.c.h.b16 %v6242
        %v6322 = vunpack.c.l.b16 %v6243
        %v6323 = vunpack.c.h.b16 %v6243
        %v6324 = vunpack.c.l.b16 %v6244
        %v6325 = vunpack.c.h.b16 %v6244
        %v6326 = vunpack.c.l.b16 %v6245
        %v6327 = vunpack.c.h.b16 %v6245
        %v6328 = vunpack.c.l.b16 %v6246
        %v6329 = vunpack.c.h.b16 %v6246
        %v6330 = vunpack.c.l.b16 %v6247
        %v6331 = vunpack.c.h.b16 %v6247
        %v6332 = vunpack.c.l.b16 %v6248
        %v6333 = vunpack.c.h.b16 %v6248
        %v6334 = vunpack.c.l.b16 %v6249
        %v6335 = vunpack.c.h.b16 %v6249
        %v6336 = vunpack.c.l.b16 %v6250
        %v6337 = vunpack.c.h.b16 %v6250
        %v6338 = vunpack.c.l.b16 %v6251
        %v6339 = vunpack.c.h.b16 %v6251
        %v6340 = vunpack.c.l.b16 %v6252
        %v6341 = vunpack.c.h.b16 %v6252
        %v6342 = vunpack.c.l.b16 %v6253
        %v6343 = vunpack.c.h.b16 %v6253
        %v6344 = vunpack.c.l.b16 %v6254
        %v6345 = vunpack.c.h.b16 %v6254
        %v6346 = vunpack.c.l.b16 %v6255
        %v6347 = vunpack.c.h.b16 %v6255
        %v6348 = vunpack.c.l.b16 %v6256
        %v6349 = vunpack.c.h.b16 %v6256
        %v6350 = vunpack.c.l.b16 %v6257
        %v6351 = vunpack.c.h.b16 %v6257
        %v6352 = vunpack.c.l.b16 %v6258
        %v6353 = vunpack.c.h.b16 %v6258
        %v6354 = vunpack.c.l.b16 %v6259
        %v6355 = vunpack.c.h.b16 %v6259
        %v6356 = vunpack.c.l.b16 %v6260
        %v6357 = vunpack.c.h.b16 %v6260
        %v6358 = vunpack.c.l.b16 %v6261
        %v6359 = vunpack.c.h.b16 %v6261
        %v6360 = vunpack.c.l.b16 %v6262
        %v6361 = vunpack.c.h.b16 %v6262
        %v6362 = vunpack.c.l.b16 %v6263
        %v6363 = vunpack.c.h.b16 %v6263
        %v6364 = vunpack.c.l.b16 %v6264
        %v6365 = vunpack.c.h.b16 %v6264
        %v6366 = vunpack.c.l.b16 %v6265
        %v6367 = vunpack.c.h.b16 %v6265
        %v6368 = vunpack.c.l.b16 %v6266
        %v6369 = vunpack.c.h.b16 %v6266
        %v6370 = vunpack.c.l.b16 %v6267
        %v6371 = vunpack.c.h.b16 %v6267
        %v6372 = vunpack.c.l.b16 %v6268
        %v6373 = vunpack.c.h.b16 %v6268
        %v6374 = vunpack.c.l.b16 %v6269
        %v6375 = vunpack.c.h.b16 %v6269
        %v6376 = vunpack.c.l.b16 %v6270
        %v6377 = vunpack.c.h.b16 %v6270
        %v6378 = vpack.c.b16 %v6318, %v6314
        %v6379 = vpack.c.b16 %v6319, %v6315
        %v6380 = vpack.c.b16 %v6320, %v6316
        %v6381 = vpack.c.b16 %v6321, %v6317
        %v6382 = vpack.c.b16 %v6326, %v6322
        %v6383 = vpack.c.b16 %v6327, %v6323
        %v6384 = vpack.c.b16 %v6328, %v6324
        %v6385 = vpack.c.b16 %v6329, %v6325
        %v6386 = vpack.c.b16 %v6334, %v6330
        %v6387 = vpack.c.b16 %v6335, %v6331
        %v6388 = vpack.c.b16 %v6336, %v6332
        %v6389 = vpack.c.b16 %v6337, %v6333
        %v6390 = vpack.c.b16 %v6342, %v6338
        %v6391 = vpack.c.b16 %v6343, %v6339
        %v6392 = vpack.c.b16 %v6344, %v6340
        %v6393 = vpack.c.b16 %v6345, %v6341
        %v6394 = vpack.c.b16 %v6350, %v6346
        %v6395 = vpack.c.b16 %v6351, %v6347
        %v6396 = vpack.c.b16 %v6352, %v6348
        %v6397 = vpack.c.b16 %v6353, %v6349
        %v6398 = vpack.c.b16 %v6358, %v6354
        %v6399 = vpack.c.b16 %v6359, %v6355
        %v6400 = vpack.c.b16 %v6360, %v6356
        %v6401 = vpack.c.b16 %v6361, %v6357
        %v6402 = vpack.c.b16 %v6366, %v6362
        %v6403 = vpack.c.b16 %v6367, %v6363
        %v6404 = vpack.c.b16 %v6368, %v6364
        %v6405 = vpack.c.b16 %v6369, %v6365
        %v6406 = vpack.c.b16 %v6374, %v6370
        %v6407 = vpack.c.b16 %v6375, %v6371
        %v6408 = vpack.c.b16 %v6376, %v6372
        %v6409 = vpack.c.b16 %v6377, %v6373
        %6442 = vmatpush.bf16.msra.mxu0 %v6406
        %6443 = vmatpush.bf16.msra.mxu0 %v6402
        %6444 = vmatpush.bf16.msra.mxu0 %v6398
        %6445 = vmatpush.bf16.msra.mxu0 %v6394
        %6446 = vmatpush.bf16.msra.mxu0 %v6390
        %6447 = vmatpush.bf16.msra.mxu0 %v6386
        %6448 = vmatpush.bf16.msra.mxu0 %v6382
        %6449 = vmatpush.bf16.msra.mxu0 %v6378
        %6450 = vmatmul.bf16.gmra.mxu0 %v6233
        %v6451 = vpop.f32.mrf.mxu0
        %v6452 = vadd.f32 %v6274, %v6451
        %v6453 = vpop.f32.mrf.mxu0
        %v6454 = vadd.f32 %v6274, %v6453
        %6455 = vmatmul.bf16.gmra.mxu0 %v6234
        %v6456 = vpop.f32.mrf.mxu0
        %v6457 = vadd.f32 %v6274, %v6456
        %v6458 = vpop.f32.mrf.mxu0
        %v6459 = vadd.f32 %v6274, %v6458
        %6460 = vmatmul.bf16.gmra.mxu0 %v6235
        %v6461 = vpop.f32.mrf.mxu0
        %v6462 = vadd.f32 %v6274, %v6461
        %v6463 = vpop.f32.mrf.mxu0
        %v6464 = vadd.f32 %v6274, %v6463
        %6465 = vmatmul.bf16.gmra.mxu0 %v6236
        %v6466 = vpop.f32.mrf.mxu0
        %v6467 = vadd.f32 %v6274, %v6466
        %v6468 = vpop.f32.mrf.mxu0
        %v6469 = vadd.f32 %v6274, %v6468
        %6470 = vmatmul.bf16.gmra.mxu0 %v6237
        %v6471 = vpop.f32.mrf.mxu0
        %v6472 = vadd.f32 %v6274, %v6471
        %v6473 = vpop.f32.mrf.mxu0
        %v6474 = vadd.f32 %v6274, %v6473
        %6475 = vdwg.mxu0
        %6476 = vmatpush.bf16.msra.mxu0 %v6407
        %6477 = vmatpush.bf16.msra.mxu0 %v6403
        %6478 = vmatpush.bf16.msra.mxu0 %v6399
        %6479 = vmatpush.bf16.msra.mxu0 %v6395
        %6480 = vmatpush.bf16.msra.mxu0 %v6391
        %6481 = vmatpush.bf16.msra.mxu0 %v6387
        %6482 = vmatpush.bf16.msra.mxu0 %v6383
        %6483 = vmatpush.bf16.msra.mxu0 %v6379
        %6484 = vmatmul.bf16.gmra.mxu0 %v6233
        %v6485 = vpop.f32.mrf.mxu0
        %v6486 = vadd.f32 %v6275, %v6485
        %v6487 = vpop.f32.mrf.mxu0
        %v6488 = vadd.f32 %v6275, %v6487
        %6489 = vmatmul.bf16.gmra.mxu0 %v6234
        %v6490 = vpop.f32.mrf.mxu0
        %v6491 = vadd.f32 %v6275, %v6490
        %v6492 = vpop.f32.mrf.mxu0
        %v6493 = vadd.f32 %v6275, %v6492
        %6494 = vmatmul.bf16.gmra.mxu0 %v6235
        %v6495 = vpop.f32.mrf.mxu0
        %v6496 = vadd.f32 %v6275, %v6495
        %v6497 = vpop.f32.mrf.mxu0
        %v6498 = vadd.f32 %v6275, %v6497
        %6499 = vmatmul.bf16.gmra.mxu0 %v6236
        %v6500 = vpop.f32.mrf.mxu0
        %v6501 = vadd.f32 %v6275, %v6500
        %v6502 = vpop.f32.mrf.mxu0
        %v6503 = vadd.f32 %v6275, %v6502
        %6504 = vmatmul.bf16.gmra.mxu0 %v6237
        %v6505 = vpop.f32.mrf.mxu0
        %v6506 = vadd.f32 %v6275, %v6505
        %v6507 = vpop.f32.mrf.mxu0
        %v6508 = vadd.f32 %v6275, %v6507
        %6509 = vdwg.mxu0
        %6510 = vmatpush.bf16.msra.mxu0 %v6408
        %6511 = vmatpush.bf16.msra.mxu0 %v6404
        %6512 = vmatpush.bf16.msra.mxu0 %v6400
        %6513 = vmatpush.bf16.msra.mxu0 %v6396
        %6514 = vmatpush.bf16.msra.mxu0 %v6392
        %6515 = vmatpush.bf16.msra.mxu0 %v6388
        %6516 = vmatpush.bf16.msra.mxu0 %v6384
        %6517 = vmatpush.bf16.msra.mxu0 %v6380
        %6518 = vmatmul.bf16.gmra.mxu0 %v6233
        %v6519 = vpop.f32.mrf.mxu0
        %v6520 = vadd.f32 %v6276, %v6519
        %v6521 = vpop.f32.mrf.mxu0
        %v6522 = vadd.f32 %v6276, %v6521
        %6523 = vmatmul.bf16.gmra.mxu0 %v6234
        %v6524 = vpop.f32.mrf.mxu0
        %v6525 = vadd.f32 %v6276, %v6524
        %v6526 = vpop.f32.mrf.mxu0
        %v6527 = vadd.f32 %v6276, %v6526
        %6528 = vmatmul.bf16.gmra.mxu0 %v6235
        %v6529 = vpop.f32.mrf.mxu0
        %v6530 = vadd.f32 %v6276, %v6529
        %v6531 = vpop.f32.mrf.mxu0
        %v6532 = vadd.f32 %v6276, %v6531
        %6533 = vmatmul.bf16.gmra.mxu0 %v6236
        %v6534 = vpop.f32.mrf.mxu0
        %v6535 = vadd.f32 %v6276, %v6534
        %v6536 = vpop.f32.mrf.mxu0
        %v6537 = vadd.f32 %v6276, %v6536
        %6538 = vmatmul.bf16.gmra.mxu0 %v6237
        %v6539 = vpop.f32.mrf.mxu0
        %v6540 = vadd.f32 %v6276, %v6539
        %v6541 = vpop.f32.mrf.mxu0
        %v6542 = vadd.f32 %v6276, %v6541
        %6543 = vdwg.mxu0
        %6544 = vmatpush.bf16.msra.mxu0 %v6409
        %6545 = vmatpush.bf16.msra.mxu0 %v6405
        %6546 = vmatpush.bf16.msra.mxu0 %v6401
        %6547 = vmatpush.bf16.msra.mxu0 %v6397
        %6548 = vmatpush.bf16.msra.mxu0 %v6393
        %6549 = vmatpush.bf16.msra.mxu0 %v6389
        %6550 = vmatpush.bf16.msra.mxu0 %v6385
        %6551 = vmatpush.bf16.msra.mxu0 %v6381
        %6552 = vmatmul.bf16.gmra.mxu0 %v6233
        %v6553 = vpop.f32.mrf.mxu0
        %v6554 = vadd.f32 %v6277, %v6553
        %v6555 = vpop.f32.mrf.mxu0
        %v6556 = vadd.f32 %v6277, %v6555
        %6557 = vmatmul.bf16.gmra.mxu0 %v6234
        %v6558 = vpop.f32.mrf.mxu0
        %v6559 = vadd.f32 %v6277, %v6558
        %v6560 = vpop.f32.mrf.mxu0
        %v6561 = vadd.f32 %v6277, %v6560
        %6562 = vmatmul.bf16.gmra.mxu0 %v6235
        %v6563 = vpop.f32.mrf.mxu0
        %v6564 = vadd.f32 %v6277, %v6563
        %v6565 = vpop.f32.mrf.mxu0
        %v6566 = vadd.f32 %v6277, %v6565
        %6567 = vmatmul.bf16.gmra.mxu0 %v6236
        %v6568 = vpop.f32.mrf.mxu0
        %v6569 = vadd.f32 %v6277, %v6568
        %v6570 = vpop.f32.mrf.mxu0
        %v6571 = vadd.f32 %v6277, %v6570
        %6572 = vmatmul.bf16.gmra.mxu0 %v6237
        %v6573 = vpop.f32.mrf.mxu0
        %v6574 = vadd.f32 %v6277, %v6573
        %v6575 = vpop.f32.mrf.mxu0
        %v6576 = vadd.f32 %v6277, %v6575
        %6577 = vdwg.mxu0
        %v6578 = vmul.f32 %v6452, 0.5
        %v6579 = vmul.f32 %v6486, 0.5
        %v6580 = vmul.f32 %v6520, 0.5
        %v6581 = vmul.f32 %v6554, 0.5
        %v6582 = vmul.f32 %v6454, 0.5
        %v6583 = vmul.f32 %v6488, 0.5
        %v6584 = vmul.f32 %v6522, 0.5
        %v6585 = vmul.f32 %v6556, 0.5
        %v6586 = vmul.f32 %v6457, 0.5
        %v6587 = vmul.f32 %v6491, 0.5
        %v6588 = vmul.f32 %v6525, 0.5
        %v6589 = vmul.f32 %v6559, 0.5
        %v6590 = vmul.f32 %v6459, 0.5
        %v6591 = vmul.f32 %v6493, 0.5
        %v6592 = vmul.f32 %v6527, 0.5
        %v6593 = vmul.f32 %v6561, 0.5
        %v6594 = vmul.f32 %v6462, 0.5
        %v6595 = vmul.f32 %v6496, 0.5
        %v6596 = vmul.f32 %v6530, 0.5
        %v6597 = vmul.f32 %v6564, 0.5
        %v6598 = vmul.f32 %v6464, 0.5
        %v6599 = vmul.f32 %v6498, 0.5
        %v6600 = vmul.f32 %v6532, 0.5
        %v6601 = vmul.f32 %v6566, 0.5
        %v6602 = vmul.f32 %v6467, 0.5
        %v6603 = vmul.f32 %v6501, 0.5
        %v6604 = vmul.f32 %v6535, 0.5
        %v6605 = vmul.f32 %v6569, 0.5
        %v6606 = vmul.f32 %v6469, 0.5
        %v6607 = vmul.f32 %v6503, 0.5
        %v6608 = vmul.f32 %v6537, 0.5
        %v6609 = vmul.f32 %v6571, 0.5
        %v6610 = vmul.f32 %v6472, 0.5
        %v6611 = vmul.f32 %v6506, 0.5
        %v6612 = vmul.f32 %v6540, 0.5
        %v6613 = vmul.f32 %v6574, 0.5
        %v6614 = vmul.f32 %v6474, 0.5
        %v6615 = vmul.f32 %v6508, 0.5
        %v6616 = vmul.f32 %v6542, 0.5
        %v6617 = vmul.f32 %v6576, 0.5
        %v6618 = vmul.f32 %v6452, 0.70710677
        %v6619 = vmul.f32 %v6486, 0.70710677
        %v6620 = vmul.f32 %v6520, 0.70710677
        %v6621 = vmul.f32 %v6554, 0.70710677
        %v6622 = vmul.f32 %v6454, 0.70710677
        %v6623 = vmul.f32 %v6488, 0.70710677
        %v6624 = vmul.f32 %v6522, 0.70710677
        %v6625 = vmul.f32 %v6556, 0.70710677
        %v6626 = vmul.f32 %v6457, 0.70710677
        %v6627 = vmul.f32 %v6491, 0.70710677
        %v6628 = vmul.f32 %v6525, 0.70710677
        %v6629 = vmul.f32 %v6559, 0.70710677
        %v6630 = vmul.f32 %v6459, 0.70710677
        %v6631 = vmul.f32 %v6493, 0.70710677
        %v6632 = vmul.f32 %v6527, 0.70710677
        %v6633 = vmul.f32 %v6561, 0.70710677
        %v6634 = vmul.f32 %v6462, 0.70710677
        %v6635 = vmul.f32 %v6496, 0.70710677
        %v6636 = vmul.f32 %v6530, 0.70710677
        %v6637 = vmul.f32 %v6564, 0.70710677
        %v6638 = vmul.f32 %v6464, 0.70710677
        %v6639 = vmul.f32 %v6498, 0.70710677
        %v6640 = vmul.f32 %v6532, 0.70710677
        %v6641 = vmul.f32 %v6566, 0.70710677
        %v6642 = vmul.f32 %v6467, 0.70710677
        %v6643 = vmul.f32 %v6501, 0.70710677
        %v6644 = vmul.f32 %v6535, 0.70710677
        %v6645 = vmul.f32 %v6569, 0.70710677
        %v6646 = vmul.f32 %v6469, 0.70710677
        %v6647 = vmul.f32 %v6503, 0.70710677
        %v6648 = vmul.f32 %v6537, 0.70710677
        %v6649 = vmul.f32 %v6571, 0.70710677
        %v6650 = vmul.f32 %v6472, 0.70710677
        %v6651 = vmul.f32 %v6506, 0.70710677
        %v6652 = vmul.f32 %v6540, 0.70710677
        %v6653 = vmul.f32 %v6574, 0.70710677
        %v6654 = vmul.f32 %v6474, 0.70710677
        %v6655 = vmul.f32 %v6508, 0.70710677
        %v6656 = vmul.f32 %v6542, 0.70710677
        %v6657 = vmul.f32 %v6576, 0.70710677
        %v6658 = vand.u32 2147483647, %v6618
        %v6659 = vand.u32 2147483647, %v6619
        %v6660 = vand.u32 2147483647, %v6620
        %v6661 = vand.u32 2147483647, %v6621
        %v6662 = vand.u32 2147483647, %v6622
        %v6663 = vand.u32 2147483647, %v6623
        %v6664 = vand.u32 2147483647, %v6624
        %v6665 = vand.u32 2147483647, %v6625
        %v6666 = vand.u32 2147483647, %v6626
        %v6667 = vand.u32 2147483647, %v6627
        %v6668 = vand.u32 2147483647, %v6628
        %v6669 = vand.u32 2147483647, %v6629
        %v6670 = vand.u32 2147483647, %v6630
        %v6671 = vand.u32 2147483647, %v6631
        %v6672 = vand.u32 2147483647, %v6632
        %v6673 = vand.u32 2147483647, %v6633
        %v6674 = vand.u32 2147483647, %v6634
        %v6675 = vand.u32 2147483647, %v6635
        %v6676 = vand.u32 2147483647, %v6636
        %v6677 = vand.u32 2147483647, %v6637
        %v6678 = vand.u32 2147483647, %v6638
        %v6679 = vand.u32 2147483647, %v6639
        %v6680 = vand.u32 2147483647, %v6640
        %v6681 = vand.u32 2147483647, %v6641
        %v6682 = vand.u32 2147483647, %v6642
        %v6683 = vand.u32 2147483647, %v6643
        %v6684 = vand.u32 2147483647, %v6644
        %v6685 = vand.u32 2147483647, %v6645
        %v6686 = vand.u32 2147483647, %v6646
        %v6687 = vand.u32 2147483647, %v6647
        %v6688 = vand.u32 2147483647, %v6648
        %v6689 = vand.u32 2147483647, %v6649
        %v6690 = vand.u32 2147483647, %v6650
        %v6691 = vand.u32 2147483647, %v6651
        %v6692 = vand.u32 2147483647, %v6652
        %v6693 = vand.u32 2147483647, %v6653
        %v6694 = vand.u32 2147483647, %v6654
        %v6695 = vand.u32 2147483647, %v6655
        %v6696 = vand.u32 2147483647, %v6656
        %v6697 = vand.u32 2147483647, %v6657
        %v6698 = vmul.f32 %v6658, 0.3275911
        %v6699 = vmul.f32 %v6659, 0.3275911
        %v6700 = vmul.f32 %v6660, 0.3275911
        %v6701 = vmul.f32 %v6661, 0.3275911
        %v6702 = vmul.f32 %v6662, 0.3275911
        %v6703 = vmul.f32 %v6663, 0.3275911
        %v6704 = vmul.f32 %v6664, 0.3275911
        %v6705 = vmul.f32 %v6665, 0.3275911
        %v6706 = vmul.f32 %v6666, 0.3275911
        %v6707 = vmul.f32 %v6667, 0.3275911
        %v6708 = vmul.f32 %v6668, 0.3275911
        %v6709 = vmul.f32 %v6669, 0.3275911
        %v6710 = vmul.f32 %v6670, 0.3275911
        %v6711 = vmul.f32 %v6671, 0.3275911
        %v6712 = vmul.f32 %v6672, 0.3275911
        %v6713 = vmul.f32 %v6673, 0.3275911
        %v6714 = vmul.f32 %v6674, 0.3275911
        %v6715 = vmul.f32 %v6675, 0.3275911
        %v6716 = vmul.f32 %v6676, 0.3275911
        %v6717 = vmul.f32 %v6677, 0.3275911
        %v6718 = vmul.f32 %v6678, 0.3275911
        %v6719 = vmul.f32 %v6679, 0.3275911
        %v6720 = vmul.f32 %v6680, 0.3275911
        %v6721 = vmul.f32 %v6681, 0.3275911
        %v6722 = vmul.f32 %v6682, 0.3275911
        %v6723 = vmul.f32 %v6683, 0.3275911
        %v6724 = vmul.f32 %v6684, 0.3275911
        %v6725 = vmul.f32 %v6685, 0.3275911
        %v6726 = vmul.f32 %v6686, 0.3275911
        %v6727 = vmul.f32 %v6687, 0.3275911
        %v6728 = vmul.f32 %v6688, 0.3275911
        %v6729 = vmul.f32 %v6689, 0.3275911
        %v6730 = vmul.f32 %v6690, 0.3275911
        %v6731 = vmul.f32 %v6691, 0.3275911
        %v6732 = vmul.f32 %v6692, 0.3275911
        %v6733 = vmul.f32 %v6693, 0.3275911
        %v6734 = vmul.f32 %v6694, 0.3275911
        %v6735 = vmul.f32 %v6695, 0.3275911
        %v6736 = vmul.f32 %v6696, 0.3275911
        %v6737 = vmul.f32 %v6697, 0.3275911
        %v6738 = vadd.f32 %v6698, 1.0
        %v6739 = vadd.f32 %v6699, 1.0
        %v6740 = vadd.f32 %v6700, 1.0
        %v6741 = vadd.f32 %v6701, 1.0
        %v6742 = vadd.f32 %v6702, 1.0
        %v6743 = vadd.f32 %v6703, 1.0
        %v6744 = vadd.f32 %v6704, 1.0
        %v6745 = vadd.f32 %v6705, 1.0
        %v6746 = vadd.f32 %v6706, 1.0
        %v6747 = vadd.f32 %v6707, 1.0
        %v6748 = vadd.f32 %v6708, 1.0
        %v6749 = vadd.f32 %v6709, 1.0
        %v6750 = vadd.f32 %v6710, 1.0
        %v6751 = vadd.f32 %v6711, 1.0
        %v6752 = vadd.f32 %v6712, 1.0
        %v6753 = vadd.f32 %v6713, 1.0
        %v6754 = vadd.f32 %v6714, 1.0
        %v6755 = vadd.f32 %v6715, 1.0
        %v6756 = vadd.f32 %v6716, 1.0
        %v6757 = vadd.f32 %v6717, 1.0
        %v6758 = vadd.f32 %v6718, 1.0
        %v6759 = vadd.f32 %v6719, 1.0
        %v6760 = vadd.f32 %v6720, 1.0
        %v6761 = vadd.f32 %v6721, 1.0
        %v6762 = vadd.f32 %v6722, 1.0
        %v6763 = vadd.f32 %v6723, 1.0
        %v6764 = vadd.f32 %v6724, 1.0
        %v6765 = vadd.f32 %v6725, 1.0
        %v6766 = vadd.f32 %v6726, 1.0
        %v6767 = vadd.f32 %v6727, 1.0
        %v6768 = vadd.f32 %v6728, 1.0
        %v6769 = vadd.f32 %v6729, 1.0
        %v6770 = vadd.f32 %v6730, 1.0
        %v6771 = vadd.f32 %v6731, 1.0
        %v6772 = vadd.f32 %v6732, 1.0
        %v6773 = vadd.f32 %v6733, 1.0
        %v6774 = vadd.f32 %v6734, 1.0
        %v6775 = vadd.f32 %v6735, 1.0
        %v6776 = vadd.f32 %v6736, 1.0
        %v6777 = vadd.f32 %v6737, 1.0
        %v6778 = vrcp.pop %v6738
        %v6779 = vrcp.pop %v6739
        %v6780 = vrcp.pop %v6740
        %v6781 = vrcp.pop %v6741
        %v6782 = vrcp.pop %v6742
        %v6783 = vrcp.pop %v6743
        %v6784 = vrcp.pop %v6744
        %v6785 = vrcp.pop %v6745
        %v6786 = vrcp.pop %v6746
        %v6787 = vrcp.pop %v6747
        %v6788 = vrcp.pop %v6748
        %v6789 = vrcp.pop %v6749
        %v6790 = vrcp.pop %v6750
        %v6791 = vrcp.pop %v6751
        %v6792 = vrcp.pop %v6752
        %v6793 = vrcp.pop %v6753
        %v6794 = vrcp.pop %v6754
        %v6795 = vrcp.pop %v6755
        %v6796 = vrcp.pop %v6756
        %v6797 = vrcp.pop %v6757
        %v6798 = vrcp.pop %v6758
        %v6799 = vrcp.pop %v6759
        %v6800 = vrcp.pop %v6760
        %v6801 = vrcp.pop %v6761
        %v6802 = vrcp.pop %v6762
        %v6803 = vrcp.pop %v6763
        %v6804 = vrcp.pop %v6764
        %v6805 = vrcp.pop %v6765
        %v6806 = vrcp.pop %v6766
        %v6807 = vrcp.pop %v6767
        %v6808 = vrcp.pop %v6768
        %v6809 = vrcp.pop %v6769
        %v6810 = vrcp.pop %v6770
        %v6811 = vrcp.pop %v6771
        %v6812 = vrcp.pop %v6772
        %v6813 = vrcp.pop %v6773
        %v6814 = vrcp.pop %v6774
        %v6815 = vrcp.pop %v6775
        %v6816 = vrcp.pop %v6776
        %v6817 = vrcp.pop %v6777
        %v6818 = vmul.f32 %v6778, 1.0614054
        %v6819 = vmul.f32 %v6779, 1.0614054
        %v6820 = vmul.f32 %v6780, 1.0614054
        %v6821 = vmul.f32 %v6781, 1.0614054
        %v6822 = vmul.f32 %v6782, 1.0614054
        %v6823 = vmul.f32 %v6783, 1.0614054
        %v6824 = vmul.f32 %v6784, 1.0614054
        %v6825 = vmul.f32 %v6785, 1.0614054
        %v6826 = vmul.f32 %v6786, 1.0614054
        %v6827 = vmul.f32 %v6787, 1.0614054
        %v6828 = vmul.f32 %v6788, 1.0614054
        %v6829 = vmul.f32 %v6789, 1.0614054
        %v6830 = vmul.f32 %v6790, 1.0614054
        %v6831 = vmul.f32 %v6791, 1.0614054
        %v6832 = vmul.f32 %v6792, 1.0614054
        %v6833 = vmul.f32 %v6793, 1.0614054
        %v6834 = vmul.f32 %v6794, 1.0614054
        %v6835 = vmul.f32 %v6795, 1.0614054
        %v6836 = vmul.f32 %v6796, 1.0614054
        %v6837 = vmul.f32 %v6797, 1.0614054
        %v6838 = vmul.f32 %v6798, 1.0614054
        %v6839 = vmul.f32 %v6799, 1.0614054
        %v6840 = vmul.f32 %v6800, 1.0614054
        %v6841 = vmul.f32 %v6801, 1.0614054
        %v6842 = vmul.f32 %v6802, 1.0614054
        %v6843 = vmul.f32 %v6803, 1.0614054
        %v6844 = vmul.f32 %v6804, 1.0614054
        %v6845 = vmul.f32 %v6805, 1.0614054
        %v6846 = vmul.f32 %v6806, 1.0614054
        %v6847 = vmul.f32 %v6807, 1.0614054
        %v6848 = vmul.f32 %v6808, 1.0614054
        %v6849 = vmul.f32 %v6809, 1.0614054
        %v6850 = vmul.f32 %v6810, 1.0614054
        %v6851 = vmul.f32 %v6811, 1.0614054
        %v6852 = vmul.f32 %v6812, 1.0614054
        %v6853 = vmul.f32 %v6813, 1.0614054
        %v6854 = vmul.f32 %v6814, 1.0614054
        %v6855 = vmul.f32 %v6815, 1.0614054
        %v6856 = vmul.f32 %v6816, 1.0614054
        %v6857 = vmul.f32 %v6817, 1.0614054
        %v6858 = vadd.f32 %v6818, -1.4531521
        %v6859 = vadd.f32 %v6819, -1.4531521
        %v6860 = vadd.f32 %v6820, -1.4531521
        %v6861 = vadd.f32 %v6821, -1.4531521
        %v6862 = vadd.f32 %v6822, -1.4531521
        %v6863 = vadd.f32 %v6823, -1.4531521
        %v6864 = vadd.f32 %v6824, -1.4531521
        %v6865 = vadd.f32 %v6825, -1.4531521
        %v6866 = vadd.f32 %v6826, -1.4531521
        %v6867 = vadd.f32 %v6827, -1.4531521
        %v6868 = vadd.f32 %v6828, -1.4531521
        %v6869 = vadd.f32 %v6829, -1.4531521
        %v6870 = vadd.f32 %v6830, -1.4531521
        %v6871 = vadd.f32 %v6831, -1.4531521
        %v6872 = vadd.f32 %v6832, -1.4531521
        %v6873 = vadd.f32 %v6833, -1.4531521
        %v6874 = vadd.f32 %v6834, -1.4531521
        %v6875 = vadd.f32 %v6835, -1.4531521
        %v6876 = vadd.f32 %v6836, -1.4531521
        %v6877 = vadd.f32 %v6837, -1.4531521
        %v6878 = vadd.f32 %v6838, -1.4531521
        %v6879 = vadd.f32 %v6839, -1.4531521
        %v6880 = vadd.f32 %v6840, -1.4531521
        %v6881 = vadd.f32 %v6841, -1.4531521
        %v6882 = vadd.f32 %v6842, -1.4531521
        %v6883 = vadd.f32 %v6843, -1.4531521
        %v6884 = vadd.f32 %v6844, -1.4531521
        %v6885 = vadd.f32 %v6845, -1.4531521
        %v6886 = vadd.f32 %v6846, -1.4531521
        %v6887 = vadd.f32 %v6847, -1.4531521
        %v6888 = vadd.f32 %v6848, -1.4531521
        %v6889 = vadd.f32 %v6849, -1.4531521
        %v6890 = vadd.f32 %v6850, -1.4531521
        %v6891 = vadd.f32 %v6851, -1.4531521
        %v6892 = vadd.f32 %v6852, -1.4531521
        %v6893 = vadd.f32 %v6853, -1.4531521
        %v6894 = vadd.f32 %v6854, -1.4531521
        %v6895 = vadd.f32 %v6855, -1.4531521
        %v6896 = vadd.f32 %v6856, -1.4531521
        %v6897 = vadd.f32 %v6857, -1.4531521
        %v6898 = vmul.f32 %v6858, %v6778
        %v6899 = vmul.f32 %v6859, %v6779
        %v6900 = vmul.f32 %v6860, %v6780
        %v6901 = vmul.f32 %v6861, %v6781
        %v6902 = vmul.f32 %v6862, %v6782
        %v6903 = vmul.f32 %v6863, %v6783
        %v6904 = vmul.f32 %v6864, %v6784
        %v6905 = vmul.f32 %v6865, %v6785
        %v6906 = vmul.f32 %v6866, %v6786
        %v6907 = vmul.f32 %v6867, %v6787
        %v6908 = vmul.f32 %v6868, %v6788
        %v6909 = vmul.f32 %v6869, %v6789
        %v6910 = vmul.f32 %v6870, %v6790
        %v6911 = vmul.f32 %v6871, %v6791
        %v6912 = vmul.f32 %v6872, %v6792
        %v6913 = vmul.f32 %v6873, %v6793
        %v6914 = vmul.f32 %v6874, %v6794
        %v6915 = vmul.f32 %v6875, %v6795
        %v6916 = vmul.f32 %v6876, %v6796
        %v6917 = vmul.f32 %v6877, %v6797
        %v6918 = vmul.f32 %v6878, %v6798
        %v6919 = vmul.f32 %v6879, %v6799
        %v6920 = vmul.f32 %v6880, %v6800
        %v6921 = vmul.f32 %v6881, %v6801
        %v6922 = vmul.f32 %v6882, %v6802
        %v6923 = vmul.f32 %v6883, %v6803
        %v6924 = vmul.f32 %v6884, %v6804
        %v6925 = vmul.f32 %v6885, %v6805
        %v6926 = vmul.f32 %v6886, %v6806
        %v6927 = vmul.f32 %v6887, %v6807
        %v6928 = vmul.f32 %v6888, %v6808
        %v6929 = vmul.f32 %v6889, %v6809
        %v6930 = vmul.f32 %v6890, %v6810
        %v6931 = vmul.f32 %v6891, %v6811
        %v6932 = vmul.f32 %v6892, %v6812
        %v6933 = vmul.f32 %v6893, %v6813
        %v6934 = vmul.f32 %v6894, %v6814
        %v6935 = vmul.f32 %v6895, %v6815
        %v6936 = vmul.f32 %v6896, %v6816
        %v6937 = vmul.f32 %v6897, %v6817
        %v6938 = vadd.f32 %v6898, 1.4214138
        %v6939 = vadd.f32 %v6899, 1.4214138
        %v6940 = vadd.f32 %v6900, 1.4214138
        %v6941 = vadd.f32 %v6901, 1.4214138
        %v6942 = vadd.f32 %v6902, 1.4214138
        %v6943 = vadd.f32 %v6903, 1.4214138
        %v6944 = vadd.f32 %v6904, 1.4214138
        %v6945 = vadd.f32 %v6905, 1.4214138
        %v6946 = vadd.f32 %v6906, 1.4214138
        %v6947 = vadd.f32 %v6907, 1.4214138
        %v6948 = vadd.f32 %v6908, 1.4214138
        %v6949 = vadd.f32 %v6909, 1.4214138
        %v6950 = vadd.f32 %v6910, 1.4214138
        %v6951 = vadd.f32 %v6911, 1.4214138
        %v6952 = vadd.f32 %v6912, 1.4214138
        %v6953 = vadd.f32 %v6913, 1.4214138
        %v6954 = vadd.f32 %v6914, 1.4214138
        %v6955 = vadd.f32 %v6915, 1.4214138
        %v6956 = vadd.f32 %v6916, 1.4214138
        %v6957 = vadd.f32 %v6917, 1.4214138
        %v6958 = vadd.f32 %v6918, 1.4214138
        %v6959 = vadd.f32 %v6919, 1.4214138
        %v6960 = vadd.f32 %v6920, 1.4214138
        %v6961 = vadd.f32 %v6921, 1.4214138
        %v6962 = vadd.f32 %v6922, 1.4214138
        %v6963 = vadd.f32 %v6923, 1.4214138
        %v6964 = vadd.f32 %v6924, 1.4214138
        %v6965 = vadd.f32 %v6925, 1.4214138
        %v6966 = vadd.f32 %v6926, 1.4214138
        %v6967 = vadd.f32 %v6927, 1.4214138
        %v6968 = vadd.f32 %v6928, 1.4214138
        %v6969 = vadd.f32 %v6929, 1.4214138
        %v6970 = vadd.f32 %v6930, 1.4214138
        %v6971 = vadd.f32 %v6931, 1.4214138
        %v6972 = vadd.f32 %v6932, 1.4214138
        %v6973 = vadd.f32 %v6933, 1.4214138
        %v6974 = vadd.f32 %v6934, 1.4214138
        %v6975 = vadd.f32 %v6935, 1.4214138
        %v6976 = vadd.f32 %v6936, 1.4214138
        %v6977 = vadd.f32 %v6937, 1.4214138
        %v6978 = vmul.f32 %v6938, %v6778
        %v6979 = vmul.f32 %v6939, %v6779
        %v6980 = vmul.f32 %v6940, %v6780
        %v6981 = vmul.f32 %v6941, %v6781
        %v6982 = vmul.f32 %v6942, %v6782
        %v6983 = vmul.f32 %v6943, %v6783
        %v6984 = vmul.f32 %v6944, %v6784
        %v6985 = vmul.f32 %v6945, %v6785
        %v6986 = vmul.f32 %v6946, %v6786
        %v6987 = vmul.f32 %v6947, %v6787
        %v6988 = vmul.f32 %v6948, %v6788
        %v6989 = vmul.f32 %v6949, %v6789
        %v6990 = vmul.f32 %v6950, %v6790
        %v6991 = vmul.f32 %v6951, %v6791
        %v6992 = vmul.f32 %v6952, %v6792
        %v6993 = vmul.f32 %v6953, %v6793
        %v6994 = vmul.f32 %v6954, %v6794
        %v6995 = vmul.f32 %v6955, %v6795
        %v6996 = vmul.f32 %v6956, %v6796
        %v6997 = vmul.f32 %v6957, %v6797
        %v6998 = vmul.f32 %v6958, %v6798
        %v6999 = vmul.f32 %v6959, %v6799
        %v7000 = vmul.f32 %v6960, %v6800
        %v7001 = vmul.f32 %v6961, %v6801
        %v7002 = vmul.f32 %v6962, %v6802
        %v7003 = vmul.f32 %v6963, %v6803
        %v7004 = vmul.f32 %v6964, %v6804
        %v7005 = vmul.f32 %v6965, %v6805
        %v7006 = vmul.f32 %v6966, %v6806
        %v7007 = vmul.f32 %v6967, %v6807
        %v7008 = vmul.f32 %v6968, %v6808
        %v7009 = vmul.f32 %v6969, %v6809
        %v7010 = vmul.f32 %v6970, %v6810
        %v7011 = vmul.f32 %v6971, %v6811
        %v7012 = vmul.f32 %v6972, %v6812
        %v7013 = vmul.f32 %v6973, %v6813
        %v7014 = vmul.f32 %v6974, %v6814
        %v7015 = vmul.f32 %v6975, %v6815
        %v7016 = vmul.f32 %v6976, %v6816
        %v7017 = vmul.f32 %v6977, %v6817
        %v7018 = vadd.f32 %v6978, -0.28449672
        %v7019 = vadd.f32 %v6979, -0.28449672
        %v7020 = vadd.f32 %v6980, -0.28449672
        %v7021 = vadd.f32 %v6981, -0.28449672
        %v7022 = vadd.f32 %v6982, -0.28449672
        %v7023 = vadd.f32 %v6983, -0.28449672
        %v7024 = vadd.f32 %v6984, -0.28449672
        %v7025 = vadd.f32 %v6985, -0.28449672
        %v7026 = vadd.f32 %v6986, -0.28449672
        %v7027 = vadd.f32 %v6987, -0.28449672
        %v7028 = vadd.f32 %v6988, -0.28449672
        %v7029 = vadd.f32 %v6989, -0.28449672
        %v7030 = vadd.f32 %v6990, -0.28449672
        %v7031 = vadd.f32 %v6991, -0.28449672
        %v7032 = vadd.f32 %v6992, -0.28449672
        %v7033 = vadd.f32 %v6993, -0.28449672
        %v7034 = vadd.f32 %v6994, -0.28449672
        %v7035 = vadd.f32 %v6995, -0.28449672
        %v7036 = vadd.f32 %v6996, -0.28449672
        %v7037 = vadd.f32 %v6997, -0.28449672
        %v7038 = vadd.f32 %v6998, -0.28449672
        %v7039 = vadd.f32 %v6999, -0.28449672
        %v7040 = vadd.f32 %v7000, -0.28449672
        %v7041 = vadd.f32 %v7001, -0.28449672
        %v7042 = vadd.f32 %v7002, -0.28449672
        %v7043 = vadd.f32 %v7003, -0.28449672
        %v7044 = vadd.f32 %v7004, -0.28449672
        %v7045 = vadd.f32 %v7005, -0.28449672
        %v7046 = vadd.f32 %v7006, -0.28449672
        %v7047 = vadd.f32 %v7007, -0.28449672
        %v7048 = vadd.f32 %v7008, -0.28449672
        %v7049 = vadd.f32 %v7009, -0.28449672
        %v7050 = vadd.f32 %v7010, -0.28449672
        %v7051 = vadd.f32 %v7011, -0.28449672
        %v7052 = vadd.f32 %v7012, -0.28449672
        %v7053 = vadd.f32 %v7013, -0.28449672
        %v7054 = vadd.f32 %v7014, -0.28449672
        %v7055 = vadd.f32 %v7015, -0.28449672
        %v7056 = vadd.f32 %v7016, -0.28449672
        %v7057 = vadd.f32 %v7017, -0.28449672
        %v7058 = vmul.f32 %v7018, %v6778
        %v7059 = vmul.f32 %v7019, %v6779
        %v7060 = vmul.f32 %v7020, %v6780
        %v7061 = vmul.f32 %v7021, %v6781
        %v7062 = vmul.f32 %v7022, %v6782
        %v7063 = vmul.f32 %v7023, %v6783
        %v7064 = vmul.f32 %v7024, %v6784
        %v7065 = vmul.f32 %v7025, %v6785
        %v7066 = vmul.f32 %v7026, %v6786
        %v7067 = vmul.f32 %v7027, %v6787
        %v7068 = vmul.f32 %v7028, %v6788
        %v7069 = vmul.f32 %v7029, %v6789
        %v7070 = vmul.f32 %v7030, %v6790
        %v7071 = vmul.f32 %v7031, %v6791
        %v7072 = vmul.f32 %v7032, %v6792
        %v7073 = vmul.f32 %v7033, %v6793
        %v7074 = vmul.f32 %v7034, %v6794
        %v7075 = vmul.f32 %v7035, %v6795
        %v7076 = vmul.f32 %v7036, %v6796
        %v7077 = vmul.f32 %v7037, %v6797
        %v7078 = vmul.f32 %v7038, %v6798
        %v7079 = vmul.f32 %v7039, %v6799
        %v7080 = vmul.f32 %v7040, %v6800
        %v7081 = vmul.f32 %v7041, %v6801
        %v7082 = vmul.f32 %v7042, %v6802
        %v7083 = vmul.f32 %v7043, %v6803
        %v7084 = vmul.f32 %v7044, %v6804
        %v7085 = vmul.f32 %v7045, %v6805
        %v7086 = vmul.f32 %v7046, %v6806
        %v7087 = vmul.f32 %v7047, %v6807
        %v7088 = vmul.f32 %v7048, %v6808
        %v7089 = vmul.f32 %v7049, %v6809
        %v7090 = vmul.f32 %v7050, %v6810
        %v7091 = vmul.f32 %v7051, %v6811
        %v7092 = vmul.f32 %v7052, %v6812
        %v7093 = vmul.f32 %v7053, %v6813
        %v7094 = vmul.f32 %v7054, %v6814
        %v7095 = vmul.f32 %v7055, %v6815
        %v7096 = vmul.f32 %v7056, %v6816
        %v7097 = vmul.f32 %v7057, %v6817
        %v7098 = vadd.f32 %v7058, 0.2548296
        %v7099 = vadd.f32 %v7059, 0.2548296
        %v7100 = vadd.f32 %v7060, 0.2548296
        %v7101 = vadd.f32 %v7061, 0.2548296
        %v7102 = vadd.f32 %v7062, 0.2548296
        %v7103 = vadd.f32 %v7063, 0.2548296
        %v7104 = vadd.f32 %v7064, 0.2548296
        %v7105 = vadd.f32 %v7065, 0.2548296
        %v7106 = vadd.f32 %v7066, 0.2548296
        %v7107 = vadd.f32 %v7067, 0.2548296
        %v7108 = vadd.f32 %v7068, 0.2548296
        %v7109 = vadd.f32 %v7069, 0.2548296
        %v7110 = vadd.f32 %v7070, 0.2548296
        %v7111 = vadd.f32 %v7071, 0.2548296
        %v7112 = vadd.f32 %v7072, 0.2548296
        %v7113 = vadd.f32 %v7073, 0.2548296
        %v7114 = vadd.f32 %v7074, 0.2548296
        %v7115 = vadd.f32 %v7075, 0.2548296
        %v7116 = vadd.f32 %v7076, 0.2548296
        %v7117 = vadd.f32 %v7077, 0.2548296
        %v7118 = vadd.f32 %v7078, 0.2548296
        %v7119 = vadd.f32 %v7079, 0.2548296
        %v7120 = vadd.f32 %v7080, 0.2548296
        %v7121 = vadd.f32 %v7081, 0.2548296
        %v7122 = vadd.f32 %v7082, 0.2548296
        %v7123 = vadd.f32 %v7083, 0.2548296
        %v7124 = vadd.f32 %v7084, 0.2548296
        %v7125 = vadd.f32 %v7085, 0.2548296
        %v7126 = vadd.f32 %v7086, 0.2548296
        %v7127 = vadd.f32 %v7087, 0.2548296
        %v7128 = vadd.f32 %v7088, 0.2548296
        %v7129 = vadd.f32 %v7089, 0.2548296
        %v7130 = vadd.f32 %v7090, 0.2548296
        %v7131 = vadd.f32 %v7091, 0.2548296
        %v7132 = vadd.f32 %v7092, 0.2548296
        %v7133 = vadd.f32 %v7093, 0.2548296
        %v7134 = vadd.f32 %v7094, 0.2548296
        %v7135 = vadd.f32 %v7095, 0.2548296
        %v7136 = vadd.f32 %v7096, 0.2548296
        %v7137 = vadd.f32 %v7097, 0.2548296
        %v7138 = vmul.f32 %v7098, %v6778
        %v7139 = vmul.f32 %v7099, %v6779
        %v7140 = vmul.f32 %v7100, %v6780
        %v7141 = vmul.f32 %v7101, %v6781
        %v7142 = vmul.f32 %v7102, %v6782
        %v7143 = vmul.f32 %v7103, %v6783
        %v7144 = vmul.f32 %v7104, %v6784
        %v7145 = vmul.f32 %v7105, %v6785
        %v7146 = vmul.f32 %v7106, %v6786
        %v7147 = vmul.f32 %v7107, %v6787
        %v7148 = vmul.f32 %v7108, %v6788
        %v7149 = vmul.f32 %v7109, %v6789
        %v7150 = vmul.f32 %v7110, %v6790
        %v7151 = vmul.f32 %v7111, %v6791
        %v7152 = vmul.f32 %v7112, %v6792
        %v7153 = vmul.f32 %v7113, %v6793
        %v7154 = vmul.f32 %v7114, %v6794
        %v7155 = vmul.f32 %v7115, %v6795
        %v7156 = vmul.f32 %v7116, %v6796
        %v7157 = vmul.f32 %v7117, %v6797
        %v7158 = vmul.f32 %v7118, %v6798
        %v7159 = vmul.f32 %v7119, %v6799
        %v7160 = vmul.f32 %v7120, %v6800
        %v7161 = vmul.f32 %v7121, %v6801
        %v7162 = vmul.f32 %v7122, %v6802
        %v7163 = vmul.f32 %v7123, %v6803
        %v7164 = vmul.f32 %v7124, %v6804
        %v7165 = vmul.f32 %v7125, %v6805
        %v7166 = vmul.f32 %v7126, %v6806
        %v7167 = vmul.f32 %v7127, %v6807
        %v7168 = vmul.f32 %v7128, %v6808
        %v7169 = vmul.f32 %v7129, %v6809
        %v7170 = vmul.f32 %v7130, %v6810
        %v7171 = vmul.f32 %v7131, %v6811
        %v7172 = vmul.f32 %v7132, %v6812
        %v7173 = vmul.f32 %v7133, %v6813
        %v7174 = vmul.f32 %v7134, %v6814
        %v7175 = vmul.f32 %v7135, %v6815
        %v7176 = vmul.f32 %v7136, %v6816
        %v7177 = vmul.f32 %v7137, %v6817
        %v7178 = vsub.f32 0.0, %v6658
        %v7179 = vsub.f32 0.0, %v6659
        %v7180 = vsub.f32 0.0, %v6660
        %v7181 = vsub.f32 0.0, %v6661
        %v7182 = vsub.f32 0.0, %v6662
        %v7183 = vsub.f32 0.0, %v6663
        %v7184 = vsub.f32 0.0, %v6664
        %v7185 = vsub.f32 0.0, %v6665
        %v7186 = vsub.f32 0.0, %v6666
        %v7187 = vsub.f32 0.0, %v6667
        %v7188 = vsub.f32 0.0, %v6668
        %v7189 = vsub.f32 0.0, %v6669
        %v7190 = vsub.f32 0.0, %v6670
        %v7191 = vsub.f32 0.0, %v6671
        %v7192 = vsub.f32 0.0, %v6672
        %v7193 = vsub.f32 0.0, %v6673
        %v7194 = vsub.f32 0.0, %v6674
        %v7195 = vsub.f32 0.0, %v6675
        %v7196 = vsub.f32 0.0, %v6676
        %v7197 = vsub.f32 0.0, %v6677
        %v7198 = vsub.f32 0.0, %v6678
        %v7199 = vsub.f32 0.0, %v6679
        %v7200 = vsub.f32 0.0, %v6680
        %v7201 = vsub.f32 0.0, %v6681
        %v7202 = vsub.f32 0.0, %v6682
        %v7203 = vsub.f32 0.0, %v6683
        %v7204 = vsub.f32 0.0, %v6684
        %v7205 = vsub.f32 0.0, %v6685
        %v7206 = vsub.f32 0.0, %v6686
        %v7207 = vsub.f32 0.0, %v6687
        %v7208 = vsub.f32 0.0, %v6688
        %v7209 = vsub.f32 0.0, %v6689
        %v7210 = vsub.f32 0.0, %v6690
        %v7211 = vsub.f32 0.0, %v6691
        %v7212 = vsub.f32 0.0, %v6692
        %v7213 = vsub.f32 0.0, %v6693
        %v7214 = vsub.f32 0.0, %v6694
        %v7215 = vsub.f32 0.0, %v6695
        %v7216 = vsub.f32 0.0, %v6696
        %v7217 = vsub.f32 0.0, %v6697
        %v7218 = vmul.f32 %v7178, %v6658
        %v7219 = vmul.f32 %v7179, %v6659
        %v7220 = vmul.f32 %v7180, %v6660
        %v7221 = vmul.f32 %v7181, %v6661
        %v7222 = vmul.f32 %v7182, %v6662
        %v7223 = vmul.f32 %v7183, %v6663
        %v7224 = vmul.f32 %v7184, %v6664
        %v7225 = vmul.f32 %v7185, %v6665
        %v7226 = vmul.f32 %v7186, %v6666
        %v7227 = vmul.f32 %v7187, %v6667
        %v7228 = vmul.f32 %v7188, %v6668
        %v7229 = vmul.f32 %v7189, %v6669
        %v7230 = vmul.f32 %v7190, %v6670
        %v7231 = vmul.f32 %v7191, %v6671
        %v7232 = vmul.f32 %v7192, %v6672
        %v7233 = vmul.f32 %v7193, %v6673
        %v7234 = vmul.f32 %v7194, %v6674
        %v7235 = vmul.f32 %v7195, %v6675
        %v7236 = vmul.f32 %v7196, %v6676
        %v7237 = vmul.f32 %v7197, %v6677
        %v7238 = vmul.f32 %v7198, %v6678
        %v7239 = vmul.f32 %v7199, %v6679
        %v7240 = vmul.f32 %v7200, %v6680
        %v7241 = vmul.f32 %v7201, %v6681
        %v7242 = vmul.f32 %v7202, %v6682
        %v7243 = vmul.f32 %v7203, %v6683
        %v7244 = vmul.f32 %v7204, %v6684
        %v7245 = vmul.f32 %v7205, %v6685
        %v7246 = vmul.f32 %v7206, %v6686
        %v7247 = vmul.f32 %v7207, %v6687
        %v7248 = vmul.f32 %v7208, %v6688
        %v7249 = vmul.f32 %v7209, %v6689
        %v7250 = vmul.f32 %v7210, %v6690
        %v7251 = vmul.f32 %v7211, %v6691
        %v7252 = vmul.f32 %v7212, %v6692
        %v7253 = vmul.f32 %v7213, %v6693
        %v7254 = vmul.f32 %v7214, %v6694
        %v7255 = vmul.f32 %v7215, %v6695
        %v7256 = vmul.f32 %v7216, %v6696
        %v7257 = vmul.f32 %v7217, %v6697
        %v7258 = vmul.f32 %v7218, 1.442695
        %v7259 = vpow.pop %v7258
        %v7260 = vmul.f32 %v7219, 1.442695
        %v7261 = vpow.pop %v7260
        %v7262 = vmul.f32 %v7220, 1.442695
        %v7263 = vpow.pop %v7262
        %v7264 = vmul.f32 %v7221, 1.442695
        %v7265 = vpow.pop %v7264
        %v7266 = vmul.f32 %v7222, 1.442695
        %v7267 = vpow.pop %v7266
        %v7268 = vmul.f32 %v7223, 1.442695
        %v7269 = vpow.pop %v7268
        %v7270 = vmul.f32 %v7224, 1.442695
        %v7271 = vpow.pop %v7270
        %v7272 = vmul.f32 %v7225, 1.442695
        %v7273 = vpow.pop %v7272
        %v7274 = vmul.f32 %v7226, 1.442695
        %v7275 = vpow.pop %v7274
        %v7276 = vmul.f32 %v7227, 1.442695
        %v7277 = vpow.pop %v7276
        %v7278 = vmul.f32 %v7228, 1.442695
        %v7279 = vpow.pop %v7278
        %v7280 = vmul.f32 %v7229, 1.442695
        %v7281 = vpow.pop %v7280
        %v7282 = vmul.f32 %v7230, 1.442695
        %v7283 = vpow.pop %v7282
        %v7284 = vmul.f32 %v7231, 1.442695
        %v7285 = vpow.pop %v7284
        %v7286 = vmul.f32 %v7232, 1.442695
        %v7287 = vpow.pop %v7286
        %v7288 = vmul.f32 %v7233, 1.442695
        %v7289 = vpow.pop %v7288
        %v7290 = vmul.f32 %v7234, 1.442695
        %v7291 = vpow.pop %v7290
        %v7292 = vmul.f32 %v7235, 1.442695
        %v7293 = vpow.pop %v7292
        %v7294 = vmul.f32 %v7236, 1.442695
        %v7295 = vpow.pop %v7294
        %v7296 = vmul.f32 %v7237, 1.442695
        %v7297 = vpow.pop %v7296
        %v7298 = vmul.f32 %v7238, 1.442695
        %v7299 = vpow.pop %v7298
        %v7300 = vmul.f32 %v7239, 1.442695
        %v7301 = vpow.pop %v7300
        %v7302 = vmul.f32 %v7240, 1.442695
        %v7303 = vpow.pop %v7302
        %v7304 = vmul.f32 %v7241, 1.442695
        %v7305 = vpow.pop %v7304
        %v7306 = vmul.f32 %v7242, 1.442695
        %v7307 = vpow.pop %v7306
        %v7308 = vmul.f32 %v7243, 1.442695
        %v7309 = vpow.pop %v7308
        %v7310 = vmul.f32 %v7244, 1.442695
        %v7311 = vpow.pop %v7310
        %v7312 = vmul.f32 %v7245, 1.442695
        %v7313 = vpow.pop %v7312
        %v7314 = vmul.f32 %v7246, 1.442695
        %v7315 = vpow.pop %v7314
        %v7316 = vmul.f32 %v7247, 1.442695
        %v7317 = vpow.pop %v7316
        %v7318 = vmul.f32 %v7248, 1.442695
        %v7319 = vpow.pop %v7318
        %v7320 = vmul.f32 %v7249, 1.442695
        %v7321 = vpow.pop %v7320
        %v7322 = vmul.f32 %v7250, 1.442695
        %v7323 = vpow.pop %v7322
        %v7324 = vmul.f32 %v7251, 1.442695
        %v7325 = vpow.pop %v7324
        %v7326 = vmul.f32 %v7252, 1.442695
        %v7327 = vpow.pop %v7326
        %v7328 = vmul.f32 %v7253, 1.442695
        %v7329 = vpow.pop %v7328
        %v7330 = vmul.f32 %v7254, 1.442695
        %v7331 = vpow.pop %v7330
        %v7332 = vmul.f32 %v7255, 1.442695
        %v7333 = vpow.pop %v7332
        %v7334 = vmul.f32 %v7256, 1.442695
        %v7335 = vpow.pop %v7334
        %v7336 = vmul.f32 %v7257, 1.442695
        %v7337 = vpow.pop %v7336
        %v7338 = vmul.f32 %v7138, %v7259
        %v7339 = vmul.f32 %v7139, %v7261
        %v7340 = vmul.f32 %v7140, %v7263
        %v7341 = vmul.f32 %v7141, %v7265
        %v7342 = vmul.f32 %v7142, %v7267
        %v7343 = vmul.f32 %v7143, %v7269
        %v7344 = vmul.f32 %v7144, %v7271
        %v7345 = vmul.f32 %v7145, %v7273
        %v7346 = vmul.f32 %v7146, %v7275
        %v7347 = vmul.f32 %v7147, %v7277
        %v7348 = vmul.f32 %v7148, %v7279
        %v7349 = vmul.f32 %v7149, %v7281
        %v7350 = vmul.f32 %v7150, %v7283
        %v7351 = vmul.f32 %v7151, %v7285
        %v7352 = vmul.f32 %v7152, %v7287
        %v7353 = vmul.f32 %v7153, %v7289
        %v7354 = vmul.f32 %v7154, %v7291
        %v7355 = vmul.f32 %v7155, %v7293
        %v7356 = vmul.f32 %v7156, %v7295
        %v7357 = vmul.f32 %v7157, %v7297
        %v7358 = vmul.f32 %v7158, %v7299
        %v7359 = vmul.f32 %v7159, %v7301
        %v7360 = vmul.f32 %v7160, %v7303
        %v7361 = vmul.f32 %v7161, %v7305
        %v7362 = vmul.f32 %v7162, %v7307
        %v7363 = vmul.f32 %v7163, %v7309
        %v7364 = vmul.f32 %v7164, %v7311
        %v7365 = vmul.f32 %v7165, %v7313
        %v7366 = vmul.f32 %v7166, %v7315
        %v7367 = vmul.f32 %v7167, %v7317
        %v7368 = vmul.f32 %v7168, %v7319
        %v7369 = vmul.f32 %v7169, %v7321
        %v7370 = vmul.f32 %v7170, %v7323
        %v7371 = vmul.f32 %v7171, %v7325
        %v7372 = vmul.f32 %v7172, %v7327
        %v7373 = vmul.f32 %v7173, %v7329
        %v7374 = vmul.f32 %v7174, %v7331
        %v7375 = vmul.f32 %v7175, %v7333
        %v7376 = vmul.f32 %v7176, %v7335
        %v7377 = vmul.f32 %v7177, %v7337
        %v7378 = vsub.f32 1.0, %v7338
        %v7379 = vsub.f32 1.0, %v7339
        %v7380 = vsub.f32 1.0, %v7340
        %v7381 = vsub.f32 1.0, %v7341
        %v7382 = vsub.f32 1.0, %v7342
        %v7383 = vsub.f32 1.0, %v7343
        %v7384 = vsub.f32 1.0, %v7344
        %v7385 = vsub.f32 1.0, %v7345
        %v7386 = vsub.f32 1.0, %v7346
        %v7387 = vsub.f32 1.0, %v7347
        %v7388 = vsub.f32 1.0, %v7348
        %v7389 = vsub.f32 1.0, %v7349
        %v7390 = vsub.f32 1.0, %v7350
        %v7391 = vsub.f32 1.0, %v7351
        %v7392 = vsub.f32 1.0, %v7352
        %v7393 = vsub.f32 1.0, %v7353
        %v7394 = vsub.f32 1.0, %v7354
        %v7395 = vsub.f32 1.0, %v7355
        %v7396 = vsub.f32 1.0, %v7356
        %v7397 = vsub.f32 1.0, %v7357
        %v7398 = vsub.f32 1.0, %v7358
        %v7399 = vsub.f32 1.0, %v7359
        %v7400 = vsub.f32 1.0, %v7360
        %v7401 = vsub.f32 1.0, %v7361
        %v7402 = vsub.f32 1.0, %v7362
        %v7403 = vsub.f32 1.0, %v7363
        %v7404 = vsub.f32 1.0, %v7364
        %v7405 = vsub.f32 1.0, %v7365
        %v7406 = vsub.f32 1.0, %v7366
        %v7407 = vsub.f32 1.0, %v7367
        %v7408 = vsub.f32 1.0, %v7368
        %v7409 = vsub.f32 1.0, %v7369
        %v7410 = vsub.f32 1.0, %v7370
        %v7411 = vsub.f32 1.0, %v7371
        %v7412 = vsub.f32 1.0, %v7372
        %v7413 = vsub.f32 1.0, %v7373
        %v7414 = vsub.f32 1.0, %v7374
        %v7415 = vsub.f32 1.0, %v7375
        %v7416 = vsub.f32 1.0, %v7376
        %v7417 = vsub.f32 1.0, %v7377
        %vm7418 = vcmp.ge.f32.partialorder %v6618, 0.0
        %vm7419 = vcmp.ge.f32.partialorder %v6619, 0.0
        %vm7420 = vcmp.ge.f32.partialorder %v6620, 0.0
        %vm7421 = vcmp.ge.f32.partialorder %v6621, 0.0
        %vm7422 = vcmp.ge.f32.partialorder %v6622, 0.0
        %vm7423 = vcmp.ge.f32.partialorder %v6623, 0.0
        %vm7424 = vcmp.ge.f32.partialorder %v6624, 0.0
        %vm7425 = vcmp.ge.f32.partialorder %v6625, 0.0
        %vm7426 = vcmp.ge.f32.partialorder %v6626, 0.0
        %vm7427 = vcmp.ge.f32.partialorder %v6627, 0.0
        %vm7428 = vcmp.ge.f32.partialorder %v6628, 0.0
        %vm7429 = vcmp.ge.f32.partialorder %v6629, 0.0
        %vm7430 = vcmp.ge.f32.partialorder %v6630, 0.0
        %vm7431 = vcmp.ge.f32.partialorder %v6631, 0.0
        %vm7432 = vcmp.ge.f32.partialorder %v6632, 0.0
        %vm7433 = vcmp.ge.f32.partialorder %v6633, 0.0
        %vm7434 = vcmp.ge.f32.partialorder %v6634, 0.0
        %vm7435 = vcmp.ge.f32.partialorder %v6635, 0.0
        %vm7436 = vcmp.ge.f32.partialorder %v6636, 0.0
        %vm7437 = vcmp.ge.f32.partialorder %v6637, 0.0
        %vm7438 = vcmp.ge.f32.partialorder %v6638, 0.0
        %vm7439 = vcmp.ge.f32.partialorder %v6639, 0.0
        %vm7440 = vcmp.ge.f32.partialorder %v6640, 0.0
        %vm7441 = vcmp.ge.f32.partialorder %v6641, 0.0
        %vm7442 = vcmp.ge.f32.partialorder %v6642, 0.0
        %vm7443 = vcmp.ge.f32.partialorder %v6643, 0.0
        %vm7444 = vcmp.ge.f32.partialorder %v6644, 0.0
        %vm7445 = vcmp.ge.f32.partialorder %v6645, 0.0
        %vm7446 = vcmp.ge.f32.partialorder %v6646, 0.0
        %vm7447 = vcmp.ge.f32.partialorder %v6647, 0.0
        %vm7448 = vcmp.ge.f32.partialorder %v6648, 0.0
        %vm7449 = vcmp.ge.f32.partialorder %v6649, 0.0
        %vm7450 = vcmp.ge.f32.partialorder %v6650, 0.0
        %vm7451 = vcmp.ge.f32.partialorder %v6651, 0.0
        %vm7452 = vcmp.ge.f32.partialorder %v6652, 0.0
        %vm7453 = vcmp.ge.f32.partialorder %v6653, 0.0
        %vm7454 = vcmp.ge.f32.partialorder %v6654, 0.0
        %vm7455 = vcmp.ge.f32.partialorder %v6655, 0.0
        %vm7456 = vcmp.ge.f32.partialorder %v6656, 0.0
        %vm7457 = vcmp.ge.f32.partialorder %v6657, 0.0
        %v7458 = vsub.f32 0.0, %v7378
        %v7459 = vsub.f32 0.0, %v7379
        %v7460 = vsub.f32 0.0, %v7380
        %v7461 = vsub.f32 0.0, %v7381
        %v7462 = vsub.f32 0.0, %v7382
        %v7463 = vsub.f32 0.0, %v7383
        %v7464 = vsub.f32 0.0, %v7384
        %v7465 = vsub.f32 0.0, %v7385
        %v7466 = vsub.f32 0.0, %v7386
        %v7467 = vsub.f32 0.0, %v7387
        %v7468 = vsub.f32 0.0, %v7388
        %v7469 = vsub.f32 0.0, %v7389
        %v7470 = vsub.f32 0.0, %v7390
        %v7471 = vsub.f32 0.0, %v7391
        %v7472 = vsub.f32 0.0, %v7392
        %v7473 = vsub.f32 0.0, %v7393
        %v7474 = vsub.f32 0.0, %v7394
        %v7475 = vsub.f32 0.0, %v7395
        %v7476 = vsub.f32 0.0, %v7396
        %v7477 = vsub.f32 0.0, %v7397
        %v7478 = vsub.f32 0.0, %v7398
        %v7479 = vsub.f32 0.0, %v7399
        %v7480 = vsub.f32 0.0, %v7400
        %v7481 = vsub.f32 0.0, %v7401
        %v7482 = vsub.f32 0.0, %v7402
        %v7483 = vsub.f32 0.0, %v7403
        %v7484 = vsub.f32 0.0, %v7404
        %v7485 = vsub.f32 0.0, %v7405
        %v7486 = vsub.f32 0.0, %v7406
        %v7487 = vsub.f32 0.0, %v7407
        %v7488 = vsub.f32 0.0, %v7408
        %v7489 = vsub.f32 0.0, %v7409
        %v7490 = vsub.f32 0.0, %v7410
        %v7491 = vsub.f32 0.0, %v7411
        %v7492 = vsub.f32 0.0, %v7412
        %v7493 = vsub.f32 0.0, %v7413
        %v7494 = vsub.f32 0.0, %v7414
        %v7495 = vsub.f32 0.0, %v7415
        %v7496 = vsub.f32 0.0, %v7416
        %v7497 = vsub.f32 0.0, %v7417
        %v7498 = vsel %vm7418, %v7378, %v7458
        %v7499 = vsel %vm7419, %v7379, %v7459
        %v7500 = vsel %vm7420, %v7380, %v7460
        %v7501 = vsel %vm7421, %v7381, %v7461
        %v7502 = vsel %vm7422, %v7382, %v7462
        %v7503 = vsel %vm7423, %v7383, %v7463
        %v7504 = vsel %vm7424, %v7384, %v7464
        %v7505 = vsel %vm7425, %v7385, %v7465
        %v7506 = vsel %vm7426, %v7386, %v7466
        %v7507 = vsel %vm7427, %v7387, %v7467
        %v7508 = vsel %vm7428, %v7388, %v7468
        %v7509 = vsel %vm7429, %v7389, %v7469
        %v7510 = vsel %vm7430, %v7390, %v7470
        %v7511 = vsel %vm7431, %v7391, %v7471
        %v7512 = vsel %vm7432, %v7392, %v7472
        %v7513 = vsel %vm7433, %v7393, %v7473
        %v7514 = vsel %vm7434, %v7394, %v7474
        %v7515 = vsel %vm7435, %v7395, %v7475
        %v7516 = vsel %vm7436, %v7396, %v7476
        %v7517 = vsel %vm7437, %v7397, %v7477
        %v7518 = vsel %vm7438, %v7398, %v7478
        %v7519 = vsel %vm7439, %v7399, %v7479
        %v7520 = vsel %vm7440, %v7400, %v7480
        %v7521 = vsel %vm7441, %v7401, %v7481
        %v7522 = vsel %vm7442, %v7402, %v7482
        %v7523 = vsel %vm7443, %v7403, %v7483
        %v7524 = vsel %vm7444, %v7404, %v7484
        %v7525 = vsel %vm7445, %v7405, %v7485
        %v7526 = vsel %vm7446, %v7406, %v7486
        %v7527 = vsel %vm7447, %v7407, %v7487
        %v7528 = vsel %vm7448, %v7408, %v7488
        %v7529 = vsel %vm7449, %v7409, %v7489
        %v7530 = vsel %vm7450, %v7410, %v7490
        %v7531 = vsel %vm7451, %v7411, %v7491
        %v7532 = vsel %vm7452, %v7412, %v7492
        %v7533 = vsel %vm7453, %v7413, %v7493
        %v7534 = vsel %vm7454, %v7414, %v7494
        %v7535 = vsel %vm7455, %v7415, %v7495
        %v7536 = vsel %vm7456, %v7416, %v7496
        %v7537 = vsel %vm7457, %v7417, %v7497
        %v7538 = vadd.f32 %v7498, 1.0
        %v7539 = vadd.f32 %v7499, 1.0
        %v7540 = vadd.f32 %v7500, 1.0
        %v7541 = vadd.f32 %v7501, 1.0
        %v7542 = vadd.f32 %v7502, 1.0
        %v7543 = vadd.f32 %v7503, 1.0
        %v7544 = vadd.f32 %v7504, 1.0
        %v7545 = vadd.f32 %v7505, 1.0
        %v7546 = vadd.f32 %v7506, 1.0
        %v7547 = vadd.f32 %v7507, 1.0
        %v7548 = vadd.f32 %v7508, 1.0
        %v7549 = vadd.f32 %v7509, 1.0
        %v7550 = vadd.f32 %v7510, 1.0
        %v7551 = vadd.f32 %v7511, 1.0
        %v7552 = vadd.f32 %v7512, 1.0
        %v7553 = vadd.f32 %v7513, 1.0
        %v7554 = vadd.f32 %v7514, 1.0
        %v7555 = vadd.f32 %v7515, 1.0
        %v7556 = vadd.f32 %v7516, 1.0
        %v7557 = vadd.f32 %v7517, 1.0
        %v7558 = vadd.f32 %v7518, 1.0
        %v7559 = vadd.f32 %v7519, 1.0
        %v7560 = vadd.f32 %v7520, 1.0
        %v7561 = vadd.f32 %v7521, 1.0
        %v7562 = vadd.f32 %v7522, 1.0
        %v7563 = vadd.f32 %v7523, 1.0
        %v7564 = vadd.f32 %v7524, 1.0
        %v7565 = vadd.f32 %v7525, 1.0
        %v7566 = vadd.f32 %v7526, 1.0
        %v7567 = vadd.f32 %v7527, 1.0
        %v7568 = vadd.f32 %v7528, 1.0
        %v7569 = vadd.f32 %v7529, 1.0
        %v7570 = vadd.f32 %v7530, 1.0
        %v7571 = vadd.f32 %v7531, 1.0
        %v7572 = vadd.f32 %v7532, 1.0
        %v7573 = vadd.f32 %v7533, 1.0
        %v7574 = vadd.f32 %v7534, 1.0
        %v7575 = vadd.f32 %v7535, 1.0
        %v7576 = vadd.f32 %v7536, 1.0
        %v7577 = vadd.f32 %v7537, 1.0
        %v7578 = vmul.f32 %v6578, %v7538
        %v7579 = vmul.f32 %v6579, %v7539
        %v7580 = vmul.f32 %v6580, %v7540
        %v7581 = vmul.f32 %v6581, %v7541
        %v7582 = vmul.f32 %v6582, %v7542
        %v7583 = vmul.f32 %v6583, %v7543
        %v7584 = vmul.f32 %v6584, %v7544
        %v7585 = vmul.f32 %v6585, %v7545
        %v7586 = vmul.f32 %v6586, %v7546
        %v7587 = vmul.f32 %v6587, %v7547
        %v7588 = vmul.f32 %v6588, %v7548
        %v7589 = vmul.f32 %v6589, %v7549
        %v7590 = vmul.f32 %v6590, %v7550
        %v7591 = vmul.f32 %v6591, %v7551
        %v7592 = vmul.f32 %v6592, %v7552
        %v7593 = vmul.f32 %v6593, %v7553
        %v7594 = vmul.f32 %v6594, %v7554
        %v7595 = vmul.f32 %v6595, %v7555
        %v7596 = vmul.f32 %v6596, %v7556
        %v7597 = vmul.f32 %v6597, %v7557
        %v7598 = vmul.f32 %v6598, %v7558
        %v7599 = vmul.f32 %v6599, %v7559
        %v7600 = vmul.f32 %v6600, %v7560
        %v7601 = vmul.f32 %v6601, %v7561
        %v7602 = vmul.f32 %v6602, %v7562
        %v7603 = vmul.f32 %v6603, %v7563
        %v7604 = vmul.f32 %v6604, %v7564
        %v7605 = vmul.f32 %v6605, %v7565
        %v7606 = vmul.f32 %v6606, %v7566
        %v7607 = vmul.f32 %v6607, %v7567
        %v7608 = vmul.f32 %v6608, %v7568
        %v7609 = vmul.f32 %v6609, %v7569
        %v7610 = vmul.f32 %v6610, %v7570
        %v7611 = vmul.f32 %v6611, %v7571
        %v7612 = vmul.f32 %v6612, %v7572
        %v7613 = vmul.f32 %v6613, %v7573
        %v7614 = vmul.f32 %v6614, %v7574
        %v7615 = vmul.f32 %v6615, %v7575
        %v7616 = vmul.f32 %v6616, %v7576
        %v7617 = vmul.f32 %v6617, %v7577
        %v7618 = vpack.c.bf16 %v7582, %v7578
        %v7619 = vpack.c.bf16 %v7583, %v7579
        %v7620 = vpack.c.bf16 %v7584, %v7580
        %v7621 = vpack.c.bf16 %v7585, %v7581
        %v7622 = vpack.c.bf16 %v7590, %v7586
        %v7623 = vpack.c.bf16 %v7591, %v7587
        %v7624 = vpack.c.bf16 %v7592, %v7588
        %v7625 = vpack.c.bf16 %v7593, %v7589
        %v7626 = vpack.c.bf16 %v7598, %v7594
        %v7627 = vpack.c.bf16 %v7599, %v7595
        %v7628 = vpack.c.bf16 %v7600, %v7596
        %v7629 = vpack.c.bf16 %v7601, %v7597
        %v7630 = vpack.c.bf16 %v7606, %v7602
        %v7631 = vpack.c.bf16 %v7607, %v7603
        %v7632 = vpack.c.bf16 %v7608, %v7604
        %v7633 = vpack.c.bf16 %v7609, %v7605
        %v7634 = vpack.c.bf16 %v7614, %v7610
        %v7635 = vpack.c.bf16 %v7615, %v7611
        %v7636 = vpack.c.bf16 %v7616, %v7612
        %v7637 = vpack.c.bf16 %v7617, %v7613
        %s7638 = scalar_lea.vmem %s14, 256
        %v7639 = vld [vmem:[%s7638] sm:$0xf]
        %v7640 = vld [vmem:[%s7638 + $0x4] sm:$0xf]
        %v7641 = vld [vmem:[%s7638 + $0x8] sm:$0xf]
        %v7642 = vld [vmem:[%s7638 + $0xc] sm:$0xf]
        %v7643 = vld [vmem:[%s7638 + $0x10] sm:$0xf]
        %v7644 = vld [vmem:[%s7638 + $0x14] sm:$0xf]
        %v7645 = vld [vmem:[%s7638 + $0x18] sm:$0xf]
        %v7646 = vld [vmem:[%s7638 + $0x1c] sm:$0xf]
        %v7647 = vld [vmem:[%s7638 + $0x20] sm:$0xf]
        %v7648 = vld [vmem:[%s7638 + $0x24] sm:$0xf]
        %v7649 = vld [vmem:[%s7638 + $0x28] sm:$0xf]
        %v7650 = vld [vmem:[%s7638 + $0x2c] sm:$0xf]
        %v7651 = vld [vmem:[%s7638 + $0x30] sm:$0xf]
        %v7652 = vld [vmem:[%s7638 + $0x34] sm:$0xf]
        %v7653 = vld [vmem:[%s7638 + $0x38] sm:$0xf]
        %v7654 = vld [vmem:[%s7638 + $0x3c] sm:$0xf]
        %v7655 = vld [vmem:[%s7638 + $0x40] sm:$0xf]
        %v7656 = vld [vmem:[%s7638 + $0x44] sm:$0xf]
        %v7657 = vld [vmem:[%s7638 + $0x48] sm:$0xf]
        %v7658 = vld [vmem:[%s7638 + $0x4c] sm:$0xf]
        %v7659 = vld [vmem:[%s7638 + $0x50] sm:$0xf]
        %v7660 = vld [vmem:[%s7638 + $0x54] sm:$0xf]
        %v7661 = vld [vmem:[%s7638 + $0x58] sm:$0xf]
        %v7662 = vld [vmem:[%s7638 + $0x5c] sm:$0xf]
        %v7663 = vld [vmem:[%s7638 + $0x60] sm:$0xf]
        %v7664 = vld [vmem:[%s7638 + $0x64] sm:$0xf]
        %v7665 = vld [vmem:[%s7638 + $0x68] sm:$0xf]
        %v7666 = vld [vmem:[%s7638 + $0x6c] sm:$0xf]
        %v7667 = vld [vmem:[%s7638 + $0x70] sm:$0xf]
        %v7668 = vld [vmem:[%s7638 + $0x74] sm:$0xf]
        %v7669 = vld [vmem:[%s7638 + $0x78] sm:$0xf]
        %v7670 = vld [vmem:[%s7638 + $0x7c] sm:$0xf]
        %v7671 = vld [vmem:[%s7638 + $0x80] sm:$0xf]
        %v7672 = vld [vmem:[%s7638 + $0x84] sm:$0xf]
        %v7673 = vld [vmem:[%s7638 + $0x88] sm:$0xf]
        %v7674 = vld [vmem:[%s7638 + $0x8c] sm:$0xf]
        %v7675 = vld [vmem:[%s7638 + $0x90] sm:$0xf]
        %v7676 = vld [vmem:[%s7638 + $0x94] sm:$0xf]
        %v7677 = vld [vmem:[%s7638 + $0x98] sm:$0xf]
        %v7678 = vld [vmem:[%s7638 + $0x9c] sm:$0xf]
        %v7679 = vld [vmem:[%s7638 + $0xa0] sm:$0xf]
        %v7680 = vld [vmem:[%s7638 + $0xa4] sm:$0xf]
        %v7681 = vld [vmem:[%s7638 + $0xa8] sm:$0xf]
        %v7682 = vld [vmem:[%s7638 + $0xac] sm:$0xf]
        %v7683 = vld [vmem:[%s7638 + $0xb0] sm:$0xf]
        %v7684 = vld [vmem:[%s7638 + $0xb4] sm:$0xf]
        %v7685 = vld [vmem:[%s7638 + $0xb8] sm:$0xf]
        %v7686 = vld [vmem:[%s7638 + $0xbc] sm:$0xf]
        %v7687 = vld [vmem:[%s7638 + $0xc0] sm:$0xf]
        %v7688 = vld [vmem:[%s7638 + $0xc4] sm:$0xf]
        %v7689 = vld [vmem:[%s7638 + $0xc8] sm:$0xf]
        %v7690 = vld [vmem:[%s7638 + $0xcc] sm:$0xf]
        %v7691 = vld [vmem:[%s7638 + $0xd0] sm:$0xf]
        %v7692 = vld [vmem:[%s7638 + $0xd4] sm:$0xf]
        %v7693 = vld [vmem:[%s7638 + $0xd8] sm:$0xf]
        %v7694 = vld [vmem:[%s7638 + $0xdc] sm:$0xf]
        %v7695 = vld [vmem:[%s7638 + $0xe0] sm:$0xf]
        %v7696 = vld [vmem:[%s7638 + $0xe4] sm:$0xf]
        %v7697 = vld [vmem:[%s7638 + $0xe8] sm:$0xf]
        %v7698 = vld [vmem:[%s7638 + $0xec] sm:$0xf]
        %v7699 = vld [vmem:[%s7638 + $0xf0] sm:$0xf]
        %v7700 = vld [vmem:[%s7638 + $0xf4] sm:$0xf]
        %v7701 = vld [vmem:[%s7638 + $0xf8] sm:$0xf]
        %v7702 = vld [vmem:[%s7638 + $0xfc] sm:$0xf]
        %s7703 = scalar_lea.vmem %s15, 1
        %v7704 = vld [vmem:[%s7703] sm:$0x1]
        %v7706 = vperm.slane %v7704, 0
        %v7772 = vunpack.c.l.b16 %v7639
        %v7773 = vunpack.c.l.b16 %v7640
        %v7774 = vunpack.c.l.b16 %v7641
        %v7775 = vunpack.c.l.b16 %v7642
        %v7776 = vunpack.c.l.b16 %v7643
        %v7777 = vunpack.c.l.b16 %v7644
        %v7778 = vunpack.c.l.b16 %v7645
        %v7779 = vunpack.c.l.b16 %v7646
        %v7780 = vunpack.c.l.b16 %v7647
        %v7781 = vunpack.c.l.b16 %v7648
        %v7782 = vunpack.c.l.b16 %v7649
        %v7783 = vunpack.c.l.b16 %v7650
        %v7784 = vunpack.c.l.b16 %v7651
        %v7785 = vunpack.c.l.b16 %v7652
        %v7786 = vunpack.c.l.b16 %v7653
        %v7787 = vunpack.c.l.b16 %v7654
        %v7788 = vunpack.c.l.b16 %v7655
        %v7789 = vunpack.c.l.b16 %v7656
        %v7790 = vunpack.c.l.b16 %v7657
        %v7791 = vunpack.c.l.b16 %v7658
        %v7792 = vunpack.c.l.b16 %v7659
        %v7793 = vunpack.c.l.b16 %v7660
        %v7794 = vunpack.c.l.b16 %v7661
        %v7795 = vunpack.c.l.b16 %v7662
        %v7796 = vunpack.c.l.b16 %v7663
        %v7797 = vunpack.c.l.b16 %v7664
        %v7798 = vunpack.c.l.b16 %v7665
        %v7799 = vunpack.c.l.b16 %v7666
        %v7800 = vunpack.c.l.b16 %v7667
        %v7801 = vunpack.c.l.b16 %v7668
        %v7802 = vunpack.c.l.b16 %v7669
        %v7803 = vunpack.c.l.b16 %v7670
        %v7804 = vunpack.c.l.b16 %v7671
        %v7805 = vunpack.c.l.b16 %v7672
        %v7806 = vunpack.c.l.b16 %v7673
        %v7807 = vunpack.c.l.b16 %v7674
        %v7808 = vunpack.c.l.b16 %v7675
        %v7809 = vunpack.c.l.b16 %v7676
        %v7810 = vunpack.c.l.b16 %v7677
        %v7811 = vunpack.c.l.b16 %v7678
        %v7812 = vunpack.c.l.b16 %v7679
        %v7813 = vunpack.c.l.b16 %v7680
        %v7814 = vunpack.c.l.b16 %v7681
        %v7815 = vunpack.c.l.b16 %v7682
        %v7816 = vunpack.c.l.b16 %v7683
        %v7817 = vunpack.c.l.b16 %v7684
        %v7818 = vunpack.c.l.b16 %v7685
        %v7819 = vunpack.c.l.b16 %v7686
        %v7820 = vunpack.c.l.b16 %v7687
        %v7821 = vunpack.c.l.b16 %v7688
        %v7822 = vunpack.c.l.b16 %v7689
        %v7823 = vunpack.c.l.b16 %v7690
        %v7824 = vunpack.c.l.b16 %v7691
        %v7825 = vunpack.c.l.b16 %v7692
        %v7826 = vunpack.c.l.b16 %v7693
        %v7827 = vunpack.c.l.b16 %v7694
        %v7828 = vunpack.c.l.b16 %v7695
        %v7829 = vunpack.c.l.b16 %v7696
        %v7830 = vunpack.c.l.b16 %v7697
        %v7831 = vunpack.c.l.b16 %v7698
        %v7832 = vunpack.c.l.b16 %v7699
        %v7833 = vunpack.c.l.b16 %v7700
        %v7834 = vunpack.c.l.b16 %v7701
        %v7835 = vunpack.c.l.b16 %v7702
        %v7836 = vpack.c.b16 %v7773, %v7772
        %v7837 = vpack.c.b16 %v7775, %v7774
        %v7838 = vpack.c.b16 %v7777, %v7776
        %v7839 = vpack.c.b16 %v7779, %v7778
        %v7840 = vpack.c.b16 %v7781, %v7780
        %v7841 = vpack.c.b16 %v7783, %v7782
        %v7842 = vpack.c.b16 %v7785, %v7784
        %v7843 = vpack.c.b16 %v7787, %v7786
        %v7844 = vpack.c.b16 %v7789, %v7788
        %v7845 = vpack.c.b16 %v7791, %v7790
        %v7846 = vpack.c.b16 %v7793, %v7792
        %v7847 = vpack.c.b16 %v7795, %v7794
        %v7848 = vpack.c.b16 %v7797, %v7796
        %v7849 = vpack.c.b16 %v7799, %v7798
        %v7850 = vpack.c.b16 %v7801, %v7800
        %v7851 = vpack.c.b16 %v7803, %v7802
        %v7852 = vpack.c.b16 %v7805, %v7804
        %v7853 = vpack.c.b16 %v7807, %v7806
        %v7854 = vpack.c.b16 %v7809, %v7808
        %v7855 = vpack.c.b16 %v7811, %v7810
        %v7856 = vpack.c.b16 %v7813, %v7812
        %v7857 = vpack.c.b16 %v7815, %v7814
        %v7858 = vpack.c.b16 %v7817, %v7816
        %v7859 = vpack.c.b16 %v7819, %v7818
        %v7860 = vpack.c.b16 %v7821, %v7820
        %v7861 = vpack.c.b16 %v7823, %v7822
        %v7862 = vpack.c.b16 %v7825, %v7824
        %v7863 = vpack.c.b16 %v7827, %v7826
        %v7864 = vpack.c.b16 %v7829, %v7828
        %v7865 = vpack.c.b16 %v7831, %v7830
        %v7866 = vpack.c.b16 %v7833, %v7832
        %v7867 = vpack.c.b16 %v7835, %v7834
        %7900 = vmatpush.bf16.msra.mxu0 %v7843
        %7901 = vmatpush.bf16.msra.mxu0 %v7842
        %7902 = vmatpush.bf16.msra.mxu0 %v7841
        %7903 = vmatpush.bf16.msra.mxu0 %v7840
        %7904 = vmatpush.bf16.msra.mxu0 %v7839
        %7905 = vmatpush.bf16.msra.mxu0 %v7838
        %7906 = vmatpush.bf16.msra.mxu0 %v7837
        %7907 = vmatpush.bf16.msra.mxu0 %v7836
        %7908 = vmatmul.bf16.gmra.mxu0 %v7618
        %v7909 = vpop.f32.mrf.mxu0
        %v7910 = vadd.f32 %v7706, %v7909
        %v7911 = vpop.f32.mrf.mxu0
        %v7912 = vadd.f32 %v7706, %v7911
        %7913 = vmatmul.bf16.gmra.mxu0 %v7622
        %v7914 = vpop.f32.mrf.mxu0
        %v7915 = vadd.f32 %v7706, %v7914
        %v7916 = vpop.f32.mrf.mxu0
        %v7917 = vadd.f32 %v7706, %v7916
        %7918 = vmatmul.bf16.gmra.mxu0 %v7626
        %v7919 = vpop.f32.mrf.mxu0
        %v7920 = vadd.f32 %v7706, %v7919
        %v7921 = vpop.f32.mrf.mxu0
        %v7922 = vadd.f32 %v7706, %v7921
        %7923 = vmatmul.bf16.gmra.mxu0 %v7630
        %v7924 = vpop.f32.mrf.mxu0
        %v7925 = vadd.f32 %v7706, %v7924
        %v7926 = vpop.f32.mrf.mxu0
        %v7927 = vadd.f32 %v7706, %v7926
        %7928 = vmatmul.bf16.gmra.mxu0 %v7634
        %v7929 = vpop.f32.mrf.mxu0
        %v7930 = vadd.f32 %v7706, %v7929
        %v7931 = vpop.f32.mrf.mxu0
        %v7932 = vadd.f32 %v7706, %v7931
        %7933 = vdwg.mxu0
        %7934 = vmatpush.bf16.msra.mxu0 %v7851
        %7935 = vmatpush.bf16.msra.mxu0 %v7850
        %7936 = vmatpush.bf16.msra.mxu0 %v7849
        %7937 = vmatpush.bf16.msra.mxu0 %v7848
        %7938 = vmatpush.bf16.msra.mxu0 %v7847
        %7939 = vmatpush.bf16.msra.mxu0 %v7846
        %7940 = vmatpush.bf16.msra.mxu0 %v7845
        %7941 = vmatpush.bf16.msra.mxu0 %v7844
        %7942 = vmatmul.bf16.gmra.mxu0 %v7619
        %v7943 = vpop.f32.mrf.mxu0
        %v7944 = vadd.f32 %v7910, %v7943
        %v7945 = vpop.f32.mrf.mxu0
        %v7946 = vadd.f32 %v7912, %v7945
        %7947 = vmatmul.bf16.gmra.mxu0 %v7623
        %v7948 = vpop.f32.mrf.mxu0
        %v7949 = vadd.f32 %v7915, %v7948
        %v7950 = vpop.f32.mrf.mxu0
        %v7951 = vadd.f32 %v7917, %v7950
        %7952 = vmatmul.bf16.gmra.mxu0 %v7627
        %v7953 = vpop.f32.mrf.mxu0
        %v7954 = vadd.f32 %v7920, %v7953
        %v7955 = vpop.f32.mrf.mxu0
        %v7956 = vadd.f32 %v7922, %v7955
        %7957 = vmatmul.bf16.gmra.mxu0 %v7631
        %v7958 = vpop.f32.mrf.mxu0
        %v7959 = vadd.f32 %v7925, %v7958
        %v7960 = vpop.f32.mrf.mxu0
        %v7961 = vadd.f32 %v7927, %v7960
        %7962 = vmatmul.bf16.gmra.mxu0 %v7635
        %v7963 = vpop.f32.mrf.mxu0
        %v7964 = vadd.f32 %v7930, %v7963
        %v7965 = vpop.f32.mrf.mxu0
        %v7966 = vadd.f32 %v7932, %v7965
        %7967 = vdwg.mxu0
        %7968 = vmatpush.bf16.msra.mxu0 %v7859
        %7969 = vmatpush.bf16.msra.mxu0 %v7858
        %7970 = vmatpush.bf16.msra.mxu0 %v7857
        %7971 = vmatpush.bf16.msra.mxu0 %v7856
        %7972 = vmatpush.bf16.msra.mxu0 %v7855
        %7973 = vmatpush.bf16.msra.mxu0 %v7854
        %7974 = vmatpush.bf16.msra.mxu0 %v7853
        %7975 = vmatpush.bf16.msra.mxu0 %v7852
        %7976 = vmatmul.bf16.gmra.mxu0 %v7620
        %v7977 = vpop.f32.mrf.mxu0
        %v7978 = vadd.f32 %v7944, %v7977
        %v7979 = vpop.f32.mrf.mxu0
        %v7980 = vadd.f32 %v7946, %v7979
        %7981 = vmatmul.bf16.gmra.mxu0 %v7624
        %v7982 = vpop.f32.mrf.mxu0
        %v7983 = vadd.f32 %v7949, %v7982
        %v7984 = vpop.f32.mrf.mxu0
        %v7985 = vadd.f32 %v7951, %v7984
        %7986 = vmatmul.bf16.gmra.mxu0 %v7628
        %v7987 = vpop.f32.mrf.mxu0
        %v7988 = vadd.f32 %v7954, %v7987
        %v7989 = vpop.f32.mrf.mxu0
        %v7990 = vadd.f32 %v7956, %v7989
        %7991 = vmatmul.bf16.gmra.mxu0 %v7632
        %v7992 = vpop.f32.mrf.mxu0
        %v7993 = vadd.f32 %v7959, %v7992
        %v7994 = vpop.f32.mrf.mxu0
        %v7995 = vadd.f32 %v7961, %v7994
        %7996 = vmatmul.bf16.gmra.mxu0 %v7636
        %v7997 = vpop.f32.mrf.mxu0
        %v7998 = vadd.f32 %v7964, %v7997
        %v7999 = vpop.f32.mrf.mxu0
        %v8000 = vadd.f32 %v7966, %v7999
        %8001 = vdwg.mxu0
        %8002 = vmatpush.bf16.msra.mxu0 %v7867
        %8003 = vmatpush.bf16.msra.mxu0 %v7866
        %8004 = vmatpush.bf16.msra.mxu0 %v7865
        %8005 = vmatpush.bf16.msra.mxu0 %v7864
        %8006 = vmatpush.bf16.msra.mxu0 %v7863
        %8007 = vmatpush.bf16.msra.mxu0 %v7862
        %8008 = vmatpush.bf16.msra.mxu0 %v7861
        %8009 = vmatpush.bf16.msra.mxu0 %v7860
        %8010 = vmatmul.bf16.gmra.mxu0 %v7621
        %v8011 = vpop.f32.mrf.mxu0
        %v8012 = vadd.f32 %v7978, %v8011
        %v8013 = vpop.f32.mrf.mxu0
        %v8014 = vadd.f32 %v7980, %v8013
        %8015 = vmatmul.bf16.gmra.mxu0 %v7625
        %v8016 = vpop.f32.mrf.mxu0
        %v8017 = vadd.f32 %v7983, %v8016
        %v8018 = vpop.f32.mrf.mxu0
        %v8019 = vadd.f32 %v7985, %v8018
        %8020 = vmatmul.bf16.gmra.mxu0 %v7629
        %v8021 = vpop.f32.mrf.mxu0
        %v8022 = vadd.f32 %v7988, %v8021
        %v8023 = vpop.f32.mrf.mxu0
        %v8024 = vadd.f32 %v7990, %v8023
        %8025 = vmatmul.bf16.gmra.mxu0 %v7633
        %v8026 = vpop.f32.mrf.mxu0
        %v8027 = vadd.f32 %v7993, %v8026
        %v8028 = vpop.f32.mrf.mxu0
        %v8029 = vadd.f32 %v7995, %v8028
        %8030 = vmatmul.bf16.gmra.mxu0 %v7637
        %v8031 = vpop.f32.mrf.mxu0
        %v8032 = vadd.f32 %v7998, %v8031
        %v8033 = vpop.f32.mrf.mxu0
        %v8034 = vadd.f32 %v8000, %v8033
        %8035 = vdwg.mxu0
        %v8036 = vadd.f32 %v5993, %v8012
        %v8037 = vadd.f32 %v5994, %v8014
        %v8038 = vadd.f32 %v5995, %v8017
        %v8039 = vadd.f32 %v5996, %v8019
        %v8040 = vadd.f32 %v5997, %v8022
        %v8041 = vadd.f32 %v5998, %v8024
        %v8042 = vadd.f32 %v5999, %v8027
        %v8043 = vadd.f32 %v6000, %v8029
        %v8044 = vadd.f32 %v6001, %v8032
        %v8045 = vadd.f32 %v6002, %v8034
        %v8056 = vrot.slane %v8036, 5
        %v8057 = vrot.slane %v8037, 2
        %v8058 = vrot.slane %v8037, 7
        %v8059 = vrot.slane %v8038, 4
        %v8060 = vrot.slane %v8039, 1
        %v8061 = vrot.slane %v8039, 6
        %v8062 = vrot.slane %v8040, 3
        %v8063 = vrot.slane %v8041, 5
        %v8064 = vrot.slane %v8042, 2
        %v8065 = vrot.slane %v8042, 7
        %v8066 = vrot.slane %v8043, 4
        %v8067 = vrot.slane %v8044, 1
        %v8068 = vrot.slane %v8044, 6
        %v8069 = vrot.slane %v8045, 3
        %v8084 = vld [vmem:[%s16] sm:$0x1]
        %v8085 = vld [vmem:[%s17] sm:$0x1]
        %8086 = vst [vmem:[#allocation1] ss:$9 sm:$0xff] %v8036
        %s8087 = scalar_lea.vmem [#allocation1], 1
        %8088 = vst [vmem:[%s8087] ss:$9 sm:$0xff] %v8056
        %s8089 = scalar_lea.vmem [#allocation1], 2
        %8090 = vst [vmem:[%s8089] ss:$9 sm:$0xff] %v8057
        %s8091 = scalar_lea.vmem [#allocation1], 3
        %8092 = vst [vmem:[%s8091] ss:$9 sm:$0xff] %v8058
        %s8093 = scalar_lea.vmem [#allocation1], 4
        %8094 = vst [vmem:[%s8093] ss:$9 sm:$0xff] %v8059
        %s8095 = scalar_lea.vmem [#allocation1], 5
        %8096 = vst [vmem:[%s8095] ss:$9 sm:$0xff] %v8060
        %s8097 = scalar_lea.vmem [#allocation1], 6
        %8098 = vst [vmem:[%s8097] ss:$9 sm:$0xff] %v8061
        %s8099 = scalar_lea.vmem [#allocation1], 7
        %8100 = vst [vmem:[%s8099] ss:$9 sm:$0xff] %v8062
        %v8101 = vld [vmem:[#allocation1] sm:$0xff]
        %8102 = vst [vmem:[#allocation1] ss:$9 sm:$0xff] %v8041
        %8103 = vst [vmem:[%s8087] ss:$9 sm:$0xff] %v8063
        %8104 = vst [vmem:[%s8089] ss:$9 sm:$0xff] %v8064
        %8105 = vst [vmem:[%s8091] ss:$9 sm:$0xff] %v8065
        %8106 = vst [vmem:[%s8093] ss:$9 sm:$0xff] %v8066
        %8107 = vst [vmem:[%s8095] ss:$9 sm:$0xff] %v8067
        %8108 = vst [vmem:[%s8097] ss:$9 sm:$0xff] %v8068
        %8109 = vst [vmem:[%s8099] ss:$9 sm:$0xff] %v8069
        %v8110 = vld [vmem:[#allocation1] sm:$0xff]
        %8113 = vadd.xlane.f32.xlu0 %v8101
        %v8114 = vpop.xlane.xlu0 %8113
        %8115 = vadd.xlane.f32.xlu0 %v8110
        %v8116 = vpop.xlane.xlu0 %8115
        %v8117 = vmul.f32 %v8114, %v1517
        %v8118 = vmul.f32 %v8116, %v1517
        %v8121 = vperm.slane %v8117, 0
        %v8122 = vperm.slane %v8117, 1
        %v8123 = vperm.slane %v8117, 2
        %v8124 = vperm.slane %v8117, 3
        %v8125 = vperm.slane %v8117, 4
        %v8126 = vperm.slane %v8117, 5
        %v8127 = vperm.slane %v8117, 6
        %v8128 = vperm.slane %v8117, 7
        %v8129 = vperm.slane %v8118, 0
        %v8130 = vperm.slane %v8118, 1
        %v8131 = vperm.slane %v8118, 2
        %v8132 = vperm.slane %v8118, 3
        %v8133 = vperm.slane %v8118, 4
        %v8134 = vperm.slane %v8118, 5
        %v8135 = vperm.slane %v8118, 6
        %v8136 = vperm.slane %v8118, 7
        %v8153 = vsub.f32 %v8036, %v8121
        %v8154 = vsub.f32 %v8056, %v8122
        %v8155 = vsub.f32 %v8057, %v8123
        %v8156 = vsub.f32 %v8058, %v8124
        %v8157 = vsub.f32 %v8059, %v8125
        %v8158 = vsub.f32 %v8060, %v8126
        %v8159 = vsub.f32 %v8061, %v8127
        %v8160 = vsub.f32 %v8062, %v8128
        %v8161 = vsub.f32 %v8041, %v8129
        %v8162 = vsub.f32 %v8063, %v8130
        %v8163 = vsub.f32 %v8064, %v8131
        %v8164 = vsub.f32 %v8065, %v8132
        %v8165 = vsub.f32 %v8066, %v8133
        %v8166 = vsub.f32 %v8067, %v8134
        %v8167 = vsub.f32 %v8068, %v8135
        %v8168 = vsub.f32 %v8069, %v8136
        %v8169 = vmul.f32 %v8153, %v8153
        %v8170 = vmul.f32 %v8154, %v8154
        %v8171 = vmul.f32 %v8155, %v8155
        %v8172 = vmul.f32 %v8156, %v8156
        %v8173 = vmul.f32 %v8157, %v8157
        %v8174 = vmul.f32 %v8158, %v8158
        %v8175 = vmul.f32 %v8159, %v8159
        %v8176 = vmul.f32 %v8160, %v8160
        %v8177 = vmul.f32 %v8161, %v8161
        %v8178 = vmul.f32 %v8162, %v8162
        %v8179 = vmul.f32 %v8163, %v8163
        %v8180 = vmul.f32 %v8164, %v8164
        %v8181 = vmul.f32 %v8165, %v8165
        %v8182 = vmul.f32 %v8166, %v8166
        %v8183 = vmul.f32 %v8167, %v8167
        %v8184 = vmul.f32 %v8168, %v8168
        %8201 = vst [vmem:[#allocation1] ss:$9 sm:$0xff] %v8169
        %s8202 = scalar_lea.vmem [#allocation1], 1
        %8203 = vst [vmem:[%s8202] ss:$9 sm:$0xff] %v8170
        %s8204 = scalar_lea.vmem [#allocation1], 2
        %8205 = vst [vmem:[%s8204] ss:$9 sm:$0xff] %v8171
        %s8206 = scalar_lea.vmem [#allocation1], 3
        %8207 = vst [vmem:[%s8206] ss:$9 sm:$0xff] %v8172
        %s8208 = scalar_lea.vmem [#allocation1], 4
        %8209 = vst [vmem:[%s8208] ss:$9 sm:$0xff] %v8173
        %s8210 = scalar_lea.vmem [#allocation1], 5
        %8211 = vst [vmem:[%s8210] ss:$9 sm:$0xff] %v8174
        %s8212 = scalar_lea.vmem [#allocation1], 6
        %8213 = vst [vmem:[%s8212] ss:$9 sm:$0xff] %v8175
        %s8214 = scalar_lea.vmem [#allocation1], 7
        %8215 = vst [vmem:[%s8214] ss:$9 sm:$0xff] %v8176
        %v8216 = vld [vmem:[#allocation1] sm:$0xff]
        %8217 = vst [vmem:[#allocation1] ss:$9 sm:$0xff] %v8177
        %8218 = vst [vmem:[%s8202] ss:$9 sm:$0xff] %v8178
        %8219 = vst [vmem:[%s8204] ss:$9 sm:$0xff] %v8179
        %8220 = vst [vmem:[%s8206] ss:$9 sm:$0xff] %v8180
        %8221 = vst [vmem:[%s8208] ss:$9 sm:$0xff] %v8181
        %8222 = vst [vmem:[%s8210] ss:$9 sm:$0xff] %v8182
        %8223 = vst [vmem:[%s8212] ss:$9 sm:$0xff] %v8183
        %8224 = vst [vmem:[%s8214] ss:$9 sm:$0xff] %v8184
        %v8225 = vld [vmem:[#allocation1] sm:$0xff]
        %8228 = vadd.xlane.f32.xlu0 %v8216
        %v8229 = vpop.xlane.xlu0 %8228
        %8230 = vadd.xlane.f32.xlu0 %v8225
        %v8231 = vpop.xlane.xlu0 %8230
        %v8232 = vmul.f32 %v8229, %v1517
        %v8233 = vmul.f32 %v8231, %v1517
        %v8234 = vadd.f32 %v8232, 1e-06
        %v8235 = vadd.f32 %v8233, 1e-06
        %v8236 = vrsqrt.pop %v8234
        %v8237 = vmul.f32 %v8236, %v8234
        %v8238 = vmul.f32 %v8237, %v8236
        %v8239 = vmul.f32 0.5, %v8238
        %v8240 = vsub.f32 1.5, %v8239
        %v8241 = vmul.f32 %v8236, %v8240
        %vm8242 = vweird.f32 %v8234
        %vm8243 = vweird.f32 %v8236
        %vm8244 = vmor %vm8242, %vm8243
        %v8245 = vsel %vm8244, %v8236, %v8241
        %v8246 = vrsqrt.pop %v8235
        %v8247 = vmul.f32 %v8246, %v8235
        %v8248 = vmul.f32 %v8247, %v8246
        %v8249 = vmul.f32 0.5, %v8248
        %v8250 = vsub.f32 1.5, %v8249
        %v8251 = vmul.f32 %v8246, %v8250
        %vm8252 = vweird.f32 %v8235
        %vm8253 = vweird.f32 %v8246
        %vm8254 = vmor %vm8252, %vm8253
        %v8255 = vsel %vm8254, %v8246, %v8251
        %v8258 = vperm.slane %v8245, 0
        %v8259 = vperm.slane %v8245, 1
        %v8260 = vperm.slane %v8245, 2
        %v8261 = vperm.slane %v8245, 3
        %v8262 = vperm.slane %v8245, 4
        %v8263 = vperm.slane %v8245, 5
        %v8264 = vperm.slane %v8245, 6
        %v8265 = vperm.slane %v8245, 7
        %v8266 = vperm.slane %v8255, 0
        %v8267 = vperm.slane %v8255, 1
        %v8268 = vperm.slane %v8255, 2
        %v8269 = vperm.slane %v8255, 3
        %v8270 = vperm.slane %v8255, 4
        %v8271 = vperm.slane %v8255, 5
        %v8272 = vperm.slane %v8255, 6
        %v8273 = vperm.slane %v8255, 7
        %v8290 = vmul.f32 %v8153, %v8258
        %v8291 = vmul.f32 %v8154, %v8259
        %v8292 = vmul.f32 %v8155, %v8260
        %v8293 = vmul.f32 %v8156, %v8261
        %v8294 = vmul.f32 %v8157, %v8262
        %v8295 = vmul.f32 %v8158, %v8263
        %v8296 = vmul.f32 %v8159, %v8264
        %v8297 = vmul.f32 %v8160, %v8265
        %v8298 = vmul.f32 %v8161, %v8266
        %v8299 = vmul.f32 %v8162, %v8267
        %v8300 = vmul.f32 %v8163, %v8268
        %v8301 = vmul.f32 %v8164, %v8269
        %v8302 = vmul.f32 %v8165, %v8270
        %v8303 = vmul.f32 %v8166, %v8271
        %v8304 = vmul.f32 %v8167, %v8272
        %v8305 = vmul.f32 %v8168, %v8273
        %v8307 = vperm.slane %v8084, 0
        %v8309 = vrot.slane %v8307, 1
        %v8310 = vrot.slane %v8307, 2
        %v8311 = vrot.slane %v8307, 3
        %v8312 = vrot.slane %v8307, 4
        %v8313 = vrot.slane %v8307, 5
        %v8314 = vrot.slane %v8307, 6
        %v8315 = vrot.slane %v8307, 7
        %v8323 = vmul.f32 %v8290, %v8307
        %v8324 = vmul.f32 %v8291, %v8309
        %v8325 = vmul.f32 %v8292, %v8310
        %v8326 = vmul.f32 %v8293, %v8311
        %v8327 = vmul.f32 %v8294, %v8312
        %v8328 = vmul.f32 %v8295, %v8313
        %v8329 = vmul.f32 %v8296, %v8314
        %v8330 = vmul.f32 %v8297, %v8315
        %v8331 = vmul.f32 %v8298, %v8307
        %v8332 = vmul.f32 %v8299, %v8309
        %v8333 = vmul.f32 %v8300, %v8310
        %v8334 = vmul.f32 %v8301, %v8311
        %v8335 = vmul.f32 %v8302, %v8312
        %v8336 = vmul.f32 %v8303, %v8313
        %v8337 = vmul.f32 %v8304, %v8314
        %v8338 = vmul.f32 %v8305, %v8315
        %v8340 = vperm.slane %v8085, 0
        %v8342 = vrot.slane %v8340, 1
        %v8343 = vrot.slane %v8340, 2
        %v8344 = vrot.slane %v8340, 3
        %v8345 = vrot.slane %v8340, 4
        %v8346 = vrot.slane %v8340, 5
        %v8347 = vrot.slane %v8340, 6
        %v8348 = vrot.slane %v8340, 7
        %v8356 = vadd.f32 %v8323, %v8340
        %v8357 = vadd.f32 %v8324, %v8342
        %v8358 = vadd.f32 %v8325, %v8343
        %v8359 = vadd.f32 %v8326, %v8344
        %v8360 = vadd.f32 %v8327, %v8345
        %v8361 = vadd.f32 %v8328, %v8346
        %v8362 = vadd.f32 %v8329, %v8347
        %v8363 = vadd.f32 %v8330, %v8348
        %v8364 = vadd.f32 %v8331, %v8340
        %v8365 = vadd.f32 %v8332, %v8342
        %v8366 = vadd.f32 %v8333, %v8343
        %v8367 = vadd.f32 %v8334, %v8344
        %v8368 = vadd.f32 %v8335, %v8345
        %v8369 = vadd.f32 %v8336, %v8346
        %v8370 = vadd.f32 %v8337, %v8347
        %v8371 = vadd.f32 %v8338, %v8348
        %v8372 = vld [vmem:[%s18] sm:$0x1]
        %v8373 = vld [vmem:[%s19] sm:$0x1]
        %8390 = vst [vmem:[#allocation1] ss:$9 sm:$0xff] %v8356
        %s8391 = scalar_lea.vmem [#allocation1], 1
        %8392 = vst [vmem:[%s8391] ss:$9 sm:$0xff] %v8357
        %s8393 = scalar_lea.vmem [#allocation1], 2
        %8394 = vst [vmem:[%s8393] ss:$9 sm:$0xff] %v8358
        %s8395 = scalar_lea.vmem [#allocation1], 3
        %8396 = vst [vmem:[%s8395] ss:$9 sm:$0xff] %v8359
        %s8397 = scalar_lea.vmem [#allocation1], 4
        %8398 = vst [vmem:[%s8397] ss:$9 sm:$0xff] %v8360
        %s8399 = scalar_lea.vmem [#allocation1], 5
        %8400 = vst [vmem:[%s8399] ss:$9 sm:$0xff] %v8361
        %s8401 = scalar_lea.vmem [#allocation1], 6
        %8402 = vst [vmem:[%s8401] ss:$9 sm:$0xff] %v8362
        %s8403 = scalar_lea.vmem [#allocation1], 7
        %8404 = vst [vmem:[%s8403] ss:$9 sm:$0xff] %v8363
        %v8405 = vld [vmem:[#allocation1] sm:$0xff]
        %8406 = vst [vmem:[#allocation1] ss:$9 sm:$0xff] %v8364
        %8407 = vst [vmem:[%s8391] ss:$9 sm:$0xff] %v8365
        %8408 = vst [vmem:[%s8393] ss:$9 sm:$0xff] %v8366
        %8409 = vst [vmem:[%s8395] ss:$9 sm:$0xff] %v8367
        %8410 = vst [vmem:[%s8397] ss:$9 sm:$0xff] %v8368
        %8411 = vst [vmem:[%s8399] ss:$9 sm:$0xff] %v8369
        %8412 = vst [vmem:[%s8401] ss:$9 sm:$0xff] %v8370
        %8413 = vst [vmem:[%s8403] ss:$9 sm:$0xff] %v8371
        %v8414 = vld [vmem:[#allocation1] sm:$0xff]
        %8417 = vadd.xlane.f32.xlu0 %v8405
        %v8418 = vpop.xlane.xlu0 %8417
        %8419 = vadd.xlane.f32.xlu0 %v8414
        %v8420 = vpop.xlane.xlu0 %8419
        %v8421 = vmul.f32 %v8418, %v1517
        %v8422 = vmul.f32 %v8420, %v1517
        %v8425 = vperm.slane %v8421, 0
        %v8426 = vperm.slane %v8421, 1
        %v8427 = vperm.slane %v8421, 2
        %v8428 = vperm.slane %v8421, 3
        %v8429 = vperm.slane %v8421, 4
        %v8430 = vperm.slane %v8421, 5
        %v8431 = vperm.slane %v8421, 6
        %v8432 = vperm.slane %v8421, 7
        %v8433 = vperm.slane %v8422, 0
        %v8434 = vperm.slane %v8422, 1
        %v8435 = vperm.slane %v8422, 2
        %v8436 = vperm.slane %v8422, 3
        %v8437 = vperm.slane %v8422, 4
        %v8438 = vperm.slane %v8422, 5
        %v8439 = vperm.slane %v8422, 6
        %v8440 = vperm.slane %v8422, 7
        %v8457 = vsub.f32 %v8356, %v8425
        %v8458 = vsub.f32 %v8357, %v8426
        %v8459 = vsub.f32 %v8358, %v8427
        %v8460 = vsub.f32 %v8359, %v8428
        %v8461 = vsub.f32 %v8360, %v8429
        %v8462 = vsub.f32 %v8361, %v8430
        %v8463 = vsub.f32 %v8362, %v8431
        %v8464 = vsub.f32 %v8363, %v8432
        %v8465 = vsub.f32 %v8364, %v8433
        %v8466 = vsub.f32 %v8365, %v8434
        %v8467 = vsub.f32 %v8366, %v8435
        %v8468 = vsub.f32 %v8367, %v8436
        %v8469 = vsub.f32 %v8368, %v8437
        %v8470 = vsub.f32 %v8369, %v8438
        %v8471 = vsub.f32 %v8370, %v8439
        %v8472 = vsub.f32 %v8371, %v8440
        %v8473 = vmul.f32 %v8457, %v8457
        %v8474 = vmul.f32 %v8458, %v8458
        %v8475 = vmul.f32 %v8459, %v8459
        %v8476 = vmul.f32 %v8460, %v8460
        %v8477 = vmul.f32 %v8461, %v8461
        %v8478 = vmul.f32 %v8462, %v8462
        %v8479 = vmul.f32 %v8463, %v8463
        %v8480 = vmul.f32 %v8464, %v8464
        %v8481 = vmul.f32 %v8465, %v8465
        %v8482 = vmul.f32 %v8466, %v8466
        %v8483 = vmul.f32 %v8467, %v8467
        %v8484 = vmul.f32 %v8468, %v8468
        %v8485 = vmul.f32 %v8469, %v8469
        %v8486 = vmul.f32 %v8470, %v8470
        %v8487 = vmul.f32 %v8471, %v8471
        %v8488 = vmul.f32 %v8472, %v8472
        %8505 = vst [vmem:[#allocation1] ss:$9 sm:$0xff] %v8473
        %s8506 = scalar_lea.vmem [#allocation1], 1
        %8507 = vst [vmem:[%s8506] ss:$9 sm:$0xff] %v8474
        %s8508 = scalar_lea.vmem [#allocation1], 2
        %8509 = vst [vmem:[%s8508] ss:$9 sm:$0xff] %v8475
        %s8510 = scalar_lea.vmem [#allocation1], 3
        %8511 = vst [vmem:[%s8510] ss:$9 sm:$0xff] %v8476
        %s8512 = scalar_lea.vmem [#allocation1], 4
        %8513 = vst [vmem:[%s8512] ss:$9 sm:$0xff] %v8477
        %s8514 = scalar_lea.vmem [#allocation1], 5
        %8515 = vst [vmem:[%s8514] ss:$9 sm:$0xff] %v8478
        %s8516 = scalar_lea.vmem [#allocation1], 6
        %8517 = vst [vmem:[%s8516] ss:$9 sm:$0xff] %v8479
        %s8518 = scalar_lea.vmem [#allocation1], 7
        %8519 = vst [vmem:[%s8518] ss:$9 sm:$0xff] %v8480
        %v8520 = vld [vmem:[#allocation1] sm:$0xff]
        %8521 = vst [vmem:[#allocation1] ss:$9 sm:$0xff] %v8481
        %8522 = vst [vmem:[%s8506] ss:$9 sm:$0xff] %v8482
        %8523 = vst [vmem:[%s8508] ss:$9 sm:$0xff] %v8483
        %8524 = vst [vmem:[%s8510] ss:$9 sm:$0xff] %v8484
        %8525 = vst [vmem:[%s8512] ss:$9 sm:$0xff] %v8485
        %8526 = vst [vmem:[%s8514] ss:$9 sm:$0xff] %v8486
        %8527 = vst [vmem:[%s8516] ss:$9 sm:$0xff] %v8487
        %8528 = vst [vmem:[%s8518] ss:$9 sm:$0xff] %v8488
        %v8529 = vld [vmem:[#allocation1] sm:$0xff]
        %8532 = vadd.xlane.f32.xlu0 %v8520
        %v8533 = vpop.xlane.xlu0 %8532
        %8534 = vadd.xlane.f32.xlu0 %v8529
        %v8535 = vpop.xlane.xlu0 %8534
        %v8536 = vmul.f32 %v8533, %v1517
        %v8537 = vmul.f32 %v8535, %v1517
        %v8538 = vadd.f32 %v8536, 1e-05
        %v8539 = vadd.f32 %v8537, 1e-05
        %v8540 = vrsqrt.pop %v8538
        %v8541 = vmul.f32 %v8540, %v8538
        %v8542 = vmul.f32 %v8541, %v8540
        %v8543 = vmul.f32 0.5, %v8542
        %v8544 = vsub.f32 1.5, %v8543
        %v8545 = vmul.f32 %v8540, %v8544
        %vm8546 = vweird.f32 %v8538
        %vm8547 = vweird.f32 %v8540
        %vm8548 = vmor %vm8546, %vm8547
        %v8549 = vsel %vm8548, %v8540, %v8545
        %v8550 = vrsqrt.pop %v8539
        %v8551 = vmul.f32 %v8550, %v8539
        %v8552 = vmul.f32 %v8551, %v8550
        %v8553 = vmul.f32 0.5, %v8552
        %v8554 = vsub.f32 1.5, %v8553
        %v8555 = vmul.f32 %v8550, %v8554
        %vm8556 = vweird.f32 %v8539
        %vm8557 = vweird.f32 %v8550
        %vm8558 = vmor %vm8556, %vm8557
        %v8559 = vsel %vm8558, %v8550, %v8555
        %v8562 = vperm.slane %v8549, 0
        %v8563 = vperm.slane %v8549, 1
        %v8564 = vperm.slane %v8549, 2
        %v8565 = vperm.slane %v8549, 3
        %v8566 = vperm.slane %v8549, 4
        %v8567 = vperm.slane %v8549, 5
        %v8568 = vperm.slane %v8549, 6
        %v8569 = vperm.slane %v8549, 7
        %v8570 = vperm.slane %v8559, 0
        %v8571 = vperm.slane %v8559, 1
        %v8572 = vperm.slane %v8559, 2
        %v8573 = vperm.slane %v8559, 3
        %v8574 = vperm.slane %v8559, 4
        %v8575 = vperm.slane %v8559, 5
        %v8576 = vperm.slane %v8559, 6
        %v8577 = vperm.slane %v8559, 7
        %v8594 = vmul.f32 %v8457, %v8562
        %v8595 = vmul.f32 %v8458, %v8563
        %v8596 = vmul.f32 %v8459, %v8564
        %v8597 = vmul.f32 %v8460, %v8565
        %v8598 = vmul.f32 %v8461, %v8566
        %v8599 = vmul.f32 %v8462, %v8567
        %v8600 = vmul.f32 %v8463, %v8568
        %v8601 = vmul.f32 %v8464, %v8569
        %v8602 = vmul.f32 %v8465, %v8570
        %v8603 = vmul.f32 %v8466, %v8571
        %v8604 = vmul.f32 %v8467, %v8572
        %v8605 = vmul.f32 %v8468, %v8573
        %v8606 = vmul.f32 %v8469, %v8574
        %v8607 = vmul.f32 %v8470, %v8575
        %v8608 = vmul.f32 %v8471, %v8576
        %v8609 = vmul.f32 %v8472, %v8577
        %v8611 = vperm.slane %v8372, 0
        %v8613 = vrot.slane %v8611, 1
        %v8614 = vrot.slane %v8611, 2
        %v8615 = vrot.slane %v8611, 3
        %v8616 = vrot.slane %v8611, 4
        %v8617 = vrot.slane %v8611, 5
        %v8618 = vrot.slane %v8611, 6
        %v8619 = vrot.slane %v8611, 7
        %v8627 = vmul.f32 %v8594, %v8611
        %v8628 = vmul.f32 %v8595, %v8613
        %v8629 = vmul.f32 %v8596, %v8614
        %v8630 = vmul.f32 %v8597, %v8615
        %v8631 = vmul.f32 %v8598, %v8616
        %v8632 = vmul.f32 %v8599, %v8617
        %v8633 = vmul.f32 %v8600, %v8618
        %v8634 = vmul.f32 %v8601, %v8619
        %v8635 = vmul.f32 %v8602, %v8611
        %v8636 = vmul.f32 %v8603, %v8613
        %v8637 = vmul.f32 %v8604, %v8614
        %v8638 = vmul.f32 %v8605, %v8615
        %v8639 = vmul.f32 %v8606, %v8616
        %v8640 = vmul.f32 %v8607, %v8617
        %v8641 = vmul.f32 %v8608, %v8618
        %v8642 = vmul.f32 %v8609, %v8619
        %v8644 = vperm.slane %v8373, 0
        %v8646 = vrot.slane %v8644, 1
        %v8647 = vrot.slane %v8644, 2
        %v8648 = vrot.slane %v8644, 3
        %v8649 = vrot.slane %v8644, 4
        %v8650 = vrot.slane %v8644, 5
        %v8651 = vrot.slane %v8644, 6
        %v8652 = vrot.slane %v8644, 7
        %v8660 = vadd.f32 %v8627, %v8644
        %v8661 = vadd.f32 %v8628, %v8646
        %v8662 = vadd.f32 %v8629, %v8647
        %v8663 = vadd.f32 %v8630, %v8648
        %v8664 = vadd.f32 %v8631, %v8649
        %v8665 = vadd.f32 %v8632, %v8650
        %v8666 = vadd.f32 %v8633, %v8651
        %v8667 = vadd.f32 %v8634, %v8652
        %v8668 = vadd.f32 %v8635, %v8644
        %v8669 = vadd.f32 %v8636, %v8646
        %v8670 = vadd.f32 %v8637, %v8647
        %v8671 = vadd.f32 %v8638, %v8648
        %v8672 = vadd.f32 %v8639, %v8649
        %v8673 = vadd.f32 %v8640, %v8650
        %v8674 = vadd.f32 %v8641, %v8651
        %v8675 = vadd.f32 %v8642, %v8652
        %v8676 = vpack.c.bf16 %v8660, %v8660
        %v8677 = vpack.c.bf16 %v8661, %v8661
        %v8678 = vpack.c.bf16 %v8662, %v8662
        %v8679 = vpack.c.bf16 %v8663, %v8663
        %v8680 = vpack.c.bf16 %v8664, %v8664
        %v8681 = vpack.c.bf16 %v8665, %v8665
        %v8682 = vpack.c.bf16 %v8666, %v8666
        %v8683 = vpack.c.bf16 %v8667, %v8667
        %v8684 = vpack.c.bf16 %v8668, %v8668
        %v8685 = vpack.c.bf16 %v8669, %v8669
        %v8686 = vpack.c.bf16 %v8670, %v8670
        %v8687 = vpack.c.bf16 %v8671, %v8671
        %v8688 = vpack.c.bf16 %v8672, %v8672
        %v8689 = vpack.c.bf16 %v8673, %v8673
        %v8690 = vpack.c.bf16 %v8674, %v8674
        %v8691 = vpack.c.bf16 %v8675, %v8675
        %v8692 = vld [vmem:[%s20] sm:$0xff]
        %v8693 = vld [vmem:[%s20 + $0x8] sm:$0xff]
        %v8694 = vld [vmem:[%s20 + $0x10] sm:$0xff]
        %v8695 = vld [vmem:[%s20 + $0x18] sm:$0xff]
        %v8696 = vld [vmem:[%s20 + $0x20] sm:$0xff]
        %v8697 = vld [vmem:[%s20 + $0x28] sm:$0xff]
        %v8698 = vld [vmem:[%s20 + $0x30] sm:$0xff]
        %v8699 = vld [vmem:[%s20 + $0x38] sm:$0xff]
        %v8700 = vld [vmem:[%s20 + $0x40] sm:$0xff]
        %v8701 = vld [vmem:[%s20 + $0x48] sm:$0xff]
        %v8702 = vld [vmem:[%s20 + $0x50] sm:$0xff]
        %v8703 = vld [vmem:[%s20 + $0x58] sm:$0xff]
        %v8704 = vld [vmem:[%s20 + $0x60] sm:$0xff]
        %v8705 = vld [vmem:[%s20 + $0x68] sm:$0xff]
        %v8706 = vld [vmem:[%s20 + $0x70] sm:$0xff]
        %v8707 = vld [vmem:[%s20 + $0x78] sm:$0xff]
        %v8708 = vld [vmem:[%s21] sm:$0x3]
        %v8710 = vperm.slane %v8708, 0
        %v8711 = vperm.slane %v8708, 1
        %v8730 = vunpack.c.l.b16 %v8676
        %v8731 = vunpack.c.l.b16 %v8677
        %v8732 = vunpack.c.l.b16 %v8678
        %v8733 = vunpack.c.l.b16 %v8679
        %v8734 = vunpack.c.l.b16 %v8680
        %v8735 = vunpack.c.l.b16 %v8681
        %v8736 = vunpack.c.l.b16 %v8682
        %v8737 = vunpack.c.l.b16 %v8683
        %v8738 = vunpack.c.l.b16 %v8684
        %v8739 = vunpack.c.l.b16 %v8685
        %v8740 = vunpack.c.l.b16 %v8686
        %v8741 = vunpack.c.l.b16 %v8687
        %v8742 = vunpack.c.l.b16 %v8688
        %v8743 = vunpack.c.l.b16 %v8689
        %v8744 = vunpack.c.l.b16 %v8690
        %v8745 = vunpack.c.l.b16 %v8691
        %v8746 = vrot.slane %v8731, 7
        %vm8747 = vcmask 1041409
        %v8748 = vsel %vm8747, %v8746, %v8730
        %v8749 = vrot.slane %v8732, 6
        %vm8750 = vcmask 1042434
        %v8751 = vsel %vm8750, %v8749, %v8748
        %v8752 = vrot.slane %v8733, 5
        %vm8753 = vcmask 1043459
        %v8754 = vsel %vm8753, %v8752, %v8751
        %v8755 = vrot.slane %v8734, 4
        %vm8756 = vcmask 1044484
        %v8757 = vsel %vm8756, %v8755, %v8754
        %v8758 = vrot.slane %v8735, 3
        %vm8759 = vcmask 1045509
        %v8760 = vsel %vm8759, %v8758, %v8757
        %v8761 = vrot.slane %v8736, 2
        %vm8762 = vcmask 1046534
        %v8763 = vsel %vm8762, %v8761, %v8760
        %v8764 = vrot.slane %v8737, 1
        %vm8765 = vcmask 1047559
        %v8766 = vsel %vm8765, %v8764, %v8763
        %v8767 = vrot.slane %v8739, 7
        %v8768 = vsel %vm8747, %v8767, %v8738
        %v8769 = vrot.slane %v8740, 6
        %v8770 = vsel %vm8750, %v8769, %v8768
        %v8771 = vrot.slane %v8741, 5
        %v8772 = vsel %vm8753, %v8771, %v8770
        %v8773 = vrot.slane %v8742, 4
        %v8774 = vsel %vm8756, %v8773, %v8772
        %v8775 = vrot.slane %v8743, 3
        %v8776 = vsel %vm8759, %v8775, %v8774
        %v8777 = vrot.slane %v8744, 2
        %v8778 = vsel %vm8762, %v8777, %v8776
        %v8779 = vrot.slane %v8745, 1
        %v8780 = vsel %vm8765, %v8779, %v8778
        %v8781 = vpack.c.b16 %v8780, %v8766
        %v8799 = vunpack.c.l.b16 %v8692
        %v8800 = vunpack.c.h.b16 %v8692
        %v8801 = vunpack.c.l.b16 %v8693
        %v8802 = vunpack.c.h.b16 %v8693
        %v8803 = vunpack.c.l.b16 %v8694
        %v8804 = vunpack.c.h.b16 %v8694
        %v8805 = vunpack.c.l.b16 %v8695
        %v8806 = vunpack.c.h.b16 %v8695
        %v8807 = vunpack.c.l.b16 %v8696
        %v8808 = vunpack.c.h.b16 %v8696
        %v8809 = vunpack.c.l.b16 %v8697
        %v8810 = vunpack.c.h.b16 %v8697
        %v8811 = vunpack.c.l.b16 %v8698
        %v8812 = vunpack.c.h.b16 %v8698
        %v8813 = vunpack.c.l.b16 %v8699
        %v8814 = vunpack.c.h.b16 %v8699
        %v8815 = vunpack.c.l.b16 %v8700
        %v8816 = vunpack.c.h.b16 %v8700
        %v8817 = vunpack.c.l.b16 %v8701
        %v8818 = vunpack.c.h.b16 %v8701
        %v8819 = vunpack.c.l.b16 %v8702
        %v8820 = vunpack.c.h.b16 %v8702
        %v8821 = vunpack.c.l.b16 %v8703
        %v8822 = vunpack.c.h.b16 %v8703
        %v8823 = vunpack.c.l.b16 %v8704
        %v8824 = vunpack.c.h.b16 %v8704
        %v8825 = vunpack.c.l.b16 %v8705
        %v8826 = vunpack.c.h.b16 %v8705
        %v8827 = vunpack.c.l.b16 %v8706
        %v8828 = vunpack.c.h.b16 %v8706
        %v8829 = vunpack.c.l.b16 %v8707
        %v8830 = vunpack.c.h.b16 %v8707
        %v8831 = vpack.c.b16 %v8801, %v8799
        %v8832 = vpack.c.b16 %v8802, %v8800
        %v8833 = vpack.c.b16 %v8805, %v8803
        %v8834 = vpack.c.b16 %v8806, %v8804
        %v8835 = vpack.c.b16 %v8809, %v8807
        %v8836 = vpack.c.b16 %v8810, %v8808
        %v8837 = vpack.c.b16 %v8813, %v8811
        %v8838 = vpack.c.b16 %v8814, %v8812
        %v8839 = vpack.c.b16 %v8817, %v8815
        %v8840 = vpack.c.b16 %v8818, %v8816
        %v8841 = vpack.c.b16 %v8821, %v8819
        %v8842 = vpack.c.b16 %v8822, %v8820
        %v8843 = vpack.c.b16 %v8825, %v8823
        %v8844 = vpack.c.b16 %v8826, %v8824
        %v8845 = vpack.c.b16 %v8829, %v8827
        %v8846 = vpack.c.b16 %v8830, %v8828
        %8863 = vmatpush.bf16.msra.mxu0 %v8845
        %8864 = vmatpush.bf16.msra.mxu0 %v8843
        %8865 = vmatpush.bf16.msra.mxu0 %v8841
        %8866 = vmatpush.bf16.msra.mxu0 %v8839
        %8867 = vmatpush.bf16.msra.mxu0 %v8837
        %8868 = vmatpush.bf16.msra.mxu0 %v8835
        %8869 = vmatpush.bf16.msra.mxu0 %v8833
        %8870 = vmatpush.bf16.msra.mxu0 %v8831
        %8871 = vmatmul.bf16.gmra.mxu0 %v8781
        %v8872 = vpop.f32.mrf.mxu0
        %v8873 = vadd.f32 %v8710, %v8872
        %v8874 = vpop.f32.mrf.mxu0
        %v8875 = vadd.f32 %v8710, %v8874
        %8876 = vdwg.mxu0
        %8877 = vmatpush.bf16.msra.mxu0 %v8846
        %8878 = vmatpush.bf16.msra.mxu0 %v8844
        %8879 = vmatpush.bf16.msra.mxu0 %v8842
        %8880 = vmatpush.bf16.msra.mxu0 %v8840
        %8881 = vmatpush.bf16.msra.mxu0 %v8838
        %8882 = vmatpush.bf16.msra.mxu0 %v8836
        %8883 = vmatpush.bf16.msra.mxu0 %v8834
        %8884 = vmatpush.bf16.msra.mxu0 %v8832
        %8885 = vmatmul.bf16.gmra.mxu0 %v8781
        %v8886 = vpop.f32.mrf.mxu0
        %v8887 = vadd.f32 %v8711, %v8886
        %v8888 = vpop.f32.mrf.mxu0
        %v8889 = vadd.f32 %v8711, %v8888
        %8890 = vdwg.mxu0
        %v8891 = vmul.f32 %v8873, 0.5
        %v8892 = vmul.f32 %v8887, 0.5
        %v8893 = vmul.f32 %v8875, 0.5
        %v8894 = vmul.f32 %v8889, 0.5
        %v8895 = vmul.f32 %v8873, 0.70710677
        %v8896 = vmul.f32 %v8887, 0.70710677
        %v8897 = vmul.f32 %v8875, 0.70710677
        %v8898 = vmul.f32 %v8889, 0.70710677
        %v8899 = vand.u32 2147483647, %v8895
        %v8900 = vand.u32 2147483647, %v8896
        %v8901 = vand.u32 2147483647, %v8897
        %v8902 = vand.u32 2147483647, %v8898
        %v8903 = vmul.f32 %v8899, 0.3275911
        %v8904 = vmul.f32 %v8900, 0.3275911
        %v8905 = vmul.f32 %v8901, 0.3275911
        %v8906 = vmul.f32 %v8902, 0.3275911
        %v8907 = vadd.f32 %v8903, 1.0
        %v8908 = vadd.f32 %v8904, 1.0
        %v8909 = vadd.f32 %v8905, 1.0
        %v8910 = vadd.f32 %v8906, 1.0
        %v8911 = vrcp.pop %v8907
        %v8912 = vrcp.pop %v8908
        %v8913 = vrcp.pop %v8909
        %v8914 = vrcp.pop %v8910
        %v8915 = vmul.f32 %v8911, 1.0614054
        %v8916 = vmul.f32 %v8912, 1.0614054
        %v8917 = vmul.f32 %v8913, 1.0614054
        %v8918 = vmul.f32 %v8914, 1.0614054
        %v8919 = vadd.f32 %v8915, -1.4531521
        %v8920 = vadd.f32 %v8916, -1.4531521
        %v8921 = vadd.f32 %v8917, -1.4531521
        %v8922 = vadd.f32 %v8918, -1.4531521
        %v8923 = vmul.f32 %v8919, %v8911
        %v8924 = vmul.f32 %v8920, %v8912
        %v8925 = vmul.f32 %v8921, %v8913
        %v8926 = vmul.f32 %v8922, %v8914
        %v8927 = vadd.f32 %v8923, 1.4214138
        %v8928 = vadd.f32 %v8924, 1.4214138
        %v8929 = vadd.f32 %v8925, 1.4214138
        %v8930 = vadd.f32 %v8926, 1.4214138
        %v8931 = vmul.f32 %v8927, %v8911
        %v8932 = vmul.f32 %v8928, %v8912
        %v8933 = vmul.f32 %v8929, %v8913
        %v8934 = vmul.f32 %v8930, %v8914
        %v8935 = vadd.f32 %v8931, -0.28449672
        %v8936 = vadd.f32 %v8932, -0.28449672
        %v8937 = vadd.f32 %v8933, -0.28449672
        %v8938 = vadd.f32 %v8934, -0.28449672
        %v8939 = vmul.f32 %v8935, %v8911
        %v8940 = vmul.f32 %v8936, %v8912
        %v8941 = vmul.f32 %v8937, %v8913
        %v8942 = vmul.f32 %v8938, %v8914
        %v8943 = vadd.f32 %v8939, 0.2548296
        %v8944 = vadd.f32 %v8940, 0.2548296
        %v8945 = vadd.f32 %v8941, 0.2548296
        %v8946 = vadd.f32 %v8942, 0.2548296
        %v8947 = vmul.f32 %v8943, %v8911
        %v8948 = vmul.f32 %v8944, %v8912
        %v8949 = vmul.f32 %v8945, %v8913
        %v8950 = vmul.f32 %v8946, %v8914
        %v8951 = vsub.f32 0.0, %v8899
        %v8952 = vsub.f32 0.0, %v8900
        %v8953 = vsub.f32 0.0, %v8901
        %v8954 = vsub.f32 0.0, %v8902
        %v8955 = vmul.f32 %v8951, %v8899
        %v8956 = vmul.f32 %v8952, %v8900
        %v8957 = vmul.f32 %v8953, %v8901
        %v8958 = vmul.f32 %v8954, %v8902
        %v8959 = vmul.f32 %v8955, 1.442695
        %v8960 = vpow.pop %v8959
        %v8961 = vmul.f32 %v8956, 1.442695
        %v8962 = vpow.pop %v8961
        %v8963 = vmul.f32 %v8957, 1.442695
        %v8964 = vpow.pop %v8963
        %v8965 = vmul.f32 %v8958, 1.442695
        %v8966 = vpow.pop %v8965
        %v8967 = vmul.f32 %v8947, %v8960
        %v8968 = vmul.f32 %v8948, %v8962
        %v8969 = vmul.f32 %v8949, %v8964
        %v8970 = vmul.f32 %v8950, %v8966
        %v8971 = vsub.f32 1.0, %v8967
        %v8972 = vsub.f32 1.0, %v8968
        %v8973 = vsub.f32 1.0, %v8969
        %v8974 = vsub.f32 1.0, %v8970
        %vm8975 = vcmp.ge.f32.partialorder %v8895, 0.0
        %vm8976 = vcmp.ge.f32.partialorder %v8896, 0.0
        %vm8977 = vcmp.ge.f32.partialorder %v8897, 0.0
        %vm8978 = vcmp.ge.f32.partialorder %v8898, 0.0
        %v8979 = vsub.f32 0.0, %v8971
        %v8980 = vsub.f32 0.0, %v8972
        %v8981 = vsub.f32 0.0, %v8973
        %v8982 = vsub.f32 0.0, %v8974
        %v8983 = vsel %vm8975, %v8971, %v8979
        %v8984 = vsel %vm8976, %v8972, %v8980
        %v8985 = vsel %vm8977, %v8973, %v8981
        %v8986 = vsel %vm8978, %v8974, %v8982
        %v8987 = vadd.f32 %v8983, 1.0
        %v8988 = vadd.f32 %v8984, 1.0
        %v8989 = vadd.f32 %v8985, 1.0
        %v8990 = vadd.f32 %v8986, 1.0
        %v8991 = vmul.f32 %v8891, %v8987
        %v8992 = vmul.f32 %v8892, %v8988
        %v8993 = vmul.f32 %v8893, %v8989
        %v8994 = vmul.f32 %v8894, %v8990
        %v8995 = vpack.c.bf16 %v8993, %v8991
        %v8996 = vpack.c.bf16 %v8994, %v8992
        %v8997 = vld [vmem:[%s22] sm:$0xf]
        %v8998 = vld [vmem:[%s22 + $0x4] sm:$0xf]
        %v8999 = vld [vmem:[%s22 + $0x8] sm:$0xf]
        %v9000 = vld [vmem:[%s22 + $0xc] sm:$0xf]
        %v9001 = vld [vmem:[%s22 + $0x10] sm:$0xf]
        %v9002 = vld [vmem:[%s22 + $0x14] sm:$0xf]
        %v9003 = vld [vmem:[%s22 + $0x18] sm:$0xf]
        %v9004 = vld [vmem:[%s22 + $0x1c] sm:$0xf]
        %v9005 = vld [vmem:[%s22 + $0x20] sm:$0xf]
        %v9006 = vld [vmem:[%s22 + $0x24] sm:$0xf]
        %v9007 = vld [vmem:[%s22 + $0x28] sm:$0xf]
        %v9008 = vld [vmem:[%s22 + $0x2c] sm:$0xf]
        %v9009 = vld [vmem:[%s22 + $0x30] sm:$0xf]
        %v9010 = vld [vmem:[%s22 + $0x34] sm:$0xf]
        %v9011 = vld [vmem:[%s22 + $0x38] sm:$0xf]
        %v9012 = vld [vmem:[%s22 + $0x3c] sm:$0xf]
        %v9013 = vld [vmem:[%s22 + $0x40] sm:$0xf]
        %v9014 = vld [vmem:[%s22 + $0x44] sm:$0xf]
        %v9015 = vld [vmem:[%s22 + $0x48] sm:$0xf]
        %v9016 = vld [vmem:[%s22 + $0x4c] sm:$0xf]
        %v9017 = vld [vmem:[%s22 + $0x50] sm:$0xf]
        %v9018 = vld [vmem:[%s22 + $0x54] sm:$0xf]
        %v9019 = vld [vmem:[%s22 + $0x58] sm:$0xf]
        %v9020 = vld [vmem:[%s22 + $0x5c] sm:$0xf]
        %v9021 = vld [vmem:[%s22 + $0x60] sm:$0xf]
        %v9022 = vld [vmem:[%s22 + $0x64] sm:$0xf]
        %v9023 = vld [vmem:[%s22 + $0x68] sm:$0xf]
        %v9024 = vld [vmem:[%s22 + $0x6c] sm:$0xf]
        %v9025 = vld [vmem:[%s22 + $0x70] sm:$0xf]
        %v9026 = vld [vmem:[%s22 + $0x74] sm:$0xf]
        %v9027 = vld [vmem:[%s22 + $0x78] sm:$0xf]
        %v9028 = vld [vmem:[%s22 + $0x7c] sm:$0xf]
        %v9029 = vld [vmem:[%s23] sm:$0x1]
        %v9031 = vperm.slane %v9029, 0
        %v9065 = vunpack.c.l.b16 %v8997
        %v9066 = vunpack.c.l.b16 %v8998
        %v9067 = vunpack.c.l.b16 %v8999
        %v9068 = vunpack.c.l.b16 %v9000
        %v9069 = vunpack.c.l.b16 %v9001
        %v9070 = vunpack.c.l.b16 %v9002
        %v9071 = vunpack.c.l.b16 %v9003
        %v9072 = vunpack.c.l.b16 %v9004
        %v9073 = vunpack.c.l.b16 %v9005
        %v9074 = vunpack.c.l.b16 %v9006
        %v9075 = vunpack.c.l.b16 %v9007
        %v9076 = vunpack.c.l.b16 %v9008
        %v9077 = vunpack.c.l.b16 %v9009
        %v9078 = vunpack.c.l.b16 %v9010
        %v9079 = vunpack.c.l.b16 %v9011
        %v9080 = vunpack.c.l.b16 %v9012
        %v9081 = vunpack.c.l.b16 %v9013
        %v9082 = vunpack.c.l.b16 %v9014
        %v9083 = vunpack.c.l.b16 %v9015
        %v9084 = vunpack.c.l.b16 %v9016
        %v9085 = vunpack.c.l.b16 %v9017
        %v9086 = vunpack.c.l.b16 %v9018
        %v9087 = vunpack.c.l.b16 %v9019
        %v9088 = vunpack.c.l.b16 %v9020
        %v9089 = vunpack.c.l.b16 %v9021
        %v9090 = vunpack.c.l.b16 %v9022
        %v9091 = vunpack.c.l.b16 %v9023
        %v9092 = vunpack.c.l.b16 %v9024
        %v9093 = vunpack.c.l.b16 %v9025
        %v9094 = vunpack.c.l.b16 %v9026
        %v9095 = vunpack.c.l.b16 %v9027
        %v9096 = vunpack.c.l.b16 %v9028
        %v9097 = vpack.c.b16 %v9066, %v9065
        %v9098 = vpack.c.b16 %v9068, %v9067
        %v9099 = vpack.c.b16 %v9070, %v9069
        %v9100 = vpack.c.b16 %v9072, %v9071
        %v9101 = vpack.c.b16 %v9074, %v9073
        %v9102 = vpack.c.b16 %v9076, %v9075
        %v9103 = vpack.c.b16 %v9078, %v9077
        %v9104 = vpack.c.b16 %v9080, %v9079
        %v9105 = vpack.c.b16 %v9082, %v9081
        %v9106 = vpack.c.b16 %v9084, %v9083
        %v9107 = vpack.c.b16 %v9086, %v9085
        %v9108 = vpack.c.b16 %v9088, %v9087
        %v9109 = vpack.c.b16 %v9090, %v9089
        %v9110 = vpack.c.b16 %v9092, %v9091
        %v9111 = vpack.c.b16 %v9094, %v9093
        %v9112 = vpack.c.b16 %v9096, %v9095
        %9129 = vmatpush.bf16.msra.mxu0 %v9104
        %9130 = vmatpush.bf16.msra.mxu0 %v9103
        %9131 = vmatpush.bf16.msra.mxu0 %v9102
        %9132 = vmatpush.bf16.msra.mxu0 %v9101
        %9133 = vmatpush.bf16.msra.mxu0 %v9100
        %9134 = vmatpush.bf16.msra.mxu0 %v9099
        %9135 = vmatpush.bf16.msra.mxu0 %v9098
        %9136 = vmatpush.bf16.msra.mxu0 %v9097
        %9137 = vmatmul.bf16.gmra.mxu0 %v8995
        %v9138 = vpop.f32.mrf.mxu0
        %v9139 = vadd.f32 %v9031, %v9138
        %v9140 = vpop.f32.mrf.mxu0
        %v9141 = vadd.f32 %v9031, %v9140
        %9142 = vdwg.mxu0
        %9143 = vmatpush.bf16.msra.mxu0 %v9112
        %9144 = vmatpush.bf16.msra.mxu0 %v9111
        %9145 = vmatpush.bf16.msra.mxu0 %v9110
        %9146 = vmatpush.bf16.msra.mxu0 %v9109
        %9147 = vmatpush.bf16.msra.mxu0 %v9108
        %9148 = vmatpush.bf16.msra.mxu0 %v9107
        %9149 = vmatpush.bf16.msra.mxu0 %v9106
        %9150 = vmatpush.bf16.msra.mxu0 %v9105
        %9151 = vmatmul.bf16.gmra.mxu0 %v8996
        %v9152 = vpop.f32.mrf.mxu0
        %v9153 = vadd.f32 %v9139, %v9152
        %v9154 = vpop.f32.mrf.mxu0
        %v9155 = vadd.f32 %v9141, %v9154
        %9156 = vdwg.mxu0
        %v9157 = vmul.f32 %v9153, 0.5
        %v9158 = vmul.f32 %v9155, 0.5
        %v9159 = vmul.f32 %v9153, 0.70710677
        %v9160 = vmul.f32 %v9155, 0.70710677
        %v9161 = vand.u32 2147483647, %v9159
        %v9162 = vand.u32 2147483647, %v9160
        %v9163 = vmul.f32 %v9161, 0.3275911
        %v9164 = vmul.f32 %v9162, 0.3275911
        %v9165 = vadd.f32 %v9163, 1.0
        %v9166 = vadd.f32 %v9164, 1.0
        %v9167 = vrcp.pop %v9165
        %v9168 = vrcp.pop %v9166
        %v9169 = vmul.f32 %v9167, 1.0614054
        %v9170 = vmul.f32 %v9168, 1.0614054
        %v9171 = vadd.f32 %v9169, -1.4531521
        %v9172 = vadd.f32 %v9170, -1.4531521
        %v9173 = vmul.f32 %v9171, %v9167
        %v9174 = vmul.f32 %v9172, %v9168
        %v9175 = vadd.f32 %v9173, 1.4214138
        %v9176 = vadd.f32 %v9174, 1.4214138
        %v9177 = vmul.f32 %v9175, %v9167
        %v9178 = vmul.f32 %v9176, %v9168
        %v9179 = vadd.f32 %v9177, -0.28449672
        %v9180 = vadd.f32 %v9178, -0.28449672
        %v9181 = vmul.f32 %v9179, %v9167
        %v9182 = vmul.f32 %v9180, %v9168
        %v9183 = vadd.f32 %v9181, 0.2548296
        %v9184 = vadd.f32 %v9182, 0.2548296
        %v9185 = vmul.f32 %v9183, %v9167
        %v9186 = vmul.f32 %v9184, %v9168
        %v9187 = vsub.f32 0.0, %v9161
        %v9188 = vsub.f32 0.0, %v9162
        %v9189 = vmul.f32 %v9187, %v9161
        %v9190 = vmul.f32 %v9188, %v9162
        %v9191 = vmul.f32 %v9189, 1.442695
        %v9192 = vpow.pop %v9191
        %v9193 = vmul.f32 %v9190, 1.442695
        %v9194 = vpow.pop %v9193
        %v9195 = vmul.f32 %v9185, %v9192
        %v9196 = vmul.f32 %v9186, %v9194
        %v9197 = vsub.f32 1.0, %v9195
        %v9198 = vsub.f32 1.0, %v9196
        %vm9199 = vcmp.ge.f32.partialorder %v9159, 0.0
        %vm9200 = vcmp.ge.f32.partialorder %v9160, 0.0
        %v9201 = vsub.f32 0.0, %v9197
        %v9202 = vsub.f32 0.0, %v9198
        %v9203 = vsel %vm9199, %v9197, %v9201
        %v9204 = vsel %vm9200, %v9198, %v9202
        %v9205 = vadd.f32 %v9203, 1.0
        %v9206 = vadd.f32 %v9204, 1.0
        %v9207 = vmul.f32 %v9157, %v9205
        %v9208 = vmul.f32 %v9158, %v9206
        %v9209 = vpack.c.bf16 %v9208, %v9207
        %v9210 = vld [vmem:[%s24] sm:$0xff]
        %v9211 = vld [vmem:[%s24 + $0x8] sm:$0xff]
        %v9212 = vld [vmem:[%s24 + $0x10] sm:$0xff]
        %v9213 = vld [vmem:[%s24 + $0x18] sm:$0xff]
        %v9214 = vld [vmem:[%s24 + $0x20] sm:$0xff]
        %v9215 = vld [vmem:[%s24 + $0x28] sm:$0xff]
        %v9216 = vld [vmem:[%s24 + $0x30] sm:$0xff]
        %v9217 = vld [vmem:[%s24 + $0x38] sm:$0xff]
        %v9218 = vld [vmem:[%s24 + $0x40] sm:$0xff]
        %v9219 = vld [vmem:[%s24 + $0x48] sm:$0xff]
        %v9220 = vld [vmem:[%s24 + $0x50] sm:$0xff]
        %v9221 = vld [vmem:[%s24 + $0x58] sm:$0xff]
        %v9222 = vld [vmem:[%s24 + $0x60] sm:$0xff]
        %v9223 = vld [vmem:[%s24 + $0x68] sm:$0xff]
        %v9224 = vld [vmem:[%s24 + $0x70] sm:$0xff]
        %v9225 = vld [vmem:[%s24 + $0x78] sm:$0xff]
        %v9226 = vld [vmem:[%s25] sm:$0x3]
        %v9228 = vperm.slane %v9226, 0
        %v9229 = vperm.slane %v9226, 1
        %v9248 = vunpack.c.l.b16 %v9210
        %v9249 = vunpack.c.h.b16 %v9210
        %v9250 = vunpack.c.l.b16 %v9211
        %v9251 = vunpack.c.h.b16 %v9211
        %v9252 = vunpack.c.l.b16 %v9212
        %v9253 = vunpack.c.h.b16 %v9212
        %v9254 = vunpack.c.l.b16 %v9213
        %v9255 = vunpack.c.h.b16 %v9213
        %v9256 = vunpack.c.l.b16 %v9214
        %v9257 = vunpack.c.h.b16 %v9214
        %v9258 = vunpack.c.l.b16 %v9215
        %v9259 = vunpack.c.h.b16 %v9215
        %v9260 = vunpack.c.l.b16 %v9216
        %v9261 = vunpack.c.h.b16 %v9216
        %v9262 = vunpack.c.l.b16 %v9217
        %v9263 = vunpack.c.h.b16 %v9217
        %v9264 = vunpack.c.l.b16 %v9218
        %v9265 = vunpack.c.h.b16 %v9218
        %v9266 = vunpack.c.l.b16 %v9219
        %v9267 = vunpack.c.h.b16 %v9219
        %v9268 = vunpack.c.l.b16 %v9220
        %v9269 = vunpack.c.h.b16 %v9220
        %v9270 = vunpack.c.l.b16 %v9221
        %v9271 = vunpack.c.h.b16 %v9221
        %v9272 = vunpack.c.l.b16 %v9222
        %v9273 = vunpack.c.h.b16 %v9222
        %v9274 = vunpack.c.l.b16 %v9223
        %v9275 = vunpack.c.h.b16 %v9223
        %v9276 = vunpack.c.l.b16 %v9224
        %v9277 = vunpack.c.h.b16 %v9224
        %v9278 = vunpack.c.l.b16 %v9225
        %v9279 = vunpack.c.h.b16 %v9225
        %v9280 = vpack.c.b16 %v9250, %v9248
        %v9281 = vpack.c.b16 %v9251, %v9249
        %v9282 = vpack.c.b16 %v9254, %v9252
        %v9283 = vpack.c.b16 %v9255, %v9253
        %v9284 = vpack.c.b16 %v9258, %v9256
        %v9285 = vpack.c.b16 %v9259, %v9257
        %v9286 = vpack.c.b16 %v9262, %v9260
        %v9287 = vpack.c.b16 %v9263, %v9261
        %v9288 = vpack.c.b16 %v9266, %v9264
        %v9289 = vpack.c.b16 %v9267, %v9265
        %v9290 = vpack.c.b16 %v9270, %v9268
        %v9291 = vpack.c.b16 %v9271, %v9269
        %v9292 = vpack.c.b16 %v9274, %v9272
        %v9293 = vpack.c.b16 %v9275, %v9273
        %v9294 = vpack.c.b16 %v9278, %v9276
        %v9295 = vpack.c.b16 %v9279, %v9277
        %9312 = vmatpush.bf16.msra.mxu0 %v9294
        %9313 = vmatpush.bf16.msra.mxu0 %v9292
        %9314 = vmatpush.bf16.msra.mxu0 %v9290
        %9315 = vmatpush.bf16.msra.mxu0 %v9288
        %9316 = vmatpush.bf16.msra.mxu0 %v9286
        %9317 = vmatpush.bf16.msra.mxu0 %v9284
        %9318 = vmatpush.bf16.msra.mxu0 %v9282
        %9319 = vmatpush.bf16.msra.mxu0 %v9280
        %9320 = vmatmul.bf16.gmra.mxu0 %v9209
        %v9321 = vpop.f32.mrf.mxu0
        %v9322 = vadd.f32 %v9228, %v9321
        %v9323 = vpop.f32.mrf.mxu0
        %v9324 = vadd.f32 %v9228, %v9323
        %9325 = vdwg.mxu0
        %9326 = vmatpush.bf16.msra.mxu0 %v9295
        %9327 = vmatpush.bf16.msra.mxu0 %v9293
        %9328 = vmatpush.bf16.msra.mxu0 %v9291
        %9329 = vmatpush.bf16.msra.mxu0 %v9289
        %9330 = vmatpush.bf16.msra.mxu0 %v9287
        %9331 = vmatpush.bf16.msra.mxu0 %v9285
        %9332 = vmatpush.bf16.msra.mxu0 %v9283
        %9333 = vmatpush.bf16.msra.mxu0 %v9281
        %9334 = vmatmul.bf16.gmra.mxu0 %v9209
        %v9335 = vpop.f32.mrf.mxu0
        %v9336 = vadd.f32 %v9229, %v9335
        %v9337 = vpop.f32.mrf.mxu0
        %v9338 = vadd.f32 %v9229, %v9337
        %9339 = vdwg.mxu0
        %9340 = vst [vmem:[%s784] sm:$0xff] %v9322
        %9341 = vst [vmem:[%s784 + $0x8] sm:$0xff] %v9336
        %9342 = vst [vmem:[%s784 + $0x10] sm:$0xff] %v9324
        %9343 = vst [vmem:[%s784 + $0x18] sm:$0xff] %v9338
        %s9344 = sand.u32 %s599, 1
        %s9345 = scalar_lea.sflag [#allocation3], %s9344
        %s9346 = sand.u32 %s599, 1
        %s9347 = smul.addr %s9346, 32
        %s9348 = scalar_lea.vmem [#allocation2], %s9347
        // Predicated region
        $region125: #{vit_forward.1} parent=123 // pred_check
          %p9349 = pneg %p609
        $region126: #{vit_forward.1} parent=123 // pred_check_branch
          %9351 = sbr.rel (%p9349) target = $region128
        $region127: #{vit_forward.1} parent=123 // pred_region
          %9353 = vsyncadd %s9345, 0
          %s9354 = smul.addr %s40, 4
          %s9355 = smul.addr %s9354, 8
          %s9356 = scalar_lea.hbm %s26, %s9355
          %s9357 = sshll.u32 %s9348, 4
          %s9358 = int_to_ptr.vmem [resolvable:$true] %s9357
          %s9359 = sshll.u32 %s9356, 4
          %s9360 = int_to_ptr.hbm [resolvable:$true] %s9359
          %9365 = dma.vmem_to_hbm [thread:$0]  %s9358, 512, %s9360, %s9345, 256, 256, 16
        $region128: #{vit_forward.1} parent=123 // pred_fallthru
          _
      $region124: #{vit_forward.1} parent=5 // pred_fallthru
        _
      %p9366 = scmp.le.s32.totalorder 2, %s35
      // Predicated region
      $region129: #{vit_forward.1} parent=5 // pred_check
        %p9367 = pneg %p9366
      $region130: #{vit_forward.1} parent=5 // pred_check_branch
        %9369 = sbr.rel (%p9367) target = $region132
      $region131: #{vit_forward.1} parent=5 // pred_region
        %s9370 = ssub.s32 %s35, 2
        // Predicated region
        $region133: #{vit_forward.1} parent=131 // pred_check
          %p9371 = pneg %p615
        $region134: #{vit_forward.1} parent=131 // pred_check_branch
          %9373 = sbr.rel (%p9371) target = $region136
        $region135: #{vit_forward.1} parent=131 // pred_region
          %s9374 = sand.u32 %s600, 1
          %s9375 = scalar_lea.sflag [#allocation3], %s9374
          %s9376 = sand.u32 %s600, 1
          %s9377 = smul.addr %s9376, 32
          %s9378 = scalar_lea.vmem [#allocation2], %s9377
          %9380 = dma.done %s9375, 512
        $region136: #{vit_forward.1} parent=131 // pred_fallthru
          _
      $region132: #{vit_forward.1} parent=5 // pred_fallthru
        _
    $region6: #{vit_forward.1} parent=1 // loop_footer
      %s39 = sadd.s32 1, %s35
    $region7: #{vit_forward.1} parent=1 // loop_footer_branch
      %34 = sbr.rel target = $region3
    $region8: #{vit_forward.1} parent=1 // loop_exit
      _
    %9381 = vsyncpa [#allocation3], 1
    %s9382 = scalar_lea.sflag [#allocation3], 1
    %9383 = vsyncpa %s9382, 1

</llo_original>
